<compile_context>
chip_gen: v5e
topology: v5e:2x2
jax: 0.10.0
libtpu: 0.0.40
codegen_flags: <defaults>
</compile_context>

<pallas_src>
import functools
import math

import jax
import jax.numpy as jnp
from jax.experimental import pallas as pl
from jax.experimental.pallas import tpu as pltpu


def _layer_norm(x, gamma, beta, eps=1e-5):
    mu = jnp.mean(x, axis=-1, keepdims=True)
    var = jnp.mean((x - mu) ** 2, axis=-1, keepdims=True)
    return (x - mu) * jax.lax.rsqrt(var + eps) * gamma + beta


def encoder_kernel(src_ref, pos_ref,
                   wqk_ref, bqk_ref, wv_ref, bv_ref,
                   wo_ref, bo_ref,
                   g1_ref, be1_ref,
                   w1_ref, fb1_ref, w2_ref, fb2_ref,
                   g2_ref, be2_ref,
                   gf_ref, bef_ref,
                   out_ref, x_buf,
                   *, nhead, q_tile, apply_final_norm):
    """One grid step == one (batch element, layer) pair.

    x_buf is a persistent VMEM scratch carrying the (S, C) activation across the
    layer ("arbitrary") grid axis; out_ref is written only on the last layer.
    """
    layer = pl.program_id(1)
    n_layers = pl.num_programs(1)

    # Layer 0: initialize the carried activation from src (per batch element).
    @pl.when(layer == 0)
    def _():
        x_buf[...] = src_ref[0].astype(jnp.float32)

    x = x_buf[...]                               # (S, C) layer input, f32
    pos = pos_ref[0].astype(jnp.float32)         # (S, C)
    S, C = x.shape
    dh = C // nhead
    bf16 = jnp.bfloat16

    # VMEM-resident weights (bf16 MXU operands) and f32 biases / norm params.
    wqk = wqk_ref[...]                           # (C, 2C): packed Q|K, Q pre-scaled
    wv, wo = wv_ref[...], wo_ref[...]            # (C, C)
    w1, w2 = w1_ref[...], w2_ref[...]            # (C, Fd), (Fd, C)
    bqk, bv, bo = bqk_ref[...], bv_ref[...], bo_ref[...]
    fb1, fb2 = fb1_ref[...], fb2_ref[...]
    g1, be1 = g1_ref[...], be1_ref[...]
    g2, be2 = g2_ref[...], be2_ref[...]

    # ---- full-sequence projections (keys/values need all rows) ----
    qk_in = (x + pos).astype(bf16)               # with_pos_embed on q, k only
    qk = jnp.dot(qk_in, wqk, preferred_element_type=jnp.float32) + bqk   # (S, 2C)
    q = qk[:, :C]                                # 1/sqrt(dh) already folded in
    k = qk[:, C:]
    v = jnp.dot(x.astype(bf16), wv, preferred_element_type=jnp.float32) + bv

    kh = k.reshape(S, nhead, dh).astype(bf16)    # (S, H, dh)
    vh = v.reshape(S, nhead, dh).astype(bf16)

    # ---- query-row tiling: caps scores at (H, Tq, S) and FFN at (Tq, Fd) ----
    n_tiles = S // q_tile                        # wrapper guarantees S % q_tile == 0
    for t in range(n_tiles):                     # static tile loop (few iterations)
        r0, r1 = t * q_tile, (t + 1) * q_tile
        x_rows = x[r0:r1]                        # (Tq, C) layer-input rows (residual)
        qh = q[r0:r1].reshape(q_tile, nhead, dh).astype(bf16)

        # scores (H, Tq, S), f32 accumulation; softmax over the full key axis
        s = jnp.einsum('qhd,khd->hqk', qh, kh, preferred_element_type=jnp.float32)
        s = s - jnp.max(s, axis=-1, keepdims=True)
        p = jnp.exp(s)
        p = p / jnp.sum(p, axis=-1, keepdims=True)     # exact divide (no approx recip)

        attn = jnp.einsum('hqk,khd->qhd', p.astype(bf16), vh,
                          preferred_element_type=jnp.float32).reshape(q_tile, C)
        attn = jnp.dot(attn.astype(bf16), wo, preferred_element_type=jnp.float32) + bo

        # residual + norm1 (dropout == identity in eval mode)
        y1 = _layer_norm(x_rows + attn, g1, be1)

        # FFN rows: linear1 -> relu -> linear2, residual + norm2
        ff = jnp.dot(y1.astype(bf16), w1, preferred_element_type=jnp.float32) + fb1
        ff = jnp.maximum(ff, 0.0)
        ff = jnp.dot(ff.astype(bf16), w2, preferred_element_type=jnp.float32) + fb2
        y2 = _layer_norm(y1 + ff, g2, be2)

        # carry the layer output for the next layer step
        x_buf[r0:r1, :] = y2

        # on the last layer, (optionally) apply the final norm and emit the output
        @pl.when(layer == n_layers - 1)
        def _():
            out = y2
            if apply_final_norm:
                out = _layer_norm(out, gf_ref[...], bef_ref[...])
            out_ref[0, r0:r1, :] = out.astype(out_ref.dtype)


def _pick_q_tile(S):
    if S <= 128:
        return S
    for t in (128, 256, 512, 64, 32, 16, 8):
        if S % t == 0:
            return t
    return S   # TODO(synk): pad/mask ragged S instead of falling back to full-S tiles


def _vmem_limit_bytes():
    # ~100 MiB on v5e/v6e (128 MiB VMEM), ~51 MiB on v7x (64 MiB VMEM).
    try:
        cap = int(pltpu.get_tpu_info().vmem_capacity_bytes)
    except Exception:
        cap = 64 << 20
    return max(32 << 20, min(int(cap * 0.8), 100 << 20))


def transformer_encoder0(src, pos, params, num_layers, nhead, norm=None):
    """Matches TransformerEncoder0.forward: num_layers identical (deep-copied)
    encoder layers, then an optional final LayerNorm. One fused pallas_call."""
    B, S, C = src.shape
    Fd = params["w1"].shape[1]
    assert C % nhead == 0
    dh = C // nhead
    scale = 1.0 / math.sqrt(dh)
    bf16 = jnp.bfloat16

    # Fold 1/sqrt(dh) into the Q half; pack Q|K into a single (C, 2C) matmul.
    wqk = jnp.concatenate([params["wq"] * scale, params["wk"]], axis=1).astype(bf16)
    bqk = jnp.concatenate([params["bq"] * scale, params["bk"]], axis=1)
    wv = params["wv"].astype(bf16)
    wo = params["wo"].astype(bf16)
    w1 = params["w1"].astype(bf16)
    w2 = params["w2"].astype(bf16)

    if norm is not None:
        gf, bef = norm
        apply_final_norm = True
    else:
        gf = jnp.ones((1, C), jnp.float32)
        bef = jnp.zeros((1, C), jnp.float32)
        apply_final_norm = False

    q_tile = _pick_q_tile(S)
    kernel = functools.partial(encoder_kernel, nhead=nhead, q_tile=q_tile,
                               apply_final_norm=apply_final_norm)

    act_spec = pl.BlockSpec((1, S, C), lambda b, l: (b, 0, 0))

    def build(single_buffer_weights):
        pipe_kw = {}
        if single_buffer_weights and hasattr(pl, "Buffered"):
            # constant index_map -> no re-fetch; single buffer halves weight VMEM.
            pipe_kw = dict(pipeline_mode=pl.Buffered(1))

        def wspec(shape):
            def index_map(b, l):
                return (0,) * len(shape)
            return pl.BlockSpec(shape, index_map, **pipe_kw)

        in_specs = [
            act_spec, act_spec,                                 # src, pos
            wspec((C, 2 * C)), wspec((1, 2 * C)),               # packed Q|K w/b
            wspec((C, C)), wspec((1, C)),                       # V w/b
            wspec((C, C)), wspec((1, C)),                       # out-proj w/b
            wspec((1, C)), wspec((1, C)),                       # ln1 gamma/beta
            wspec((C, Fd)), wspec((1, Fd)),                     # linear1 w/b
            wspec((Fd, C)), wspec((1, C)),                      # linear2 w/b
            wspec((1, C)), wspec((1, C)),                       # ln2 gamma/beta
            wspec((1, C)), wspec((1, C)),                       # final norm gamma/beta
        ]
        return pl.pallas_call(
            kernel,
            out_shape=jax.ShapeDtypeStruct((B, S, C), jnp.float32),
            grid=(B, num_layers),
            in_specs=in_specs,
            out_specs=act_spec,
            scratch_shapes=[pltpu.VMEM((S, C), jnp.float32)],   # carried activation
            compiler_params=pltpu.CompilerParams(
                dimension_semantics=("parallel", "arbitrary"),
                vmem_limit_bytes=_vmem_limit_bytes()),
        )

    args = (src, pos,
            wqk, bqk, wv, params["bv"], wo, params["bo"],
            params["g1"], params["be1"],
            w1, params["fb1"], w2, params["fb2"],
            params["g2"], params["be2"],
            gf, bef)

    try:
        return build(True)(*args)
    except Exception:
        # Fallback if this JAX build rejects single-buffered weight BlockSpecs.
        return build(False)(*args)


# ---------------------------------------------------------------------------
# pure-JAX f32 reference (tolerance check) + param init
# ---------------------------------------------------------------------------
def reference(src, pos, params, num_layers, nhead, norm=None):
    B, S, C = src.shape
    dh = C // nhead
    x = src
    for _ in range(num_layers):
        qk_in = x + pos
        q = qk_in @ params["wq"] + params["bq"]
        k = qk_in @ params["wk"] + params["bk"]
        v = x @ params["wv"] + params["bv"]
        qh = q.reshape(B, S, nhead, dh).transpose(0, 2, 1, 3)
        kh = k.reshape(B, S, nhead, dh).transpose(0, 2, 1, 3)
        vh = v.reshape(B, S, nhead, dh).transpose(0, 2, 1, 3)
        s = jnp.einsum('bhqd,bhkd->bhqk', qh, kh) / math.sqrt(dh)
        p = jax.nn.softmax(s, axis=-1)
        attn = jnp.einsum('bhqk,bhkd->bhqd', p, vh).transpose(0, 2, 1, 3).reshape(B, S, C)
        attn = attn @ params["wo"] + params["bo"]
        x = _layer_norm(x + attn, params["g1"], params["be1"])
        ff = jnp.maximum(x @ params["w1"] + params["fb1"], 0.0)
        ff = ff @ params["w2"] + params["fb2"]
        x = _layer_norm(x + ff, params["g2"], params["be2"])
    if norm is not None:
        x = _layer_norm(x, norm[0], norm[1])
    return x


def init_layer_params(key, C, Fd):
    ks = jax.random.split(key, 6)

    def lin(k, fan_in, shape):
        return (jax.random.normal(k, shape, jnp.float32) / jnp.sqrt(fan_in)).astype(jnp.float32)

    # Weights stored pre-transposed so the kernel computes x @ W (+ b),
    # equivalent to PyTorch's x @ W_pt.T + b.
    return dict(
        wq=lin(ks[0], C, (C, C)), wk=lin(ks[1], C, (C, C)), wv=lin(ks[2], C, (C, C)),
        bq=jnp.zeros((1, C), jnp.float32), bk=jnp.zeros((1, C), jnp.float32),
        bv=jnp.zeros((1, C), jnp.float32),
        wo=lin(ks[3], C, (C, C)), bo=jnp.zeros((1, C), jnp.float32),
        g1=jnp.ones((1, C), jnp.float32), be1=jnp.zeros((1, C), jnp.float32),
        w1=lin(ks[4], C, (C, Fd)), fb1=jnp.zeros((1, Fd), jnp.float32),
        w2=lin(ks[5], Fd, (Fd, C)), fb2=jnp.zeros((1, C), jnp.float32),
        g2=jnp.ones((1, C), jnp.float32), be2=jnp.zeros((1, C), jnp.float32),
    )


if __name__ == "__main__":
    # Small demo shapes (production UniAD: C=256, nhead=8, Fd=2048, S ~ H*W).
    B, S, C = 2, 16, 64
    nhead, Fd, num_layers = 4, 128, 2

    key = jax.random.PRNGKey(0)
    k_src, k_pos, k_par = jax.random.split(key, 3)
    src = jax.random.normal(k_src, (B, S, C), jnp.float32)
    pos = jax.random.normal(k_pos, (B, S, C), jnp.float32)

    layer_params = init_layer_params(k_par, C, Fd)     # _get_clones -> same params per layer
    final_norm = (jnp.ones((1, C), jnp.float32), jnp.zeros((1, C), jnp.float32))

    out = transformer_encoder0(src, pos, layer_params, num_layers, nhead, norm=final_norm)
    out = jax.block_until_ready(out)
    assert out.shape == (B, S, C) and out.dtype == jnp.float32

    # Check against the f32 reference (kernel uses bf16 MXU inputs, f32 accumulation).
    ref = jax.block_until_ready(reference(src, pos, layer_params, num_layers, nhead,
                                          norm=final_norm))
    max_err = float(jnp.max(jnp.abs(out - ref)))
    assert max_err < 1e-1, f"max abs err {max_err}"
    print("KERNEL_OK")
</pallas_src>

<mosaic_0001>
module attributes {stable_mosaic.version = 11 : i64} {
  func.func @encoder_kernel(%arg0: i32, %arg1: i32, %arg2: memref<1x16x64xf32, #tpu.memory_space<vmem>>, %arg3: memref<1x16x64xf32, #tpu.memory_space<vmem>>, %arg4: memref<64x128xbf16, #tpu.memory_space<vmem>>, %arg5: memref<1x128xf32, #tpu.memory_space<vmem>>, %arg6: memref<64x64xbf16, #tpu.memory_space<vmem>>, %arg7: memref<1x64xf32, #tpu.memory_space<vmem>>, %arg8: memref<64x64xbf16, #tpu.memory_space<vmem>>, %arg9: memref<1x64xf32, #tpu.memory_space<vmem>>, %arg10: memref<1x64xf32, #tpu.memory_space<vmem>>, %arg11: memref<1x64xf32, #tpu.memory_space<vmem>>, %arg12: memref<64x128xbf16, #tpu.memory_space<vmem>>, %arg13: memref<1x128xf32, #tpu.memory_space<vmem>>, %arg14: memref<128x64xbf16, #tpu.memory_space<vmem>>, %arg15: memref<1x64xf32, #tpu.memory_space<vmem>>, %arg16: memref<1x64xf32, #tpu.memory_space<vmem>>, %arg17: memref<1x64xf32, #tpu.memory_space<vmem>>, %arg18: memref<1x64xf32, #tpu.memory_space<vmem>>, %arg19: memref<1x64xf32, #tpu.memory_space<vmem>>, %arg20: memref<1x16x64xf32, #tpu.memory_space<vmem>>, %arg21: memref<16x64xf32, #tpu.memory_space<vmem>>) attributes {dimension_semantics = [#tpu.dimension_semantics<parallel>, #tpu.dimension_semantics<arbitrary>], iteration_bounds = array<i64: 2, 2>, scalar_prefetch = 0 : i64, scratch_operands = 1 : i64, tpu.core_type = #tpu.core_type<tc>, window_params = [{transform_indices = @transform_0, window_bounds = array<i64: 1, 16, 64>}, {transform_indices = @transform_1, window_bounds = array<i64: 1, 16, 64>}, {pipeline_mode = #tpu.pipeline_mode<synchronous>, transform_indices = @transform_2, window_bounds = array<i64: 64, 128>}, {pipeline_mode = #tpu.pipeline_mode<synchronous>, transform_indices = @transform_3, window_bounds = array<i64: 1, 128>}, {pipeline_mode = #tpu.pipeline_mode<synchronous>, transform_indices = @transform_4, window_bounds = array<i64: 64, 64>}, {pipeline_mode = #tpu.pipeline_mode<synchronous>, transform_indices = @transform_5, window_bounds = array<i64: 1, 64>}, {pipeline_mode = #tpu.pipeline_mode<synchronous>, transform_indices = @transform_6, window_bounds = array<i64: 64, 64>}, {pipeline_mode = #tpu.pipeline_mode<synchronous>, transform_indices = @transform_7, window_bounds = array<i64: 1, 64>}, {pipeline_mode = #tpu.pipeline_mode<synchronous>, transform_indices = @transform_8, window_bounds = array<i64: 1, 64>}, {pipeline_mode = #tpu.pipeline_mode<synchronous>, transform_indices = @transform_9, window_bounds = array<i64: 1, 64>}, {pipeline_mode = #tpu.pipeline_mode<synchronous>, transform_indices = @transform_10, window_bounds = array<i64: 64, 128>}, {pipeline_mode = #tpu.pipeline_mode<synchronous>, transform_indices = @transform_11, window_bounds = array<i64: 1, 128>}, {pipeline_mode = #tpu.pipeline_mode<synchronous>, transform_indices = @transform_12, window_bounds = array<i64: 128, 64>}, {pipeline_mode = #tpu.pipeline_mode<synchronous>, transform_indices = @transform_13, window_bounds = array<i64: 1, 64>}, {pipeline_mode = #tpu.pipeline_mode<synchronous>, transform_indices = @transform_14, window_bounds = array<i64: 1, 64>}, {pipeline_mode = #tpu.pipeline_mode<synchronous>, transform_indices = @transform_15, window_bounds = array<i64: 1, 64>}, {pipeline_mode = #tpu.pipeline_mode<synchronous>, transform_indices = @transform_16, window_bounds = array<i64: 1, 64>}, {pipeline_mode = #tpu.pipeline_mode<synchronous>, transform_indices = @transform_17, window_bounds = array<i64: 1, 64>}, {transform_indices = @transform_18, window_bounds = array<i64: 1, 16, 64>}]} {
    %c0_i32 = arith.constant 0 : i32
    %0 = arith.cmpi eq, %arg1, %c0_i32 : i32
    %1 = arith.extui %0 : i1 to i32
    %c0_i32_0 = arith.constant 0 : i32
    %2 = arith.cmpi ne, %1, %c0_i32_0 : i32
    scf.if %2 {
      %c0_55 = arith.constant 0 : index
      %c0_56 = arith.constant 0 : index
      %c0_57 = arith.constant 0 : index
      %115 = vector.load %arg2[%c0_55, %c0_56, %c0_57] : memref<1x16x64xf32, #tpu.memory_space<vmem>>, vector<1x16x64xf32>
      %116 = vector.shape_cast %115 : vector<1x16x64xf32> to vector<16x64xf32>
      %c0_58 = arith.constant 0 : index
      %c0_59 = arith.constant 0 : index
      %117 = vector.load %arg21[%c0_58, %c0_59] : memref<16x64xf32, #tpu.memory_space<vmem>>, vector<16x64xf32>
      tpu.vector_store %arg21[%c0_58, %c0_59], %116 {strides = array<i32>} : memref<16x64xf32, #tpu.memory_space<vmem>>, vector<16x64xf32>,
    } else {
    }
    %c0 = arith.constant 0 : index
    %c0_1 = arith.constant 0 : index
    %3 = vector.load %arg21[%c0, %c0_1] : memref<16x64xf32, #tpu.memory_space<vmem>>, vector<16x64xf32>
    %c0_2 = arith.constant 0 : index
    %c0_3 = arith.constant 0 : index
    %c0_4 = arith.constant 0 : index
    %4 = vector.load %arg3[%c0_2, %c0_3, %c0_4] : memref<1x16x64xf32, #tpu.memory_space<vmem>>, vector<1x16x64xf32>
    %5 = vector.shape_cast %4 : vector<1x16x64xf32> to vector<16x64xf32>
    %c0_5 = arith.constant 0 : index
    %c0_6 = arith.constant 0 : index
    %6 = vector.load %arg4[%c0_5, %c0_6] : memref<64x128xbf16, #tpu.memory_space<vmem>>, vector<64x128xbf16>
    %c0_7 = arith.constant 0 : index
    %c0_8 = arith.constant 0 : index
    %7 = vector.load %arg6[%c0_7, %c0_8] : memref<64x64xbf16, #tpu.memory_space<vmem>>, vector<64x64xbf16>
    %c0_9 = arith.constant 0 : index
    %c0_10 = arith.constant 0 : index
    %8 = vector.load %arg8[%c0_9, %c0_10] : memref<64x64xbf16, #tpu.memory_space<vmem>>, vector<64x64xbf16>
    %c0_11 = arith.constant 0 : index
    %c0_12 = arith.constant 0 : index
    %9 = vector.load %arg12[%c0_11, %c0_12] : memref<64x128xbf16, #tpu.memory_space<vmem>>, vector<64x128xbf16>
    %c0_13 = arith.constant 0 : index
    %c0_14 = arith.constant 0 : index
    %10 = vector.load %arg14[%c0_13, %c0_14] : memref<128x64xbf16, #tpu.memory_space<vmem>>, vector<128x64xbf16>
    %c0_15 = arith.constant 0 : index
    %c0_16 = arith.constant 0 : index
    %11 = vector.load %arg5[%c0_15, %c0_16] : memref<1x128xf32, #tpu.memory_space<vmem>>, vector<1x128xf32>
    %c0_17 = arith.constant 0 : index
    %c0_18 = arith.constant 0 : index
    %12 = vector.load %arg7[%c0_17, %c0_18] : memref<1x64xf32, #tpu.memory_space<vmem>>, vector<1x64xf32>
    %c0_19 = arith.constant 0 : index
    %c0_20 = arith.constant 0 : index
    %13 = vector.load %arg9[%c0_19, %c0_20] : memref<1x64xf32, #tpu.memory_space<vmem>>, vector<1x64xf32>
    %c0_21 = arith.constant 0 : index
    %c0_22 = arith.constant 0 : index
    %14 = vector.load %arg13[%c0_21, %c0_22] : memref<1x128xf32, #tpu.memory_space<vmem>>, vector<1x128xf32>
    %c0_23 = arith.constant 0 : index
    %c0_24 = arith.constant 0 : index
    %15 = vector.load %arg15[%c0_23, %c0_24] : memref<1x64xf32, #tpu.memory_space<vmem>>, vector<1x64xf32>
    %c0_25 = arith.constant 0 : index
    %c0_26 = arith.constant 0 : index
    %16 = vector.load %arg10[%c0_25, %c0_26] : memref<1x64xf32, #tpu.memory_space<vmem>>, vector<1x64xf32>
    %c0_27 = arith.constant 0 : index
    %c0_28 = arith.constant 0 : index
    %17 = vector.load %arg11[%c0_27, %c0_28] : memref<1x64xf32, #tpu.memory_space<vmem>>, vector<1x64xf32>
    %c0_29 = arith.constant 0 : index
    %c0_30 = arith.constant 0 : index
    %18 = vector.load %arg16[%c0_29, %c0_30] : memref<1x64xf32, #tpu.memory_space<vmem>>, vector<1x64xf32>
    %c0_31 = arith.constant 0 : index
    %c0_32 = arith.constant 0 : index
    %19 = vector.load %arg17[%c0_31, %c0_32] : memref<1x64xf32, #tpu.memory_space<vmem>>, vector<1x64xf32>
    %20 = arith.addf %3, %5 : vector<16x64xf32>
    %21 = arith.truncf %20 : vector<16x64xf32> to vector<16x64xbf16>
    %cst = arith.constant dense<0.000000e+00> : vector<16x128xf32>
    %22 = tpu.matmul %21, %6, %cst {dimension_numbers = #tpu.dot_dimension_numbers<[1], [0], [0], [1], [0, 0, 1, 1], [], []>} : vector<16x64xbf16>, vector<64x128xbf16>, vector<16x128xf32> -> vector<16x128xf32>
    %23 = vector.broadcast %11 : vector<1x128xf32> to vector<16x128xf32>
    %24 = arith.addf %22, %23 : vector<16x128xf32>
    %25 = vector.extract_strided_slice %24 {offsets = [0, 0], sizes = [16, 64], strides = [1, 1]} : vector<16x128xf32> to vector<16x64xf32>
    %26 = vector.extract_strided_slice %24 {offsets = [0, 64], sizes = [16, 64], strides = [1, 1]} : vector<16x128xf32> to vector<16x64xf32>
    %27 = arith.truncf %3 : vector<16x64xf32> to vector<16x64xbf16>
    %cst_33 = arith.constant dense<0.000000e+00> : vector<16x64xf32>
    %28 = tpu.matmul %27, %7, %cst_33 {dimension_numbers = #tpu.dot_dimension_numbers<[1], [0], [0], [1], [0, 0, 1, 1], [], []>} : vector<16x64xbf16>, vector<64x64xbf16>, vector<16x64xf32> -> vector<16x64xf32>
    %29 = vector.broadcast %12 : vector<1x64xf32> to vector<16x64xf32>
    %30 = arith.addf %28, %29 : vector<16x64xf32>
    %31 = vector.shape_cast %26 : vector<16x64xf32> to vector<16x4x16xf32>
    %32 = arith.truncf %31 : vector<16x4x16xf32> to vector<16x4x16xbf16>
    %33 = vector.shape_cast %30 : vector<16x64xf32> to vector<16x4x16xf32>
    %34 = arith.truncf %33 : vector<16x4x16xf32> to vector<16x4x16xbf16>
    %35 = vector.shape_cast %25 : vector<16x64xf32> to vector<16x4x16xf32>
    %36 = arith.truncf %35 : vector<16x4x16xf32> to vector<16x4x16xbf16>
    "tpu.trace_start"() <{level = 10 : i32, message = "qhd,khd->hqk"}> : () -> ()
    %cst_34 = arith.constant dense<0.000000e+00> : vector<4x16x16xf32>
    %37 = tpu.matmul %36, %32, %cst_34 {dimension_numbers = #tpu.dot_dimension_numbers<[2], [2], [0], [0], [0, 1, 0, 0, 1, 0], [1], [1]>} : vector<16x4x16xbf16>, vector<16x4x16xbf16>, vector<4x16x16xf32> -> vector<4x16x16xf32>
    "tpu.trace_stop"() : () -> ()
    %cst_35 = arith.constant dense<0xFF800000> : vector<4x16xf32>
    %38 = vector.multi_reduction <maximumf>, %37, %cst_35 [2] : vector<4x16x16xf32> to vector<4x16xf32>
    %39 = vector.shape_cast %38 : vector<4x16xf32> to vector<4x16x1xf32>
    %40 = vector.broadcast %39 : vector<4x16x1xf32> to vector<4x16x16xf32>
    %41 = arith.subf %37, %40 : vector<4x16x16xf32>
    %42 = math.exp %41 : vector<4x16x16xf32>
    %cst_36 = arith.constant dense<0.000000e+00> : vector<4x16xf32>
    %43 = vector.multi_reduction <add>, %42, %cst_36 [2] : vector<4x16x16xf32> to vector<4x16xf32>
    %44 = vector.shape_cast %43 : vector<4x16xf32> to vector<4x16x1xf32>
    %45 = vector.broadcast %44 : vector<4x16x1xf32> to vector<4x16x16xf32>
    %46 = arith.divf %42, %45 : vector<4x16x16xf32>
    %47 = arith.truncf %46 : vector<4x16x16xf32> to vector<4x16x16xbf16>
    "tpu.trace_start"() <{level = 10 : i32, message = "hqk,khd->qhd"}> : () -> ()
    %cst_37 = arith.constant dense<0.000000e+00> : vector<4x16x16xf32>
    %48 = tpu.matmul %34, %47, %cst_37 {dimension_numbers = #tpu.dot_dimension_numbers<[0], [2], [2], [1], [0, 1, 0, 2, 1, 1], [1], [0]>} : vector<16x4x16xbf16>, vector<4x16x16xbf16>, vector<4x16x16xf32> -> vector<4x16x16xf32>
    %49 = tpu.transpose %48, [2, 0, 1] : vector<4x16x16xf32> -> vector<16x4x16xf32>
    "tpu.trace_stop"() : () -> ()
    %50 = vector.shape_cast %49 : vector<16x4x16xf32> to vector<16x64xf32>
    %51 = arith.truncf %50 : vector<16x64xf32> to vector<16x64xbf16>
    %cst_38 = arith.constant dense<0.000000e+00> : vector<16x64xf32>
    %52 = tpu.matmul %51, %8, %cst_38 {dimension_numbers = #tpu.dot_dimension_numbers<[1], [0], [0], [1], [0, 0, 1, 1], [], []>} : vector<16x64xbf16>, vector<64x64xbf16>, vector<16x64xf32> -> vector<16x64xf32>
    %53 = vector.broadcast %13 : vector<1x64xf32> to vector<16x64xf32>
    %54 = arith.addf %52, %53 : vector<16x64xf32>
    %55 = arith.addf %3, %54 : vector<16x64xf32>
    %cst_39 = arith.constant dense<0.000000e+00> : vector<16xf32>
    %56 = vector.multi_reduction <add>, %55, %cst_39 [1] : vector<16x64xf32> to vector<16xf32>
    %57 = vector.shape_cast %56 : vector<16xf32> to vector<16x1xf32>
    %cst_40 = arith.constant 6.400000e+01 : f32
    %58 = vector.broadcast %cst_40 : f32 to vector<16x1xf32>
    %59 = arith.divf %57, %58 : vector<16x1xf32>
    %60 = vector.broadcast %59 : vector<16x1xf32> to vector<16x64xf32>
    %61 = arith.subf %55, %60 : vector<16x64xf32>
    %62 = arith.mulf %61, %61 : vector<16x64xf32>
    %cst_41 = arith.constant dense<0.000000e+00> : vector<16xf32>
    %63 = vector.multi_reduction <add>, %62, %cst_41 [1] : vector<16x64xf32> to vector<16xf32>
    %64 = vector.shape_cast %63 : vector<16xf32> to vector<16x1xf32>
    %cst_42 = arith.constant 6.400000e+01 : f32
    %65 = vector.broadcast %cst_42 : f32 to vector<16x1xf32>
    %66 = arith.divf %64, %65 : vector<16x1xf32>
    %67 = vector.broadcast %59 : vector<16x1xf32> to vector<16x64xf32>
    %68 = arith.subf %55, %67 : vector<16x64xf32>
    %cst_43 = arith.constant 9.99999974E-6 : f32
    %69 = vector.broadcast %cst_43 : f32 to vector<16x1xf32>
    %70 = arith.addf %66, %69 : vector<16x1xf32>
    %71 = math.rsqrt %70 : vector<16x1xf32>
    %72 = vector.broadcast %71 : vector<16x1xf32> to vector<16x64xf32>
    %73 = arith.mulf %68, %72 : vector<16x64xf32>
    %74 = vector.broadcast %16 : vector<1x64xf32> to vector<16x64xf32>
    %75 = arith.mulf %73, %74 : vector<16x64xf32>
    %76 = vector.broadcast %17 : vector<1x64xf32> to vector<16x64xf32>
    %77 = arith.addf %75, %76 : vector<16x64xf32>
    %78 = arith.truncf %77 : vector<16x64xf32> to vector<16x64xbf16>
    %cst_44 = arith.constant dense<0.000000e+00> : vector<16x128xf32>
    %79 = tpu.matmul %78, %9, %cst_44 {dimension_numbers = #tpu.dot_dimension_numbers<[1], [0], [0], [1], [0, 0, 1, 1], [], []>} : vector<16x64xbf16>, vector<64x128xbf16>, vector<16x128xf32> -> vector<16x128xf32>
    %80 = vector.broadcast %14 : vector<1x128xf32> to vector<16x128xf32>
    %81 = arith.addf %79, %80 : vector<16x128xf32>
    %cst_45 = arith.constant 0.000000e+00 : f32
    %82 = vector.broadcast %cst_45 : f32 to vector<16x128xf32>
    %83 = arith.maximumf %81, %82 : vector<16x128xf32>
    %84 = arith.truncf %83 : vector<16x128xf32> to vector<16x128xbf16>
    %cst_46 = arith.constant dense<0.000000e+00> : vector<16x64xf32>
    %85 = tpu.matmul %84, %10, %cst_46 {dimension_numbers = #tpu.dot_dimension_numbers<[1], [0], [0], [1], [0, 0, 1, 1], [], []>} : vector<16x128xbf16>, vector<128x64xbf16>, vector<16x64xf32> -> vector<16x64xf32>
    %86 = vector.broadcast %15 : vector<1x64xf32> to vector<16x64xf32>
    %87 = arith.addf %85, %86 : vector<16x64xf32>
    %88 = arith.addf %77, %87 : vector<16x64xf32>
    %cst_47 = arith.constant dense<0.000000e+00> : vector<16xf32>
    %89 = vector.multi_reduction <add>, %88, %cst_47 [1] : vector<16x64xf32> to vector<16xf32>
    %90 = vector.shape_cast %89 : vector<16xf32> to vector<16x1xf32>
    %cst_48 = arith.constant 6.400000e+01 : f32
    %91 = vector.broadcast %cst_48 : f32 to vector<16x1xf32>
    %92 = arith.divf %90, %91 : vector<16x1xf32>
    %93 = vector.broadcast %92 : vector<16x1xf32> to vector<16x64xf32>
    %94 = arith.subf %88, %93 : vector<16x64xf32>
    %95 = arith.mulf %94, %94 : vector<16x64xf32>
    %cst_49 = arith.constant dense<0.000000e+00> : vector<16xf32>
    %96 = vector.multi_reduction <add>, %95, %cst_49 [1] : vector<16x64xf32> to vector<16xf32>
    %97 = vector.shape_cast %96 : vector<16xf32> to vector<16x1xf32>
    %cst_50 = arith.constant 6.400000e+01 : f32
    %98 = vector.broadcast %cst_50 : f32 to vector<16x1xf32>
    %99 = arith.divf %97, %98 : vector<16x1xf32>
    %100 = vector.broadcast %92 : vector<16x1xf32> to vector<16x64xf32>
    %101 = arith.subf %88, %100 : vector<16x64xf32>
    %cst_51 = arith.constant 9.99999974E-6 : f32
    %102 = vector.broadcast %cst_51 : f32 to vector<16x1xf32>
    %103 = arith.addf %99, %102 : vector<16x1xf32>
    %104 = math.rsqrt %103 : vector<16x1xf32>
    %105 = vector.broadcast %104 : vector<16x1xf32> to vector<16x64xf32>
    %106 = arith.mulf %101, %105 : vector<16x64xf32>
    %107 = vector.broadcast %18 : vector<1x64xf32> to vector<16x64xf32>
    %108 = arith.mulf %106, %107 : vector<16x64xf32>
    %109 = vector.broadcast %19 : vector<1x64xf32> to vector<16x64xf32>
    %110 = arith.addf %108, %109 : vector<16x64xf32>
    %c0_52 = arith.constant 0 : index
    %c0_53 = arith.constant 0 : index
    %111 = vector.load %arg21[%c0_52, %c0_53] : memref<16x64xf32, #tpu.memory_space<vmem>>, vector<16x64xf32>
    tpu.vector_store %arg21[%c0_52, %c0_53], %110 {strides = array<i32>} : memref<16x64xf32, #tpu.memory_space<vmem>>, vector<16x64xf32>,
    %c1_i32 = arith.constant 1 : i32
    %112 = arith.cmpi eq, %arg1, %c1_i32 : i32
    %113 = arith.extui %112 : i1 to i32
    %c0_i32_54 = arith.constant 0 : i32
    %114 = arith.cmpi ne, %113, %c0_i32_54 : i32
    scf.if %114 {
      %c0_55 = arith.constant 0 : index
      %c0_56 = arith.constant 0 : index
      %115 = vector.load %arg18[%c0_55, %c0_56] : memref<1x64xf32, #tpu.memory_space<vmem>>, vector<1x64xf32>
      %c0_57 = arith.constant 0 : index
      %c0_58 = arith.constant 0 : index
      %116 = vector.load %arg19[%c0_57, %c0_58] : memref<1x64xf32, #tpu.memory_space<vmem>>, vector<1x64xf32>
      %cst_59 = arith.constant dense<0.000000e+00> : vector<16xf32>
      %117 = vector.multi_reduction <add>, %110, %cst_59 [1] : vector<16x64xf32> to vector<16xf32>
      %118 = vector.shape_cast %117 : vector<16xf32> to vector<16x1xf32>
      %cst_60 = arith.constant 6.400000e+01 : f32
      %119 = vector.broadcast %cst_60 : f32 to vector<16x1xf32>
      %120 = arith.divf %118, %119 : vector<16x1xf32>
      %121 = vector.broadcast %120 : vector<16x1xf32> to vector<16x64xf32>
      %122 = arith.subf %110, %121 : vector<16x64xf32>
      %123 = arith.mulf %122, %122 : vector<16x64xf32>
      %cst_61 = arith.constant dense<0.000000e+00> : vector<16xf32>
      %124 = vector.multi_reduction <add>, %123, %cst_61 [1] : vector<16x64xf32> to vector<16xf32>
      %125 = vector.shape_cast %124 : vector<16xf32> to vector<16x1xf32>
      %cst_62 = arith.constant 6.400000e+01 : f32
      %126 = vector.broadcast %cst_62 : f32 to vector<16x1xf32>
      %127 = arith.divf %125, %126 : vector<16x1xf32>
      %128 = vector.broadcast %120 : vector<16x1xf32> to vector<16x64xf32>
      %129 = arith.subf %110, %128 : vector<16x64xf32>
      %cst_63 = arith.constant 9.99999974E-6 : f32
      %130 = vector.broadcast %cst_63 : f32 to vector<16x1xf32>
      %131 = arith.addf %127, %130 : vector<16x1xf32>
      %132 = math.rsqrt %131 : vector<16x1xf32>
      %133 = vector.broadcast %132 : vector<16x1xf32> to vector<16x64xf32>
      %134 = arith.mulf %129, %133 : vector<16x64xf32>
      %135 = vector.broadcast %115 : vector<1x64xf32> to vector<16x64xf32>
      %136 = arith.mulf %134, %135 : vector<16x64xf32>
      %137 = vector.broadcast %116 : vector<1x64xf32> to vector<16x64xf32>
      %138 = arith.addf %136, %137 : vector<16x64xf32>
      %c0_64 = arith.constant 0 : index
      %c0_65 = arith.constant 0 : index
      %c0_66 = arith.constant 0 : index
      %139 = vector.load %arg20[%c0_64, %c0_65, %c0_66] : memref<1x16x64xf32, #tpu.memory_space<vmem>>, vector<1x16x64xf32>
      %140 = vector.shape_cast %139 : vector<1x16x64xf32> to vector<16x64xf32>
      %141 = vector.shape_cast %138 : vector<16x64xf32> to vector<1x16x64xf32>
      tpu.vector_store %arg20[%c0_64, %c0_65, %c0_66], %141 {strides = array<i32>} : memref<1x16x64xf32, #tpu.memory_space<vmem>>, vector<1x16x64xf32>,
    } else {
    }
    return
  }
  func.func @transform_0(%arg0: i32, %arg1: i32) -> (i32, i32, i32) {
    %c0_i32 = arith.constant 0 : i32
    %c0_i32_0 = arith.constant 0 : i32
    %c0_i32_1 = arith.constant 0 : i32
    return %arg0, %c0_i32, %c0_i32_0 : i32, i32, i32
  }
  func.func @transform_1(%arg0: i32, %arg1: i32) -> (i32, i32, i32) {
    %c0_i32 = arith.constant 0 : i32
    %c0_i32_0 = arith.constant 0 : i32
    %c0_i32_1 = arith.constant 0 : i32
    return %arg0, %c0_i32, %c0_i32_0 : i32, i32, i32
  }
  func.func @transform_2(%arg0: i32, %arg1: i32) -> (i32, i32) {
    %c0_i32 = arith.constant 0 : i32
    %c0_i32_0 = arith.constant 0 : i32
    %c0_i32_1 = arith.constant 0 : i32
    return %c0_i32, %c0_i32_0 : i32, i32
  }
  func.func @transform_3(%arg0: i32, %arg1: i32) -> (i32, i32) {
    %c0_i32 = arith.constant 0 : i32
    %c0_i32_0 = arith.constant 0 : i32
    %c0_i32_1 = arith.constant 0 : i32
    return %c0_i32, %c0_i32_0 : i32, i32
  }
  func.func @transform_4(%arg0: i32, %arg1: i32) -> (i32, i32) {
    %c0_i32 = arith.constant 0 : i32
    %c0_i32_0 = arith.constant 0 : i32
    %c0_i32_1 = arith.constant 0 : i32
    return %c0_i32, %c0_i32_0 : i32, i32
  }
  func.func @transform_5(%arg0: i32, %arg1: i32) -> (i32, i32) {
    %c0_i32 = arith.constant 0 : i32
    %c0_i32_0 = arith.constant 0 : i32
    %c0_i32_1 = arith.constant 0 : i32
    return %c0_i32, %c0_i32_0 : i32, i32
  }
  func.func @transform_6(%arg0: i32, %arg1: i32) -> (i32, i32) {
    %c0_i32 = arith.constant 0 : i32
    %c0_i32_0 = arith.constant 0 : i32
    %c0_i32_1 = arith.constant 0 : i32
    return %c0_i32, %c0_i32_0 : i32, i32
  }
  func.func @transform_7(%arg0: i32, %arg1: i32) -> (i32, i32) {
    %c0_i32 = arith.constant 0 : i32
    %c0_i32_0 = arith.constant 0 : i32
    %c0_i32_1 = arith.constant 0 : i32
    return %c0_i32, %c0_i32_0 : i32, i32
  }
  func.func @transform_8(%arg0: i32, %arg1: i32) -> (i32, i32) {
    %c0_i32 = arith.constant 0 : i32
    %c0_i32_0 = arith.constant 0 : i32
    %c0_i32_1 = arith.constant 0 : i32
    return %c0_i32, %c0_i32_0 : i32, i32
  }
  func.func @transform_9(%arg0: i32, %arg1: i32) -> (i32, i32) {
    %c0_i32 = arith.constant 0 : i32
    %c0_i32_0 = arith.constant 0 : i32
    %c0_i32_1 = arith.constant 0 : i32
    return %c0_i32, %c0_i32_0 : i32, i32
  }
  func.func @transform_10(%arg0: i32, %arg1: i32) -> (i32, i32) {
    %c0_i32 = arith.constant 0 : i32
    %c0_i32_0 = arith.constant 0 : i32
    %c0_i32_1 = arith.constant 0 : i32
    return %c0_i32, %c0_i32_0 : i32, i32
  }
  func.func @transform_11(%arg0: i32, %arg1: i32) -> (i32, i32) {
    %c0_i32 = arith.constant 0 : i32
    %c0_i32_0 = arith.constant 0 : i32
    %c0_i32_1 = arith.constant 0 : i32
    return %c0_i32, %c0_i32_0 : i32, i32
  }
  func.func @transform_12(%arg0: i32, %arg1: i32) -> (i32, i32) {
    %c0_i32 = arith.constant 0 : i32
    %c0_i32_0 = arith.constant 0 : i32
    %c0_i32_1 = arith.constant 0 : i32
    return %c0_i32, %c0_i32_0 : i32, i32
  }
  func.func @transform_13(%arg0: i32, %arg1: i32) -> (i32, i32) {
    %c0_i32 = arith.constant 0 : i32
    %c0_i32_0 = arith.constant 0 : i32
    %c0_i32_1 = arith.constant 0 : i32
    return %c0_i32, %c0_i32_0 : i32, i32
  }
  func.func @transform_14(%arg0: i32, %arg1: i32) -> (i32, i32) {
    %c0_i32 = arith.constant 0 : i32
    %c0_i32_0 = arith.constant 0 : i32
    %c0_i32_1 = arith.constant 0 : i32
    return %c0_i32, %c0_i32_0 : i32, i32
  }
  func.func @transform_15(%arg0: i32, %arg1: i32) -> (i32, i32) {
    %c0_i32 = arith.constant 0 : i32
    %c0_i32_0 = arith.constant 0 : i32
    %c0_i32_1 = arith.constant 0 : i32
    return %c0_i32, %c0_i32_0 : i32, i32
  }
  func.func @transform_16(%arg0: i32, %arg1: i32) -> (i32, i32) {
    %c0_i32 = arith.constant 0 : i32
    %c0_i32_0 = arith.constant 0 : i32
    %c0_i32_1 = arith.constant 0 : i32
    return %c0_i32, %c0_i32_0 : i32, i32
  }
  func.func @transform_17(%arg0: i32, %arg1: i32) -> (i32, i32) {
    %c0_i32 = arith.constant 0 : i32
    %c0_i32_0 = arith.constant 0 : i32
    %c0_i32_1 = arith.constant 0 : i32
    return %c0_i32, %c0_i32_0 : i32, i32
  }
  func.func @transform_18(%arg0: i32, %arg1: i32) -> (i32, i32, i32) {
    %c0_i32 = arith.constant 0 : i32
    %c0_i32_0 = arith.constant 0 : i32
    %c0_i32_1 = arith.constant 0 : i32
    return %arg0, %c0_i32, %c0_i32_0 : i32, i32, i32
  }
}

module attributes {stable_mosaic.version = 11 : i64} {
  func.func @encoder_kernel(%arg0: i32, %arg1: i32, %arg2: memref<1x16x64xf32, #tpu.memory_space<vmem>>, %arg3: memref<1x16x64xf32, #tpu.memory_space<vmem>>, %arg4: memref<64x128xbf16, #tpu.memory_space<vmem>>, %arg5: memref<1x128xf32, #tpu.memory_space<vmem>>, %arg6: memref<64x64xbf16, #tpu.memory_space<vmem>>, %arg7: memref<1x64xf32, #tpu.memory_space<vmem>>, %arg8: memref<64x64xbf16, #tpu.memory_space<vmem>>, %arg9: memref<1x64xf32, #tpu.memory_space<vmem>>, %arg10: memref<1x64xf32, #tpu.memory_space<vmem>>, %arg11: memref<1x64xf32, #tpu.memory_space<vmem>>, %arg12: memref<64x128xbf16, #tpu.memory_space<vmem>>, %arg13: memref<1x128xf32, #tpu.memory_space<vmem>>, %arg14: memref<128x64xbf16, #tpu.memory_space<vmem>>, %arg15: memref<1x64xf32, #tpu.memory_space<vmem>>, %arg16: memref<1x64xf32, #tpu.memory_space<vmem>>, %arg17: memref<1x64xf32, #tpu.memory_space<vmem>>, %arg18: memref<1x64xf32, #tpu.memory_space<vmem>>, %arg19: memref<1x64xf32, #tpu.memory_space<vmem>>, %arg20: memref<1x16x64xf32, #tpu.memory_space<vmem>>, %arg21: memref<16x64xf32, #tpu.memory_space<vmem>>) attributes {dimension_semantics = [#tpu.dimension_semantics<parallel>, #tpu.dimension_semantics<arbitrary>], iteration_bounds = array<i64: 2, 2>, scalar_prefetch = 0 : i64, scratch_operands = 1 : i64, tpu.core_type = #tpu.core_type<tc>, window_params = [{transform_indices = @transform_0, window_bounds = array<i64: 1, 16, 64>}, {transform_indices = @transform_1, window_bounds = array<i64: 1, 16, 64>}, {pipeline_mode = #tpu.pipeline_mode<synchronous>, transform_indices = @transform_2, window_bounds = array<i64: 64, 128>}, {pipeline_mode = #tpu.pipeline_mode<synchronous>, transform_indices = @transform_3, window_bounds = array<i64: 1, 128>}, {pipeline_mode = #tpu.pipeline_mode<synchronous>, transform_indices = @transform_4, window_bounds = array<i64: 64, 64>}, {pipeline_mode = #tpu.pipeline_mode<synchronous>, transform_indices = @transform_5, window_bounds = array<i64: 1, 64>}, {pipeline_mode = #tpu.pipeline_mode<synchronous>, transform_indices = @transform_6, window_bounds = array<i64: 64, 64>}, {pipeline_mode = #tpu.pipeline_mode<synchronous>, transform_indices = @transform_7, window_bounds = array<i64: 1, 64>}, {pipeline_mode = #tpu.pipeline_mode<synchronous>, transform_indices = @transform_8, window_bounds = array<i64: 1, 64>}, {pipeline_mode = #tpu.pipeline_mode<synchronous>, transform_indices = @transform_9, window_bounds = array<i64: 1, 64>}, {pipeline_mode = #tpu.pipeline_mode<synchronous>, transform_indices = @transform_10, window_bounds = array<i64: 64, 128>}, {pipeline_mode = #tpu.pipeline_mode<synchronous>, transform_indices = @transform_11, window_bounds = array<i64: 1, 128>}, {pipeline_mode = #tpu.pipeline_mode<synchronous>, transform_indices = @transform_12, window_bounds = array<i64: 128, 64>}, {pipeline_mode = #tpu.pipeline_mode<synchronous>, transform_indices = @transform_13, window_bounds = array<i64: 1, 64>}, {pipeline_mode = #tpu.pipeline_mode<synchronous>, transform_indices = @transform_14, window_bounds = array<i64: 1, 64>}, {pipeline_mode = #tpu.pipeline_mode<synchronous>, transform_indices = @transform_15, window_bounds = array<i64: 1, 64>}, {pipeline_mode = #tpu.pipeline_mode<synchronous>, transform_indices = @transform_16, window_bounds = array<i64: 1, 64>}, {pipeline_mode = #tpu.pipeline_mode<synchronous>, transform_indices = @transform_17, window_bounds = array<i64: 1, 64>}, {transform_indices = @transform_18, window_bounds = array<i64: 1, 16, 64>}]} {
    %c0_i32 = arith.constant 0 : i32
    %0 = arith.cmpi eq, %arg1, %c0_i32 : i32
    %1 = arith.extui %0 : i1 to i32
    %c0_i32_0 = arith.constant 0 : i32
    %2 = arith.cmpi ne, %1, %c0_i32_0 : i32
    scf.if %2 {
      %c0_55 = arith.constant 0 : index
      %c0_56 = arith.constant 0 : index
      %c0_57 = arith.constant 0 : index
      %115 = vector.load %arg2[%c0_55, %c0_56, %c0_57] : memref<1x16x64xf32, #tpu.memory_space<vmem>>, vector<1x16x64xf32>
      %116 = vector.shape_cast %115 : vector<1x16x64xf32> to vector<16x64xf32>
      %c0_58 = arith.constant 0 : index
      %c0_59 = arith.constant 0 : index
      %117 = vector.load %arg21[%c0_58, %c0_59] : memref<16x64xf32, #tpu.memory_space<vmem>>, vector<16x64xf32>
      tpu.vector_store %arg21[%c0_58, %c0_59], %116 {strides = array<i32>} : memref<16x64xf32, #tpu.memory_space<vmem>>, vector<16x64xf32>,
    } else {
    }
    %c0 = arith.constant 0 : index
    %c0_1 = arith.constant 0 : index
    %3 = vector.load %arg21[%c0, %c0_1] : memref<16x64xf32, #tpu.memory_space<vmem>>, vector<16x64xf32>
    %c0_2 = arith.constant 0 : index
    %c0_3 = arith.constant 0 : index
    %c0_4 = arith.constant 0 : index
    %4 = vector.load %arg3[%c0_2, %c0_3, %c0_4] : memref<1x16x64xf32, #tpu.memory_space<vmem>>, vector<1x16x64xf32>
    %5 = vector.shape_cast %4 : vector<1x16x64xf32> to vector<16x64xf32>
    %c0_5 = arith.constant 0 : index
    %c0_6 = arith.constant 0 : index
    %6 = vector.load %arg4[%c0_5, %c0_6] : memref<64x128xbf16, #tpu.memory_space<vmem>>, vector<64x128xbf16>
    %c0_7 = arith.constant 0 : index
    %c0_8 = arith.constant 0 : index
    %7 = vector.load %arg6[%c0_7, %c0_8] : memref<64x64xbf16, #tpu.memory_space<vmem>>, vector<64x64xbf16>
    %c0_9 = arith.constant 0 : index
    %c0_10 = arith.constant 0 : index
    %8 = vector.load %arg8[%c0_9, %c0_10] : memref<64x64xbf16, #tpu.memory_space<vmem>>, vector<64x64xbf16>
    %c0_11 = arith.constant 0 : index
    %c0_12 = arith.constant 0 : index
    %9 = vector.load %arg12[%c0_11, %c0_12] : memref<64x128xbf16, #tpu.memory_space<vmem>>, vector<64x128xbf16>
    %c0_13 = arith.constant 0 : index
    %c0_14 = arith.constant 0 : index
    %10 = vector.load %arg14[%c0_13, %c0_14] : memref<128x64xbf16, #tpu.memory_space<vmem>>, vector<128x64xbf16>
    %c0_15 = arith.constant 0 : index
    %c0_16 = arith.constant 0 : index
    %11 = vector.load %arg5[%c0_15, %c0_16] : memref<1x128xf32, #tpu.memory_space<vmem>>, vector<1x128xf32>
    %c0_17 = arith.constant 0 : index
    %c0_18 = arith.constant 0 : index
    %12 = vector.load %arg7[%c0_17, %c0_18] : memref<1x64xf32, #tpu.memory_space<vmem>>, vector<1x64xf32>
    %c0_19 = arith.constant 0 : index
    %c0_20 = arith.constant 0 : index
    %13 = vector.load %arg9[%c0_19, %c0_20] : memref<1x64xf32, #tpu.memory_space<vmem>>, vector<1x64xf32>
    %c0_21 = arith.constant 0 : index
    %c0_22 = arith.constant 0 : index
    %14 = vector.load %arg13[%c0_21, %c0_22] : memref<1x128xf32, #tpu.memory_space<vmem>>, vector<1x128xf32>
    %c0_23 = arith.constant 0 : index
    %c0_24 = arith.constant 0 : index
    %15 = vector.load %arg15[%c0_23, %c0_24] : memref<1x64xf32, #tpu.memory_space<vmem>>, vector<1x64xf32>
    %c0_25 = arith.constant 0 : index
    %c0_26 = arith.constant 0 : index
    %16 = vector.load %arg10[%c0_25, %c0_26] : memref<1x64xf32, #tpu.memory_space<vmem>>, vector<1x64xf32>
    %c0_27 = arith.constant 0 : index
    %c0_28 = arith.constant 0 : index
    %17 = vector.load %arg11[%c0_27, %c0_28] : memref<1x64xf32, #tpu.memory_space<vmem>>, vector<1x64xf32>
    %c0_29 = arith.constant 0 : index
    %c0_30 = arith.constant 0 : index
    %18 = vector.load %arg16[%c0_29, %c0_30] : memref<1x64xf32, #tpu.memory_space<vmem>>, vector<1x64xf32>
    %c0_31 = arith.constant 0 : index
    %c0_32 = arith.constant 0 : index
    %19 = vector.load %arg17[%c0_31, %c0_32] : memref<1x64xf32, #tpu.memory_space<vmem>>, vector<1x64xf32>
    %20 = arith.addf %3, %5 : vector<16x64xf32>
    %21 = arith.truncf %20 : vector<16x64xf32> to vector<16x64xbf16>
    %cst = arith.constant dense<0.000000e+00> : vector<16x128xf32>
    %22 = tpu.matmul %21, %6, %cst {dimension_numbers = #tpu.dot_dimension_numbers<[1], [0], [0], [1], [0, 0, 1, 1], [], []>} : vector<16x64xbf16>, vector<64x128xbf16>, vector<16x128xf32> -> vector<16x128xf32>
    %23 = vector.broadcast %11 : vector<1x128xf32> to vector<16x128xf32>
    %24 = arith.addf %22, %23 : vector<16x128xf32>
    %25 = vector.extract_strided_slice %24 {offsets = [0, 0], sizes = [16, 64], strides = [1, 1]} : vector<16x128xf32> to vector<16x64xf32>
    %26 = vector.extract_strided_slice %24 {offsets = [0, 64], sizes = [16, 64], strides = [1, 1]} : vector<16x128xf32> to vector<16x64xf32>
    %27 = arith.truncf %3 : vector<16x64xf32> to vector<16x64xbf16>
    %cst_33 = arith.constant dense<0.000000e+00> : vector<16x64xf32>
    %28 = tpu.matmul %27, %7, %cst_33 {dimension_numbers = #tpu.dot_dimension_numbers<[1], [0], [0], [1], [0, 0, 1, 1], [], []>} : vector<16x64xbf16>, vector<64x64xbf16>, vector<16x64xf32> -> vector<16x64xf32>
    %29 = vector.broadcast %12 : vector<1x64xf32> to vector<16x64xf32>
    %30 = arith.addf %28, %29 : vector<16x64xf32>
    %31 = vector.shape_cast %26 : vector<16x64xf32> to vector<16x4x16xf32>
    %32 = arith.truncf %31 : vector<16x4x16xf32> to vector<16x4x16xbf16>
    %33 = vector.shape_cast %30 : vector<16x64xf32> to vector<16x4x16xf32>
    %34 = arith.truncf %33 : vector<16x4x16xf32> to vector<16x4x16xbf16>
    %35 = vector.shape_cast %25 : vector<16x64xf32> to vector<16x4x16xf32>
    %36 = arith.truncf %35 : vector<16x4x16xf32> to vector<16x4x16xbf16>
    "tpu.trace_start"() <{level = 10 : i32, message = "qhd,khd->hqk"}> : () -> ()
    %cst_34 = arith.constant dense<0.000000e+00> : vector<4x16x16xf32>
    %37 = tpu.matmul %36, %32, %cst_34 {dimension_numbers = #tpu.dot_dimension_numbers<[2], [2], [0], [0], [0, 1, 0, 0, 1, 0], [1], [1]>} : vector<16x4x16xbf16>, vector<16x4x16xbf16>, vector<4x16x16xf32> -> vector<4x16x16xf32>
    "tpu.trace_stop"() : () -> ()
    %cst_35 = arith.constant dense<0xFF800000> : vector<4x16xf32>
    %38 = vector.multi_reduction <maximumf>, %37, %cst_35 [2] : vector<4x16x16xf32> to vector<4x16xf32>
    %39 = vector.shape_cast %38 : vector<4x16xf32> to vector<4x16x1xf32>
    %40 = vector.broadcast %39 : vector<4x16x1xf32> to vector<4x16x16xf32>
    %41 = arith.subf %37, %40 : vector<4x16x16xf32>
    %42 = math.exp %41 : vector<4x16x16xf32>
    %cst_36 = arith.constant dense<0.000000e+00> : vector<4x16xf32>
    %43 = vector.multi_reduction <add>, %42, %cst_36 [2] : vector<4x16x16xf32> to vector<4x16xf32>
    %44 = vector.shape_cast %43 : vector<4x16xf32> to vector<4x16x1xf32>
    %45 = vector.broadcast %44 : vector<4x16x1xf32> to vector<4x16x16xf32>
    %46 = arith.divf %42, %45 : vector<4x16x16xf32>
    %47 = arith.truncf %46 : vector<4x16x16xf32> to vector<4x16x16xbf16>
    "tpu.trace_start"() <{level = 10 : i32, message = "hqk,khd->qhd"}> : () -> ()
    %cst_37 = arith.constant dense<0.000000e+00> : vector<4x16x16xf32>
    %48 = tpu.matmul %34, %47, %cst_37 {dimension_numbers = #tpu.dot_dimension_numbers<[0], [2], [2], [1], [0, 1, 0, 2, 1, 1], [1], [0]>} : vector<16x4x16xbf16>, vector<4x16x16xbf16>, vector<4x16x16xf32> -> vector<4x16x16xf32>
    %49 = tpu.transpose %48, [2, 0, 1] : vector<4x16x16xf32> -> vector<16x4x16xf32>
    "tpu.trace_stop"() : () -> ()
    %50 = vector.shape_cast %49 : vector<16x4x16xf32> to vector<16x64xf32>
    %51 = arith.truncf %50 : vector<16x64xf32> to vector<16x64xbf16>
    %cst_38 = arith.constant dense<0.000000e+00> : vector<16x64xf32>
    %52 = tpu.matmul %51, %8, %cst_38 {dimension_numbers = #tpu.dot_dimension_numbers<[1], [0], [0], [1], [0, 0, 1, 1], [], []>} : vector<16x64xbf16>, vector<64x64xbf16>, vector<16x64xf32> -> vector<16x64xf32>
    %53 = vector.broadcast %13 : vector<1x64xf32> to vector<16x64xf32>
    %54 = arith.addf %52, %53 : vector<16x64xf32>
    %55 = arith.addf %3, %54 : vector<16x64xf32>
    %cst_39 = arith.constant dense<0.000000e+00> : vector<16xf32>
    %56 = vector.multi_reduction <add>, %55, %cst_39 [1] : vector<16x64xf32> to vector<16xf32>
    %57 = vector.shape_cast %56 : vector<16xf32> to vector<16x1xf32>
    %cst_40 = arith.constant 6.400000e+01 : f32
    %58 = vector.broadcast %cst_40 : f32 to vector<16x1xf32>
    %59 = arith.divf %57, %58 : vector<16x1xf32>
    %60 = vector.broadcast %59 : vector<16x1xf32> to vector<16x64xf32>
    %61 = arith.subf %55, %60 : vector<16x64xf32>
    %62 = arith.mulf %61, %61 : vector<16x64xf32>
    %cst_41 = arith.constant dense<0.000000e+00> : vector<16xf32>
    %63 = vector.multi_reduction <add>, %62, %cst_41 [1] : vector<16x64xf32> to vector<16xf32>
    %64 = vector.shape_cast %63 : vector<16xf32> to vector<16x1xf32>
    %cst_42 = arith.constant 6.400000e+01 : f32
    %65 = vector.broadcast %cst_42 : f32 to vector<16x1xf32>
    %66 = arith.divf %64, %65 : vector<16x1xf32>
    %67 = vector.broadcast %59 : vector<16x1xf32> to vector<16x64xf32>
    %68 = arith.subf %55, %67 : vector<16x64xf32>
    %cst_43 = arith.constant 9.99999974E-6 : f32
    %69 = vector.broadcast %cst_43 : f32 to vector<16x1xf32>
    %70 = arith.addf %66, %69 : vector<16x1xf32>
    %71 = math.rsqrt %70 : vector<16x1xf32>
    %72 = vector.broadcast %71 : vector<16x1xf32> to vector<16x64xf32>
    %73 = arith.mulf %68, %72 : vector<16x64xf32>
    %74 = vector.broadcast %16 : vector<1x64xf32> to vector<16x64xf32>
    %75 = arith.mulf %73, %74 : vector<16x64xf32>
    %76 = vector.broadcast %17 : vector<1x64xf32> to vector<16x64xf32>
    %77 = arith.addf %75, %76 : vector<16x64xf32>
    %78 = arith.truncf %77 : vector<16x64xf32> to vector<16x64xbf16>
    %cst_44 = arith.constant dense<0.000000e+00> : vector<16x128xf32>
    %79 = tpu.matmul %78, %9, %cst_44 {dimension_numbers = #tpu.dot_dimension_numbers<[1], [0], [0], [1], [0, 0, 1, 1], [], []>} : vector<16x64xbf16>, vector<64x128xbf16>, vector<16x128xf32> -> vector<16x128xf32>
    %80 = vector.broadcast %14 : vector<1x128xf32> to vector<16x128xf32>
    %81 = arith.addf %79, %80 : vector<16x128xf32>
    %cst_45 = arith.constant 0.000000e+00 : f32
    %82 = vector.broadcast %cst_45 : f32 to vector<16x128xf32>
    %83 = arith.maximumf %81, %82 : vector<16x128xf32>
    %84 = arith.truncf %83 : vector<16x128xf32> to vector<16x128xbf16>
    %cst_46 = arith.constant dense<0.000000e+00> : vector<16x64xf32>
    %85 = tpu.matmul %84, %10, %cst_46 {dimension_numbers = #tpu.dot_dimension_numbers<[1], [0], [0], [1], [0, 0, 1, 1], [], []>} : vector<16x128xbf16>, vector<128x64xbf16>, vector<16x64xf32> -> vector<16x64xf32>
    %86 = vector.broadcast %15 : vector<1x64xf32> to vector<16x64xf32>
    %87 = arith.addf %85, %86 : vector<16x64xf32>
    %88 = arith.addf %77, %87 : vector<16x64xf32>
    %cst_47 = arith.constant dense<0.000000e+00> : vector<16xf32>
    %89 = vector.multi_reduction <add>, %88, %cst_47 [1] : vector<16x64xf32> to vector<16xf32>
    %90 = vector.shape_cast %89 : vector<16xf32> to vector<16x1xf32>
    %cst_48 = arith.constant 6.400000e+01 : f32
    %91 = vector.broadcast %cst_48 : f32 to vector<16x1xf32>
    %92 = arith.divf %90, %91 : vector<16x1xf32>
    %93 = vector.broadcast %92 : vector<16x1xf32> to vector<16x64xf32>
    %94 = arith.subf %88, %93 : vector<16x64xf32>
    %95 = arith.mulf %94, %94 : vector<16x64xf32>
    %cst_49 = arith.constant dense<0.000000e+00> : vector<16xf32>
    %96 = vector.multi_reduction <add>, %95, %cst_49 [1] : vector<16x64xf32> to vector<16xf32>
    %97 = vector.shape_cast %96 : vector<16xf32> to vector<16x1xf32>
    %cst_50 = arith.constant 6.400000e+01 : f32
    %98 = vector.broadcast %cst_50 : f32 to vector<16x1xf32>
    %99 = arith.divf %97, %98 : vector<16x1xf32>
    %100 = vector.broadcast %92 : vector<16x1xf32> to vector<16x64xf32>
    %101 = arith.subf %88, %100 : vector<16x64xf32>
    %cst_51 = arith.constant 9.99999974E-6 : f32
    %102 = vector.broadcast %cst_51 : f32 to vector<16x1xf32>
    %103 = arith.addf %99, %102 : vector<16x1xf32>
    %104 = math.rsqrt %103 : vector<16x1xf32>
    %105 = vector.broadcast %104 : vector<16x1xf32> to vector<16x64xf32>
    %106 = arith.mulf %101, %105 : vector<16x64xf32>
    %107 = vector.broadcast %18 : vector<1x64xf32> to vector<16x64xf32>
    %108 = arith.mulf %106, %107 : vector<16x64xf32>
    %109 = vector.broadcast %19 : vector<1x64xf32> to vector<16x64xf32>
    %110 = arith.addf %108, %109 : vector<16x64xf32>
    %c0_52 = arith.constant 0 : index
    %c0_53 = arith.constant 0 : index
    %111 = vector.load %arg21[%c0_52, %c0_53] : memref<16x64xf32, #tpu.memory_space<vmem>>, vector<16x64xf32>
    tpu.vector_store %arg21[%c0_52, %c0_53], %110 {strides = array<i32>} : memref<16x64xf32, #tpu.memory_space<vmem>>, vector<16x64xf32>,
    %c1_i32 = arith.constant 1 : i32
    %112 = arith.cmpi eq, %arg1, %c1_i32 : i32
    %113 = arith.extui %112 : i1 to i32
    %c0_i32_54 = arith.constant 0 : i32
    %114 = arith.cmpi ne, %113, %c0_i32_54 : i32
    scf.if %114 {
      %c0_55 = arith.constant 0 : index
      %c0_56 = arith.constant 0 : index
      %115 = vector.load %arg18[%c0_55, %c0_56] : memref<1x64xf32, #tpu.memory_space<vmem>>, vector<1x64xf32>
      %c0_57 = arith.constant 0 : index
      %c0_58 = arith.constant 0 : index
      %116 = vector.load %arg19[%c0_57, %c0_58] : memref<1x64xf32, #tpu.memory_space<vmem>>, vector<1x64xf32>
      %cst_59 = arith.constant dense<0.000000e+00> : vector<16xf32>
      %117 = vector.multi_reduction <add>, %110, %cst_59 [1] : vector<16x64xf32> to vector<16xf32>
      %118 = vector.shape_cast %117 : vector<16xf32> to vector<16x1xf32>
      %cst_60 = arith.constant 6.400000e+01 : f32
      %119 = vector.broadcast %cst_60 : f32 to vector<16x1xf32>
      %120 = arith.divf %118, %119 : vector<16x1xf32>
      %121 = vector.broadcast %120 : vector<16x1xf32> to vector<16x64xf32>
      %122 = arith.subf %110, %121 : vector<16x64xf32>
      %123 = arith.mulf %122, %122 : vector<16x64xf32>
      %cst_61 = arith.constant dense<0.000000e+00> : vector<16xf32>
      %124 = vector.multi_reduction <add>, %123, %cst_61 [1] : vector<16x64xf32> to vector<16xf32>
      %125 = vector.shape_cast %124 : vector<16xf32> to vector<16x1xf32>
      %cst_62 = arith.constant 6.400000e+01 : f32
      %126 = vector.broadcast %cst_62 : f32 to vector<16x1xf32>
      %127 = arith.divf %125, %126 : vector<16x1xf32>
      %128 = vector.broadcast %120 : vector<16x1xf32> to vector<16x64xf32>
      %129 = arith.subf %110, %128 : vector<16x64xf32>
      %cst_63 = arith.constant 9.99999974E-6 : f32
      %130 = vector.broadcast %cst_63 : f32 to vector<16x1xf32>
      %131 = arith.addf %127, %130 : vector<16x1xf32>
      %132 = math.rsqrt %131 : vector<16x1xf32>
      %133 = vector.broadcast %132 : vector<16x1xf32> to vector<16x64xf32>
      %134 = arith.mulf %129, %133 : vector<16x64xf32>
      %135 = vector.broadcast %115 : vector<1x64xf32> to vector<16x64xf32>
      %136 = arith.mulf %134, %135 : vector<16x64xf32>
      %137 = vector.broadcast %116 : vector<1x64xf32> to vector<16x64xf32>
      %138 = arith.addf %136, %137 : vector<16x64xf32>
      %c0_64 = arith.constant 0 : index
      %c0_65 = arith.constant 0 : index
      %c0_66 = arith.constant 0 : index
      %139 = vector.load %arg20[%c0_64, %c0_65, %c0_66] : memref<1x16x64xf32, #tpu.memory_space<vmem>>, vector<1x16x64xf32>
      %140 = vector.shape_cast %139 : vector<1x16x64xf32> to vector<16x64xf32>
      %141 = vector.shape_cast %138 : vector<16x64xf32> to vector<1x16x64xf32>
      tpu.vector_store %arg20[%c0_64, %c0_65, %c0_66], %141 {strides = array<i32>} : memref<1x16x64xf32, #tpu.memory_space<vmem>>, vector<1x16x64xf32>,
    } else {
    }
    return
  }
  func.func @transform_0(%arg0: i32, %arg1: i32) -> (i32, i32, i32) {
    %c0_i32 = arith.constant 0 : i32
    %c0_i32_0 = arith.constant 0 : i32
    %c0_i32_1 = arith.constant 0 : i32
    return %arg0, %c0_i32, %c0_i32_0 : i32, i32, i32
  }
  func.func @transform_1(%arg0: i32, %arg1: i32) -> (i32, i32, i32) {
    %c0_i32 = arith.constant 0 : i32
    %c0_i32_0 = arith.constant 0 : i32
    %c0_i32_1 = arith.constant 0 : i32
    return %arg0, %c0_i32, %c0_i32_0 : i32, i32, i32
  }
  func.func @transform_2(%arg0: i32, %arg1: i32) -> (i32, i32) {
    %c0_i32 = arith.constant 0 : i32
    %c0_i32_0 = arith.constant 0 : i32
    %c0_i32_1 = arith.constant 0 : i32
    return %c0_i32, %c0_i32_0 : i32, i32
  }
  func.func @transform_3(%arg0: i32, %arg1: i32) -> (i32, i32) {
    %c0_i32 = arith.constant 0 : i32
    %c0_i32_0 = arith.constant 0 : i32
    %c0_i32_1 = arith.constant 0 : i32
    return %c0_i32, %c0_i32_0 : i32, i32
  }
  func.func @transform_4(%arg0: i32, %arg1: i32) -> (i32, i32) {
    %c0_i32 = arith.constant 0 : i32
    %c0_i32_0 = arith.constant 0 : i32
    %c0_i32_1 = arith.constant 0 : i32
    return %c0_i32, %c0_i32_0 : i32, i32
  }
  func.func @transform_5(%arg0: i32, %arg1: i32) -> (i32, i32) {
    %c0_i32 = arith.constant 0 : i32
    %c0_i32_0 = arith.constant 0 : i32
    %c0_i32_1 = arith.constant 0 : i32
    return %c0_i32, %c0_i32_0 : i32, i32
  }
  func.func @transform_6(%arg0: i32, %arg1: i32) -> (i32, i32) {
    %c0_i32 = arith.constant 0 : i32
    %c0_i32_0 = arith.constant 0 : i32
    %c0_i32_1 = arith.constant 0 : i32
    return %c0_i32, %c0_i32_0 : i32, i32
  }
  func.func @transform_7(%arg0: i32, %arg1: i32) -> (i32, i32) {
    %c0_i32 = arith.constant 0 : i32
    %c0_i32_0 = arith.constant 0 : i32
    %c0_i32_1 = arith.constant 0 : i32
    return %c0_i32, %c0_i32_0 : i32, i32
  }
  func.func @transform_8(%arg0: i32, %arg1: i32) -> (i32, i32) {
    %c0_i32 = arith.constant 0 : i32
    %c0_i32_0 = arith.constant 0 : i32
    %c0_i32_1 = arith.constant 0 : i32
    return %c0_i32, %c0_i32_0 : i32, i32
  }
  func.func @transform_9(%arg0: i32, %arg1: i32) -> (i32, i32) {
    %c0_i32 = arith.constant 0 : i32
    %c0_i32_0 = arith.constant 0 : i32
    %c0_i32_1 = arith.constant 0 : i32
    return %c0_i32, %c0_i32_0 : i32, i32
  }
  func.func @transform_10(%arg0: i32, %arg1: i32) -> (i32, i32) {
    %c0_i32 = arith.constant 0 : i32
    %c0_i32_0 = arith.constant 0 : i32
    %c0_i32_1 = arith.constant 0 : i32
    return %c0_i32, %c0_i32_0 : i32, i32
  }
  func.func @transform_11(%arg0: i32, %arg1: i32) -> (i32, i32) {
    %c0_i32 = arith.constant 0 : i32
    %c0_i32_0 = arith.constant 0 : i32
    %c0_i32_1 = arith.constant 0 : i32
    return %c0_i32, %c0_i32_0 : i32, i32
  }
  func.func @transform_12(%arg0: i32, %arg1: i32) -> (i32, i32) {
    %c0_i32 = arith.constant 0 : i32
    %c0_i32_0 = arith.constant 0 : i32
    %c0_i32_1 = arith.constant 0 : i32
    return %c0_i32, %c0_i32_0 : i32, i32
  }
  func.func @transform_13(%arg0: i32, %arg1: i32) -> (i32, i32) {
    %c0_i32 = arith.constant 0 : i32
    %c0_i32_0 = arith.constant 0 : i32
    %c0_i32_1 = arith.constant 0 : i32
    return %c0_i32, %c0_i32_0 : i32, i32
  }
  func.func @transform_14(%arg0: i32, %arg1: i32) -> (i32, i32) {
    %c0_i32 = arith.constant 0 : i32
    %c0_i32_0 = arith.constant 0 : i32
    %c0_i32_1 = arith.constant 0 : i32
    return %c0_i32, %c0_i32_0 : i32, i32
  }
  func.func @transform_15(%arg0: i32, %arg1: i32) -> (i32, i32) {
    %c0_i32 = arith.constant 0 : i32
    %c0_i32_0 = arith.constant 0 : i32
    %c0_i32_1 = arith.constant 0 : i32
    return %c0_i32, %c0_i32_0 : i32, i32
  }
  func.func @transform_16(%arg0: i32, %arg1: i32) -> (i32, i32) {
    %c0_i32 = arith.constant 0 : i32
    %c0_i32_0 = arith.constant 0 : i32
    %c0_i32_1 = arith.constant 0 : i32
    return %c0_i32, %c0_i32_0 : i32, i32
  }
  func.func @transform_17(%arg0: i32, %arg1: i32) -> (i32, i32) {
    %c0_i32 = arith.constant 0 : i32
    %c0_i32_0 = arith.constant 0 : i32
    %c0_i32_1 = arith.constant 0 : i32
    return %c0_i32, %c0_i32_0 : i32, i32
  }
  func.func @transform_18(%arg0: i32, %arg1: i32) -> (i32, i32, i32) {
    %c0_i32 = arith.constant 0 : i32
    %c0_i32_0 = arith.constant 0 : i32
    %c0_i32_1 = arith.constant 0 : i32
    return %arg0, %c0_i32, %c0_i32_0 : i32, i32, i32
  }
}

</mosaic_0001>

<llo_original>
// kernel: tpu_custom_call.1
$region0: #{tpu_custom_call.1}
  #allocation0 [shape = 'u32[]', space=smem, size = 0x4, offset = 0x4, fixed_abs, tag = 'smem constant byte address 0x4 - core index']
  #allocation1 [shape = 'u32[72,128]{1,0:T(1,128)}', space=vmem, size = 0x9000, scoped, tag = 'internal scratch']
  #allocation2 [shape = 'f32[16,64]{1,0:T(8,128)}', space=vmem, size = 0x2000, scoped, tag = 'scratch operand']
  %s0 = inlined_call_operand.vmem [shape: f32[2,16,64], index: 0, kind: input, shape index: {}]
  %s1 = inlined_call_operand.vmem [shape: f32[2,16,64], index: 1, kind: input, shape index: {}]
  %s2 = inlined_call_operand.vmem [shape: bf16[64,128], index: 2, kind: input, shape index: {}]
  %s3 = inlined_call_operand.vmem [shape: f32[1,128], index: 3, kind: input, shape index: {}]
  %s4 = inlined_call_operand.hbm [shape: bf16[64,64], index: 4, kind: input, shape index: {}]
  %s5 = inlined_call_operand.vmem [shape: f32[1,64], index: 5, kind: input, shape index: {}]
  %s6 = inlined_call_operand.hbm [shape: bf16[64,64], index: 6, kind: input, shape index: {}]
  %s7 = inlined_call_operand.vmem [shape: f32[1,64], index: 7, kind: input, shape index: {}]
  %s8 = inlined_call_operand.vmem [shape: f32[1,64], index: 8, kind: input, shape index: {}]
  %s9 = inlined_call_operand.vmem [shape: f32[1,64], index: 9, kind: input, shape index: {}]
  %s10 = inlined_call_operand.hbm [shape: bf16[64,128], index: 10, kind: input, shape index: {}]
  %s11 = inlined_call_operand.vmem [shape: f32[1,128], index: 11, kind: input, shape index: {}]
  %s12 = inlined_call_operand.vmem [shape: bf16[128,64], index: 12, kind: input, shape index: {}]
  %s13 = inlined_call_operand.vmem [shape: f32[1,64], index: 13, kind: input, shape index: {}]
  %s14 = inlined_call_operand.vmem [shape: f32[1,64], index: 14, kind: input, shape index: {}]
  %s15 = inlined_call_operand.vmem [shape: f32[1,64], index: 15, kind: input, shape index: {}]
  %s16 = inlined_call_operand.vmem [shape: f32[1,64], index: 16, kind: input, shape index: {}]
  %s17 = inlined_call_operand.vmem [shape: f32[1,64], index: 17, kind: input, shape index: {}]
  %s18 = inlined_call_operand.hbm [shape: f32[2,16,64], index: 18, kind: output, shape index: {}]
  %s19 = sld [smem:[#allocation0]]
  $region125: #{tpu_custom_call.1} parent=0
    _
  %s21 = ssub.s32 1, %s19
  %s22 = scalar_select 0, %s21, %s19
  $region1: #{tpu_custom_call.1} parent=0
    #allocation3 [shape = 'u8[16384]{0}', space=vmem, size = 0x4000, scoped, tag = 'input window, operand 4, single buffered']
    #allocation4 [shape = 's32[2]{0}', space=sflag, size = 0x8, scoped, tag = 'scoped memory for tpu_custom_call.1']
    #allocation5 [shape = 's32[2]{0}', space=sflag, size = 0x8, scoped, tag = 'scoped memory for tpu_custom_call.1']
    #allocation6 [shape = 'u8[16384]{0}', space=vmem, size = 0x4000, scoped, tag = 'input window, operand 6, single buffered']
    #allocation7 [shape = 's32[1]{0}', space=sflag, size = 0x4, scoped, tag = 'scoped memory for tpu_custom_call.1']
    #allocation8 [shape = 'u8[16384]{0}', space=vmem, size = 0x4000, scoped, tag = 'input window, operand 10, single buffered']
    #allocation9 [shape = 'u8[16384]{0}', space=vmem, size = 0x4000, scoped, tag = 'output window, operand 0']
    %23 = vsyncpa [#allocation4], 0
    %24 = vsyncpa [#allocation7], 0
    %25 = vsyncpa [#allocation5], 0
    %s26 = scalar_lea.sflag [#allocation5], 1
    %27 = vsyncpa %s26, 0
    loop: start=0, step=1, limit=6
    $region2: #{tpu_custom_call.1} parent=1 // loop_pre_header
      _
    $region3: #{tpu_custom_call.1} parent=1 // loop_header
      %s29 = sphi 0, %s33
      %p30 = scmp.ge.s32.totalorder %s29, 6
      %s36 = sphi 0, %s48
      %s37 = sphi 0, %s44
      %s38 = sphi 0, %s36
      %s39 = sphi 0, %s37
      %s40 = sphi 0, %s38
      %s41 = sphi 0, %s39
      %s51 = sphi 0, %s53
      %s54 = sphi 0, %s51
      %s55 = sphi 0, %s54
      %s71 = sphi 0, %s55
      %s77 = sphi 0, %s79
      %s80 = sphi 0, %s77
      %s81 = sphi 0, %s80
      %s97 = sphi 0, %s81
      %s101 = sphi 0, %s101
      %s103 = sphi 0, %s101
      %s104 = sphi 0, %s103
      %s118 = sphi 0, %s104
      %s122 = sphi 0, %s122
      %s124 = sphi 0, %s122
      %s125 = sphi 0, %s124
      %s139 = sphi 0, %s125
      %s143 = sphi 0, %s143
      %s145 = sphi 0, %s143
      %s146 = sphi 0, %s145
      %s160 = sphi 0, %s146
      %s164 = sphi 0, %s164
      %s166 = sphi 0, %s164
      %s167 = sphi 0, %s166
      %s181 = sphi 0, %s167
      %s185 = sphi 0, %s185
      %s187 = sphi 0, %s185
      %s188 = sphi 0, %s187
      %s202 = sphi 0, %s188
      %s206 = sphi 0, %s206
      %s208 = sphi 0, %s206
      %s209 = sphi 0, %s208
      %s223 = sphi 0, %s209
      %s227 = sphi 0, %s227
      %s229 = sphi 0, %s227
      %s230 = sphi 0, %s229
      %s244 = sphi 0, %s230
      %s248 = sphi 0, %s248
      %s250 = sphi 0, %s248
      %s251 = sphi 0, %s250
      %s265 = sphi 0, %s251
      %s269 = sphi 0, %s269
      %s271 = sphi 0, %s269
      %s272 = sphi 0, %s271
      %s286 = sphi 0, %s272
      %s290 = sphi 0, %s290
      %s292 = sphi 0, %s290
      %s293 = sphi 0, %s292
      %s307 = sphi 0, %s293
      %s311 = sphi 0, %s311
      %s313 = sphi 0, %s311
      %s314 = sphi 0, %s313
      %s328 = sphi 0, %s314
      %s332 = sphi 0, %s332
      %s334 = sphi 0, %s332
      %s335 = sphi 0, %s334
      %s349 = sphi 0, %s335
      %s353 = sphi 0, %s353
      %s355 = sphi 0, %s353
      %s356 = sphi 0, %s355
      %s370 = sphi 0, %s356
      %s374 = sphi 0, %s374
      %s376 = sphi 0, %s374
      %s377 = sphi 0, %s376
      %s391 = sphi 0, %s377
      %s395 = sphi 0, %s395
      %s397 = sphi 0, %s395
      %s398 = sphi 0, %s397
      %s412 = sphi 0, %s398
      %s416 = sphi 0, %s416
      %s418 = sphi 0, %s416
      %s419 = sphi 0, %s418
      %s433 = sphi 0, %s419
      %s439 = sphi 0, %s441
      %s442 = sphi 0, %s439
      %s443 = sphi 0, %s442
      %s459 = sphi 0, %s443
    $region4: #{tpu_custom_call.1} parent=1 // loop_header_branch
      %32 = sbr.rel (%p30) target = $region8
    $region5: #{tpu_custom_call.1} parent=1 // loop_body
      %s34 = ssub.s32 %s29, 1
      %s35 = ssub.s32 %s29, 2
      %s42 = sadd.s32 1, %s37
      %p43 = scmp.ge.s32.totalorder %s42, 2
      %s44 = scalar_select %p43, 0, %s42
      %s45 = sadd.s32 1, %s36
      %s46 = scalar_select %p43, %s45, %s36
      %p47 = scmp.ge.s32.totalorder %s46, 2
      %s48 = scalar_select %p47, 0, %s46
      %s49 = ssub.s32 %s36, %s48
      %p50 = scmp.eq.s32.totalorder %s49, 0
      %s52 = sadd.s32 %s51, 1
      %s53 = scalar_select %p50, %s51, %s52
      %p56 = pneg %p50
      %p57 = scmp.eq.s32.totalorder %s29, 3
      %p58 = por %p56, %p57
      %p59 = scmp.ne.s32.totalorder %s51, %s54
      %p60 = scmp.eq.s32.totalorder %s29, 0
      %p61 = por %p59, %p60
      %p62 = scmp.ne.s32.totalorder %s51, %s54
      %p63 = scmp.eq.s32.totalorder %s34, 3
      %p64 = por %p62, %p63
      %p65 = scmp.ne.s32.totalorder %s54, %s55
      %p66 = scmp.eq.s32.totalorder %s34, 0
      %p67 = por %p65, %p66
      %p68 = scmp.ne.s32.totalorder %s54, %s55
      %p69 = scmp.eq.s32.totalorder %s35, 3
      %p70 = por %p68, %p69
      %p72 = scmp.ne.s32.totalorder %s55, %s71
      %p73 = scmp.eq.s32.totalorder %s35, 0
      %p74 = por %p72, %p73
      %s75 = ssub.s32 %s36, %s48
      %p76 = scmp.eq.s32.totalorder %s75, 0
      %s78 = sadd.s32 %s77, 1
      %s79 = scalar_select %p76, %s77, %s78
      %p82 = pneg %p76
      %p83 = scmp.eq.s32.totalorder %s29, 3
      %p84 = por %p82, %p83
      %p85 = scmp.ne.s32.totalorder %s77, %s80
      %p86 = scmp.eq.s32.totalorder %s29, 0
      %p87 = por %p85, %p86
      %p88 = scmp.ne.s32.totalorder %s77, %s80
      %p89 = scmp.eq.s32.totalorder %s34, 3
      %p90 = por %p88, %p89
      %p91 = scmp.ne.s32.totalorder %s80, %s81
      %p92 = scmp.eq.s32.totalorder %s34, 0
      %p93 = por %p91, %p92
      %p94 = scmp.ne.s32.totalorder %s80, %s81
      %p95 = scmp.eq.s32.totalorder %s35, 3
      %p96 = por %p94, %p95
      %p98 = scmp.ne.s32.totalorder %s81, %s97
      %p99 = scmp.eq.s32.totalorder %s35, 0
      %p100 = por %p98, %p99
      %s102 = sadd.s32 %s101, 1
      %p105 = scmp.eq.s32.totalorder %s29, 3
      %p106 = scmp.ne.s32.totalorder %s101, %s103
      %p107 = scmp.eq.s32.totalorder %s29, 0
      %p108 = por %p106, %p107
      %p109 = scmp.ne.s32.totalorder %s101, %s103
      %p110 = scmp.eq.s32.totalorder %s34, 3
      %p111 = por %p109, %p110
      %p112 = scmp.ne.s32.totalorder %s103, %s104
      %p113 = scmp.eq.s32.totalorder %s34, 0
      %p114 = por %p112, %p113
      %p115 = scmp.ne.s32.totalorder %s103, %s104
      %p116 = scmp.eq.s32.totalorder %s35, 3
      %p117 = por %p115, %p116
      %p119 = scmp.ne.s32.totalorder %s104, %s118
      %p120 = scmp.eq.s32.totalorder %s35, 0
      %p121 = por %p119, %p120
      %s123 = sadd.s32 %s122, 1
      %p126 = scmp.eq.s32.totalorder %s29, 3
      %p127 = scmp.ne.s32.totalorder %s122, %s124
      %p128 = scmp.eq.s32.totalorder %s29, 0
      %p129 = por %p127, %p128
      %p130 = scmp.ne.s32.totalorder %s122, %s124
      %p131 = scmp.eq.s32.totalorder %s34, 3
      %p132 = por %p130, %p131
      %p133 = scmp.ne.s32.totalorder %s124, %s125
      %p134 = scmp.eq.s32.totalorder %s34, 0
      %p135 = por %p133, %p134
      %p136 = scmp.ne.s32.totalorder %s124, %s125
      %p137 = scmp.eq.s32.totalorder %s35, 3
      %p138 = por %p136, %p137
      %p140 = scmp.ne.s32.totalorder %s125, %s139
      %p141 = scmp.eq.s32.totalorder %s35, 0
      %p142 = por %p140, %p141
      %s144 = sadd.s32 %s143, 1
      %p147 = scmp.eq.s32.totalorder %s29, 3
      %p148 = scmp.ne.s32.totalorder %s143, %s145
      %p149 = scmp.eq.s32.totalorder %s29, 0
      %p150 = por %p148, %p149
      %p151 = scmp.ne.s32.totalorder %s143, %s145
      %p152 = scmp.eq.s32.totalorder %s34, 3
      %p153 = por %p151, %p152
      %p154 = scmp.ne.s32.totalorder %s145, %s146
      %p155 = scmp.eq.s32.totalorder %s34, 0
      %p156 = por %p154, %p155
      %p157 = scmp.ne.s32.totalorder %s145, %s146
      %p158 = scmp.eq.s32.totalorder %s35, 3
      %p159 = por %p157, %p158
      %p161 = scmp.ne.s32.totalorder %s146, %s160
      %p162 = scmp.eq.s32.totalorder %s35, 0
      %p163 = por %p161, %p162
      %s165 = sadd.s32 %s164, 1
      %p168 = scmp.eq.s32.totalorder %s29, 3
      %p169 = scmp.ne.s32.totalorder %s164, %s166
      %p170 = scmp.eq.s32.totalorder %s29, 0
      %p171 = por %p169, %p170
      %p172 = scmp.ne.s32.totalorder %s164, %s166
      %p173 = scmp.eq.s32.totalorder %s34, 3
      %p174 = por %p172, %p173
      %p175 = scmp.ne.s32.totalorder %s166, %s167
      %p176 = scmp.eq.s32.totalorder %s34, 0
      %p177 = por %p175, %p176
      %p178 = scmp.ne.s32.totalorder %s166, %s167
      %p179 = scmp.eq.s32.totalorder %s35, 3
      %p180 = por %p178, %p179
      %p182 = scmp.ne.s32.totalorder %s167, %s181
      %p183 = scmp.eq.s32.totalorder %s35, 0
      %p184 = por %p182, %p183
      %s186 = sadd.s32 %s185, 1
      %p189 = scmp.eq.s32.totalorder %s29, 3
      %p190 = scmp.ne.s32.totalorder %s185, %s187
      %p191 = scmp.eq.s32.totalorder %s29, 0
      %p192 = por %p190, %p191
      %p193 = scmp.ne.s32.totalorder %s185, %s187
      %p194 = scmp.eq.s32.totalorder %s34, 3
      %p195 = por %p193, %p194
      %p196 = scmp.ne.s32.totalorder %s187, %s188
      %p197 = scmp.eq.s32.totalorder %s34, 0
      %p198 = por %p196, %p197
      %p199 = scmp.ne.s32.totalorder %s187, %s188
      %p200 = scmp.eq.s32.totalorder %s35, 3
      %p201 = por %p199, %p200
      %p203 = scmp.ne.s32.totalorder %s188, %s202
      %p204 = scmp.eq.s32.totalorder %s35, 0
      %p205 = por %p203, %p204
      %s207 = sadd.s32 %s206, 1
      %p210 = scmp.eq.s32.totalorder %s29, 3
      %p211 = scmp.ne.s32.totalorder %s206, %s208
      %p212 = scmp.eq.s32.totalorder %s29, 0
      %p213 = por %p211, %p212
      %p214 = scmp.ne.s32.totalorder %s206, %s208
      %p215 = scmp.eq.s32.totalorder %s34, 3
      %p216 = por %p214, %p215
      %p217 = scmp.ne.s32.totalorder %s208, %s209
      %p218 = scmp.eq.s32.totalorder %s34, 0
      %p219 = por %p217, %p218
      %p220 = scmp.ne.s32.totalorder %s208, %s209
      %p221 = scmp.eq.s32.totalorder %s35, 3
      %p222 = por %p220, %p221
      %p224 = scmp.ne.s32.totalorder %s209, %s223
      %p225 = scmp.eq.s32.totalorder %s35, 0
      %p226 = por %p224, %p225
      %s228 = sadd.s32 %s227, 1
      %p231 = scmp.eq.s32.totalorder %s29, 3
      %p232 = scmp.ne.s32.totalorder %s227, %s229
      %p233 = scmp.eq.s32.totalorder %s29, 0
      %p234 = por %p232, %p233
      %p235 = scmp.ne.s32.totalorder %s227, %s229
      %p236 = scmp.eq.s32.totalorder %s34, 3
      %p237 = por %p235, %p236
      %p238 = scmp.ne.s32.totalorder %s229, %s230
      %p239 = scmp.eq.s32.totalorder %s34, 0
      %p240 = por %p238, %p239
      %p241 = scmp.ne.s32.totalorder %s229, %s230
      %p242 = scmp.eq.s32.totalorder %s35, 3
      %p243 = por %p241, %p242
      %p245 = scmp.ne.s32.totalorder %s230, %s244
      %p246 = scmp.eq.s32.totalorder %s35, 0
      %p247 = por %p245, %p246
      %s249 = sadd.s32 %s248, 1
      %p252 = scmp.eq.s32.totalorder %s29, 3
      %p253 = scmp.ne.s32.totalorder %s248, %s250
      %p254 = scmp.eq.s32.totalorder %s29, 0
      %p255 = por %p253, %p254
      %p256 = scmp.ne.s32.totalorder %s248, %s250
      %p257 = scmp.eq.s32.totalorder %s34, 3
      %p258 = por %p256, %p257
      %p259 = scmp.ne.s32.totalorder %s250, %s251
      %p260 = scmp.eq.s32.totalorder %s34, 0
      %p261 = por %p259, %p260
      %p262 = scmp.ne.s32.totalorder %s250, %s251
      %p263 = scmp.eq.s32.totalorder %s35, 3
      %p264 = por %p262, %p263
      %p266 = scmp.ne.s32.totalorder %s251, %s265
      %p267 = scmp.eq.s32.totalorder %s35, 0
      %p268 = por %p266, %p267
      %s270 = sadd.s32 %s269, 1
      %p273 = scmp.eq.s32.totalorder %s29, 3
      %p274 = scmp.ne.s32.totalorder %s269, %s271
      %p275 = scmp.eq.s32.totalorder %s29, 0
      %p276 = por %p274, %p275
      %p277 = scmp.ne.s32.totalorder %s269, %s271
      %p278 = scmp.eq.s32.totalorder %s34, 3
      %p279 = por %p277, %p278
      %p280 = scmp.ne.s32.totalorder %s271, %s272
      %p281 = scmp.eq.s32.totalorder %s34, 0
      %p282 = por %p280, %p281
      %p283 = scmp.ne.s32.totalorder %s271, %s272
      %p284 = scmp.eq.s32.totalorder %s35, 3
      %p285 = por %p283, %p284
      %p287 = scmp.ne.s32.totalorder %s272, %s286
      %p288 = scmp.eq.s32.totalorder %s35, 0
      %p289 = por %p287, %p288
      %s291 = sadd.s32 %s290, 1
      %p294 = scmp.eq.s32.totalorder %s29, 3
      %p295 = scmp.ne.s32.totalorder %s290, %s292
      %p296 = scmp.eq.s32.totalorder %s29, 0
      %p297 = por %p295, %p296
      %p298 = scmp.ne.s32.totalorder %s290, %s292
      %p299 = scmp.eq.s32.totalorder %s34, 3
      %p300 = por %p298, %p299
      %p301 = scmp.ne.s32.totalorder %s292, %s293
      %p302 = scmp.eq.s32.totalorder %s34, 0
      %p303 = por %p301, %p302
      %p304 = scmp.ne.s32.totalorder %s292, %s293
      %p305 = scmp.eq.s32.totalorder %s35, 3
      %p306 = por %p304, %p305
      %p308 = scmp.ne.s32.totalorder %s293, %s307
      %p309 = scmp.eq.s32.totalorder %s35, 0
      %p310 = por %p308, %p309
      %s312 = sadd.s32 %s311, 1
      %p315 = scmp.eq.s32.totalorder %s29, 3
      %p316 = scmp.ne.s32.totalorder %s311, %s313
      %p317 = scmp.eq.s32.totalorder %s29, 0
      %p318 = por %p316, %p317
      %p319 = scmp.ne.s32.totalorder %s311, %s313
      %p320 = scmp.eq.s32.totalorder %s34, 3
      %p321 = por %p319, %p320
      %p322 = scmp.ne.s32.totalorder %s313, %s314
      %p323 = scmp.eq.s32.totalorder %s34, 0
      %p324 = por %p322, %p323
      %p325 = scmp.ne.s32.totalorder %s313, %s314
      %p326 = scmp.eq.s32.totalorder %s35, 3
      %p327 = por %p325, %p326
      %p329 = scmp.ne.s32.totalorder %s314, %s328
      %p330 = scmp.eq.s32.totalorder %s35, 0
      %p331 = por %p329, %p330
      %s333 = sadd.s32 %s332, 1
      %p336 = scmp.eq.s32.totalorder %s29, 3
      %p337 = scmp.ne.s32.totalorder %s332, %s334
      %p338 = scmp.eq.s32.totalorder %s29, 0
      %p339 = por %p337, %p338
      %p340 = scmp.ne.s32.totalorder %s332, %s334
      %p341 = scmp.eq.s32.totalorder %s34, 3
      %p342 = por %p340, %p341
      %p343 = scmp.ne.s32.totalorder %s334, %s335
      %p344 = scmp.eq.s32.totalorder %s34, 0
      %p345 = por %p343, %p344
      %p346 = scmp.ne.s32.totalorder %s334, %s335
      %p347 = scmp.eq.s32.totalorder %s35, 3
      %p348 = por %p346, %p347
      %p350 = scmp.ne.s32.totalorder %s335, %s349
      %p351 = scmp.eq.s32.totalorder %s35, 0
      %p352 = por %p350, %p351
      %s354 = sadd.s32 %s353, 1
      %p357 = scmp.eq.s32.totalorder %s29, 3
      %p358 = scmp.ne.s32.totalorder %s353, %s355
      %p359 = scmp.eq.s32.totalorder %s29, 0
      %p360 = por %p358, %p359
      %p361 = scmp.ne.s32.totalorder %s353, %s355
      %p362 = scmp.eq.s32.totalorder %s34, 3
      %p363 = por %p361, %p362
      %p364 = scmp.ne.s32.totalorder %s355, %s356
      %p365 = scmp.eq.s32.totalorder %s34, 0
      %p366 = por %p364, %p365
      %p367 = scmp.ne.s32.totalorder %s355, %s356
      %p368 = scmp.eq.s32.totalorder %s35, 3
      %p369 = por %p367, %p368
      %p371 = scmp.ne.s32.totalorder %s356, %s370
      %p372 = scmp.eq.s32.totalorder %s35, 0
      %p373 = por %p371, %p372
      %s375 = sadd.s32 %s374, 1
      %p378 = scmp.eq.s32.totalorder %s29, 3
      %p379 = scmp.ne.s32.totalorder %s374, %s376
      %p380 = scmp.eq.s32.totalorder %s29, 0
      %p381 = por %p379, %p380
      %p382 = scmp.ne.s32.totalorder %s374, %s376
      %p383 = scmp.eq.s32.totalorder %s34, 3
      %p384 = por %p382, %p383
      %p385 = scmp.ne.s32.totalorder %s376, %s377
      %p386 = scmp.eq.s32.totalorder %s34, 0
      %p387 = por %p385, %p386
      %p388 = scmp.ne.s32.totalorder %s376, %s377
      %p389 = scmp.eq.s32.totalorder %s35, 3
      %p390 = por %p388, %p389
      %p392 = scmp.ne.s32.totalorder %s377, %s391
      %p393 = scmp.eq.s32.totalorder %s35, 0
      %p394 = por %p392, %p393
      %s396 = sadd.s32 %s395, 1
      %p399 = scmp.eq.s32.totalorder %s29, 3
      %p400 = scmp.ne.s32.totalorder %s395, %s397
      %p401 = scmp.eq.s32.totalorder %s29, 0
      %p402 = por %p400, %p401
      %p403 = scmp.ne.s32.totalorder %s395, %s397
      %p404 = scmp.eq.s32.totalorder %s34, 3
      %p405 = por %p403, %p404
      %p406 = scmp.ne.s32.totalorder %s397, %s398
      %p407 = scmp.eq.s32.totalorder %s34, 0
      %p408 = por %p406, %p407
      %p409 = scmp.ne.s32.totalorder %s397, %s398
      %p410 = scmp.eq.s32.totalorder %s35, 3
      %p411 = por %p409, %p410
      %p413 = scmp.ne.s32.totalorder %s398, %s412
      %p414 = scmp.eq.s32.totalorder %s35, 0
      %p415 = por %p413, %p414
      %s417 = sadd.s32 %s416, 1
      %p420 = scmp.eq.s32.totalorder %s29, 3
      %p421 = scmp.ne.s32.totalorder %s416, %s418
      %p422 = scmp.eq.s32.totalorder %s29, 0
      %p423 = por %p421, %p422
      %p424 = scmp.ne.s32.totalorder %s416, %s418
      %p425 = scmp.eq.s32.totalorder %s34, 3
      %p426 = por %p424, %p425
      %p427 = scmp.ne.s32.totalorder %s418, %s419
      %p428 = scmp.eq.s32.totalorder %s34, 0
      %p429 = por %p427, %p428
      %p430 = scmp.ne.s32.totalorder %s418, %s419
      %p431 = scmp.eq.s32.totalorder %s35, 3
      %p432 = por %p430, %p431
      %p434 = scmp.ne.s32.totalorder %s419, %s433
      %p435 = scmp.eq.s32.totalorder %s35, 0
      %p436 = por %p434, %p435
      %s437 = ssub.s32 %s36, %s48
      %p438 = scmp.eq.s32.totalorder %s437, 0
      %s440 = sadd.s32 %s439, 1
      %s441 = scalar_select %p438, %s439, %s440
      %p444 = pneg %p438
      %p445 = scmp.eq.s32.totalorder %s29, 3
      %p446 = por %p444, %p445
      %p447 = scmp.ne.s32.totalorder %s439, %s442
      %p448 = scmp.eq.s32.totalorder %s29, 0
      %p449 = por %p447, %p448
      %p450 = scmp.ne.s32.totalorder %s439, %s442
      %p451 = scmp.eq.s32.totalorder %s34, 3
      %p452 = por %p450, %p451
      %p453 = scmp.ne.s32.totalorder %s442, %s443
      %p454 = scmp.eq.s32.totalorder %s34, 0
      %p455 = por %p453, %p454
      %p456 = scmp.ne.s32.totalorder %s442, %s443
      %p457 = scmp.eq.s32.totalorder %s35, 3
      %p458 = por %p456, %p457
      %p460 = scmp.ne.s32.totalorder %s443, %s459
      %p461 = scmp.eq.s32.totalorder %s35, 0
      %p462 = por %p460, %p461
      %p463 = scmp.le.s32.totalorder 1, %s29
      %p464 = scmp.lt.s32.totalorder %s29, 5
      %p465 = pnand %p463, %p464
      %p466 = pneg %p465
      // Predicated region
      $region9: #{tpu_custom_call.1} parent=5 // pred_check
        _
      $region10: #{tpu_custom_call.1} parent=5 // pred_check_branch
        %468 = sbr.rel (%p465) target = $region12
      $region11: #{tpu_custom_call.1} parent=5 // pred_region
        %s469 = ssub.s32 %s29, 1
        // Predicated region
        $region13: #{tpu_custom_call.1} parent=11 // pred_check
          %p470 = pneg %p114
        $region14: #{tpu_custom_call.1} parent=11 // pred_check_branch
          %472 = sbr.rel (%p470) target = $region16
        $region15: #{tpu_custom_call.1} parent=11 // pred_region
          _
        $region16: #{tpu_custom_call.1} parent=11 // pred_fallthru
          _
        // Predicated region
        $region17: #{tpu_custom_call.1} parent=11 // pred_check
          %p473 = pneg %p135
        $region18: #{tpu_custom_call.1} parent=11 // pred_check_branch
          %475 = sbr.rel (%p473) target = $region20
        $region19: #{tpu_custom_call.1} parent=11 // pred_region
          _
        $region20: #{tpu_custom_call.1} parent=11 // pred_fallthru
          _
        // Predicated region
        $region21: #{tpu_custom_call.1} parent=11 // pred_check
          %p476 = pneg %p156
        $region22: #{tpu_custom_call.1} parent=11 // pred_check_branch
          %478 = sbr.rel (%p476) target = $region24
        $region23: #{tpu_custom_call.1} parent=11 // pred_region
          %480 = vsyncadd [#allocation4], 0
          %s481 = sshll.u32 %s4, 4
          %s482 = int_to_ptr.hbm [resolvable:$true] %s481
          %s483 = sshll.u32 [#allocation3], 4
          %s484 = int_to_ptr.vmem [resolvable:$true] %s483
          %489 = dma.hbm_to_vmem [thread:$0]  %s482, 512, %s484, [#allocation4], 64, 64, 4
        $region24: #{tpu_custom_call.1} parent=11 // pred_fallthru
          _
        // Predicated region
        $region25: #{tpu_custom_call.1} parent=11 // pred_check
          %p490 = pneg %p177
        $region26: #{tpu_custom_call.1} parent=11 // pred_check_branch
          %492 = sbr.rel (%p490) target = $region28
        $region27: #{tpu_custom_call.1} parent=11 // pred_region
          _
        $region28: #{tpu_custom_call.1} parent=11 // pred_fallthru
          _
        // Predicated region
        $region29: #{tpu_custom_call.1} parent=11 // pred_check
          %p493 = pneg %p198
        $region30: #{tpu_custom_call.1} parent=11 // pred_check_branch
          %495 = sbr.rel (%p493) target = $region32
        $region31: #{tpu_custom_call.1} parent=11 // pred_region
          %497 = vsyncadd [#allocation7], 0
          %s498 = sshll.u32 %s6, 4
          %s499 = int_to_ptr.hbm [resolvable:$true] %s498
          %s500 = sshll.u32 [#allocation6], 4
          %s501 = int_to_ptr.vmem [resolvable:$true] %s500
          %506 = dma.hbm_to_vmem [thread:$0]  %s499, 512, %s501, [#allocation7], 64, 64, 4
        $region32: #{tpu_custom_call.1} parent=11 // pred_fallthru
          _
        // Predicated region
        $region33: #{tpu_custom_call.1} parent=11 // pred_check
          %p507 = pneg %p219
        $region34: #{tpu_custom_call.1} parent=11 // pred_check_branch
          %509 = sbr.rel (%p507) target = $region36
        $region35: #{tpu_custom_call.1} parent=11 // pred_region
          _
        $region36: #{tpu_custom_call.1} parent=11 // pred_fallthru
          _
        // Predicated region
        $region37: #{tpu_custom_call.1} parent=11 // pred_check
          %p510 = pneg %p240
        $region38: #{tpu_custom_call.1} parent=11 // pred_check_branch
          %512 = sbr.rel (%p510) target = $region40
        $region39: #{tpu_custom_call.1} parent=11 // pred_region
          _
        $region40: #{tpu_custom_call.1} parent=11 // pred_fallthru
          _
        // Predicated region
        $region41: #{tpu_custom_call.1} parent=11 // pred_check
          %p513 = pneg %p261
        $region42: #{tpu_custom_call.1} parent=11 // pred_check_branch
          %515 = sbr.rel (%p513) target = $region44
        $region43: #{tpu_custom_call.1} parent=11 // pred_region
          _
        $region44: #{tpu_custom_call.1} parent=11 // pred_fallthru
          _
        // Predicated region
        $region45: #{tpu_custom_call.1} parent=11 // pred_check
          %p516 = pneg %p282
        $region46: #{tpu_custom_call.1} parent=11 // pred_check_branch
          %518 = sbr.rel (%p516) target = $region48
        $region47: #{tpu_custom_call.1} parent=11 // pred_region
          %520 = vsyncadd [#allocation7], 0
          %s521 = sshll.u32 %s10, 4
          %s522 = int_to_ptr.hbm [resolvable:$true] %s521
          %s523 = sshll.u32 [#allocation8], 4
          %s524 = int_to_ptr.vmem [resolvable:$true] %s523
          %529 = dma.hbm_to_vmem [thread:$0]  %s522, 512, %s524, [#allocation7], 64, 64, 4
        $region48: #{tpu_custom_call.1} parent=11 // pred_fallthru
          _
        // Predicated region
        $region49: #{tpu_custom_call.1} parent=11 // pred_check
          %p530 = pneg %p303
        $region50: #{tpu_custom_call.1} parent=11 // pred_check_branch
          %532 = sbr.rel (%p530) target = $region52
        $region51: #{tpu_custom_call.1} parent=11 // pred_region
          _
        $region52: #{tpu_custom_call.1} parent=11 // pred_fallthru
          _
        // Predicated region
        $region53: #{tpu_custom_call.1} parent=11 // pred_check
          %p533 = pneg %p324
        $region54: #{tpu_custom_call.1} parent=11 // pred_check_branch
          %535 = sbr.rel (%p533) target = $region56
        $region55: #{tpu_custom_call.1} parent=11 // pred_region
          _
        $region56: #{tpu_custom_call.1} parent=11 // pred_fallthru
          _
        // Predicated region
        $region57: #{tpu_custom_call.1} parent=11 // pred_check
          %p536 = pneg %p345
        $region58: #{tpu_custom_call.1} parent=11 // pred_check_branch
          %538 = sbr.rel (%p536) target = $region60
        $region59: #{tpu_custom_call.1} parent=11 // pred_region
          _
        $region60: #{tpu_custom_call.1} parent=11 // pred_fallthru
          _
        // Predicated region
        $region61: #{tpu_custom_call.1} parent=11 // pred_check
          %p539 = pneg %p366
        $region62: #{tpu_custom_call.1} parent=11 // pred_check_branch
          %541 = sbr.rel (%p539) target = $region64
        $region63: #{tpu_custom_call.1} parent=11 // pred_region
          _
        $region64: #{tpu_custom_call.1} parent=11 // pred_fallthru
          _
        // Predicated region
        $region65: #{tpu_custom_call.1} parent=11 // pred_check
          %p542 = pneg %p387
        $region66: #{tpu_custom_call.1} parent=11 // pred_check_branch
          %544 = sbr.rel (%p542) target = $region68
        $region67: #{tpu_custom_call.1} parent=11 // pred_region
          _
        $region68: #{tpu_custom_call.1} parent=11 // pred_fallthru
          _
        // Predicated region
        $region69: #{tpu_custom_call.1} parent=11 // pred_check
          %p545 = pneg %p408
        $region70: #{tpu_custom_call.1} parent=11 // pred_check_branch
          %547 = sbr.rel (%p545) target = $region72
        $region71: #{tpu_custom_call.1} parent=11 // pred_region
          _
        $region72: #{tpu_custom_call.1} parent=11 // pred_fallthru
          _
        // Predicated region
        $region73: #{tpu_custom_call.1} parent=11 // pred_check
          %p548 = pneg %p429
        $region74: #{tpu_custom_call.1} parent=11 // pred_check_branch
          %550 = sbr.rel (%p548) target = $region76
        $region75: #{tpu_custom_call.1} parent=11 // pred_region
          _
        $region76: #{tpu_custom_call.1} parent=11 // pred_fallthru
          _
      $region12: #{tpu_custom_call.1} parent=5 // pred_fallthru
        _
      %p551 = scmp.lt.s32.totalorder %s29, 4
      // Predicated region
      $region77: #{tpu_custom_call.1} parent=5 // pred_check
        %p552 = pneg %p551
      $region78: #{tpu_custom_call.1} parent=5 // pred_check_branch
        %554 = sbr.rel (%p552) target = $region80
      $region79: #{tpu_custom_call.1} parent=5 // pred_region
        // Predicated region
        $region81: #{tpu_custom_call.1} parent=79 // pred_check
          %p555 = pneg %p61
        $region82: #{tpu_custom_call.1} parent=79 // pred_check_branch
          %557 = sbr.rel (%p555) target = $region84
        $region83: #{tpu_custom_call.1} parent=79 // pred_region
          %p558 = scmp.lt.s32.totalorder %s36, 1
          %s559 = scalar_select %p558, %s36, 1
          %s560 = smul.addr %s559, 2
          %s561 = smul.addr %s560, 8
          %s562 = scalar_lea.vmem %s0, %s561
        $region84: #{tpu_custom_call.1} parent=79 // pred_fallthru
          _
        // Predicated region
        $region85: #{tpu_custom_call.1} parent=79 // pred_check
          %p563 = pneg %p87
        $region86: #{tpu_custom_call.1} parent=79 // pred_check_branch
          %565 = sbr.rel (%p563) target = $region88
        $region87: #{tpu_custom_call.1} parent=79 // pred_region
          %p566 = scmp.lt.s32.totalorder %s36, 1
          %s567 = scalar_select %p566, %s36, 1
          %s568 = smul.addr %s567, 2
          %s569 = smul.addr %s568, 8
          %s570 = scalar_lea.vmem %s1, %s569
        $region88: #{tpu_custom_call.1} parent=79 // pred_fallthru
          _
      $region80: #{tpu_custom_call.1} parent=5 // pred_fallthru
        _
      %p571 = scmp.le.s32.totalorder 1, %s29
      %p572 = scmp.lt.s32.totalorder %s29, 5
      %p573 = pnand %p571, %p572
      %p574 = pneg %p573
      // Predicated region
      $region89: #{tpu_custom_call.1} parent=5 // pred_check
        _
      $region90: #{tpu_custom_call.1} parent=5 // pred_check_branch
        %576 = sbr.rel (%p573) target = $region92
      $region91: #{tpu_custom_call.1} parent=5 // pred_region
        %s577 = ssub.s32 %s29, 1
        // Predicated region
        $region93: #{tpu_custom_call.1} parent=91 // pred_check
          %p578 = pneg %p156
        $region94: #{tpu_custom_call.1} parent=91 // pred_check_branch
          %580 = sbr.rel (%p578) target = $region96
        $region95: #{tpu_custom_call.1} parent=91 // pred_region
          %582 = dma.done [#allocation4], 512
        $region96: #{tpu_custom_call.1} parent=91 // pred_fallthru
          _
        // Predicated region
        $region97: #{tpu_custom_call.1} parent=91 // pred_check
          %p583 = pneg %p198
        $region98: #{tpu_custom_call.1} parent=91 // pred_check_branch
          %585 = sbr.rel (%p583) target = $region100
        $region99: #{tpu_custom_call.1} parent=91 // pred_region
          %587 = dma.done [#allocation7], 512
        $region100: #{tpu_custom_call.1} parent=91 // pred_fallthru
          _
        // Predicated region
        $region101: #{tpu_custom_call.1} parent=91 // pred_check
          %p588 = pneg %p282
        $region102: #{tpu_custom_call.1} parent=91 // pred_check_branch
          %590 = sbr.rel (%p588) target = $region104
        $region103: #{tpu_custom_call.1} parent=91 // pred_region
          %592 = dma.done [#allocation7], 512
        $region104: #{tpu_custom_call.1} parent=91 // pred_fallthru
          _
        %p593 = scmp.lt.s32.totalorder %s38, 1
        %s594 = scalar_select %p593, %s38, 1
        %s595 = smul.addr %s594, 2
        %s596 = smul.addr %s595, 8
        %s597 = scalar_lea.vmem %s0, %s596
        %p598 = pneg %p67
        %p599 = pneg %p64
        %p600 = scmp.lt.s32.totalorder %s38, 1
        %s601 = scalar_select %p600, %s38, 1
        %s602 = smul.addr %s601, 2
        %s603 = smul.addr %s602, 8
        %s604 = scalar_lea.vmem %s1, %s603
        %p605 = pneg %p93
        %p606 = pneg %p90
        %p607 = pneg %p114
        %p608 = pneg %p111
        %p609 = pneg %p135
        %p610 = pneg %p132
        %p611 = pneg %p156
        %p612 = pneg %p153
        %p613 = pneg %p177
        %p614 = pneg %p174
        %p615 = pneg %p198
        %p616 = pneg %p195
        %p617 = pneg %p219
        %p618 = pneg %p216
        %p619 = pneg %p240
        %p620 = pneg %p237
        %p621 = pneg %p261
        %p622 = pneg %p258
        %p623 = pneg %p282
        %p624 = pneg %p279
        %p625 = pneg %p303
        %p626 = pneg %p300
        %p627 = pneg %p324
        %p628 = pneg %p321
        %p629 = pneg %p345
        %p630 = pneg %p342
        %p631 = pneg %p366
        %p632 = pneg %p363
        %p633 = pneg %p387
        %p634 = pneg %p384
        %p635 = pneg %p408
        %p636 = pneg %p405
        %p637 = pneg %p429
        %p638 = pneg %p426
        %p639 = pneg %p455
        %p640 = pneg %p452
        %s641 = sand.u32 %s442, 1
        %s642 = scalar_lea.sflag [#allocation5], %s641
        %s643 = sand.u32 %s442, 1
        %s644 = smul.addr %s643, 16
        %s645 = scalar_lea.vmem [#allocation9], %s644
        %p646 = scmp.lt.s32.totalorder %s38, 1
        %s647 = scalar_select %p646, %s38, 1
        %s648 = smul.addr %s647, 2
        %s649 = smul.addr %s648, 8
        %s650 = scalar_lea.vmem %s0, %s649
        %p651 = scmp.lt.s32.totalorder %s38, 1
        %s652 = scalar_select %p651, %s38, 1
        %s653 = smul.addr %s652, 2
        %s654 = smul.addr %s653, 8
        %s655 = scalar_lea.vmem %s1, %s654
        %p657 = scmp.eq.s32.totalorder %s39, 0
        // Predicated region
        $region105: #{tpu_custom_call.1} parent=91 // pred_check
          %p658 = pneg %p657
        $region106: #{tpu_custom_call.1} parent=91 // pred_check_branch
          %660 = sbr.rel (%p658) target = $region108
        $region107: #{tpu_custom_call.1} parent=91 // pred_region
          %v661 = vld [vmem:[%s650] sm:$0xff]
          %v662 = vld [vmem:[%s650 + $0x8] sm:$0xff]
          %vm663 = vcmask 523264
          %664 = vst.msk [vmem:[#allocation2] sm:$0xff] %vm663, %v661
          %665 = vst.msk [vmem:[#allocation2 + $0x8] sm:$0xff] %vm663, %v662
        $region108: #{tpu_custom_call.1} parent=91 // pred_fallthru
          _
        %v666 = vld [vmem:[#allocation2] sm:$0xff]
        %v667 = vld [vmem:[#allocation2 + $0x8] sm:$0xff]
        %v668 = vld [vmem:[%s655] sm:$0xff]
        %v669 = vld [vmem:[%s655 + $0x8] sm:$0xff]
        %v670 = vld [vmem:[%s2] sm:$0xf]
        %v671 = vld [vmem:[%s2 + $0x4] sm:$0xf]
        %v672 = vld [vmem:[%s2 + $0x8] sm:$0xf]
        %v673 = vld [vmem:[%s2 + $0xc] sm:$0xf]
        %v674 = vld [vmem:[%s2 + $0x10] sm:$0xf]
        %v675 = vld [vmem:[%s2 + $0x14] sm:$0xf]
        %v676 = vld [vmem:[%s2 + $0x18] sm:$0xf]
        %v677 = vld [vmem:[%s2 + $0x1c] sm:$0xf]
        %v678 = vld [vmem:[#allocation3] sm:$0xf]
        %v679 = vld [vmem:[#allocation3 + $0x4] sm:$0xf]
        %v680 = vld [vmem:[#allocation3 + $0x8] sm:$0xf]
        %v681 = vld [vmem:[#allocation3 + $0xc] sm:$0xf]
        %v682 = vld [vmem:[#allocation3 + $0x10] sm:$0xf]
        %v683 = vld [vmem:[#allocation3 + $0x14] sm:$0xf]
        %v684 = vld [vmem:[#allocation3 + $0x18] sm:$0xf]
        %v685 = vld [vmem:[#allocation3 + $0x1c] sm:$0xf]
        %v686 = vld [vmem:[#allocation6] sm:$0xf]
        %v687 = vld [vmem:[#allocation6 + $0x4] sm:$0xf]
        %v688 = vld [vmem:[#allocation6 + $0x8] sm:$0xf]
        %v689 = vld [vmem:[#allocation6 + $0xc] sm:$0xf]
        %v690 = vld [vmem:[#allocation6 + $0x10] sm:$0xf]
        %v691 = vld [vmem:[#allocation6 + $0x14] sm:$0xf]
        %v692 = vld [vmem:[#allocation6 + $0x18] sm:$0xf]
        %v693 = vld [vmem:[#allocation6 + $0x1c] sm:$0xf]
        %v694 = vld [vmem:[#allocation8] sm:$0xf]
        %v695 = vld [vmem:[#allocation8 + $0x4] sm:$0xf]
        %v696 = vld [vmem:[#allocation8 + $0x8] sm:$0xf]
        %v697 = vld [vmem:[#allocation8 + $0xc] sm:$0xf]
        %v698 = vld [vmem:[#allocation8 + $0x10] sm:$0xf]
        %v699 = vld [vmem:[#allocation8 + $0x14] sm:$0xf]
        %v700 = vld [vmem:[#allocation8 + $0x18] sm:$0xf]
        %v701 = vld [vmem:[#allocation8 + $0x1c] sm:$0xf]
        %v702 = vld [vmem:[%s12] sm:$0xf]
        %v703 = vld [vmem:[%s12 + $0x4] sm:$0xf]
        %v704 = vld [vmem:[%s12 + $0x8] sm:$0xf]
        %v705 = vld [vmem:[%s12 + $0xc] sm:$0xf]
        %v706 = vld [vmem:[%s12 + $0x10] sm:$0xf]
        %v707 = vld [vmem:[%s12 + $0x14] sm:$0xf]
        %v708 = vld [vmem:[%s12 + $0x18] sm:$0xf]
        %v709 = vld [vmem:[%s12 + $0x1c] sm:$0xf]
        %v710 = vld [vmem:[%s12 + $0x20] sm:$0xf]
        %v711 = vld [vmem:[%s12 + $0x24] sm:$0xf]
        %v712 = vld [vmem:[%s12 + $0x28] sm:$0xf]
        %v713 = vld [vmem:[%s12 + $0x2c] sm:$0xf]
        %v714 = vld [vmem:[%s12 + $0x30] sm:$0xf]
        %v715 = vld [vmem:[%s12 + $0x34] sm:$0xf]
        %v716 = vld [vmem:[%s12 + $0x38] sm:$0xf]
        %v717 = vld [vmem:[%s12 + $0x3c] sm:$0xf]
        %v718 = vld [vmem:[%s3] sm:$0x1]
        %v719 = vld [vmem:[%s5] sm:$0x1]
        %v720 = vld [vmem:[%s7] sm:$0x1]
        %v721 = vld [vmem:[%s11] sm:$0x1]
        %v722 = vld [vmem:[%s13] sm:$0x1]
        %v723 = vld [vmem:[%s8] sm:$0x1]
        %v724 = vld [vmem:[%s9] sm:$0x1]
        %v725 = vld [vmem:[%s14] sm:$0x1]
        %v726 = vld [vmem:[%s15] sm:$0x1]
        %v727 = vadd.f32 %v666, %v668
        %v728 = vadd.f32 %v667, %v669
        %v729 = vpack.c.bf16 %v728, %v727
        %v731 = vperm.slane %v718, 0
        %v741 = vunpack.c.l.b16 %v670
        %v742 = vunpack.c.l.b16 %v671
        %v743 = vunpack.c.l.b16 %v672
        %v744 = vunpack.c.l.b16 %v673
        %v745 = vunpack.c.l.b16 %v674
        %v746 = vunpack.c.l.b16 %v675
        %v747 = vunpack.c.l.b16 %v676
        %v748 = vunpack.c.l.b16 %v677
        %v749 = vpack.c.b16 %v742, %v741
        %v750 = vpack.c.b16 %v744, %v743
        %v751 = vpack.c.b16 %v746, %v745
        %v752 = vpack.c.b16 %v748, %v747
        %vm757 = vcmask 523264
        %v759 = vsel %vm757, %v729, 0
        %761 = vmatpush.bf16.msra.mxu0 0
        %762 = vmatpush.bf16.msra.mxu0 0
        %763 = vmatpush.bf16.msra.mxu0 0
        %764 = vmatpush.bf16.msra.mxu0 0
        %765 = vmatpush.bf16.msra.mxu0 %v752
        %766 = vmatpush.bf16.msra.mxu0 %v751
        %767 = vmatpush.bf16.msra.mxu0 %v750
        %768 = vmatpush.bf16.msra.mxu0 %v749
        %769 = vmatmul.bf16.gmra.mxu0 %v759
        %v770 = vpop.f32.mrf.mxu0
        %v771 = vadd.f32 %v731, %v770
        %v772 = vpop.f32.mrf.mxu0
        %v773 = vadd.f32 %v731, %v772
        %774 = vdwg.mxu0
        %v775 = vpack.c.bf16 %v667, %v666
        %v777 = vperm.slane %v719, 0
        %v787 = vunpack.c.l.b16 %v678
        %v788 = vunpack.c.l.b16 %v679
        %v789 = vunpack.c.l.b16 %v680
        %v790 = vunpack.c.l.b16 %v681
        %v791 = vunpack.c.l.b16 %v682
        %v792 = vunpack.c.l.b16 %v683
        %v793 = vunpack.c.l.b16 %v684
        %v794 = vunpack.c.l.b16 %v685
        %v795 = vpack.c.b16 %v788, %v787
        %v796 = vpack.c.b16 %v790, %v789
        %v797 = vpack.c.b16 %v792, %v791
        %v798 = vpack.c.b16 %v794, %v793
        %v804 = vsel %vm757, %v775, 0
        %806 = vmatpush.bf16.msra.mxu0 0
        %807 = vmatpush.bf16.msra.mxu0 0
        %808 = vmatpush.bf16.msra.mxu0 0
        %809 = vmatpush.bf16.msra.mxu0 0
        %810 = vmatpush.bf16.msra.mxu0 %v798
        %811 = vmatpush.bf16.msra.mxu0 %v797
        %812 = vmatpush.bf16.msra.mxu0 %v796
        %813 = vmatpush.bf16.msra.mxu0 %v795
        %814 = vmatmul.bf16.gmra.mxu0 %v804
        %v815 = vpop.f32.mrf.mxu0
        %v816 = vadd.f32 %v777, %v815
        %v817 = vpop.f32.mrf.mxu0
        %v818 = vadd.f32 %v777, %v817
        %819 = vdwg.mxu0
        %822 = vrot.lane.b32.xlu0 %v771, 112
        %v823 = vpop.permute.xlu0 %822
        %824 = vrot.lane.b32.xlu0 %v773, 112
        %v825 = vpop.permute.xlu0 %824
        %826 = vrot.lane.b32.xlu0 %v771, 96
        %v827 = vpop.permute.xlu0 %826
        %828 = vrot.lane.b32.xlu0 %v773, 96
        %v829 = vpop.permute.xlu0 %828
        %830 = vrot.lane.b32.xlu0 %v771, 80
        %v831 = vpop.permute.xlu0 %830
        %832 = vrot.lane.b32.xlu0 %v773, 80
        %v833 = vpop.permute.xlu0 %832
        %834 = vrot.lane.b32.xlu0 %v771, 64
        %v835 = vpop.permute.xlu0 %834
        %836 = vrot.lane.b32.xlu0 %v773, 64
        %v837 = vpop.permute.xlu0 %836
        %838 = vrot.lane.b32.xlu0 %v823, 64
        %v839 = vpop.permute.xlu0 %838
        %840 = vrot.lane.b32.xlu0 %v825, 64
        %v841 = vpop.permute.xlu0 %840
        %842 = vrot.lane.b32.xlu0 %v827, 64
        %v843 = vpop.permute.xlu0 %842
        %844 = vrot.lane.b32.xlu0 %v829, 64
        %v845 = vpop.permute.xlu0 %844
        %846 = vrot.lane.b32.xlu0 %v831, 64
        %v847 = vpop.permute.xlu0 %846
        %848 = vrot.lane.b32.xlu0 %v833, 64
        %v849 = vpop.permute.xlu0 %848
        %v858 = vrot.slane %v843, 4
        %vm859 = vcmask 1047556
        %v860 = vsel %vm859, %v858, %v835
        %v861 = vrot.slane %v835, 4
        %v862 = vsel %vm859, %v843, %v861
        %v864 = vunpack.c.l.s4 1983009808
        %v865 = vunpack.c.0.s8 %v864
        %v866 = vperm.slane %v860, %v865
        %v868 = vunpack.c.l.s4 1983009808
        %v869 = vunpack.c.0.s8 %v868
        %v870 = vperm.slane %v862, %v869
        %v871 = vrot.slane %v847, 4
        %v872 = vsel %vm859, %v871, %v839
        %v873 = vrot.slane %v839, 4
        %v874 = vsel %vm859, %v847, %v873
        %v876 = vunpack.c.l.s4 1983009808
        %v877 = vunpack.c.0.s8 %v876
        %v878 = vperm.slane %v872, %v877
        %v880 = vunpack.c.l.s4 1983009808
        %v881 = vunpack.c.0.s8 %v880
        %v882 = vperm.slane %v874, %v881
        %v883 = vrot.slane %v878, 4
        %v884 = vsel %vm859, %v883, %v866
        %v885 = vrot.slane %v866, 4
        %v886 = vsel %vm859, %v878, %v885
        %v888 = vunpack.c.l.s4 1934713408
        %v889 = vunpack.c.0.s8 %v888
        %v890 = vperm.slane %v884, %v889
        %v892 = vunpack.c.l.s4 1934713408
        %v893 = vunpack.c.0.s8 %v892
        %v894 = vperm.slane %v886, %v893
        %v895 = vrot.slane %v882, 4
        %v896 = vsel %vm859, %v895, %v870
        %v897 = vrot.slane %v870, 4
        %v898 = vsel %vm859, %v882, %v897
        %v900 = vunpack.c.l.s4 1934713408
        %v901 = vunpack.c.0.s8 %v900
        %v902 = vperm.slane %v896, %v901
        %v904 = vunpack.c.l.s4 1934713408
        %v905 = vunpack.c.0.s8 %v904
        %v906 = vperm.slane %v898, %v905
        %v907 = vrot.slane %v890, 4
        %v908 = vsel %vm859, 0.0, %v907
        %v909 = vrot.slane %v894, 4
        %v910 = vsel %vm859, 0.0, %v909
        %v911 = vrot.slane %v902, 4
        %v912 = vsel %vm859, 0.0, %v911
        %v913 = vrot.slane %v906, 4
        %v914 = vsel %vm859, 0.0, %v913
        %v915 = vrot.slane %v845, 4
        %v916 = vsel %vm859, %v915, %v837
        %v917 = vrot.slane %v837, 4
        %v918 = vsel %vm859, %v845, %v917
        %v920 = vunpack.c.l.s4 1983009808
        %v921 = vunpack.c.0.s8 %v920
        %v922 = vperm.slane %v916, %v921
        %v924 = vunpack.c.l.s4 1983009808
        %v925 = vunpack.c.0.s8 %v924
        %v926 = vperm.slane %v918, %v925
        %v927 = vrot.slane %v849, 4
        %v928 = vsel %vm859, %v927, %v841
        %v929 = vrot.slane %v841, 4
        %v930 = vsel %vm859, %v849, %v929
        %v932 = vunpack.c.l.s4 1983009808
        %v933 = vunpack.c.0.s8 %v932
        %v934 = vperm.slane %v928, %v933
        %v936 = vunpack.c.l.s4 1983009808
        %v937 = vunpack.c.0.s8 %v936
        %v938 = vperm.slane %v930, %v937
        %v939 = vrot.slane %v934, 4
        %v940 = vsel %vm859, %v939, %v922
        %v941 = vrot.slane %v922, 4
        %v942 = vsel %vm859, %v934, %v941
        %v944 = vunpack.c.l.s4 1934713408
        %v945 = vunpack.c.0.s8 %v944
        %v946 = vperm.slane %v940, %v945
        %v948 = vunpack.c.l.s4 1934713408
        %v949 = vunpack.c.0.s8 %v948
        %v950 = vperm.slane %v942, %v949
        %v951 = vrot.slane %v938, 4
        %v952 = vsel %vm859, %v951, %v926
        %v953 = vrot.slane %v926, 4
        %v954 = vsel %vm859, %v938, %v953
        %v956 = vunpack.c.l.s4 1934713408
        %v957 = vunpack.c.0.s8 %v956
        %v958 = vperm.slane %v952, %v957
        %v960 = vunpack.c.l.s4 1934713408
        %v961 = vunpack.c.0.s8 %v960
        %v962 = vperm.slane %v954, %v961
        %v963 = vrot.slane %v946, 4
        %v964 = vsel %vm859, 0.0, %v963
        %v965 = vrot.slane %v950, 4
        %v966 = vsel %vm859, 0.0, %v965
        %v967 = vrot.slane %v958, 4
        %v968 = vsel %vm859, 0.0, %v967
        %v969 = vrot.slane %v962, 4
        %v970 = vsel %vm859, 0.0, %v969
        %v971 = vpack.c.bf16 %v890, %v890
        %v972 = vpack.c.bf16 %v908, %v908
        %v973 = vpack.c.bf16 %v894, %v894
        %v974 = vpack.c.bf16 %v910, %v910
        %v975 = vpack.c.bf16 %v902, %v902
        %v976 = vpack.c.bf16 %v912, %v912
        %v977 = vpack.c.bf16 %v906, %v906
        %v978 = vpack.c.bf16 %v914, %v914
        %v979 = vpack.c.bf16 %v946, %v946
        %v980 = vpack.c.bf16 %v964, %v964
        %v981 = vpack.c.bf16 %v950, %v950
        %v982 = vpack.c.bf16 %v966, %v966
        %v983 = vpack.c.bf16 %v958, %v958
        %v984 = vpack.c.bf16 %v968, %v968
        %v985 = vpack.c.bf16 %v962, %v962
        %v986 = vpack.c.bf16 %v970, %v970
        %989 = vrot.lane.b32.xlu0 %v816, 112
        %v990 = vpop.permute.xlu0 %989
        %991 = vrot.lane.b32.xlu0 %v818, 112
        %v992 = vpop.permute.xlu0 %991
        %995 = vrot.lane.b32.xlu0 %v816, 96
        %v996 = vpop.permute.xlu0 %995
        %997 = vrot.lane.b32.xlu0 %v818, 96
        %v998 = vpop.permute.xlu0 %997
        %1001 = vrot.lane.b32.xlu0 %v816, 80
        %v1002 = vpop.permute.xlu0 %1001
        %1003 = vrot.lane.b32.xlu0 %v818, 80
        %v1004 = vpop.permute.xlu0 %1003
        %v1007 = vrot.slane %v996, 4
        %v1008 = vsel %vm859, %v1007, %v816
        %v1009 = vrot.slane %v816, 4
        %v1010 = vsel %vm859, %v996, %v1009
        %v1012 = vunpack.c.l.s4 1983009808
        %v1013 = vunpack.c.0.s8 %v1012
        %v1014 = vperm.slane %v1008, %v1013
        %v1016 = vunpack.c.l.s4 1983009808
        %v1017 = vunpack.c.0.s8 %v1016
        %v1018 = vperm.slane %v1010, %v1017
        %v1019 = vrot.slane %v1002, 4
        %v1020 = vsel %vm859, %v1019, %v990
        %v1021 = vrot.slane %v990, 4
        %v1022 = vsel %vm859, %v1002, %v1021
        %v1024 = vunpack.c.l.s4 1983009808
        %v1025 = vunpack.c.0.s8 %v1024
        %v1026 = vperm.slane %v1020, %v1025
        %v1028 = vunpack.c.l.s4 1983009808
        %v1029 = vunpack.c.0.s8 %v1028
        %v1030 = vperm.slane %v1022, %v1029
        %v1031 = vrot.slane %v1026, 4
        %v1032 = vsel %vm859, %v1031, %v1014
        %v1033 = vrot.slane %v1014, 4
        %v1034 = vsel %vm859, %v1026, %v1033
        %v1036 = vunpack.c.l.s4 1934713408
        %v1037 = vunpack.c.0.s8 %v1036
        %v1038 = vperm.slane %v1032, %v1037
        %v1040 = vunpack.c.l.s4 1934713408
        %v1041 = vunpack.c.0.s8 %v1040
        %v1042 = vperm.slane %v1034, %v1041
        %v1043 = vrot.slane %v1030, 4
        %v1044 = vsel %vm859, %v1043, %v1018
        %v1045 = vrot.slane %v1018, 4
        %v1046 = vsel %vm859, %v1030, %v1045
        %v1048 = vunpack.c.l.s4 1934713408
        %v1049 = vunpack.c.0.s8 %v1048
        %v1050 = vperm.slane %v1044, %v1049
        %v1052 = vunpack.c.l.s4 1934713408
        %v1053 = vunpack.c.0.s8 %v1052
        %v1054 = vperm.slane %v1046, %v1053
        %v1055 = vrot.slane %v1038, 4
        %v1056 = vsel %vm859, 0.0, %v1055
        %v1057 = vrot.slane %v1042, 4
        %v1058 = vsel %vm859, 0.0, %v1057
        %v1059 = vrot.slane %v1050, 4
        %v1060 = vsel %vm859, 0.0, %v1059
        %v1061 = vrot.slane %v1054, 4
        %v1062 = vsel %vm859, 0.0, %v1061
        %v1063 = vrot.slane %v998, 4
        %v1064 = vsel %vm859, %v1063, %v818
        %v1065 = vrot.slane %v818, 4
        %v1066 = vsel %vm859, %v998, %v1065
        %v1068 = vunpack.c.l.s4 1983009808
        %v1069 = vunpack.c.0.s8 %v1068
        %v1070 = vperm.slane %v1064, %v1069
        %v1072 = vunpack.c.l.s4 1983009808
        %v1073 = vunpack.c.0.s8 %v1072
        %v1074 = vperm.slane %v1066, %v1073
        %v1075 = vrot.slane %v1004, 4
        %v1076 = vsel %vm859, %v1075, %v992
        %v1077 = vrot.slane %v992, 4
        %v1078 = vsel %vm859, %v1004, %v1077
        %v1080 = vunpack.c.l.s4 1983009808
        %v1081 = vunpack.c.0.s8 %v1080
        %v1082 = vperm.slane %v1076, %v1081
        %v1084 = vunpack.c.l.s4 1983009808
        %v1085 = vunpack.c.0.s8 %v1084
        %v1086 = vperm.slane %v1078, %v1085
        %v1087 = vrot.slane %v1082, 4
        %v1088 = vsel %vm859, %v1087, %v1070
        %v1089 = vrot.slane %v1070, 4
        %v1090 = vsel %vm859, %v1082, %v1089
        %v1092 = vunpack.c.l.s4 1934713408
        %v1093 = vunpack.c.0.s8 %v1092
        %v1094 = vperm.slane %v1088, %v1093
        %v1096 = vunpack.c.l.s4 1934713408
        %v1097 = vunpack.c.0.s8 %v1096
        %v1098 = vperm.slane %v1090, %v1097
        %v1099 = vrot.slane %v1086, 4
        %v1100 = vsel %vm859, %v1099, %v1074
        %v1101 = vrot.slane %v1074, 4
        %v1102 = vsel %vm859, %v1086, %v1101
        %v1104 = vunpack.c.l.s4 1934713408
        %v1105 = vunpack.c.0.s8 %v1104
        %v1106 = vperm.slane %v1100, %v1105
        %v1108 = vunpack.c.l.s4 1934713408
        %v1109 = vunpack.c.0.s8 %v1108
        %v1110 = vperm.slane %v1102, %v1109
        %v1111 = vrot.slane %v1094, 4
        %v1112 = vsel %vm859, 0.0, %v1111
        %v1113 = vrot.slane %v1098, 4
        %v1114 = vsel %vm859, 0.0, %v1113
        %v1115 = vrot.slane %v1106, 4
        %v1116 = vsel %vm859, 0.0, %v1115
        %v1117 = vrot.slane %v1110, 4
        %v1118 = vsel %vm859, 0.0, %v1117
        %v1119 = vpack.c.bf16 %v1038, %v1038
        %v1120 = vpack.c.bf16 %v1056, %v1056
        %v1121 = vpack.c.bf16 %v1042, %v1042
        %v1122 = vpack.c.bf16 %v1058, %v1058
        %v1123 = vpack.c.bf16 %v1050, %v1050
        %v1124 = vpack.c.bf16 %v1060, %v1060
        %v1125 = vpack.c.bf16 %v1054, %v1054
        %v1126 = vpack.c.bf16 %v1062, %v1062
        %v1127 = vpack.c.bf16 %v1094, %v1094
        %v1128 = vpack.c.bf16 %v1112, %v1112
        %v1129 = vpack.c.bf16 %v1098, %v1098
        %v1130 = vpack.c.bf16 %v1114, %v1114
        %v1131 = vpack.c.bf16 %v1106, %v1106
        %v1132 = vpack.c.bf16 %v1116, %v1116
        %v1133 = vpack.c.bf16 %v1110, %v1110
        %v1134 = vpack.c.bf16 %v1118, %v1118
        %v1141 = vrot.slane %v827, 4
        %v1142 = vsel %vm859, %v1141, %v771
        %v1143 = vrot.slane %v771, 4
        %v1144 = vsel %vm859, %v827, %v1143
        %v1146 = vunpack.c.l.s4 1983009808
        %v1147 = vunpack.c.0.s8 %v1146
        %v1148 = vperm.slane %v1142, %v1147
        %v1150 = vunpack.c.l.s4 1983009808
        %v1151 = vunpack.c.0.s8 %v1150
        %v1152 = vperm.slane %v1144, %v1151
        %v1153 = vrot.slane %v831, 4
        %v1154 = vsel %vm859, %v1153, %v823
        %v1155 = vrot.slane %v823, 4
        %v1156 = vsel %vm859, %v831, %v1155
        %v1158 = vunpack.c.l.s4 1983009808
        %v1159 = vunpack.c.0.s8 %v1158
        %v1160 = vperm.slane %v1154, %v1159
        %v1162 = vunpack.c.l.s4 1983009808
        %v1163 = vunpack.c.0.s8 %v1162
        %v1164 = vperm.slane %v1156, %v1163
        %v1165 = vrot.slane %v1160, 4
        %v1166 = vsel %vm859, %v1165, %v1148
        %v1167 = vrot.slane %v1148, 4
        %v1168 = vsel %vm859, %v1160, %v1167
        %v1170 = vunpack.c.l.s4 1934713408
        %v1171 = vunpack.c.0.s8 %v1170
        %v1172 = vperm.slane %v1166, %v1171
        %v1174 = vunpack.c.l.s4 1934713408
        %v1175 = vunpack.c.0.s8 %v1174
        %v1176 = vperm.slane %v1168, %v1175
        %v1177 = vrot.slane %v1164, 4
        %v1178 = vsel %vm859, %v1177, %v1152
        %v1179 = vrot.slane %v1152, 4
        %v1180 = vsel %vm859, %v1164, %v1179
        %v1182 = vunpack.c.l.s4 1934713408
        %v1183 = vunpack.c.0.s8 %v1182
        %v1184 = vperm.slane %v1178, %v1183
        %v1186 = vunpack.c.l.s4 1934713408
        %v1187 = vunpack.c.0.s8 %v1186
        %v1188 = vperm.slane %v1180, %v1187
        %v1189 = vrot.slane %v1172, 4
        %v1190 = vsel %vm859, 0.0, %v1189
        %v1191 = vrot.slane %v1176, 4
        %v1192 = vsel %vm859, 0.0, %v1191
        %v1193 = vrot.slane %v1184, 4
        %v1194 = vsel %vm859, 0.0, %v1193
        %v1195 = vrot.slane %v1188, 4
        %v1196 = vsel %vm859, 0.0, %v1195
        %v1197 = vrot.slane %v829, 4
        %v1198 = vsel %vm859, %v1197, %v773
        %v1199 = vrot.slane %v773, 4
        %v1200 = vsel %vm859, %v829, %v1199
        %v1202 = vunpack.c.l.s4 1983009808
        %v1203 = vunpack.c.0.s8 %v1202
        %v1204 = vperm.slane %v1198, %v1203
        %v1206 = vunpack.c.l.s4 1983009808
        %v1207 = vunpack.c.0.s8 %v1206
        %v1208 = vperm.slane %v1200, %v1207
        %v1209 = vrot.slane %v833, 4
        %v1210 = vsel %vm859, %v1209, %v825
        %v1211 = vrot.slane %v825, 4
        %v1212 = vsel %vm859, %v833, %v1211
        %v1214 = vunpack.c.l.s4 1983009808
        %v1215 = vunpack.c.0.s8 %v1214
        %v1216 = vperm.slane %v1210, %v1215
        %v1218 = vunpack.c.l.s4 1983009808
        %v1219 = vunpack.c.0.s8 %v1218
        %v1220 = vperm.slane %v1212, %v1219
        %v1221 = vrot.slane %v1216, 4
        %v1222 = vsel %vm859, %v1221, %v1204
        %v1223 = vrot.slane %v1204, 4
        %v1224 = vsel %vm859, %v1216, %v1223
        %v1226 = vunpack.c.l.s4 1934713408
        %v1227 = vunpack.c.0.s8 %v1226
        %v1228 = vperm.slane %v1222, %v1227
        %v1230 = vunpack.c.l.s4 1934713408
        %v1231 = vunpack.c.0.s8 %v1230
        %v1232 = vperm.slane %v1224, %v1231
        %v1233 = vrot.slane %v1220, 4
        %v1234 = vsel %vm859, %v1233, %v1208
        %v1235 = vrot.slane %v1208, 4
        %v1236 = vsel %vm859, %v1220, %v1235
        %v1238 = vunpack.c.l.s4 1934713408
        %v1239 = vunpack.c.0.s8 %v1238
        %v1240 = vperm.slane %v1234, %v1239
        %v1242 = vunpack.c.l.s4 1934713408
        %v1243 = vunpack.c.0.s8 %v1242
        %v1244 = vperm.slane %v1236, %v1243
        %v1245 = vrot.slane %v1228, 4
        %v1246 = vsel %vm859, 0.0, %v1245
        %v1247 = vrot.slane %v1232, 4
        %v1248 = vsel %vm859, 0.0, %v1247
        %v1249 = vrot.slane %v1240, 4
        %v1250 = vsel %vm859, 0.0, %v1249
        %v1251 = vrot.slane %v1244, 4
        %v1252 = vsel %vm859, 0.0, %v1251
        %v1253 = vpack.c.bf16 %v1172, %v1172
        %v1254 = vpack.c.bf16 %v1190, %v1190
        %v1255 = vpack.c.bf16 %v1176, %v1176
        %v1256 = vpack.c.bf16 %v1192, %v1192
        %v1257 = vpack.c.bf16 %v1184, %v1184
        %v1258 = vpack.c.bf16 %v1194, %v1194
        %v1259 = vpack.c.bf16 %v1188, %v1188
        %v1260 = vpack.c.bf16 %v1196, %v1196
        %v1261 = vpack.c.bf16 %v1228, %v1228
        %v1262 = vpack.c.bf16 %v1246, %v1246
        %v1263 = vpack.c.bf16 %v1232, %v1232
        %v1264 = vpack.c.bf16 %v1248, %v1248
        %v1265 = vpack.c.bf16 %v1240, %v1240
        %v1266 = vpack.c.bf16 %v1250, %v1250
        %v1267 = vpack.c.bf16 %v1244, %v1244
        %v1268 = vpack.c.bf16 %v1252, %v1252
        %v1269 = vrot.slane %v1257, 4
        %vm1270 = vcmask 1047556
        %v1271 = vsel %vm1270, %v1269, %v1253
        %v1273 = vunpack.c.l.s4 1983009808
        %v1274 = vunpack.c.0.s8 %v1273
        %v1275 = vperm.slane %v1271, %v1274
        %v1276 = vrot.slane %v1259, 4
        %v1277 = vsel %vm1270, %v1276, %v1255
        %v1279 = vunpack.c.l.s4 1983009808
        %v1280 = vunpack.c.0.s8 %v1279
        %v1281 = vperm.slane %v1277, %v1280
        %v1282 = vrot.slane %v1281, 4
        %v1283 = vsel %vm1270, %v1282, %v1275
        %v1285 = vunpack.c.l.s4 1934713408
        %v1286 = vunpack.c.0.s8 %v1285
        %v1287 = vperm.slane %v1283, %v1286
        %v1288 = vrot.slane %v1287, 4
        %v1289 = vsel %vm1270, 0, %v1288
        %v1290 = vrot.slane %v1258, 4
        %v1291 = vsel %vm1270, %v1290, %v1254
        %v1293 = vunpack.c.l.s4 1983009808
        %v1294 = vunpack.c.0.s8 %v1293
        %v1295 = vperm.slane %v1291, %v1294
        %v1296 = vrot.slane %v1260, 4
        %v1297 = vsel %vm1270, %v1296, %v1256
        %v1299 = vunpack.c.l.s4 1983009808
        %v1300 = vunpack.c.0.s8 %v1299
        %v1301 = vperm.slane %v1297, %v1300
        %v1302 = vrot.slane %v1301, 4
        %v1303 = vsel %vm1270, %v1302, %v1295
        %v1305 = vunpack.c.l.s4 1934713408
        %v1306 = vunpack.c.0.s8 %v1305
        %v1307 = vperm.slane %v1303, %v1306
        %v1308 = vrot.slane %v1307, 4
        %v1309 = vsel %vm1270, 0, %v1308
        %v1310 = vrot.slane %v1265, 4
        %v1311 = vsel %vm1270, %v1310, %v1261
        %v1313 = vunpack.c.l.s4 1983009808
        %v1314 = vunpack.c.0.s8 %v1313
        %v1315 = vperm.slane %v1311, %v1314
        %v1316 = vrot.slane %v1267, 4
        %v1317 = vsel %vm1270, %v1316, %v1263
        %v1319 = vunpack.c.l.s4 1983009808
        %v1320 = vunpack.c.0.s8 %v1319
        %v1321 = vperm.slane %v1317, %v1320
        %v1322 = vrot.slane %v1321, 4
        %v1323 = vsel %vm1270, %v1322, %v1315
        %v1325 = vunpack.c.l.s4 1934713408
        %v1326 = vunpack.c.0.s8 %v1325
        %v1327 = vperm.slane %v1323, %v1326
        %v1328 = vrot.slane %v1327, 4
        %v1329 = vsel %vm1270, 0, %v1328
        %v1330 = vrot.slane %v1266, 4
        %v1331 = vsel %vm1270, %v1330, %v1262
        %v1333 = vunpack.c.l.s4 1983009808
        %v1334 = vunpack.c.0.s8 %v1333
        %v1335 = vperm.slane %v1331, %v1334
        %v1336 = vrot.slane %v1268, 4
        %v1337 = vsel %vm1270, %v1336, %v1264
        %v1339 = vunpack.c.l.s4 1983009808
        %v1340 = vunpack.c.0.s8 %v1339
        %v1341 = vperm.slane %v1337, %v1340
        %v1342 = vrot.slane %v1341, 4
        %v1343 = vsel %vm1270, %v1342, %v1335
        %v1345 = vunpack.c.l.s4 1934713408
        %v1346 = vunpack.c.0.s8 %v1345
        %v1347 = vperm.slane %v1343, %v1346
        %v1348 = vrot.slane %v1347, 4
        %v1349 = vsel %vm1270, 0, %v1348
        %v1352 = vpack.i.b16 %v1307, %v1287
        %v1353 = vshrl.u32 %v1287, 16
        %v1354 = vshrl.u32 %v1307, 16
        %v1355 = vpack.i.b16 %v1354, %v1353
        %v1358 = vpack.i.b16 %v1309, %v1289
        %v1359 = vshrl.u32 %v1289, 16
        %v1360 = vshrl.u32 %v1309, 16
        %v1361 = vpack.i.b16 %v1360, %v1359
        %v1364 = vpack.i.b16 %v1347, %v1327
        %v1365 = vshrl.u32 %v1327, 16
        %v1366 = vshrl.u32 %v1347, 16
        %v1367 = vpack.i.b16 %v1366, %v1365
        %v1370 = vpack.i.b16 %v1349, %v1329
        %v1371 = vshrl.u32 %v1329, 16
        %v1372 = vshrl.u32 %v1349, 16
        %v1373 = vpack.i.b16 %v1372, %v1371
        %1374 = vxpose.xlu0.c.b16.start [1/8] %v971, 128
        %1375 = vxpose.xlu0.c.b16.cont [2/8] 0, 128
        %1376 = vxpose.xlu0.c.b16.cont [3/8] 0, 128
        %1377 = vxpose.xlu0.c.b16.cont [4/8] 0, 128
        %1378 = vxpose.xlu0.c.b16.cont [5/8] 0, 128
        %1379 = vxpose.xlu0.c.b16.cont [6/8] 0, 128
        %1380 = vxpose.xlu0.c.b16.cont [7/8] 0, 128
        %1381 = vxpose.xlu0.c.b16.end [8/8] 0, 128
        %v1382 = vpop.trf.xlu0
        %v1383 = vpop.trf.xlu0
        %v1384 = vpop.trf.xlu0
        %v1385 = vpop.trf.xlu0
        %v1386 = vpop.trf.xlu0
        %v1387 = vpop.trf.xlu0
        %v1388 = vpop.trf.xlu0
        %v1389 = vpop.trf.xlu0
        %1390 = vxpose.xlu0.c.b16.start [1/8] %v972, 128
        %1391 = vxpose.xlu0.c.b16.cont [2/8] 0, 128
        %1392 = vxpose.xlu0.c.b16.cont [3/8] 0, 128
        %1393 = vxpose.xlu0.c.b16.cont [4/8] 0, 128
        %1394 = vxpose.xlu0.c.b16.cont [5/8] 0, 128
        %1395 = vxpose.xlu0.c.b16.cont [6/8] 0, 128
        %1396 = vxpose.xlu0.c.b16.cont [7/8] 0, 128
        %1397 = vxpose.xlu0.c.b16.end [8/8] 0, 128
        %v1398 = vpop.trf.xlu0
        %v1399 = vpop.trf.xlu0
        %v1400 = vpop.trf.xlu0
        %v1401 = vpop.trf.xlu0
        %v1402 = vpop.trf.xlu0
        %v1403 = vpop.trf.xlu0
        %v1404 = vpop.trf.xlu0
        %v1405 = vpop.trf.xlu0
        %1406 = vxpose.xlu0.c.b16.start [1/8] %v973, 128
        %1407 = vxpose.xlu0.c.b16.cont [2/8] 0, 128
        %1408 = vxpose.xlu0.c.b16.cont [3/8] 0, 128
        %1409 = vxpose.xlu0.c.b16.cont [4/8] 0, 128
        %1410 = vxpose.xlu0.c.b16.cont [5/8] 0, 128
        %1411 = vxpose.xlu0.c.b16.cont [6/8] 0, 128
        %1412 = vxpose.xlu0.c.b16.cont [7/8] 0, 128
        %1413 = vxpose.xlu0.c.b16.end [8/8] 0, 128
        %v1414 = vpop.trf.xlu0
        %v1415 = vpop.trf.xlu0
        %v1416 = vpop.trf.xlu0
        %v1417 = vpop.trf.xlu0
        %v1418 = vpop.trf.xlu0
        %v1419 = vpop.trf.xlu0
        %v1420 = vpop.trf.xlu0
        %v1421 = vpop.trf.xlu0
        %1422 = vxpose.xlu0.c.b16.start [1/8] %v974, 128
        %1423 = vxpose.xlu0.c.b16.cont [2/8] 0, 128
        %1424 = vxpose.xlu0.c.b16.cont [3/8] 0, 128
        %1425 = vxpose.xlu0.c.b16.cont [4/8] 0, 128
        %1426 = vxpose.xlu0.c.b16.cont [5/8] 0, 128
        %1427 = vxpose.xlu0.c.b16.cont [6/8] 0, 128
        %1428 = vxpose.xlu0.c.b16.cont [7/8] 0, 128
        %1429 = vxpose.xlu0.c.b16.end [8/8] 0, 128
        %v1430 = vpop.trf.xlu0
        %v1431 = vpop.trf.xlu0
        %v1432 = vpop.trf.xlu0
        %v1433 = vpop.trf.xlu0
        %v1434 = vpop.trf.xlu0
        %v1435 = vpop.trf.xlu0
        %v1436 = vpop.trf.xlu0
        %v1437 = vpop.trf.xlu0
        %1438 = vxpose.xlu0.c.b16.start [1/8] %v975, 128
        %1439 = vxpose.xlu0.c.b16.cont [2/8] 0, 128
        %1440 = vxpose.xlu0.c.b16.cont [3/8] 0, 128
        %1441 = vxpose.xlu0.c.b16.cont [4/8] 0, 128
        %1442 = vxpose.xlu0.c.b16.cont [5/8] 0, 128
        %1443 = vxpose.xlu0.c.b16.cont [6/8] 0, 128
        %1444 = vxpose.xlu0.c.b16.cont [7/8] 0, 128
        %1445 = vxpose.xlu0.c.b16.end [8/8] 0, 128
        %v1446 = vpop.trf.xlu0
        %v1447 = vpop.trf.xlu0
        %v1448 = vpop.trf.xlu0
        %v1449 = vpop.trf.xlu0
        %v1450 = vpop.trf.xlu0
        %v1451 = vpop.trf.xlu0
        %v1452 = vpop.trf.xlu0
        %v1453 = vpop.trf.xlu0
        %1454 = vxpose.xlu0.c.b16.start [1/8] %v976, 128
        %1455 = vxpose.xlu0.c.b16.cont [2/8] 0, 128
        %1456 = vxpose.xlu0.c.b16.cont [3/8] 0, 128
        %1457 = vxpose.xlu0.c.b16.cont [4/8] 0, 128
        %1458 = vxpose.xlu0.c.b16.cont [5/8] 0, 128
        %1459 = vxpose.xlu0.c.b16.cont [6/8] 0, 128
        %1460 = vxpose.xlu0.c.b16.cont [7/8] 0, 128
        %1461 = vxpose.xlu0.c.b16.end [8/8] 0, 128
        %v1462 = vpop.trf.xlu0
        %v1463 = vpop.trf.xlu0
        %v1464 = vpop.trf.xlu0
        %v1465 = vpop.trf.xlu0
        %v1466 = vpop.trf.xlu0
        %v1467 = vpop.trf.xlu0
        %v1468 = vpop.trf.xlu0
        %v1469 = vpop.trf.xlu0
        %1470 = vxpose.xlu0.c.b16.start [1/8] %v977, 128
        %1471 = vxpose.xlu0.c.b16.cont [2/8] 0, 128
        %1472 = vxpose.xlu0.c.b16.cont [3/8] 0, 128
        %1473 = vxpose.xlu0.c.b16.cont [4/8] 0, 128
        %1474 = vxpose.xlu0.c.b16.cont [5/8] 0, 128
        %1475 = vxpose.xlu0.c.b16.cont [6/8] 0, 128
        %1476 = vxpose.xlu0.c.b16.cont [7/8] 0, 128
        %1477 = vxpose.xlu0.c.b16.end [8/8] 0, 128
        %v1478 = vpop.trf.xlu0
        %v1479 = vpop.trf.xlu0
        %v1480 = vpop.trf.xlu0
        %v1481 = vpop.trf.xlu0
        %v1482 = vpop.trf.xlu0
        %v1483 = vpop.trf.xlu0
        %v1484 = vpop.trf.xlu0
        %v1485 = vpop.trf.xlu0
        %1486 = vxpose.xlu0.c.b16.start [1/8] %v978, 128
        %1487 = vxpose.xlu0.c.b16.cont [2/8] 0, 128
        %1488 = vxpose.xlu0.c.b16.cont [3/8] 0, 128
        %1489 = vxpose.xlu0.c.b16.cont [4/8] 0, 128
        %1490 = vxpose.xlu0.c.b16.cont [5/8] 0, 128
        %1491 = vxpose.xlu0.c.b16.cont [6/8] 0, 128
        %1492 = vxpose.xlu0.c.b16.cont [7/8] 0, 128
        %1493 = vxpose.xlu0.c.b16.end [8/8] 0, 128
        %v1494 = vpop.trf.xlu0
        %v1495 = vpop.trf.xlu0
        %v1496 = vpop.trf.xlu0
        %v1497 = vpop.trf.xlu0
        %v1498 = vpop.trf.xlu0
        %v1499 = vpop.trf.xlu0
        %v1500 = vpop.trf.xlu0
        %v1501 = vpop.trf.xlu0
        %1502 = vxpose.xlu0.c.b16.start [1/8] %v979, 128
        %1503 = vxpose.xlu0.c.b16.cont [2/8] 0, 128
        %1504 = vxpose.xlu0.c.b16.cont [3/8] 0, 128
        %1505 = vxpose.xlu0.c.b16.cont [4/8] 0, 128
        %1506 = vxpose.xlu0.c.b16.cont [5/8] 0, 128
        %1507 = vxpose.xlu0.c.b16.cont [6/8] 0, 128
        %1508 = vxpose.xlu0.c.b16.cont [7/8] 0, 128
        %1509 = vxpose.xlu0.c.b16.end [8/8] 0, 128
        %v1510 = vpop.trf.xlu0
        %v1511 = vpop.trf.xlu0
        %v1512 = vpop.trf.xlu0
        %v1513 = vpop.trf.xlu0
        %v1514 = vpop.trf.xlu0
        %v1515 = vpop.trf.xlu0
        %v1516 = vpop.trf.xlu0
        %v1517 = vpop.trf.xlu0
        %1518 = vxpose.xlu0.c.b16.start [1/8] %v980, 128
        %1519 = vxpose.xlu0.c.b16.cont [2/8] 0, 128
        %1520 = vxpose.xlu0.c.b16.cont [3/8] 0, 128
        %1521 = vxpose.xlu0.c.b16.cont [4/8] 0, 128
        %1522 = vxpose.xlu0.c.b16.cont [5/8] 0, 128
        %1523 = vxpose.xlu0.c.b16.cont [6/8] 0, 128
        %1524 = vxpose.xlu0.c.b16.cont [7/8] 0, 128
        %1525 = vxpose.xlu0.c.b16.end [8/8] 0, 128
        %v1526 = vpop.trf.xlu0
        %v1527 = vpop.trf.xlu0
        %v1528 = vpop.trf.xlu0
        %v1529 = vpop.trf.xlu0
        %v1530 = vpop.trf.xlu0
        %v1531 = vpop.trf.xlu0
        %v1532 = vpop.trf.xlu0
        %v1533 = vpop.trf.xlu0
        %1534 = vxpose.xlu0.c.b16.start [1/8] %v981, 128
        %1535 = vxpose.xlu0.c.b16.cont [2/8] 0, 128
        %1536 = vxpose.xlu0.c.b16.cont [3/8] 0, 128
        %1537 = vxpose.xlu0.c.b16.cont [4/8] 0, 128
        %1538 = vxpose.xlu0.c.b16.cont [5/8] 0, 128
        %1539 = vxpose.xlu0.c.b16.cont [6/8] 0, 128
        %1540 = vxpose.xlu0.c.b16.cont [7/8] 0, 128
        %1541 = vxpose.xlu0.c.b16.end [8/8] 0, 128
        %v1542 = vpop.trf.xlu0
        %v1543 = vpop.trf.xlu0
        %v1544 = vpop.trf.xlu0
        %v1545 = vpop.trf.xlu0
        %v1546 = vpop.trf.xlu0
        %v1547 = vpop.trf.xlu0
        %v1548 = vpop.trf.xlu0
        %v1549 = vpop.trf.xlu0
        %1550 = vxpose.xlu0.c.b16.start [1/8] %v982, 128
        %1551 = vxpose.xlu0.c.b16.cont [2/8] 0, 128
        %1552 = vxpose.xlu0.c.b16.cont [3/8] 0, 128
        %1553 = vxpose.xlu0.c.b16.cont [4/8] 0, 128
        %1554 = vxpose.xlu0.c.b16.cont [5/8] 0, 128
        %1555 = vxpose.xlu0.c.b16.cont [6/8] 0, 128
        %1556 = vxpose.xlu0.c.b16.cont [7/8] 0, 128
        %1557 = vxpose.xlu0.c.b16.end [8/8] 0, 128
        %v1558 = vpop.trf.xlu0
        %v1559 = vpop.trf.xlu0
        %v1560 = vpop.trf.xlu0
        %v1561 = vpop.trf.xlu0
        %v1562 = vpop.trf.xlu0
        %v1563 = vpop.trf.xlu0
        %v1564 = vpop.trf.xlu0
        %v1565 = vpop.trf.xlu0
        %1566 = vxpose.xlu0.c.b16.start [1/8] %v983, 128
        %1567 = vxpose.xlu0.c.b16.cont [2/8] 0, 128
        %1568 = vxpose.xlu0.c.b16.cont [3/8] 0, 128
        %1569 = vxpose.xlu0.c.b16.cont [4/8] 0, 128
        %1570 = vxpose.xlu0.c.b16.cont [5/8] 0, 128
        %1571 = vxpose.xlu0.c.b16.cont [6/8] 0, 128
        %1572 = vxpose.xlu0.c.b16.cont [7/8] 0, 128
        %1573 = vxpose.xlu0.c.b16.end [8/8] 0, 128
        %v1574 = vpop.trf.xlu0
        %v1575 = vpop.trf.xlu0
        %v1576 = vpop.trf.xlu0
        %v1577 = vpop.trf.xlu0
        %v1578 = vpop.trf.xlu0
        %v1579 = vpop.trf.xlu0
        %v1580 = vpop.trf.xlu0
        %v1581 = vpop.trf.xlu0
        %1582 = vxpose.xlu0.c.b16.start [1/8] %v984, 128
        %1583 = vxpose.xlu0.c.b16.cont [2/8] 0, 128
        %1584 = vxpose.xlu0.c.b16.cont [3/8] 0, 128
        %1585 = vxpose.xlu0.c.b16.cont [4/8] 0, 128
        %1586 = vxpose.xlu0.c.b16.cont [5/8] 0, 128
        %1587 = vxpose.xlu0.c.b16.cont [6/8] 0, 128
        %1588 = vxpose.xlu0.c.b16.cont [7/8] 0, 128
        %1589 = vxpose.xlu0.c.b16.end [8/8] 0, 128
        %v1590 = vpop.trf.xlu0
        %v1591 = vpop.trf.xlu0
        %v1592 = vpop.trf.xlu0
        %v1593 = vpop.trf.xlu0
        %v1594 = vpop.trf.xlu0
        %v1595 = vpop.trf.xlu0
        %v1596 = vpop.trf.xlu0
        %v1597 = vpop.trf.xlu0
        %1598 = vxpose.xlu0.c.b16.start [1/8] %v985, 128
        %1599 = vxpose.xlu0.c.b16.cont [2/8] 0, 128
        %1600 = vxpose.xlu0.c.b16.cont [3/8] 0, 128
        %1601 = vxpose.xlu0.c.b16.cont [4/8] 0, 128
        %1602 = vxpose.xlu0.c.b16.cont [5/8] 0, 128
        %1603 = vxpose.xlu0.c.b16.cont [6/8] 0, 128
        %1604 = vxpose.xlu0.c.b16.cont [7/8] 0, 128
        %1605 = vxpose.xlu0.c.b16.end [8/8] 0, 128
        %v1606 = vpop.trf.xlu0
        %v1607 = vpop.trf.xlu0
        %v1608 = vpop.trf.xlu0
        %v1609 = vpop.trf.xlu0
        %v1610 = vpop.trf.xlu0
        %v1611 = vpop.trf.xlu0
        %v1612 = vpop.trf.xlu0
        %v1613 = vpop.trf.xlu0
        %1614 = vxpose.xlu0.c.b16.start [1/8] %v986, 128
        %1615 = vxpose.xlu0.c.b16.cont [2/8] 0, 128
        %1616 = vxpose.xlu0.c.b16.cont [3/8] 0, 128
        %1617 = vxpose.xlu0.c.b16.cont [4/8] 0, 128
        %1618 = vxpose.xlu0.c.b16.cont [5/8] 0, 128
        %1619 = vxpose.xlu0.c.b16.cont [6/8] 0, 128
        %1620 = vxpose.xlu0.c.b16.cont [7/8] 0, 128
        %1621 = vxpose.xlu0.c.b16.end [8/8] 0, 128
        %v1622 = vpop.trf.xlu0
        %v1623 = vpop.trf.xlu0
        %v1624 = vpop.trf.xlu0
        %v1625 = vpop.trf.xlu0
        %v1626 = vpop.trf.xlu0
        %v1627 = vpop.trf.xlu0
        %v1628 = vpop.trf.xlu0
        %v1629 = vpop.trf.xlu0
        %v1630 = vrot.slane %v1446, 4
        %v1631 = vsel %vm1270, %v1630, %v1382
        %v1632 = vrot.slane %v1382, 4
        %v1633 = vsel %vm1270, %v1446, %v1632
        %v1635 = vunpack.c.l.s4 1983009808
        %v1636 = vunpack.c.0.s8 %v1635
        %v1637 = vperm.slane %v1631, %v1636
        %v1639 = vunpack.c.l.s4 1983009808
        %v1640 = vunpack.c.0.s8 %v1639
        %v1641 = vperm.slane %v1633, %v1640
        %v1642 = vrot.slane %v1478, 4
        %v1643 = vsel %vm1270, %v1642, %v1414
        %v1644 = vrot.slane %v1414, 4
        %v1645 = vsel %vm1270, %v1478, %v1644
        %v1647 = vunpack.c.l.s4 1983009808
        %v1648 = vunpack.c.0.s8 %v1647
        %v1649 = vperm.slane %v1643, %v1648
        %v1651 = vunpack.c.l.s4 1983009808
        %v1652 = vunpack.c.0.s8 %v1651
        %v1653 = vperm.slane %v1645, %v1652
        %v1654 = vrot.slane %v1574, 4
        %v1655 = vsel %vm1270, %v1654, %v1510
        %v1656 = vrot.slane %v1510, 4
        %v1657 = vsel %vm1270, %v1574, %v1656
        %v1659 = vunpack.c.l.s4 1983009808
        %v1660 = vunpack.c.0.s8 %v1659
        %v1661 = vperm.slane %v1655, %v1660
        %v1663 = vunpack.c.l.s4 1983009808
        %v1664 = vunpack.c.0.s8 %v1663
        %v1665 = vperm.slane %v1657, %v1664
        %v1666 = vrot.slane %v1606, 4
        %v1667 = vsel %vm1270, %v1666, %v1542
        %v1668 = vrot.slane %v1542, 4
        %v1669 = vsel %vm1270, %v1606, %v1668
        %v1671 = vunpack.c.l.s4 1983009808
        %v1672 = vunpack.c.0.s8 %v1671
        %v1673 = vperm.slane %v1667, %v1672
        %v1675 = vunpack.c.l.s4 1983009808
        %v1676 = vunpack.c.0.s8 %v1675
        %v1677 = vperm.slane %v1669, %v1676
        %v1678 = vrot.slane %v1649, 4
        %v1679 = vsel %vm1270, %v1678, %v1637
        %v1680 = vrot.slane %v1637, 4
        %v1681 = vsel %vm1270, %v1649, %v1680
        %v1683 = vunpack.c.l.s4 1934713408
        %v1684 = vunpack.c.0.s8 %v1683
        %v1685 = vperm.slane %v1679, %v1684
        %v1687 = vunpack.c.l.s4 1934713408
        %v1688 = vunpack.c.0.s8 %v1687
        %v1689 = vperm.slane %v1681, %v1688
        %v1690 = vrot.slane %v1653, 4
        %v1691 = vsel %vm1270, %v1690, %v1641
        %v1692 = vrot.slane %v1641, 4
        %v1693 = vsel %vm1270, %v1653, %v1692
        %v1695 = vunpack.c.l.s4 1934713408
        %v1696 = vunpack.c.0.s8 %v1695
        %v1697 = vperm.slane %v1691, %v1696
        %v1699 = vunpack.c.l.s4 1934713408
        %v1700 = vunpack.c.0.s8 %v1699
        %v1701 = vperm.slane %v1693, %v1700
        %v1702 = vrot.slane %v1673, 4
        %v1703 = vsel %vm1270, %v1702, %v1661
        %v1704 = vrot.slane %v1661, 4
        %v1705 = vsel %vm1270, %v1673, %v1704
        %v1707 = vunpack.c.l.s4 1934713408
        %v1708 = vunpack.c.0.s8 %v1707
        %v1709 = vperm.slane %v1703, %v1708
        %v1711 = vunpack.c.l.s4 1934713408
        %v1712 = vunpack.c.0.s8 %v1711
        %v1713 = vperm.slane %v1705, %v1712
        %v1714 = vrot.slane %v1677, 4
        %v1715 = vsel %vm1270, %v1714, %v1665
        %v1716 = vrot.slane %v1665, 4
        %v1717 = vsel %vm1270, %v1677, %v1716
        %v1719 = vunpack.c.l.s4 1934713408
        %v1720 = vunpack.c.0.s8 %v1719
        %v1721 = vperm.slane %v1715, %v1720
        %v1723 = vunpack.c.l.s4 1934713408
        %v1724 = vunpack.c.0.s8 %v1723
        %v1725 = vperm.slane %v1717, %v1724
        %v1726 = vrot.slane %v1709, 4
        %v1727 = vsel %vm1270, %v1726, %v1685
        %v1728 = vrot.slane %v1685, 4
        %v1729 = vsel %vm1270, %v1709, %v1728
        %v1730 = vrot.slane %v1713, 4
        %v1731 = vsel %vm1270, %v1730, %v1689
        %v1732 = vrot.slane %v1689, 4
        %v1733 = vsel %vm1270, %v1713, %v1732
        %v1734 = vrot.slane %v1721, 4
        %v1735 = vsel %vm1270, %v1734, %v1697
        %v1736 = vrot.slane %v1697, 4
        %v1737 = vsel %vm1270, %v1721, %v1736
        %v1738 = vrot.slane %v1725, 4
        %v1739 = vsel %vm1270, %v1738, %v1701
        %v1740 = vrot.slane %v1701, 4
        %v1741 = vsel %vm1270, %v1725, %v1740
        %v1742 = vrot.slane %v1462, 4
        %v1743 = vsel %vm1270, %v1742, %v1398
        %v1744 = vrot.slane %v1398, 4
        %v1745 = vsel %vm1270, %v1462, %v1744
        %v1747 = vunpack.c.l.s4 1983009808
        %v1748 = vunpack.c.0.s8 %v1747
        %v1749 = vperm.slane %v1743, %v1748
        %v1751 = vunpack.c.l.s4 1983009808
        %v1752 = vunpack.c.0.s8 %v1751
        %v1753 = vperm.slane %v1745, %v1752
        %v1754 = vrot.slane %v1494, 4
        %v1755 = vsel %vm1270, %v1754, %v1430
        %v1756 = vrot.slane %v1430, 4
        %v1757 = vsel %vm1270, %v1494, %v1756
        %v1759 = vunpack.c.l.s4 1983009808
        %v1760 = vunpack.c.0.s8 %v1759
        %v1761 = vperm.slane %v1755, %v1760
        %v1763 = vunpack.c.l.s4 1983009808
        %v1764 = vunpack.c.0.s8 %v1763
        %v1765 = vperm.slane %v1757, %v1764
        %v1766 = vrot.slane %v1590, 4
        %v1767 = vsel %vm1270, %v1766, %v1526
        %v1768 = vrot.slane %v1526, 4
        %v1769 = vsel %vm1270, %v1590, %v1768
        %v1771 = vunpack.c.l.s4 1983009808
        %v1772 = vunpack.c.0.s8 %v1771
        %v1773 = vperm.slane %v1767, %v1772
        %v1775 = vunpack.c.l.s4 1983009808
        %v1776 = vunpack.c.0.s8 %v1775
        %v1777 = vperm.slane %v1769, %v1776
        %v1778 = vrot.slane %v1622, 4
        %v1779 = vsel %vm1270, %v1778, %v1558
        %v1780 = vrot.slane %v1558, 4
        %v1781 = vsel %vm1270, %v1622, %v1780
        %v1783 = vunpack.c.l.s4 1983009808
        %v1784 = vunpack.c.0.s8 %v1783
        %v1785 = vperm.slane %v1779, %v1784
        %v1787 = vunpack.c.l.s4 1983009808
        %v1788 = vunpack.c.0.s8 %v1787
        %v1789 = vperm.slane %v1781, %v1788
        %v1790 = vrot.slane %v1761, 4
        %v1791 = vsel %vm1270, %v1790, %v1749
        %v1792 = vrot.slane %v1749, 4
        %v1793 = vsel %vm1270, %v1761, %v1792
        %v1795 = vunpack.c.l.s4 1934713408
        %v1796 = vunpack.c.0.s8 %v1795
        %v1797 = vperm.slane %v1791, %v1796
        %v1799 = vunpack.c.l.s4 1934713408
        %v1800 = vunpack.c.0.s8 %v1799
        %v1801 = vperm.slane %v1793, %v1800
        %v1802 = vrot.slane %v1765, 4
        %v1803 = vsel %vm1270, %v1802, %v1753
        %v1804 = vrot.slane %v1753, 4
        %v1805 = vsel %vm1270, %v1765, %v1804
        %v1807 = vunpack.c.l.s4 1934713408
        %v1808 = vunpack.c.0.s8 %v1807
        %v1809 = vperm.slane %v1803, %v1808
        %v1811 = vunpack.c.l.s4 1934713408
        %v1812 = vunpack.c.0.s8 %v1811
        %v1813 = vperm.slane %v1805, %v1812
        %v1814 = vrot.slane %v1785, 4
        %v1815 = vsel %vm1270, %v1814, %v1773
        %v1816 = vrot.slane %v1773, 4
        %v1817 = vsel %vm1270, %v1785, %v1816
        %v1819 = vunpack.c.l.s4 1934713408
        %v1820 = vunpack.c.0.s8 %v1819
        %v1821 = vperm.slane %v1815, %v1820
        %v1823 = vunpack.c.l.s4 1934713408
        %v1824 = vunpack.c.0.s8 %v1823
        %v1825 = vperm.slane %v1817, %v1824
        %v1826 = vrot.slane %v1789, 4
        %v1827 = vsel %vm1270, %v1826, %v1777
        %v1828 = vrot.slane %v1777, 4
        %v1829 = vsel %vm1270, %v1789, %v1828
        %v1831 = vunpack.c.l.s4 1934713408
        %v1832 = vunpack.c.0.s8 %v1831
        %v1833 = vperm.slane %v1827, %v1832
        %v1835 = vunpack.c.l.s4 1934713408
        %v1836 = vunpack.c.0.s8 %v1835
        %v1837 = vperm.slane %v1829, %v1836
        %v1838 = vrot.slane %v1821, 4
        %v1839 = vsel %vm1270, %v1838, %v1797
        %v1840 = vrot.slane %v1797, 4
        %v1841 = vsel %vm1270, %v1821, %v1840
        %v1842 = vrot.slane %v1825, 4
        %v1843 = vsel %vm1270, %v1842, %v1801
        %v1844 = vrot.slane %v1801, 4
        %v1845 = vsel %vm1270, %v1825, %v1844
        %v1846 = vrot.slane %v1833, 4
        %v1847 = vsel %vm1270, %v1846, %v1809
        %v1848 = vrot.slane %v1809, 4
        %v1849 = vsel %vm1270, %v1833, %v1848
        %v1850 = vrot.slane %v1837, 4
        %v1851 = vsel %vm1270, %v1850, %v1813
        %v1852 = vrot.slane %v1813, 4
        %v1853 = vsel %vm1270, %v1837, %v1852
        %v1856 = vpack.i.b16 %v1839, %v1727
        %v1858 = vshrl.u32 %v1727, 16
        %v1859 = vshrl.u32 %v1839, 16
        %v1860 = vpack.i.b16 %v1859, %v1858
        %v1864 = vpack.i.b16 %v1841, %v1729
        %v1866 = vshrl.u32 %v1729, 16
        %v1867 = vshrl.u32 %v1841, 16
        %v1868 = vpack.i.b16 %v1867, %v1866
        %v1872 = vpack.i.b16 %v1843, %v1731
        %v1874 = vshrl.u32 %v1731, 16
        %v1875 = vshrl.u32 %v1843, 16
        %v1876 = vpack.i.b16 %v1875, %v1874
        %v1880 = vpack.i.b16 %v1845, %v1733
        %v1882 = vshrl.u32 %v1733, 16
        %v1883 = vshrl.u32 %v1845, 16
        %v1884 = vpack.i.b16 %v1883, %v1882
        %v1888 = vpack.i.b16 %v1847, %v1735
        %v1890 = vshrl.u32 %v1735, 16
        %v1891 = vshrl.u32 %v1847, 16
        %v1892 = vpack.i.b16 %v1891, %v1890
        %v1896 = vpack.i.b16 %v1849, %v1737
        %v1898 = vshrl.u32 %v1737, 16
        %v1899 = vshrl.u32 %v1849, 16
        %v1900 = vpack.i.b16 %v1899, %v1898
        %v1904 = vpack.i.b16 %v1851, %v1739
        %v1906 = vshrl.u32 %v1739, 16
        %v1907 = vshrl.u32 %v1851, 16
        %v1908 = vpack.i.b16 %v1907, %v1906
        %v1912 = vpack.i.b16 %v1853, %v1741
        %v1914 = vshrl.u32 %v1741, 16
        %v1915 = vshrl.u32 %v1853, 16
        %v1916 = vpack.i.b16 %v1915, %v1914
        %1918 = vxpose.xlu0.c.b16.start [1/8] %v1856, 128
        %1919 = vxpose.xlu0.c.b16.cont [2/8] 0, 128
        %1920 = vxpose.xlu0.c.b16.cont [3/8] 0, 128
        %1921 = vxpose.xlu0.c.b16.cont [4/8] 0, 128
        %1922 = vxpose.xlu0.c.b16.cont [5/8] 0, 128
        %1923 = vxpose.xlu0.c.b16.cont [6/8] 0, 128
        %1924 = vxpose.xlu0.c.b16.cont [7/8] 0, 128
        %1925 = vxpose.xlu0.c.b16.end [8/8] 0, 128
        %v1926 = vpop.trf.xlu0
        %v1927 = vpop.trf.xlu0
        %v1928 = vpop.trf.xlu0
        %v1929 = vpop.trf.xlu0
        %v1930 = vpop.trf.xlu0
        %v1931 = vpop.trf.xlu0
        %v1932 = vpop.trf.xlu0
        %v1933 = vpop.trf.xlu0
        %1934 = vxpose.xlu0.c.b16.start [1/8] %v1860, 128
        %1935 = vxpose.xlu0.c.b16.cont [2/8] 0, 128
        %1936 = vxpose.xlu0.c.b16.cont [3/8] 0, 128
        %1937 = vxpose.xlu0.c.b16.cont [4/8] 0, 128
        %1938 = vxpose.xlu0.c.b16.cont [5/8] 0, 128
        %1939 = vxpose.xlu0.c.b16.cont [6/8] 0, 128
        %1940 = vxpose.xlu0.c.b16.cont [7/8] 0, 128
        %1941 = vxpose.xlu0.c.b16.end [8/8] 0, 128
        %v1942 = vpop.trf.xlu0
        %v1943 = vpop.trf.xlu0
        %v1944 = vpop.trf.xlu0
        %v1945 = vpop.trf.xlu0
        %v1946 = vpop.trf.xlu0
        %v1947 = vpop.trf.xlu0
        %v1948 = vpop.trf.xlu0
        %v1949 = vpop.trf.xlu0
        %1950 = vxpose.xlu0.c.b16.start [1/8] %v1864, 128
        %1951 = vxpose.xlu0.c.b16.cont [2/8] 0, 128
        %1952 = vxpose.xlu0.c.b16.cont [3/8] 0, 128
        %1953 = vxpose.xlu0.c.b16.cont [4/8] 0, 128
        %1954 = vxpose.xlu0.c.b16.cont [5/8] 0, 128
        %1955 = vxpose.xlu0.c.b16.cont [6/8] 0, 128
        %1956 = vxpose.xlu0.c.b16.cont [7/8] 0, 128
        %1957 = vxpose.xlu0.c.b16.end [8/8] 0, 128
        %v1958 = vpop.trf.xlu0
        %v1959 = vpop.trf.xlu0
        %v1960 = vpop.trf.xlu0
        %v1961 = vpop.trf.xlu0
        %v1962 = vpop.trf.xlu0
        %v1963 = vpop.trf.xlu0
        %v1964 = vpop.trf.xlu0
        %v1965 = vpop.trf.xlu0
        %1966 = vxpose.xlu0.c.b16.start [1/8] %v1868, 128
        %1967 = vxpose.xlu0.c.b16.cont [2/8] 0, 128
        %1968 = vxpose.xlu0.c.b16.cont [3/8] 0, 128
        %1969 = vxpose.xlu0.c.b16.cont [4/8] 0, 128
        %1970 = vxpose.xlu0.c.b16.cont [5/8] 0, 128
        %1971 = vxpose.xlu0.c.b16.cont [6/8] 0, 128
        %1972 = vxpose.xlu0.c.b16.cont [7/8] 0, 128
        %1973 = vxpose.xlu0.c.b16.end [8/8] 0, 128
        %v1974 = vpop.trf.xlu0
        %v1975 = vpop.trf.xlu0
        %v1976 = vpop.trf.xlu0
        %v1977 = vpop.trf.xlu0
        %v1978 = vpop.trf.xlu0
        %v1979 = vpop.trf.xlu0
        %v1980 = vpop.trf.xlu0
        %v1981 = vpop.trf.xlu0
        %1982 = vxpose.xlu0.c.b16.start [1/8] %v1872, 128
        %1983 = vxpose.xlu0.c.b16.cont [2/8] 0, 128
        %1984 = vxpose.xlu0.c.b16.cont [3/8] 0, 128
        %1985 = vxpose.xlu0.c.b16.cont [4/8] 0, 128
        %1986 = vxpose.xlu0.c.b16.cont [5/8] 0, 128
        %1987 = vxpose.xlu0.c.b16.cont [6/8] 0, 128
        %1988 = vxpose.xlu0.c.b16.cont [7/8] 0, 128
        %1989 = vxpose.xlu0.c.b16.end [8/8] 0, 128
        %v1990 = vpop.trf.xlu0
        %v1991 = vpop.trf.xlu0
        %v1992 = vpop.trf.xlu0
        %v1993 = vpop.trf.xlu0
        %v1994 = vpop.trf.xlu0
        %v1995 = vpop.trf.xlu0
        %v1996 = vpop.trf.xlu0
        %v1997 = vpop.trf.xlu0
        %1998 = vxpose.xlu0.c.b16.start [1/8] %v1876, 128
        %1999 = vxpose.xlu0.c.b16.cont [2/8] 0, 128
        %2000 = vxpose.xlu0.c.b16.cont [3/8] 0, 128
        %2001 = vxpose.xlu0.c.b16.cont [4/8] 0, 128
        %2002 = vxpose.xlu0.c.b16.cont [5/8] 0, 128
        %2003 = vxpose.xlu0.c.b16.cont [6/8] 0, 128
        %2004 = vxpose.xlu0.c.b16.cont [7/8] 0, 128
        %2005 = vxpose.xlu0.c.b16.end [8/8] 0, 128
        %v2006 = vpop.trf.xlu0
        %v2007 = vpop.trf.xlu0
        %v2008 = vpop.trf.xlu0
        %v2009 = vpop.trf.xlu0
        %v2010 = vpop.trf.xlu0
        %v2011 = vpop.trf.xlu0
        %v2012 = vpop.trf.xlu0
        %v2013 = vpop.trf.xlu0
        %2014 = vxpose.xlu0.c.b16.start [1/8] %v1880, 128
        %2015 = vxpose.xlu0.c.b16.cont [2/8] 0, 128
        %2016 = vxpose.xlu0.c.b16.cont [3/8] 0, 128
        %2017 = vxpose.xlu0.c.b16.cont [4/8] 0, 128
        %2018 = vxpose.xlu0.c.b16.cont [5/8] 0, 128
        %2019 = vxpose.xlu0.c.b16.cont [6/8] 0, 128
        %2020 = vxpose.xlu0.c.b16.cont [7/8] 0, 128
        %2021 = vxpose.xlu0.c.b16.end [8/8] 0, 128
        %v2022 = vpop.trf.xlu0
        %v2023 = vpop.trf.xlu0
        %v2024 = vpop.trf.xlu0
        %v2025 = vpop.trf.xlu0
        %v2026 = vpop.trf.xlu0
        %v2027 = vpop.trf.xlu0
        %v2028 = vpop.trf.xlu0
        %v2029 = vpop.trf.xlu0
        %2030 = vxpose.xlu0.c.b16.start [1/8] %v1884, 128
        %2031 = vxpose.xlu0.c.b16.cont [2/8] 0, 128
        %2032 = vxpose.xlu0.c.b16.cont [3/8] 0, 128
        %2033 = vxpose.xlu0.c.b16.cont [4/8] 0, 128
        %2034 = vxpose.xlu0.c.b16.cont [5/8] 0, 128
        %2035 = vxpose.xlu0.c.b16.cont [6/8] 0, 128
        %2036 = vxpose.xlu0.c.b16.cont [7/8] 0, 128
        %2037 = vxpose.xlu0.c.b16.end [8/8] 0, 128
        %v2038 = vpop.trf.xlu0
        %v2039 = vpop.trf.xlu0
        %v2040 = vpop.trf.xlu0
        %v2041 = vpop.trf.xlu0
        %v2042 = vpop.trf.xlu0
        %v2043 = vpop.trf.xlu0
        %v2044 = vpop.trf.xlu0
        %v2045 = vpop.trf.xlu0
        %2046 = vxpose.xlu0.c.b16.start [1/8] %v1888, 128
        %2047 = vxpose.xlu0.c.b16.cont [2/8] 0, 128
        %2048 = vxpose.xlu0.c.b16.cont [3/8] 0, 128
        %2049 = vxpose.xlu0.c.b16.cont [4/8] 0, 128
        %2050 = vxpose.xlu0.c.b16.cont [5/8] 0, 128
        %2051 = vxpose.xlu0.c.b16.cont [6/8] 0, 128
        %2052 = vxpose.xlu0.c.b16.cont [7/8] 0, 128
        %2053 = vxpose.xlu0.c.b16.end [8/8] 0, 128
        %v2054 = vpop.trf.xlu0
        %v2055 = vpop.trf.xlu0
        %v2056 = vpop.trf.xlu0
        %v2057 = vpop.trf.xlu0
        %v2058 = vpop.trf.xlu0
        %v2059 = vpop.trf.xlu0
        %v2060 = vpop.trf.xlu0
        %v2061 = vpop.trf.xlu0
        %2062 = vxpose.xlu0.c.b16.start [1/8] %v1892, 128
        %2063 = vxpose.xlu0.c.b16.cont [2/8] 0, 128
        %2064 = vxpose.xlu0.c.b16.cont [3/8] 0, 128
        %2065 = vxpose.xlu0.c.b16.cont [4/8] 0, 128
        %2066 = vxpose.xlu0.c.b16.cont [5/8] 0, 128
        %2067 = vxpose.xlu0.c.b16.cont [6/8] 0, 128
        %2068 = vxpose.xlu0.c.b16.cont [7/8] 0, 128
        %2069 = vxpose.xlu0.c.b16.end [8/8] 0, 128
        %v2070 = vpop.trf.xlu0
        %v2071 = vpop.trf.xlu0
        %v2072 = vpop.trf.xlu0
        %v2073 = vpop.trf.xlu0
        %v2074 = vpop.trf.xlu0
        %v2075 = vpop.trf.xlu0
        %v2076 = vpop.trf.xlu0
        %v2077 = vpop.trf.xlu0
        %2078 = vxpose.xlu0.c.b16.start [1/8] %v1896, 128
        %2079 = vxpose.xlu0.c.b16.cont [2/8] 0, 128
        %2080 = vxpose.xlu0.c.b16.cont [3/8] 0, 128
        %2081 = vxpose.xlu0.c.b16.cont [4/8] 0, 128
        %2082 = vxpose.xlu0.c.b16.cont [5/8] 0, 128
        %2083 = vxpose.xlu0.c.b16.cont [6/8] 0, 128
        %2084 = vxpose.xlu0.c.b16.cont [7/8] 0, 128
        %2085 = vxpose.xlu0.c.b16.end [8/8] 0, 128
        %v2086 = vpop.trf.xlu0
        %v2087 = vpop.trf.xlu0
        %v2088 = vpop.trf.xlu0
        %v2089 = vpop.trf.xlu0
        %v2090 = vpop.trf.xlu0
        %v2091 = vpop.trf.xlu0
        %v2092 = vpop.trf.xlu0
        %v2093 = vpop.trf.xlu0
        %2094 = vxpose.xlu0.c.b16.start [1/8] %v1900, 128
        %2095 = vxpose.xlu0.c.b16.cont [2/8] 0, 128
        %2096 = vxpose.xlu0.c.b16.cont [3/8] 0, 128
        %2097 = vxpose.xlu0.c.b16.cont [4/8] 0, 128
        %2098 = vxpose.xlu0.c.b16.cont [5/8] 0, 128
        %2099 = vxpose.xlu0.c.b16.cont [6/8] 0, 128
        %2100 = vxpose.xlu0.c.b16.cont [7/8] 0, 128
        %2101 = vxpose.xlu0.c.b16.end [8/8] 0, 128
        %v2102 = vpop.trf.xlu0
        %v2103 = vpop.trf.xlu0
        %v2104 = vpop.trf.xlu0
        %v2105 = vpop.trf.xlu0
        %v2106 = vpop.trf.xlu0
        %v2107 = vpop.trf.xlu0
        %v2108 = vpop.trf.xlu0
        %v2109 = vpop.trf.xlu0
        %2110 = vxpose.xlu0.c.b16.start [1/8] %v1904, 128
        %2111 = vxpose.xlu0.c.b16.cont [2/8] 0, 128
        %2112 = vxpose.xlu0.c.b16.cont [3/8] 0, 128
        %2113 = vxpose.xlu0.c.b16.cont [4/8] 0, 128
        %2114 = vxpose.xlu0.c.b16.cont [5/8] 0, 128
        %2115 = vxpose.xlu0.c.b16.cont [6/8] 0, 128
        %2116 = vxpose.xlu0.c.b16.cont [7/8] 0, 128
        %2117 = vxpose.xlu0.c.b16.end [8/8] 0, 128
        %v2118 = vpop.trf.xlu0
        %v2119 = vpop.trf.xlu0
        %v2120 = vpop.trf.xlu0
        %v2121 = vpop.trf.xlu0
        %v2122 = vpop.trf.xlu0
        %v2123 = vpop.trf.xlu0
        %v2124 = vpop.trf.xlu0
        %v2125 = vpop.trf.xlu0
        %2126 = vxpose.xlu0.c.b16.start [1/8] %v1908, 128
        %2127 = vxpose.xlu0.c.b16.cont [2/8] 0, 128
        %2128 = vxpose.xlu0.c.b16.cont [3/8] 0, 128
        %2129 = vxpose.xlu0.c.b16.cont [4/8] 0, 128
        %2130 = vxpose.xlu0.c.b16.cont [5/8] 0, 128
        %2131 = vxpose.xlu0.c.b16.cont [6/8] 0, 128
        %2132 = vxpose.xlu0.c.b16.cont [7/8] 0, 128
        %2133 = vxpose.xlu0.c.b16.end [8/8] 0, 128
        %v2134 = vpop.trf.xlu0
        %v2135 = vpop.trf.xlu0
        %v2136 = vpop.trf.xlu0
        %v2137 = vpop.trf.xlu0
        %v2138 = vpop.trf.xlu0
        %v2139 = vpop.trf.xlu0
        %v2140 = vpop.trf.xlu0
        %v2141 = vpop.trf.xlu0
        %2142 = vxpose.xlu0.c.b16.start [1/8] %v1912, 128
        %2143 = vxpose.xlu0.c.b16.cont [2/8] 0, 128
        %2144 = vxpose.xlu0.c.b16.cont [3/8] 0, 128
        %2145 = vxpose.xlu0.c.b16.cont [4/8] 0, 128
        %2146 = vxpose.xlu0.c.b16.cont [5/8] 0, 128
        %2147 = vxpose.xlu0.c.b16.cont [6/8] 0, 128
        %2148 = vxpose.xlu0.c.b16.cont [7/8] 0, 128
        %2149 = vxpose.xlu0.c.b16.end [8/8] 0, 128
        %v2150 = vpop.trf.xlu0
        %v2151 = vpop.trf.xlu0
        %v2152 = vpop.trf.xlu0
        %v2153 = vpop.trf.xlu0
        %v2154 = vpop.trf.xlu0
        %v2155 = vpop.trf.xlu0
        %v2156 = vpop.trf.xlu0
        %v2157 = vpop.trf.xlu0
        %2158 = vxpose.xlu0.c.b16.start [1/8] %v1916, 128
        %2159 = vxpose.xlu0.c.b16.cont [2/8] 0, 128
        %2160 = vxpose.xlu0.c.b16.cont [3/8] 0, 128
        %2161 = vxpose.xlu0.c.b16.cont [4/8] 0, 128
        %2162 = vxpose.xlu0.c.b16.cont [5/8] 0, 128
        %2163 = vxpose.xlu0.c.b16.cont [6/8] 0, 128
        %2164 = vxpose.xlu0.c.b16.cont [7/8] 0, 128
        %2165 = vxpose.xlu0.c.b16.end [8/8] 0, 128
        %v2166 = vpop.trf.xlu0
        %v2167 = vpop.trf.xlu0
        %v2168 = vpop.trf.xlu0
        %v2169 = vpop.trf.xlu0
        %v2170 = vpop.trf.xlu0
        %v2171 = vpop.trf.xlu0
        %v2172 = vpop.trf.xlu0
        %v2173 = vpop.trf.xlu0
        %v2174 = vrot.slane %v1990, 4
        %v2175 = vsel %vm1270, %v2174, %v1926
        %v2177 = vunpack.c.l.s4 1983009808
        %v2178 = vunpack.c.0.s8 %v2177
        %v2179 = vperm.slane %v2175, %v2178
        %v2180 = vrot.slane %v2022, 4
        %v2181 = vsel %vm1270, %v2180, %v1958
        %v2183 = vunpack.c.l.s4 1983009808
        %v2184 = vunpack.c.0.s8 %v2183
        %v2185 = vperm.slane %v2181, %v2184
        %v2186 = vrot.slane %v2118, 4
        %v2187 = vsel %vm1270, %v2186, %v2054
        %v2189 = vunpack.c.l.s4 1983009808
        %v2190 = vunpack.c.0.s8 %v2189
        %v2191 = vperm.slane %v2187, %v2190
        %v2192 = vrot.slane %v2150, 4
        %v2193 = vsel %vm1270, %v2192, %v2086
        %v2195 = vunpack.c.l.s4 1983009808
        %v2196 = vunpack.c.0.s8 %v2195
        %v2197 = vperm.slane %v2193, %v2196
        %v2198 = vrot.slane %v2185, 4
        %v2199 = vsel %vm1270, %v2198, %v2179
        %v2201 = vunpack.c.l.s4 1934713408
        %v2202 = vunpack.c.0.s8 %v2201
        %v2203 = vperm.slane %v2199, %v2202
        %v2204 = vrot.slane %v2197, 4
        %v2205 = vsel %vm1270, %v2204, %v2191
        %v2207 = vunpack.c.l.s4 1934713408
        %v2208 = vunpack.c.0.s8 %v2207
        %v2209 = vperm.slane %v2205, %v2208
        %v2210 = vrot.slane %v2209, 4
        %v2211 = vsel %vm1270, %v2210, %v2203
        %v2212 = vrot.slane %v2203, 4
        %v2213 = vsel %vm1270, %v2209, %v2212
        %v2214 = vrot.slane %v2006, 4
        %v2215 = vsel %vm1270, %v2214, %v1942
        %v2217 = vunpack.c.l.s4 1983009808
        %v2218 = vunpack.c.0.s8 %v2217
        %v2219 = vperm.slane %v2215, %v2218
        %v2220 = vrot.slane %v2038, 4
        %v2221 = vsel %vm1270, %v2220, %v1974
        %v2223 = vunpack.c.l.s4 1983009808
        %v2224 = vunpack.c.0.s8 %v2223
        %v2225 = vperm.slane %v2221, %v2224
        %v2226 = vrot.slane %v2134, 4
        %v2227 = vsel %vm1270, %v2226, %v2070
        %v2229 = vunpack.c.l.s4 1983009808
        %v2230 = vunpack.c.0.s8 %v2229
        %v2231 = vperm.slane %v2227, %v2230
        %v2232 = vrot.slane %v2166, 4
        %v2233 = vsel %vm1270, %v2232, %v2102
        %v2235 = vunpack.c.l.s4 1983009808
        %v2236 = vunpack.c.0.s8 %v2235
        %v2237 = vperm.slane %v2233, %v2236
        %v2238 = vrot.slane %v2225, 4
        %v2239 = vsel %vm1270, %v2238, %v2219
        %v2241 = vunpack.c.l.s4 1934713408
        %v2242 = vunpack.c.0.s8 %v2241
        %v2243 = vperm.slane %v2239, %v2242
        %v2244 = vrot.slane %v2237, 4
        %v2245 = vsel %vm1270, %v2244, %v2231
        %v2247 = vunpack.c.l.s4 1934713408
        %v2248 = vunpack.c.0.s8 %v2247
        %v2249 = vperm.slane %v2245, %v2248
        %v2250 = vrot.slane %v2249, 4
        %v2251 = vsel %vm1270, %v2250, %v2243
        %v2252 = vrot.slane %v2243, 4
        %v2253 = vsel %vm1270, %v2249, %v2252
        %v2256 = vpack.i.b16 %v2251, %v2211
        %v2258 = vshrl.u32 %v2211, 16
        %v2259 = vshrl.u32 %v2251, 16
        %v2260 = vpack.i.b16 %v2259, %v2258
        %v2264 = vpack.i.b16 %v2253, %v2213
        %v2266 = vshrl.u32 %v2213, 16
        %v2267 = vshrl.u32 %v2253, 16
        %v2268 = vpack.i.b16 %v2267, %v2266
        %v2270 = vunpack.c.l.b16 %v1352
        %v2271 = vunpack.c.l.b16 %v1364
        %v2272 = vpack.c.b16 %v2271, %v2270
        %vm2273 = vcmask 130048
        %v2275 = vsel %vm2273, %v2272, 0
        %2277 = vmatpush.bf16.msra.mxu0 0
        %2278 = vmatpush.bf16.msra.mxu0 0
        %2279 = vmatpush.bf16.msra.mxu0 0
        %2280 = vmatpush.bf16.msra.mxu0 0
        %2281 = vmatpush.bf16.msra.mxu0 0
        %2282 = vmatpush.bf16.msra.mxu0 0
        %2283 = vmatpush.bf16.msra.mxu0 0
        %2284 = vmatpush.bf16.msra.mxu0 %v2256
        %2285 = vmatmul.bf16.gmra.mxu0 %v2275
        %v2286 = vpop.f32.mrf.mxu0
        %v2287 = vadd.f32 0.0, %v2286
        %v2288 = vpop.f32.mrf.mxu0
        %v2289 = vadd.f32 0.0, %v2288
        %2290 = vdwg.mxu0
        %v2291 = vunpack.c.l.b16 %v1355
        %v2292 = vunpack.c.l.b16 %v1367
        %v2293 = vpack.c.b16 %v2292, %v2291
        %v2295 = vsel %vm2273, %v2293, 0
        %2297 = vmatpush.bf16.msra.mxu0 0
        %2298 = vmatpush.bf16.msra.mxu0 0
        %2299 = vmatpush.bf16.msra.mxu0 0
        %2300 = vmatpush.bf16.msra.mxu0 0
        %2301 = vmatpush.bf16.msra.mxu0 0
        %2302 = vmatpush.bf16.msra.mxu0 0
        %2303 = vmatpush.bf16.msra.mxu0 0
        %2304 = vmatpush.bf16.msra.mxu0 %v2260
        %2305 = vmatmul.bf16.gmra.mxu0 %v2295
        %v2306 = vpop.f32.mrf.mxu0
        %v2307 = vadd.f32 0.0, %v2306
        %v2308 = vpop.f32.mrf.mxu0
        %v2309 = vadd.f32 0.0, %v2308
        %2310 = vdwg.mxu0
        %v2311 = vunpack.c.l.b16 %v1358
        %v2312 = vunpack.c.l.b16 %v1370
        %v2313 = vpack.c.b16 %v2312, %v2311
        %v2315 = vsel %vm2273, %v2313, 0
        %2317 = vmatpush.bf16.msra.mxu0 0
        %2318 = vmatpush.bf16.msra.mxu0 0
        %2319 = vmatpush.bf16.msra.mxu0 0
        %2320 = vmatpush.bf16.msra.mxu0 0
        %2321 = vmatpush.bf16.msra.mxu0 0
        %2322 = vmatpush.bf16.msra.mxu0 0
        %2323 = vmatpush.bf16.msra.mxu0 0
        %2324 = vmatpush.bf16.msra.mxu0 %v2264
        %2325 = vmatmul.bf16.gmra.mxu0 %v2315
        %v2326 = vpop.f32.mrf.mxu0
        %v2327 = vadd.f32 0.0, %v2326
        %v2328 = vpop.f32.mrf.mxu0
        %v2329 = vadd.f32 0.0, %v2328
        %2330 = vdwg.mxu0
        %v2331 = vunpack.c.l.b16 %v1361
        %v2332 = vunpack.c.l.b16 %v1373
        %v2333 = vpack.c.b16 %v2332, %v2331
        %v2335 = vsel %vm2273, %v2333, 0
        %2337 = vmatpush.bf16.msra.mxu0 0
        %2338 = vmatpush.bf16.msra.mxu0 0
        %2339 = vmatpush.bf16.msra.mxu0 0
        %2340 = vmatpush.bf16.msra.mxu0 0
        %2341 = vmatpush.bf16.msra.mxu0 0
        %2342 = vmatpush.bf16.msra.mxu0 0
        %2343 = vmatpush.bf16.msra.mxu0 0
        %2344 = vmatpush.bf16.msra.mxu0 %v2268
        %2345 = vmatmul.bf16.gmra.mxu0 %v2335
        %v2346 = vpop.f32.mrf.mxu0
        %v2347 = vadd.f32 0.0, %v2346
        %v2348 = vpop.f32.mrf.mxu0
        %v2349 = vadd.f32 0.0, %v2348
        %2350 = vdwg.mxu0
        %v2351 = vsel %vm2273, %v2287, -inf
        %2352 = vmax.xlane.f32.xlu0 %v2351
        %v2353 = vpop.xlane.xlu0 %2352
        %v2354 = vsel %vm2273, %v2289, -inf
        %2355 = vmax.xlane.f32.xlu0 %v2354
        %v2356 = vpop.xlane.xlu0 %2355
        %v2357 = vsel %vm2273, %v2307, -inf
        %2358 = vmax.xlane.f32.xlu0 %v2357
        %v2359 = vpop.xlane.xlu0 %2358
        %v2360 = vsel %vm2273, %v2309, -inf
        %2361 = vmax.xlane.f32.xlu0 %v2360
        %v2362 = vpop.xlane.xlu0 %2361
        %v2363 = vsel %vm2273, %v2327, -inf
        %2364 = vmax.xlane.f32.xlu0 %v2363
        %v2365 = vpop.xlane.xlu0 %2364
        %v2366 = vsel %vm2273, %v2329, -inf
        %2367 = vmax.xlane.f32.xlu0 %v2366
        %v2368 = vpop.xlane.xlu0 %2367
        %v2369 = vsel %vm2273, %v2347, -inf
        %2370 = vmax.xlane.f32.xlu0 %v2369
        %v2371 = vpop.xlane.xlu0 %2370
        %v2372 = vsel %vm2273, %v2349, -inf
        %2373 = vmax.xlane.f32.xlu0 %v2372
        %v2374 = vpop.xlane.xlu0 %2373
        %v2375 = vsub.f32 %v2287, %v2353
        %v2376 = vsub.f32 %v2289, %v2356
        %v2377 = vsub.f32 %v2307, %v2359
        %v2378 = vsub.f32 %v2309, %v2362
        %v2379 = vsub.f32 %v2327, %v2365
        %v2380 = vsub.f32 %v2329, %v2368
        %v2381 = vsub.f32 %v2347, %v2371
        %v2382 = vsub.f32 %v2349, %v2374
        %v2383 = vmul.f32 %v2375, 1.442695
        %v2384 = vpow.pop %v2383
        %v2385 = vmul.f32 %v2376, 1.442695
        %v2386 = vpow.pop %v2385
        %v2387 = vmul.f32 %v2377, 1.442695
        %v2388 = vpow.pop %v2387
        %v2389 = vmul.f32 %v2378, 1.442695
        %v2390 = vpow.pop %v2389
        %v2391 = vmul.f32 %v2379, 1.442695
        %v2392 = vpow.pop %v2391
        %v2393 = vmul.f32 %v2380, 1.442695
        %v2394 = vpow.pop %v2393
        %v2395 = vmul.f32 %v2381, 1.442695
        %v2396 = vpow.pop %v2395
        %v2397 = vmul.f32 %v2382, 1.442695
        %v2398 = vpow.pop %v2397
        %v2399 = vsel %vm2273, %v2384, 0.0
        %2400 = vadd.xlane.f32.xlu0 %v2399
        %v2401 = vpop.xlane.xlu0 %2400
        %v2402 = vsel %vm2273, %v2386, 0.0
        %2403 = vadd.xlane.f32.xlu0 %v2402
        %v2404 = vpop.xlane.xlu0 %2403
        %v2405 = vsel %vm2273, %v2388, 0.0
        %2406 = vadd.xlane.f32.xlu0 %v2405
        %v2407 = vpop.xlane.xlu0 %2406
        %v2408 = vsel %vm2273, %v2390, 0.0
        %2409 = vadd.xlane.f32.xlu0 %v2408
        %v2410 = vpop.xlane.xlu0 %2409
        %v2411 = vsel %vm2273, %v2392, 0.0
        %2412 = vadd.xlane.f32.xlu0 %v2411
        %v2413 = vpop.xlane.xlu0 %2412
        %v2414 = vsel %vm2273, %v2394, 0.0
        %2415 = vadd.xlane.f32.xlu0 %v2414
        %v2416 = vpop.xlane.xlu0 %2415
        %v2417 = vsel %vm2273, %v2396, 0.0
        %2418 = vadd.xlane.f32.xlu0 %v2417
        %v2419 = vpop.xlane.xlu0 %2418
        %v2420 = vsel %vm2273, %v2398, 0.0
        %2421 = vadd.xlane.f32.xlu0 %v2420
        %v2422 = vpop.xlane.xlu0 %2421
        %v2423 = vrcp.pop %v2401
        %v2424 = vmul.f32 %v2401, %v2423
        %v2425 = vsub.f32 1.0, %v2424
        %v2426 = vmul.f32 %v2423, %v2425
        %v2427 = vadd.f32 %v2423, %v2426
        %vm2428 = vweird.f32 %v2401
        %vm2429 = vweird.f32 %v2423
        %vm2430 = vmor %vm2428, %vm2429
        %v2431 = vsel %vm2430, %v2423, %v2427
        %v2432 = vand.u32 2147483647, %v2401
        %vm2433 = vcmp.eq.f32.partialorder %v2432, 8.507059e+37
        %v2434 = vand.u32 %v2401, 2147483648
        %v2435 = vor.u32 1.1754944e-38, %v2434
        %v2436 = vsel %vm2433, %v2435, %v2431
        %v2437 = vmul.f32 %v2384, %v2436
        %v2438 = vrcp.pop %v2404
        %v2439 = vmul.f32 %v2404, %v2438
        %v2440 = vsub.f32 1.0, %v2439
        %v2441 = vmul.f32 %v2438, %v2440
        %v2442 = vadd.f32 %v2438, %v2441
        %vm2443 = vweird.f32 %v2404
        %vm2444 = vweird.f32 %v2438
        %vm2445 = vmor %vm2443, %vm2444
        %v2446 = vsel %vm2445, %v2438, %v2442
        %v2447 = vand.u32 2147483647, %v2404
        %vm2448 = vcmp.eq.f32.partialorder %v2447, 8.507059e+37
        %v2449 = vand.u32 %v2404, 2147483648
        %v2450 = vor.u32 1.1754944e-38, %v2449
        %v2451 = vsel %vm2448, %v2450, %v2446
        %v2452 = vmul.f32 %v2386, %v2451
        %v2453 = vrcp.pop %v2407
        %v2454 = vmul.f32 %v2407, %v2453
        %v2455 = vsub.f32 1.0, %v2454
        %v2456 = vmul.f32 %v2453, %v2455
        %v2457 = vadd.f32 %v2453, %v2456
        %vm2458 = vweird.f32 %v2407
        %vm2459 = vweird.f32 %v2453
        %vm2460 = vmor %vm2458, %vm2459
        %v2461 = vsel %vm2460, %v2453, %v2457
        %v2462 = vand.u32 2147483647, %v2407
        %vm2463 = vcmp.eq.f32.partialorder %v2462, 8.507059e+37
        %v2464 = vand.u32 %v2407, 2147483648
        %v2465 = vor.u32 1.1754944e-38, %v2464
        %v2466 = vsel %vm2463, %v2465, %v2461
        %v2467 = vmul.f32 %v2388, %v2466
        %v2468 = vrcp.pop %v2410
        %v2469 = vmul.f32 %v2410, %v2468
        %v2470 = vsub.f32 1.0, %v2469
        %v2471 = vmul.f32 %v2468, %v2470
        %v2472 = vadd.f32 %v2468, %v2471
        %vm2473 = vweird.f32 %v2410
        %vm2474 = vweird.f32 %v2468
        %vm2475 = vmor %vm2473, %vm2474
        %v2476 = vsel %vm2475, %v2468, %v2472
        %v2477 = vand.u32 2147483647, %v2410
        %vm2478 = vcmp.eq.f32.partialorder %v2477, 8.507059e+37
        %v2479 = vand.u32 %v2410, 2147483648
        %v2480 = vor.u32 1.1754944e-38, %v2479
        %v2481 = vsel %vm2478, %v2480, %v2476
        %v2482 = vmul.f32 %v2390, %v2481
        %v2483 = vrcp.pop %v2413
        %v2484 = vmul.f32 %v2413, %v2483
        %v2485 = vsub.f32 1.0, %v2484
        %v2486 = vmul.f32 %v2483, %v2485
        %v2487 = vadd.f32 %v2483, %v2486
        %vm2488 = vweird.f32 %v2413
        %vm2489 = vweird.f32 %v2483
        %vm2490 = vmor %vm2488, %vm2489
        %v2491 = vsel %vm2490, %v2483, %v2487
        %v2492 = vand.u32 2147483647, %v2413
        %vm2493 = vcmp.eq.f32.partialorder %v2492, 8.507059e+37
        %v2494 = vand.u32 %v2413, 2147483648
        %v2495 = vor.u32 1.1754944e-38, %v2494
        %v2496 = vsel %vm2493, %v2495, %v2491
        %v2497 = vmul.f32 %v2392, %v2496
        %v2498 = vrcp.pop %v2416
        %v2499 = vmul.f32 %v2416, %v2498
        %v2500 = vsub.f32 1.0, %v2499
        %v2501 = vmul.f32 %v2498, %v2500
        %v2502 = vadd.f32 %v2498, %v2501
        %vm2503 = vweird.f32 %v2416
        %vm2504 = vweird.f32 %v2498
        %vm2505 = vmor %vm2503, %vm2504
        %v2506 = vsel %vm2505, %v2498, %v2502
        %v2507 = vand.u32 2147483647, %v2416
        %vm2508 = vcmp.eq.f32.partialorder %v2507, 8.507059e+37
        %v2509 = vand.u32 %v2416, 2147483648
        %v2510 = vor.u32 1.1754944e-38, %v2509
        %v2511 = vsel %vm2508, %v2510, %v2506
        %v2512 = vmul.f32 %v2394, %v2511
        %v2513 = vrcp.pop %v2419
        %v2514 = vmul.f32 %v2419, %v2513
        %v2515 = vsub.f32 1.0, %v2514
        %v2516 = vmul.f32 %v2513, %v2515
        %v2517 = vadd.f32 %v2513, %v2516
        %vm2518 = vweird.f32 %v2419
        %vm2519 = vweird.f32 %v2513
        %vm2520 = vmor %vm2518, %vm2519
        %v2521 = vsel %vm2520, %v2513, %v2517
        %v2522 = vand.u32 2147483647, %v2419
        %vm2523 = vcmp.eq.f32.partialorder %v2522, 8.507059e+37
        %v2524 = vand.u32 %v2419, 2147483648
        %v2525 = vor.u32 1.1754944e-38, %v2524
        %v2526 = vsel %vm2523, %v2525, %v2521
        %v2527 = vmul.f32 %v2396, %v2526
        %v2528 = vrcp.pop %v2422
        %v2529 = vmul.f32 %v2422, %v2528
        %v2530 = vsub.f32 1.0, %v2529
        %v2531 = vmul.f32 %v2528, %v2530
        %v2532 = vadd.f32 %v2528, %v2531
        %vm2533 = vweird.f32 %v2422
        %vm2534 = vweird.f32 %v2528
        %vm2535 = vmor %vm2533, %vm2534
        %v2536 = vsel %vm2535, %v2528, %v2532
        %v2537 = vand.u32 2147483647, %v2422
        %vm2538 = vcmp.eq.f32.partialorder %v2537, 8.507059e+37
        %v2539 = vand.u32 %v2422, 2147483648
        %v2540 = vor.u32 1.1754944e-38, %v2539
        %v2541 = vsel %vm2538, %v2540, %v2536
        %v2542 = vmul.f32 %v2398, %v2541
        %v2543 = vpack.c.bf16 %v2437, %v2437
        %v2544 = vpack.c.bf16 %v2452, %v2452
        %v2545 = vpack.c.bf16 %v2467, %v2467
        %v2546 = vpack.c.bf16 %v2482, %v2482
        %v2547 = vpack.c.bf16 %v2497, %v2497
        %v2548 = vpack.c.bf16 %v2512, %v2512
        %v2549 = vpack.c.bf16 %v2527, %v2527
        %v2550 = vpack.c.bf16 %v2542, %v2542
        %2551 = vxpose.xlu0.c.b16.start [1/8] %v1119, 128
        %2552 = vxpose.xlu0.c.b16.cont [2/8] 0, 128
        %2553 = vxpose.xlu0.c.b16.cont [3/8] 0, 128
        %2554 = vxpose.xlu0.c.b16.cont [4/8] 0, 128
        %2555 = vxpose.xlu0.c.b16.cont [5/8] 0, 128
        %2556 = vxpose.xlu0.c.b16.cont [6/8] 0, 128
        %2557 = vxpose.xlu0.c.b16.cont [7/8] 0, 128
        %2558 = vxpose.xlu0.c.b16.end [8/8] 0, 128
        %v2559 = vpop.trf.xlu0
        %v2560 = vpop.trf.xlu0
        %v2561 = vpop.trf.xlu0
        %v2562 = vpop.trf.xlu0
        %v2563 = vpop.trf.xlu0
        %v2564 = vpop.trf.xlu0
        %v2565 = vpop.trf.xlu0
        %v2566 = vpop.trf.xlu0
        %2567 = vxpose.xlu0.c.b16.start [1/8] %v1120, 128
        %2568 = vxpose.xlu0.c.b16.cont [2/8] 0, 128
        %2569 = vxpose.xlu0.c.b16.cont [3/8] 0, 128
        %2570 = vxpose.xlu0.c.b16.cont [4/8] 0, 128
        %2571 = vxpose.xlu0.c.b16.cont [5/8] 0, 128
        %2572 = vxpose.xlu0.c.b16.cont [6/8] 0, 128
        %2573 = vxpose.xlu0.c.b16.cont [7/8] 0, 128
        %2574 = vxpose.xlu0.c.b16.end [8/8] 0, 128
        %v2575 = vpop.trf.xlu0
        %v2576 = vpop.trf.xlu0
        %v2577 = vpop.trf.xlu0
        %v2578 = vpop.trf.xlu0
        %v2579 = vpop.trf.xlu0
        %v2580 = vpop.trf.xlu0
        %v2581 = vpop.trf.xlu0
        %v2582 = vpop.trf.xlu0
        %2583 = vxpose.xlu0.c.b16.start [1/8] %v1121, 128
        %2584 = vxpose.xlu0.c.b16.cont [2/8] 0, 128
        %2585 = vxpose.xlu0.c.b16.cont [3/8] 0, 128
        %2586 = vxpose.xlu0.c.b16.cont [4/8] 0, 128
        %2587 = vxpose.xlu0.c.b16.cont [5/8] 0, 128
        %2588 = vxpose.xlu0.c.b16.cont [6/8] 0, 128
        %2589 = vxpose.xlu0.c.b16.cont [7/8] 0, 128
        %2590 = vxpose.xlu0.c.b16.end [8/8] 0, 128
        %v2591 = vpop.trf.xlu0
        %v2592 = vpop.trf.xlu0
        %v2593 = vpop.trf.xlu0
        %v2594 = vpop.trf.xlu0
        %v2595 = vpop.trf.xlu0
        %v2596 = vpop.trf.xlu0
        %v2597 = vpop.trf.xlu0
        %v2598 = vpop.trf.xlu0
        %2599 = vxpose.xlu0.c.b16.start [1/8] %v1122, 128
        %2600 = vxpose.xlu0.c.b16.cont [2/8] 0, 128
        %2601 = vxpose.xlu0.c.b16.cont [3/8] 0, 128
        %2602 = vxpose.xlu0.c.b16.cont [4/8] 0, 128
        %2603 = vxpose.xlu0.c.b16.cont [5/8] 0, 128
        %2604 = vxpose.xlu0.c.b16.cont [6/8] 0, 128
        %2605 = vxpose.xlu0.c.b16.cont [7/8] 0, 128
        %2606 = vxpose.xlu0.c.b16.end [8/8] 0, 128
        %v2607 = vpop.trf.xlu0
        %v2608 = vpop.trf.xlu0
        %v2609 = vpop.trf.xlu0
        %v2610 = vpop.trf.xlu0
        %v2611 = vpop.trf.xlu0
        %v2612 = vpop.trf.xlu0
        %v2613 = vpop.trf.xlu0
        %v2614 = vpop.trf.xlu0
        %2615 = vxpose.xlu0.c.b16.start [1/8] %v1123, 128
        %2616 = vxpose.xlu0.c.b16.cont [2/8] 0, 128
        %2617 = vxpose.xlu0.c.b16.cont [3/8] 0, 128
        %2618 = vxpose.xlu0.c.b16.cont [4/8] 0, 128
        %2619 = vxpose.xlu0.c.b16.cont [5/8] 0, 128
        %2620 = vxpose.xlu0.c.b16.cont [6/8] 0, 128
        %2621 = vxpose.xlu0.c.b16.cont [7/8] 0, 128
        %2622 = vxpose.xlu0.c.b16.end [8/8] 0, 128
        %v2623 = vpop.trf.xlu0
        %v2624 = vpop.trf.xlu0
        %v2625 = vpop.trf.xlu0
        %v2626 = vpop.trf.xlu0
        %v2627 = vpop.trf.xlu0
        %v2628 = vpop.trf.xlu0
        %v2629 = vpop.trf.xlu0
        %v2630 = vpop.trf.xlu0
        %2631 = vxpose.xlu0.c.b16.start [1/8] %v1124, 128
        %2632 = vxpose.xlu0.c.b16.cont [2/8] 0, 128
        %2633 = vxpose.xlu0.c.b16.cont [3/8] 0, 128
        %2634 = vxpose.xlu0.c.b16.cont [4/8] 0, 128
        %2635 = vxpose.xlu0.c.b16.cont [5/8] 0, 128
        %2636 = vxpose.xlu0.c.b16.cont [6/8] 0, 128
        %2637 = vxpose.xlu0.c.b16.cont [7/8] 0, 128
        %2638 = vxpose.xlu0.c.b16.end [8/8] 0, 128
        %v2639 = vpop.trf.xlu0
        %v2640 = vpop.trf.xlu0
        %v2641 = vpop.trf.xlu0
        %v2642 = vpop.trf.xlu0
        %v2643 = vpop.trf.xlu0
        %v2644 = vpop.trf.xlu0
        %v2645 = vpop.trf.xlu0
        %v2646 = vpop.trf.xlu0
        %2647 = vxpose.xlu0.c.b16.start [1/8] %v1125, 128
        %2648 = vxpose.xlu0.c.b16.cont [2/8] 0, 128
        %2649 = vxpose.xlu0.c.b16.cont [3/8] 0, 128
        %2650 = vxpose.xlu0.c.b16.cont [4/8] 0, 128
        %2651 = vxpose.xlu0.c.b16.cont [5/8] 0, 128
        %2652 = vxpose.xlu0.c.b16.cont [6/8] 0, 128
        %2653 = vxpose.xlu0.c.b16.cont [7/8] 0, 128
        %2654 = vxpose.xlu0.c.b16.end [8/8] 0, 128
        %v2655 = vpop.trf.xlu0
        %v2656 = vpop.trf.xlu0
        %v2657 = vpop.trf.xlu0
        %v2658 = vpop.trf.xlu0
        %v2659 = vpop.trf.xlu0
        %v2660 = vpop.trf.xlu0
        %v2661 = vpop.trf.xlu0
        %v2662 = vpop.trf.xlu0
        %2663 = vxpose.xlu0.c.b16.start [1/8] %v1126, 128
        %2664 = vxpose.xlu0.c.b16.cont [2/8] 0, 128
        %2665 = vxpose.xlu0.c.b16.cont [3/8] 0, 128
        %2666 = vxpose.xlu0.c.b16.cont [4/8] 0, 128
        %2667 = vxpose.xlu0.c.b16.cont [5/8] 0, 128
        %2668 = vxpose.xlu0.c.b16.cont [6/8] 0, 128
        %2669 = vxpose.xlu0.c.b16.cont [7/8] 0, 128
        %2670 = vxpose.xlu0.c.b16.end [8/8] 0, 128
        %v2671 = vpop.trf.xlu0
        %v2672 = vpop.trf.xlu0
        %v2673 = vpop.trf.xlu0
        %v2674 = vpop.trf.xlu0
        %v2675 = vpop.trf.xlu0
        %v2676 = vpop.trf.xlu0
        %v2677 = vpop.trf.xlu0
        %v2678 = vpop.trf.xlu0
        %2679 = vxpose.xlu0.c.b16.start [1/8] %v1127, 128
        %2680 = vxpose.xlu0.c.b16.cont [2/8] 0, 128
        %2681 = vxpose.xlu0.c.b16.cont [3/8] 0, 128
        %2682 = vxpose.xlu0.c.b16.cont [4/8] 0, 128
        %2683 = vxpose.xlu0.c.b16.cont [5/8] 0, 128
        %2684 = vxpose.xlu0.c.b16.cont [6/8] 0, 128
        %2685 = vxpose.xlu0.c.b16.cont [7/8] 0, 128
        %2686 = vxpose.xlu0.c.b16.end [8/8] 0, 128
        %v2687 = vpop.trf.xlu0
        %v2688 = vpop.trf.xlu0
        %v2689 = vpop.trf.xlu0
        %v2690 = vpop.trf.xlu0
        %v2691 = vpop.trf.xlu0
        %v2692 = vpop.trf.xlu0
        %v2693 = vpop.trf.xlu0
        %v2694 = vpop.trf.xlu0
        %2695 = vxpose.xlu0.c.b16.start [1/8] %v1128, 128
        %2696 = vxpose.xlu0.c.b16.cont [2/8] 0, 128
        %2697 = vxpose.xlu0.c.b16.cont [3/8] 0, 128
        %2698 = vxpose.xlu0.c.b16.cont [4/8] 0, 128
        %2699 = vxpose.xlu0.c.b16.cont [5/8] 0, 128
        %2700 = vxpose.xlu0.c.b16.cont [6/8] 0, 128
        %2701 = vxpose.xlu0.c.b16.cont [7/8] 0, 128
        %2702 = vxpose.xlu0.c.b16.end [8/8] 0, 128
        %v2703 = vpop.trf.xlu0
        %v2704 = vpop.trf.xlu0
        %v2705 = vpop.trf.xlu0
        %v2706 = vpop.trf.xlu0
        %v2707 = vpop.trf.xlu0
        %v2708 = vpop.trf.xlu0
        %v2709 = vpop.trf.xlu0
        %v2710 = vpop.trf.xlu0
        %2711 = vxpose.xlu0.c.b16.start [1/8] %v1129, 128
        %2712 = vxpose.xlu0.c.b16.cont [2/8] 0, 128
        %2713 = vxpose.xlu0.c.b16.cont [3/8] 0, 128
        %2714 = vxpose.xlu0.c.b16.cont [4/8] 0, 128
        %2715 = vxpose.xlu0.c.b16.cont [5/8] 0, 128
        %2716 = vxpose.xlu0.c.b16.cont [6/8] 0, 128
        %2717 = vxpose.xlu0.c.b16.cont [7/8] 0, 128
        %2718 = vxpose.xlu0.c.b16.end [8/8] 0, 128
        %v2719 = vpop.trf.xlu0
        %v2720 = vpop.trf.xlu0
        %v2721 = vpop.trf.xlu0
        %v2722 = vpop.trf.xlu0
        %v2723 = vpop.trf.xlu0
        %v2724 = vpop.trf.xlu0
        %v2725 = vpop.trf.xlu0
        %v2726 = vpop.trf.xlu0
        %2727 = vxpose.xlu0.c.b16.start [1/8] %v1130, 128
        %2728 = vxpose.xlu0.c.b16.cont [2/8] 0, 128
        %2729 = vxpose.xlu0.c.b16.cont [3/8] 0, 128
        %2730 = vxpose.xlu0.c.b16.cont [4/8] 0, 128
        %2731 = vxpose.xlu0.c.b16.cont [5/8] 0, 128
        %2732 = vxpose.xlu0.c.b16.cont [6/8] 0, 128
        %2733 = vxpose.xlu0.c.b16.cont [7/8] 0, 128
        %2734 = vxpose.xlu0.c.b16.end [8/8] 0, 128
        %v2735 = vpop.trf.xlu0
        %v2736 = vpop.trf.xlu0
        %v2737 = vpop.trf.xlu0
        %v2738 = vpop.trf.xlu0
        %v2739 = vpop.trf.xlu0
        %v2740 = vpop.trf.xlu0
        %v2741 = vpop.trf.xlu0
        %v2742 = vpop.trf.xlu0
        %2743 = vxpose.xlu0.c.b16.start [1/8] %v1131, 128
        %2744 = vxpose.xlu0.c.b16.cont [2/8] 0, 128
        %2745 = vxpose.xlu0.c.b16.cont [3/8] 0, 128
        %2746 = vxpose.xlu0.c.b16.cont [4/8] 0, 128
        %2747 = vxpose.xlu0.c.b16.cont [5/8] 0, 128
        %2748 = vxpose.xlu0.c.b16.cont [6/8] 0, 128
        %2749 = vxpose.xlu0.c.b16.cont [7/8] 0, 128
        %2750 = vxpose.xlu0.c.b16.end [8/8] 0, 128
        %v2751 = vpop.trf.xlu0
        %v2752 = vpop.trf.xlu0
        %v2753 = vpop.trf.xlu0
        %v2754 = vpop.trf.xlu0
        %v2755 = vpop.trf.xlu0
        %v2756 = vpop.trf.xlu0
        %v2757 = vpop.trf.xlu0
        %v2758 = vpop.trf.xlu0
        %2759 = vxpose.xlu0.c.b16.start [1/8] %v1132, 128
        %2760 = vxpose.xlu0.c.b16.cont [2/8] 0, 128
        %2761 = vxpose.xlu0.c.b16.cont [3/8] 0, 128
        %2762 = vxpose.xlu0.c.b16.cont [4/8] 0, 128
        %2763 = vxpose.xlu0.c.b16.cont [5/8] 0, 128
        %2764 = vxpose.xlu0.c.b16.cont [6/8] 0, 128
        %2765 = vxpose.xlu0.c.b16.cont [7/8] 0, 128
        %2766 = vxpose.xlu0.c.b16.end [8/8] 0, 128
        %v2767 = vpop.trf.xlu0
        %v2768 = vpop.trf.xlu0
        %v2769 = vpop.trf.xlu0
        %v2770 = vpop.trf.xlu0
        %v2771 = vpop.trf.xlu0
        %v2772 = vpop.trf.xlu0
        %v2773 = vpop.trf.xlu0
        %v2774 = vpop.trf.xlu0
        %2775 = vxpose.xlu0.c.b16.start [1/8] %v1133, 128
        %2776 = vxpose.xlu0.c.b16.cont [2/8] 0, 128
        %2777 = vxpose.xlu0.c.b16.cont [3/8] 0, 128
        %2778 = vxpose.xlu0.c.b16.cont [4/8] 0, 128
        %2779 = vxpose.xlu0.c.b16.cont [5/8] 0, 128
        %2780 = vxpose.xlu0.c.b16.cont [6/8] 0, 128
        %2781 = vxpose.xlu0.c.b16.cont [7/8] 0, 128
        %2782 = vxpose.xlu0.c.b16.end [8/8] 0, 128
        %v2783 = vpop.trf.xlu0
        %v2784 = vpop.trf.xlu0
        %v2785 = vpop.trf.xlu0
        %v2786 = vpop.trf.xlu0
        %v2787 = vpop.trf.xlu0
        %v2788 = vpop.trf.xlu0
        %v2789 = vpop.trf.xlu0
        %v2790 = vpop.trf.xlu0
        %2791 = vxpose.xlu0.c.b16.start [1/8] %v1134, 128
        %2792 = vxpose.xlu0.c.b16.cont [2/8] 0, 128
        %2793 = vxpose.xlu0.c.b16.cont [3/8] 0, 128
        %2794 = vxpose.xlu0.c.b16.cont [4/8] 0, 128
        %2795 = vxpose.xlu0.c.b16.cont [5/8] 0, 128
        %2796 = vxpose.xlu0.c.b16.cont [6/8] 0, 128
        %2797 = vxpose.xlu0.c.b16.cont [7/8] 0, 128
        %2798 = vxpose.xlu0.c.b16.end [8/8] 0, 128
        %v2799 = vpop.trf.xlu0
        %v2800 = vpop.trf.xlu0
        %v2801 = vpop.trf.xlu0
        %v2802 = vpop.trf.xlu0
        %v2803 = vpop.trf.xlu0
        %v2804 = vpop.trf.xlu0
        %v2805 = vpop.trf.xlu0
        %v2806 = vpop.trf.xlu0
        %v2807 = vrot.slane %v2623, 4
        %v2808 = vsel %vm1270, %v2807, %v2559
        %v2809 = vrot.slane %v2559, 4
        %v2810 = vsel %vm1270, %v2623, %v2809
        %v2812 = vunpack.c.l.s4 1983009808
        %v2813 = vunpack.c.0.s8 %v2812
        %v2814 = vperm.slane %v2808, %v2813
        %v2816 = vunpack.c.l.s4 1983009808
        %v2817 = vunpack.c.0.s8 %v2816
        %v2818 = vperm.slane %v2810, %v2817
        %v2819 = vrot.slane %v2655, 4
        %v2820 = vsel %vm1270, %v2819, %v2591
        %v2821 = vrot.slane %v2591, 4
        %v2822 = vsel %vm1270, %v2655, %v2821
        %v2824 = vunpack.c.l.s4 1983009808
        %v2825 = vunpack.c.0.s8 %v2824
        %v2826 = vperm.slane %v2820, %v2825
        %v2828 = vunpack.c.l.s4 1983009808
        %v2829 = vunpack.c.0.s8 %v2828
        %v2830 = vperm.slane %v2822, %v2829
        %v2831 = vrot.slane %v2751, 4
        %v2832 = vsel %vm1270, %v2831, %v2687
        %v2833 = vrot.slane %v2687, 4
        %v2834 = vsel %vm1270, %v2751, %v2833
        %v2836 = vunpack.c.l.s4 1983009808
        %v2837 = vunpack.c.0.s8 %v2836
        %v2838 = vperm.slane %v2832, %v2837
        %v2840 = vunpack.c.l.s4 1983009808
        %v2841 = vunpack.c.0.s8 %v2840
        %v2842 = vperm.slane %v2834, %v2841
        %v2843 = vrot.slane %v2783, 4
        %v2844 = vsel %vm1270, %v2843, %v2719
        %v2845 = vrot.slane %v2719, 4
        %v2846 = vsel %vm1270, %v2783, %v2845
        %v2848 = vunpack.c.l.s4 1983009808
        %v2849 = vunpack.c.0.s8 %v2848
        %v2850 = vperm.slane %v2844, %v2849
        %v2852 = vunpack.c.l.s4 1983009808
        %v2853 = vunpack.c.0.s8 %v2852
        %v2854 = vperm.slane %v2846, %v2853
        %v2855 = vrot.slane %v2826, 4
        %v2856 = vsel %vm1270, %v2855, %v2814
        %v2857 = vrot.slane %v2814, 4
        %v2858 = vsel %vm1270, %v2826, %v2857
        %v2860 = vunpack.c.l.s4 1934713408
        %v2861 = vunpack.c.0.s8 %v2860
        %v2862 = vperm.slane %v2856, %v2861
        %v2864 = vunpack.c.l.s4 1934713408
        %v2865 = vunpack.c.0.s8 %v2864
        %v2866 = vperm.slane %v2858, %v2865
        %v2867 = vrot.slane %v2830, 4
        %v2868 = vsel %vm1270, %v2867, %v2818
        %v2869 = vrot.slane %v2818, 4
        %v2870 = vsel %vm1270, %v2830, %v2869
        %v2872 = vunpack.c.l.s4 1934713408
        %v2873 = vunpack.c.0.s8 %v2872
        %v2874 = vperm.slane %v2868, %v2873
        %v2876 = vunpack.c.l.s4 1934713408
        %v2877 = vunpack.c.0.s8 %v2876
        %v2878 = vperm.slane %v2870, %v2877
        %v2879 = vrot.slane %v2850, 4
        %v2880 = vsel %vm1270, %v2879, %v2838
        %v2881 = vrot.slane %v2838, 4
        %v2882 = vsel %vm1270, %v2850, %v2881
        %v2884 = vunpack.c.l.s4 1934713408
        %v2885 = vunpack.c.0.s8 %v2884
        %v2886 = vperm.slane %v2880, %v2885
        %v2888 = vunpack.c.l.s4 1934713408
        %v2889 = vunpack.c.0.s8 %v2888
        %v2890 = vperm.slane %v2882, %v2889
        %v2891 = vrot.slane %v2854, 4
        %v2892 = vsel %vm1270, %v2891, %v2842
        %v2893 = vrot.slane %v2842, 4
        %v2894 = vsel %vm1270, %v2854, %v2893
        %v2896 = vunpack.c.l.s4 1934713408
        %v2897 = vunpack.c.0.s8 %v2896
        %v2898 = vperm.slane %v2892, %v2897
        %v2900 = vunpack.c.l.s4 1934713408
        %v2901 = vunpack.c.0.s8 %v2900
        %v2902 = vperm.slane %v2894, %v2901
        %v2903 = vrot.slane %v2886, 4
        %v2904 = vsel %vm1270, %v2903, %v2862
        %v2905 = vrot.slane %v2862, 4
        %v2906 = vsel %vm1270, %v2886, %v2905
        %v2907 = vrot.slane %v2890, 4
        %v2908 = vsel %vm1270, %v2907, %v2866
        %v2909 = vrot.slane %v2866, 4
        %v2910 = vsel %vm1270, %v2890, %v2909
        %v2911 = vrot.slane %v2898, 4
        %v2912 = vsel %vm1270, %v2911, %v2874
        %v2913 = vrot.slane %v2874, 4
        %v2914 = vsel %vm1270, %v2898, %v2913
        %v2915 = vrot.slane %v2902, 4
        %v2916 = vsel %vm1270, %v2915, %v2878
        %v2917 = vrot.slane %v2878, 4
        %v2918 = vsel %vm1270, %v2902, %v2917
        %v2919 = vrot.slane %v2639, 4
        %v2920 = vsel %vm1270, %v2919, %v2575
        %v2921 = vrot.slane %v2575, 4
        %v2922 = vsel %vm1270, %v2639, %v2921
        %v2924 = vunpack.c.l.s4 1983009808
        %v2925 = vunpack.c.0.s8 %v2924
        %v2926 = vperm.slane %v2920, %v2925
        %v2928 = vunpack.c.l.s4 1983009808
        %v2929 = vunpack.c.0.s8 %v2928
        %v2930 = vperm.slane %v2922, %v2929
        %v2931 = vrot.slane %v2671, 4
        %v2932 = vsel %vm1270, %v2931, %v2607
        %v2933 = vrot.slane %v2607, 4
        %v2934 = vsel %vm1270, %v2671, %v2933
        %v2936 = vunpack.c.l.s4 1983009808
        %v2937 = vunpack.c.0.s8 %v2936
        %v2938 = vperm.slane %v2932, %v2937
        %v2940 = vunpack.c.l.s4 1983009808
        %v2941 = vunpack.c.0.s8 %v2940
        %v2942 = vperm.slane %v2934, %v2941
        %v2943 = vrot.slane %v2767, 4
        %v2944 = vsel %vm1270, %v2943, %v2703
        %v2945 = vrot.slane %v2703, 4
        %v2946 = vsel %vm1270, %v2767, %v2945
        %v2948 = vunpack.c.l.s4 1983009808
        %v2949 = vunpack.c.0.s8 %v2948
        %v2950 = vperm.slane %v2944, %v2949
        %v2952 = vunpack.c.l.s4 1983009808
        %v2953 = vunpack.c.0.s8 %v2952
        %v2954 = vperm.slane %v2946, %v2953
        %v2955 = vrot.slane %v2799, 4
        %v2956 = vsel %vm1270, %v2955, %v2735
        %v2957 = vrot.slane %v2735, 4
        %v2958 = vsel %vm1270, %v2799, %v2957
        %v2960 = vunpack.c.l.s4 1983009808
        %v2961 = vunpack.c.0.s8 %v2960
        %v2962 = vperm.slane %v2956, %v2961
        %v2964 = vunpack.c.l.s4 1983009808
        %v2965 = vunpack.c.0.s8 %v2964
        %v2966 = vperm.slane %v2958, %v2965
        %v2967 = vrot.slane %v2938, 4
        %v2968 = vsel %vm1270, %v2967, %v2926
        %v2969 = vrot.slane %v2926, 4
        %v2970 = vsel %vm1270, %v2938, %v2969
        %v2972 = vunpack.c.l.s4 1934713408
        %v2973 = vunpack.c.0.s8 %v2972
        %v2974 = vperm.slane %v2968, %v2973
        %v2976 = vunpack.c.l.s4 1934713408
        %v2977 = vunpack.c.0.s8 %v2976
        %v2978 = vperm.slane %v2970, %v2977
        %v2979 = vrot.slane %v2942, 4
        %v2980 = vsel %vm1270, %v2979, %v2930
        %v2981 = vrot.slane %v2930, 4
        %v2982 = vsel %vm1270, %v2942, %v2981
        %v2984 = vunpack.c.l.s4 1934713408
        %v2985 = vunpack.c.0.s8 %v2984
        %v2986 = vperm.slane %v2980, %v2985
        %v2988 = vunpack.c.l.s4 1934713408
        %v2989 = vunpack.c.0.s8 %v2988
        %v2990 = vperm.slane %v2982, %v2989
        %v2991 = vrot.slane %v2962, 4
        %v2992 = vsel %vm1270, %v2991, %v2950
        %v2993 = vrot.slane %v2950, 4
        %v2994 = vsel %vm1270, %v2962, %v2993
        %v2996 = vunpack.c.l.s4 1934713408
        %v2997 = vunpack.c.0.s8 %v2996
        %v2998 = vperm.slane %v2992, %v2997
        %v3000 = vunpack.c.l.s4 1934713408
        %v3001 = vunpack.c.0.s8 %v3000
        %v3002 = vperm.slane %v2994, %v3001
        %v3003 = vrot.slane %v2966, 4
        %v3004 = vsel %vm1270, %v3003, %v2954
        %v3005 = vrot.slane %v2954, 4
        %v3006 = vsel %vm1270, %v2966, %v3005
        %v3008 = vunpack.c.l.s4 1934713408
        %v3009 = vunpack.c.0.s8 %v3008
        %v3010 = vperm.slane %v3004, %v3009
        %v3012 = vunpack.c.l.s4 1934713408
        %v3013 = vunpack.c.0.s8 %v3012
        %v3014 = vperm.slane %v3006, %v3013
        %v3015 = vrot.slane %v2998, 4
        %v3016 = vsel %vm1270, %v3015, %v2974
        %v3017 = vrot.slane %v2974, 4
        %v3018 = vsel %vm1270, %v2998, %v3017
        %v3019 = vrot.slane %v3002, 4
        %v3020 = vsel %vm1270, %v3019, %v2978
        %v3021 = vrot.slane %v2978, 4
        %v3022 = vsel %vm1270, %v3002, %v3021
        %v3023 = vrot.slane %v3010, 4
        %v3024 = vsel %vm1270, %v3023, %v2986
        %v3025 = vrot.slane %v2986, 4
        %v3026 = vsel %vm1270, %v3010, %v3025
        %v3027 = vrot.slane %v3014, 4
        %v3028 = vsel %vm1270, %v3027, %v2990
        %v3029 = vrot.slane %v2990, 4
        %v3030 = vsel %vm1270, %v3014, %v3029
        %v3033 = vpack.i.b16 %v3016, %v2904
        %v3035 = vshrl.u32 %v2904, 16
        %v3036 = vshrl.u32 %v3016, 16
        %v3037 = vpack.i.b16 %v3036, %v3035
        %v3041 = vpack.i.b16 %v3018, %v2906
        %v3043 = vshrl.u32 %v2906, 16
        %v3044 = vshrl.u32 %v3018, 16
        %v3045 = vpack.i.b16 %v3044, %v3043
        %v3049 = vpack.i.b16 %v3020, %v2908
        %v3051 = vshrl.u32 %v2908, 16
        %v3052 = vshrl.u32 %v3020, 16
        %v3053 = vpack.i.b16 %v3052, %v3051
        %v3057 = vpack.i.b16 %v3022, %v2910
        %v3059 = vshrl.u32 %v2910, 16
        %v3060 = vshrl.u32 %v3022, 16
        %v3061 = vpack.i.b16 %v3060, %v3059
        %v3065 = vpack.i.b16 %v3024, %v2912
        %v3067 = vshrl.u32 %v2912, 16
        %v3068 = vshrl.u32 %v3024, 16
        %v3069 = vpack.i.b16 %v3068, %v3067
        %v3073 = vpack.i.b16 %v3026, %v2914
        %v3075 = vshrl.u32 %v2914, 16
        %v3076 = vshrl.u32 %v3026, 16
        %v3077 = vpack.i.b16 %v3076, %v3075
        %v3081 = vpack.i.b16 %v3028, %v2916
        %v3083 = vshrl.u32 %v2916, 16
        %v3084 = vshrl.u32 %v3028, 16
        %v3085 = vpack.i.b16 %v3084, %v3083
        %v3089 = vpack.i.b16 %v3030, %v2918
        %v3091 = vshrl.u32 %v2918, 16
        %v3092 = vshrl.u32 %v3030, 16
        %v3093 = vpack.i.b16 %v3092, %v3091
        %3095 = vxpose.xlu0.c.b16.start [1/8] %v3033, 128
        %3096 = vxpose.xlu0.c.b16.cont [2/8] 0, 128
        %3097 = vxpose.xlu0.c.b16.cont [3/8] 0, 128
        %3098 = vxpose.xlu0.c.b16.cont [4/8] 0, 128
        %3099 = vxpose.xlu0.c.b16.cont [5/8] 0, 128
        %3100 = vxpose.xlu0.c.b16.cont [6/8] 0, 128
        %3101 = vxpose.xlu0.c.b16.cont [7/8] 0, 128
        %3102 = vxpose.xlu0.c.b16.end [8/8] 0, 128
        %v3103 = vpop.trf.xlu0
        %v3104 = vpop.trf.xlu0
        %v3105 = vpop.trf.xlu0
        %v3106 = vpop.trf.xlu0
        %v3107 = vpop.trf.xlu0
        %v3108 = vpop.trf.xlu0
        %v3109 = vpop.trf.xlu0
        %v3110 = vpop.trf.xlu0
        %3111 = vxpose.xlu0.c.b16.start [1/8] %v3037, 128
        %3112 = vxpose.xlu0.c.b16.cont [2/8] 0, 128
        %3113 = vxpose.xlu0.c.b16.cont [3/8] 0, 128
        %3114 = vxpose.xlu0.c.b16.cont [4/8] 0, 128
        %3115 = vxpose.xlu0.c.b16.cont [5/8] 0, 128
        %3116 = vxpose.xlu0.c.b16.cont [6/8] 0, 128
        %3117 = vxpose.xlu0.c.b16.cont [7/8] 0, 128
        %3118 = vxpose.xlu0.c.b16.end [8/8] 0, 128
        %v3119 = vpop.trf.xlu0
        %v3120 = vpop.trf.xlu0
        %v3121 = vpop.trf.xlu0
        %v3122 = vpop.trf.xlu0
        %v3123 = vpop.trf.xlu0
        %v3124 = vpop.trf.xlu0
        %v3125 = vpop.trf.xlu0
        %v3126 = vpop.trf.xlu0
        %3127 = vxpose.xlu0.c.b16.start [1/8] %v3041, 128
        %3128 = vxpose.xlu0.c.b16.cont [2/8] 0, 128
        %3129 = vxpose.xlu0.c.b16.cont [3/8] 0, 128
        %3130 = vxpose.xlu0.c.b16.cont [4/8] 0, 128
        %3131 = vxpose.xlu0.c.b16.cont [5/8] 0, 128
        %3132 = vxpose.xlu0.c.b16.cont [6/8] 0, 128
        %3133 = vxpose.xlu0.c.b16.cont [7/8] 0, 128
        %3134 = vxpose.xlu0.c.b16.end [8/8] 0, 128
        %v3135 = vpop.trf.xlu0
        %v3136 = vpop.trf.xlu0
        %v3137 = vpop.trf.xlu0
        %v3138 = vpop.trf.xlu0
        %v3139 = vpop.trf.xlu0
        %v3140 = vpop.trf.xlu0
        %v3141 = vpop.trf.xlu0
        %v3142 = vpop.trf.xlu0
        %3143 = vxpose.xlu0.c.b16.start [1/8] %v3045, 128
        %3144 = vxpose.xlu0.c.b16.cont [2/8] 0, 128
        %3145 = vxpose.xlu0.c.b16.cont [3/8] 0, 128
        %3146 = vxpose.xlu0.c.b16.cont [4/8] 0, 128
        %3147 = vxpose.xlu0.c.b16.cont [5/8] 0, 128
        %3148 = vxpose.xlu0.c.b16.cont [6/8] 0, 128
        %3149 = vxpose.xlu0.c.b16.cont [7/8] 0, 128
        %3150 = vxpose.xlu0.c.b16.end [8/8] 0, 128
        %v3151 = vpop.trf.xlu0
        %v3152 = vpop.trf.xlu0
        %v3153 = vpop.trf.xlu0
        %v3154 = vpop.trf.xlu0
        %v3155 = vpop.trf.xlu0
        %v3156 = vpop.trf.xlu0
        %v3157 = vpop.trf.xlu0
        %v3158 = vpop.trf.xlu0
        %3159 = vxpose.xlu0.c.b16.start [1/8] %v3049, 128
        %3160 = vxpose.xlu0.c.b16.cont [2/8] 0, 128
        %3161 = vxpose.xlu0.c.b16.cont [3/8] 0, 128
        %3162 = vxpose.xlu0.c.b16.cont [4/8] 0, 128
        %3163 = vxpose.xlu0.c.b16.cont [5/8] 0, 128
        %3164 = vxpose.xlu0.c.b16.cont [6/8] 0, 128
        %3165 = vxpose.xlu0.c.b16.cont [7/8] 0, 128
        %3166 = vxpose.xlu0.c.b16.end [8/8] 0, 128
        %v3167 = vpop.trf.xlu0
        %v3168 = vpop.trf.xlu0
        %v3169 = vpop.trf.xlu0
        %v3170 = vpop.trf.xlu0
        %v3171 = vpop.trf.xlu0
        %v3172 = vpop.trf.xlu0
        %v3173 = vpop.trf.xlu0
        %v3174 = vpop.trf.xlu0
        %3175 = vxpose.xlu0.c.b16.start [1/8] %v3053, 128
        %3176 = vxpose.xlu0.c.b16.cont [2/8] 0, 128
        %3177 = vxpose.xlu0.c.b16.cont [3/8] 0, 128
        %3178 = vxpose.xlu0.c.b16.cont [4/8] 0, 128
        %3179 = vxpose.xlu0.c.b16.cont [5/8] 0, 128
        %3180 = vxpose.xlu0.c.b16.cont [6/8] 0, 128
        %3181 = vxpose.xlu0.c.b16.cont [7/8] 0, 128
        %3182 = vxpose.xlu0.c.b16.end [8/8] 0, 128
        %v3183 = vpop.trf.xlu0
        %v3184 = vpop.trf.xlu0
        %v3185 = vpop.trf.xlu0
        %v3186 = vpop.trf.xlu0
        %v3187 = vpop.trf.xlu0
        %v3188 = vpop.trf.xlu0
        %v3189 = vpop.trf.xlu0
        %v3190 = vpop.trf.xlu0
        %3191 = vxpose.xlu0.c.b16.start [1/8] %v3057, 128
        %3192 = vxpose.xlu0.c.b16.cont [2/8] 0, 128
        %3193 = vxpose.xlu0.c.b16.cont [3/8] 0, 128
        %3194 = vxpose.xlu0.c.b16.cont [4/8] 0, 128
        %3195 = vxpose.xlu0.c.b16.cont [5/8] 0, 128
        %3196 = vxpose.xlu0.c.b16.cont [6/8] 0, 128
        %3197 = vxpose.xlu0.c.b16.cont [7/8] 0, 128
        %3198 = vxpose.xlu0.c.b16.end [8/8] 0, 128
        %v3199 = vpop.trf.xlu0
        %v3200 = vpop.trf.xlu0
        %v3201 = vpop.trf.xlu0
        %v3202 = vpop.trf.xlu0
        %v3203 = vpop.trf.xlu0
        %v3204 = vpop.trf.xlu0
        %v3205 = vpop.trf.xlu0
        %v3206 = vpop.trf.xlu0
        %3207 = vxpose.xlu0.c.b16.start [1/8] %v3061, 128
        %3208 = vxpose.xlu0.c.b16.cont [2/8] 0, 128
        %3209 = vxpose.xlu0.c.b16.cont [3/8] 0, 128
        %3210 = vxpose.xlu0.c.b16.cont [4/8] 0, 128
        %3211 = vxpose.xlu0.c.b16.cont [5/8] 0, 128
        %3212 = vxpose.xlu0.c.b16.cont [6/8] 0, 128
        %3213 = vxpose.xlu0.c.b16.cont [7/8] 0, 128
        %3214 = vxpose.xlu0.c.b16.end [8/8] 0, 128
        %v3215 = vpop.trf.xlu0
        %v3216 = vpop.trf.xlu0
        %v3217 = vpop.trf.xlu0
        %v3218 = vpop.trf.xlu0
        %v3219 = vpop.trf.xlu0
        %v3220 = vpop.trf.xlu0
        %v3221 = vpop.trf.xlu0
        %v3222 = vpop.trf.xlu0
        %3223 = vxpose.xlu0.c.b16.start [1/8] %v3065, 128
        %3224 = vxpose.xlu0.c.b16.cont [2/8] 0, 128
        %3225 = vxpose.xlu0.c.b16.cont [3/8] 0, 128
        %3226 = vxpose.xlu0.c.b16.cont [4/8] 0, 128
        %3227 = vxpose.xlu0.c.b16.cont [5/8] 0, 128
        %3228 = vxpose.xlu0.c.b16.cont [6/8] 0, 128
        %3229 = vxpose.xlu0.c.b16.cont [7/8] 0, 128
        %3230 = vxpose.xlu0.c.b16.end [8/8] 0, 128
        %v3231 = vpop.trf.xlu0
        %v3232 = vpop.trf.xlu0
        %v3233 = vpop.trf.xlu0
        %v3234 = vpop.trf.xlu0
        %v3235 = vpop.trf.xlu0
        %v3236 = vpop.trf.xlu0
        %v3237 = vpop.trf.xlu0
        %v3238 = vpop.trf.xlu0
        %3239 = vxpose.xlu0.c.b16.start [1/8] %v3069, 128
        %3240 = vxpose.xlu0.c.b16.cont [2/8] 0, 128
        %3241 = vxpose.xlu0.c.b16.cont [3/8] 0, 128
        %3242 = vxpose.xlu0.c.b16.cont [4/8] 0, 128
        %3243 = vxpose.xlu0.c.b16.cont [5/8] 0, 128
        %3244 = vxpose.xlu0.c.b16.cont [6/8] 0, 128
        %3245 = vxpose.xlu0.c.b16.cont [7/8] 0, 128
        %3246 = vxpose.xlu0.c.b16.end [8/8] 0, 128
        %v3247 = vpop.trf.xlu0
        %v3248 = vpop.trf.xlu0
        %v3249 = vpop.trf.xlu0
        %v3250 = vpop.trf.xlu0
        %v3251 = vpop.trf.xlu0
        %v3252 = vpop.trf.xlu0
        %v3253 = vpop.trf.xlu0
        %v3254 = vpop.trf.xlu0
        %3255 = vxpose.xlu0.c.b16.start [1/8] %v3073, 128
        %3256 = vxpose.xlu0.c.b16.cont [2/8] 0, 128
        %3257 = vxpose.xlu0.c.b16.cont [3/8] 0, 128
        %3258 = vxpose.xlu0.c.b16.cont [4/8] 0, 128
        %3259 = vxpose.xlu0.c.b16.cont [5/8] 0, 128
        %3260 = vxpose.xlu0.c.b16.cont [6/8] 0, 128
        %3261 = vxpose.xlu0.c.b16.cont [7/8] 0, 128
        %3262 = vxpose.xlu0.c.b16.end [8/8] 0, 128
        %v3263 = vpop.trf.xlu0
        %v3264 = vpop.trf.xlu0
        %v3265 = vpop.trf.xlu0
        %v3266 = vpop.trf.xlu0
        %v3267 = vpop.trf.xlu0
        %v3268 = vpop.trf.xlu0
        %v3269 = vpop.trf.xlu0
        %v3270 = vpop.trf.xlu0
        %3271 = vxpose.xlu0.c.b16.start [1/8] %v3077, 128
        %3272 = vxpose.xlu0.c.b16.cont [2/8] 0, 128
        %3273 = vxpose.xlu0.c.b16.cont [3/8] 0, 128
        %3274 = vxpose.xlu0.c.b16.cont [4/8] 0, 128
        %3275 = vxpose.xlu0.c.b16.cont [5/8] 0, 128
        %3276 = vxpose.xlu0.c.b16.cont [6/8] 0, 128
        %3277 = vxpose.xlu0.c.b16.cont [7/8] 0, 128
        %3278 = vxpose.xlu0.c.b16.end [8/8] 0, 128
        %v3279 = vpop.trf.xlu0
        %v3280 = vpop.trf.xlu0
        %v3281 = vpop.trf.xlu0
        %v3282 = vpop.trf.xlu0
        %v3283 = vpop.trf.xlu0
        %v3284 = vpop.trf.xlu0
        %v3285 = vpop.trf.xlu0
        %v3286 = vpop.trf.xlu0
        %3287 = vxpose.xlu0.c.b16.start [1/8] %v3081, 128
        %3288 = vxpose.xlu0.c.b16.cont [2/8] 0, 128
        %3289 = vxpose.xlu0.c.b16.cont [3/8] 0, 128
        %3290 = vxpose.xlu0.c.b16.cont [4/8] 0, 128
        %3291 = vxpose.xlu0.c.b16.cont [5/8] 0, 128
        %3292 = vxpose.xlu0.c.b16.cont [6/8] 0, 128
        %3293 = vxpose.xlu0.c.b16.cont [7/8] 0, 128
        %3294 = vxpose.xlu0.c.b16.end [8/8] 0, 128
        %v3295 = vpop.trf.xlu0
        %v3296 = vpop.trf.xlu0
        %v3297 = vpop.trf.xlu0
        %v3298 = vpop.trf.xlu0
        %v3299 = vpop.trf.xlu0
        %v3300 = vpop.trf.xlu0
        %v3301 = vpop.trf.xlu0
        %v3302 = vpop.trf.xlu0
        %3303 = vxpose.xlu0.c.b16.start [1/8] %v3085, 128
        %3304 = vxpose.xlu0.c.b16.cont [2/8] 0, 128
        %3305 = vxpose.xlu0.c.b16.cont [3/8] 0, 128
        %3306 = vxpose.xlu0.c.b16.cont [4/8] 0, 128
        %3307 = vxpose.xlu0.c.b16.cont [5/8] 0, 128
        %3308 = vxpose.xlu0.c.b16.cont [6/8] 0, 128
        %3309 = vxpose.xlu0.c.b16.cont [7/8] 0, 128
        %3310 = vxpose.xlu0.c.b16.end [8/8] 0, 128
        %v3311 = vpop.trf.xlu0
        %v3312 = vpop.trf.xlu0
        %v3313 = vpop.trf.xlu0
        %v3314 = vpop.trf.xlu0
        %v3315 = vpop.trf.xlu0
        %v3316 = vpop.trf.xlu0
        %v3317 = vpop.trf.xlu0
        %v3318 = vpop.trf.xlu0
        %3319 = vxpose.xlu0.c.b16.start [1/8] %v3089, 128
        %3320 = vxpose.xlu0.c.b16.cont [2/8] 0, 128
        %3321 = vxpose.xlu0.c.b16.cont [3/8] 0, 128
        %3322 = vxpose.xlu0.c.b16.cont [4/8] 0, 128
        %3323 = vxpose.xlu0.c.b16.cont [5/8] 0, 128
        %3324 = vxpose.xlu0.c.b16.cont [6/8] 0, 128
        %3325 = vxpose.xlu0.c.b16.cont [7/8] 0, 128
        %3326 = vxpose.xlu0.c.b16.end [8/8] 0, 128
        %v3327 = vpop.trf.xlu0
        %v3328 = vpop.trf.xlu0
        %v3329 = vpop.trf.xlu0
        %v3330 = vpop.trf.xlu0
        %v3331 = vpop.trf.xlu0
        %v3332 = vpop.trf.xlu0
        %v3333 = vpop.trf.xlu0
        %v3334 = vpop.trf.xlu0
        %3335 = vxpose.xlu0.c.b16.start [1/8] %v3093, 128
        %3336 = vxpose.xlu0.c.b16.cont [2/8] 0, 128
        %3337 = vxpose.xlu0.c.b16.cont [3/8] 0, 128
        %3338 = vxpose.xlu0.c.b16.cont [4/8] 0, 128
        %3339 = vxpose.xlu0.c.b16.cont [5/8] 0, 128
        %3340 = vxpose.xlu0.c.b16.cont [6/8] 0, 128
        %3341 = vxpose.xlu0.c.b16.cont [7/8] 0, 128
        %3342 = vxpose.xlu0.c.b16.end [8/8] 0, 128
        %v3343 = vpop.trf.xlu0
        %v3344 = vpop.trf.xlu0
        %v3345 = vpop.trf.xlu0
        %v3346 = vpop.trf.xlu0
        %v3347 = vpop.trf.xlu0
        %v3348 = vpop.trf.xlu0
        %v3349 = vpop.trf.xlu0
        %v3350 = vpop.trf.xlu0
        %v3351 = vrot.slane %v3167, 4
        %v3352 = vsel %vm1270, %v3351, %v3103
        %v3354 = vunpack.c.l.s4 1983009808
        %v3355 = vunpack.c.0.s8 %v3354
        %v3356 = vperm.slane %v3352, %v3355
        %v3357 = vrot.slane %v3199, 4
        %v3358 = vsel %vm1270, %v3357, %v3135
        %v3360 = vunpack.c.l.s4 1983009808
        %v3361 = vunpack.c.0.s8 %v3360
        %v3362 = vperm.slane %v3358, %v3361
        %v3363 = vrot.slane %v3295, 4
        %v3364 = vsel %vm1270, %v3363, %v3231
        %v3366 = vunpack.c.l.s4 1983009808
        %v3367 = vunpack.c.0.s8 %v3366
        %v3368 = vperm.slane %v3364, %v3367
        %v3369 = vrot.slane %v3327, 4
        %v3370 = vsel %vm1270, %v3369, %v3263
        %v3372 = vunpack.c.l.s4 1983009808
        %v3373 = vunpack.c.0.s8 %v3372
        %v3374 = vperm.slane %v3370, %v3373
        %v3375 = vrot.slane %v3362, 4
        %v3376 = vsel %vm1270, %v3375, %v3356
        %v3378 = vunpack.c.l.s4 1934713408
        %v3379 = vunpack.c.0.s8 %v3378
        %v3380 = vperm.slane %v3376, %v3379
        %v3381 = vrot.slane %v3374, 4
        %v3382 = vsel %vm1270, %v3381, %v3368
        %v3384 = vunpack.c.l.s4 1934713408
        %v3385 = vunpack.c.0.s8 %v3384
        %v3386 = vperm.slane %v3382, %v3385
        %v3387 = vrot.slane %v3386, 4
        %v3388 = vsel %vm1270, %v3387, %v3380
        %v3389 = vrot.slane %v3380, 4
        %v3390 = vsel %vm1270, %v3386, %v3389
        %v3391 = vrot.slane %v3183, 4
        %v3392 = vsel %vm1270, %v3391, %v3119
        %v3394 = vunpack.c.l.s4 1983009808
        %v3395 = vunpack.c.0.s8 %v3394
        %v3396 = vperm.slane %v3392, %v3395
        %v3397 = vrot.slane %v3215, 4
        %v3398 = vsel %vm1270, %v3397, %v3151
        %v3400 = vunpack.c.l.s4 1983009808
        %v3401 = vunpack.c.0.s8 %v3400
        %v3402 = vperm.slane %v3398, %v3401
        %v3403 = vrot.slane %v3311, 4
        %v3404 = vsel %vm1270, %v3403, %v3247
        %v3406 = vunpack.c.l.s4 1983009808
        %v3407 = vunpack.c.0.s8 %v3406
        %v3408 = vperm.slane %v3404, %v3407
        %v3409 = vrot.slane %v3343, 4
        %v3410 = vsel %vm1270, %v3409, %v3279
        %v3412 = vunpack.c.l.s4 1983009808
        %v3413 = vunpack.c.0.s8 %v3412
        %v3414 = vperm.slane %v3410, %v3413
        %v3415 = vrot.slane %v3402, 4
        %v3416 = vsel %vm1270, %v3415, %v3396
        %v3418 = vunpack.c.l.s4 1934713408
        %v3419 = vunpack.c.0.s8 %v3418
        %v3420 = vperm.slane %v3416, %v3419
        %v3421 = vrot.slane %v3414, 4
        %v3422 = vsel %vm1270, %v3421, %v3408
        %v3424 = vunpack.c.l.s4 1934713408
        %v3425 = vunpack.c.0.s8 %v3424
        %v3426 = vperm.slane %v3422, %v3425
        %v3427 = vrot.slane %v3426, 4
        %v3428 = vsel %vm1270, %v3427, %v3420
        %v3429 = vrot.slane %v3420, 4
        %v3430 = vsel %vm1270, %v3426, %v3429
        %v3433 = vpack.i.b16 %v3428, %v3388
        %v3434 = vshrl.u32 %v3388, 16
        %v3435 = vshrl.u32 %v3428, 16
        %v3436 = vpack.i.b16 %v3435, %v3434
        %v3439 = vpack.i.b16 %v3430, %v3390
        %v3440 = vshrl.u32 %v3390, 16
        %v3441 = vshrl.u32 %v3430, 16
        %v3442 = vpack.i.b16 %v3441, %v3440
        %v3445 = vunpack.c.l.b16 %v2543
        %v3446 = vunpack.c.l.b16 %v2544
        %v3447 = vpack.c.b16 %v3446, %v3445
        %v3449 = vsel %vm2273, %v3433, 0
        %v3452 = vsel %vm2273, %v3447, 0
        %3454 = vmatpush.bf16.xpose.msra.mxu0 0
        %3455 = vmatpush.bf16.xpose.msra.mxu0 0
        %3456 = vmatpush.bf16.xpose.msra.mxu0 0
        %3457 = vmatpush.bf16.xpose.msra.mxu0 0
        %3458 = vmatpush.bf16.xpose.msra.mxu0 0
        %3459 = vmatpush.bf16.xpose.msra.mxu0 0
        %3460 = vmatpush.bf16.xpose.msra.mxu0 0
        %3461 = vmatpush.bf16.xpose.msra.mxu0 %v3452
        %3462 = vmatmul.bf16.gmra.mxu0 %v3449
        %v3463 = vpop.f32.mrf.mxu0
        %v3464 = vadd.f32 0.0, %v3463
        %v3465 = vpop.f32.mrf.mxu0
        %v3466 = vadd.f32 0.0, %v3465
        %3467 = vdwg.mxu0
        %v3470 = vunpack.c.l.b16 %v2545
        %v3471 = vunpack.c.l.b16 %v2546
        %v3472 = vpack.c.b16 %v3471, %v3470
        %v3474 = vsel %vm2273, %v3436, 0
        %v3477 = vsel %vm2273, %v3472, 0
        %3479 = vmatpush.bf16.xpose.msra.mxu0 0
        %3480 = vmatpush.bf16.xpose.msra.mxu0 0
        %3481 = vmatpush.bf16.xpose.msra.mxu0 0
        %3482 = vmatpush.bf16.xpose.msra.mxu0 0
        %3483 = vmatpush.bf16.xpose.msra.mxu0 0
        %3484 = vmatpush.bf16.xpose.msra.mxu0 0
        %3485 = vmatpush.bf16.xpose.msra.mxu0 0
        %3486 = vmatpush.bf16.xpose.msra.mxu0 %v3477
        %3487 = vmatmul.bf16.gmra.mxu0 %v3474
        %v3488 = vpop.f32.mrf.mxu0
        %v3489 = vadd.f32 0.0, %v3488
        %v3490 = vpop.f32.mrf.mxu0
        %v3491 = vadd.f32 0.0, %v3490
        %3492 = vdwg.mxu0
        %v3495 = vunpack.c.l.b16 %v2547
        %v3496 = vunpack.c.l.b16 %v2548
        %v3497 = vpack.c.b16 %v3496, %v3495
        %v3499 = vsel %vm2273, %v3439, 0
        %v3502 = vsel %vm2273, %v3497, 0
        %3504 = vmatpush.bf16.xpose.msra.mxu0 0
        %3505 = vmatpush.bf16.xpose.msra.mxu0 0
        %3506 = vmatpush.bf16.xpose.msra.mxu0 0
        %3507 = vmatpush.bf16.xpose.msra.mxu0 0
        %3508 = vmatpush.bf16.xpose.msra.mxu0 0
        %3509 = vmatpush.bf16.xpose.msra.mxu0 0
        %3510 = vmatpush.bf16.xpose.msra.mxu0 0
        %3511 = vmatpush.bf16.xpose.msra.mxu0 %v3502
        %3512 = vmatmul.bf16.gmra.mxu0 %v3499
        %v3513 = vpop.f32.mrf.mxu0
        %v3514 = vadd.f32 0.0, %v3513
        %v3515 = vpop.f32.mrf.mxu0
        %v3516 = vadd.f32 0.0, %v3515
        %3517 = vdwg.mxu0
        %v3520 = vunpack.c.l.b16 %v2549
        %v3521 = vunpack.c.l.b16 %v2550
        %v3522 = vpack.c.b16 %v3521, %v3520
        %v3524 = vsel %vm2273, %v3442, 0
        %v3527 = vsel %vm2273, %v3522, 0
        %3529 = vmatpush.bf16.xpose.msra.mxu0 0
        %3530 = vmatpush.bf16.xpose.msra.mxu0 0
        %3531 = vmatpush.bf16.xpose.msra.mxu0 0
        %3532 = vmatpush.bf16.xpose.msra.mxu0 0
        %3533 = vmatpush.bf16.xpose.msra.mxu0 0
        %3534 = vmatpush.bf16.xpose.msra.mxu0 0
        %3535 = vmatpush.bf16.xpose.msra.mxu0 0
        %3536 = vmatpush.bf16.xpose.msra.mxu0 %v3527
        %3537 = vmatmul.bf16.gmra.mxu0 %v3524
        %v3538 = vpop.f32.mrf.mxu0
        %v3539 = vadd.f32 0.0, %v3538
        %v3540 = vpop.f32.mrf.mxu0
        %v3541 = vadd.f32 0.0, %v3540
        %3542 = vdwg.mxu0
        %3543 = vxpose.xlu0.b32.start [1/16] %v3464, 128
        %3544 = vxpose.xlu0.b32.cont [2/16] %v3466, 128
        %3545 = vxpose.xlu0.b32.cont [3/16] 0.0, 128
        %3546 = vxpose.xlu0.b32.cont [4/16] 0.0, 128
        %3547 = vxpose.xlu0.b32.cont [5/16] 0.0, 128
        %3548 = vxpose.xlu0.b32.cont [6/16] 0.0, 128
        %3549 = vxpose.xlu0.b32.cont [7/16] 0.0, 128
        %3550 = vxpose.xlu0.b32.cont [8/16] 0.0, 128
        %3551 = vxpose.xlu0.b32.cont [9/16] 0.0, 128
        %3552 = vxpose.xlu0.b32.cont [10/16] 0.0, 128
        %3553 = vxpose.xlu0.b32.cont [11/16] 0.0, 128
        %3554 = vxpose.xlu0.b32.cont [12/16] 0.0, 128
        %3555 = vxpose.xlu0.b32.cont [13/16] 0.0, 128
        %3556 = vxpose.xlu0.b32.cont [14/16] 0.0, 128
        %3557 = vxpose.xlu0.b32.cont [15/16] 0.0, 128
        %3558 = vxpose.xlu0.b32.end [16/16] 0.0, 128
        %v3559 = vpop.trf.xlu0
        %v3560 = vpop.trf.xlu0
        %v3561 = vpop.trf.xlu0
        %v3562 = vpop.trf.xlu0
        %v3563 = vpop.trf.xlu0
        %v3564 = vpop.trf.xlu0
        %v3565 = vpop.trf.xlu0
        %v3566 = vpop.trf.xlu0
        %v3567 = vpop.trf.xlu0
        %v3568 = vpop.trf.xlu0
        %v3569 = vpop.trf.xlu0
        %v3570 = vpop.trf.xlu0
        %v3571 = vpop.trf.xlu0
        %v3572 = vpop.trf.xlu0
        %v3573 = vpop.trf.xlu0
        %v3574 = vpop.trf.xlu0
        %3575 = vxpose.xlu0.b32.start [1/16] %v3489, 128
        %3576 = vxpose.xlu0.b32.cont [2/16] %v3491, 128
        %3577 = vxpose.xlu0.b32.cont [3/16] 0.0, 128
        %3578 = vxpose.xlu0.b32.cont [4/16] 0.0, 128
        %3579 = vxpose.xlu0.b32.cont [5/16] 0.0, 128
        %3580 = vxpose.xlu0.b32.cont [6/16] 0.0, 128
        %3581 = vxpose.xlu0.b32.cont [7/16] 0.0, 128
        %3582 = vxpose.xlu0.b32.cont [8/16] 0.0, 128
        %3583 = vxpose.xlu0.b32.cont [9/16] 0.0, 128
        %3584 = vxpose.xlu0.b32.cont [10/16] 0.0, 128
        %3585 = vxpose.xlu0.b32.cont [11/16] 0.0, 128
        %3586 = vxpose.xlu0.b32.cont [12/16] 0.0, 128
        %3587 = vxpose.xlu0.b32.cont [13/16] 0.0, 128
        %3588 = vxpose.xlu0.b32.cont [14/16] 0.0, 128
        %3589 = vxpose.xlu0.b32.cont [15/16] 0.0, 128
        %3590 = vxpose.xlu0.b32.end [16/16] 0.0, 128
        %v3591 = vpop.trf.xlu0
        %v3592 = vpop.trf.xlu0
        %v3593 = vpop.trf.xlu0
        %v3594 = vpop.trf.xlu0
        %v3595 = vpop.trf.xlu0
        %v3596 = vpop.trf.xlu0
        %v3597 = vpop.trf.xlu0
        %v3598 = vpop.trf.xlu0
        %v3599 = vpop.trf.xlu0
        %v3600 = vpop.trf.xlu0
        %v3601 = vpop.trf.xlu0
        %v3602 = vpop.trf.xlu0
        %v3603 = vpop.trf.xlu0
        %v3604 = vpop.trf.xlu0
        %v3605 = vpop.trf.xlu0
        %v3606 = vpop.trf.xlu0
        %3607 = vxpose.xlu0.b32.start [1/16] %v3514, 128
        %3608 = vxpose.xlu0.b32.cont [2/16] %v3516, 128
        %3609 = vxpose.xlu0.b32.cont [3/16] 0.0, 128
        %3610 = vxpose.xlu0.b32.cont [4/16] 0.0, 128
        %3611 = vxpose.xlu0.b32.cont [5/16] 0.0, 128
        %3612 = vxpose.xlu0.b32.cont [6/16] 0.0, 128
        %3613 = vxpose.xlu0.b32.cont [7/16] 0.0, 128
        %3614 = vxpose.xlu0.b32.cont [8/16] 0.0, 128
        %3615 = vxpose.xlu0.b32.cont [9/16] 0.0, 128
        %3616 = vxpose.xlu0.b32.cont [10/16] 0.0, 128
        %3617 = vxpose.xlu0.b32.cont [11/16] 0.0, 128
        %3618 = vxpose.xlu0.b32.cont [12/16] 0.0, 128
        %3619 = vxpose.xlu0.b32.cont [13/16] 0.0, 128
        %3620 = vxpose.xlu0.b32.cont [14/16] 0.0, 128
        %3621 = vxpose.xlu0.b32.cont [15/16] 0.0, 128
        %3622 = vxpose.xlu0.b32.end [16/16] 0.0, 128
        %v3623 = vpop.trf.xlu0
        %v3624 = vpop.trf.xlu0
        %v3625 = vpop.trf.xlu0
        %v3626 = vpop.trf.xlu0
        %v3627 = vpop.trf.xlu0
        %v3628 = vpop.trf.xlu0
        %v3629 = vpop.trf.xlu0
        %v3630 = vpop.trf.xlu0
        %v3631 = vpop.trf.xlu0
        %v3632 = vpop.trf.xlu0
        %v3633 = vpop.trf.xlu0
        %v3634 = vpop.trf.xlu0
        %v3635 = vpop.trf.xlu0
        %v3636 = vpop.trf.xlu0
        %v3637 = vpop.trf.xlu0
        %v3638 = vpop.trf.xlu0
        %3639 = vxpose.xlu0.b32.start [1/16] %v3539, 128
        %3640 = vxpose.xlu0.b32.cont [2/16] %v3541, 128
        %3641 = vxpose.xlu0.b32.cont [3/16] 0.0, 128
        %3642 = vxpose.xlu0.b32.cont [4/16] 0.0, 128
        %3643 = vxpose.xlu0.b32.cont [5/16] 0.0, 128
        %3644 = vxpose.xlu0.b32.cont [6/16] 0.0, 128
        %3645 = vxpose.xlu0.b32.cont [7/16] 0.0, 128
        %3646 = vxpose.xlu0.b32.cont [8/16] 0.0, 128
        %3647 = vxpose.xlu0.b32.cont [9/16] 0.0, 128
        %3648 = vxpose.xlu0.b32.cont [10/16] 0.0, 128
        %3649 = vxpose.xlu0.b32.cont [11/16] 0.0, 128
        %3650 = vxpose.xlu0.b32.cont [12/16] 0.0, 128
        %3651 = vxpose.xlu0.b32.cont [13/16] 0.0, 128
        %3652 = vxpose.xlu0.b32.cont [14/16] 0.0, 128
        %3653 = vxpose.xlu0.b32.cont [15/16] 0.0, 128
        %3654 = vxpose.xlu0.b32.end [16/16] 0.0, 128
        %v3655 = vpop.trf.xlu0
        %v3656 = vpop.trf.xlu0
        %v3657 = vpop.trf.xlu0
        %v3658 = vpop.trf.xlu0
        %v3659 = vpop.trf.xlu0
        %v3660 = vpop.trf.xlu0
        %v3661 = vpop.trf.xlu0
        %v3662 = vpop.trf.xlu0
        %v3663 = vpop.trf.xlu0
        %v3664 = vpop.trf.xlu0
        %v3665 = vpop.trf.xlu0
        %v3666 = vpop.trf.xlu0
        %v3667 = vpop.trf.xlu0
        %v3668 = vpop.trf.xlu0
        %v3669 = vpop.trf.xlu0
        %v3670 = vpop.trf.xlu0
        %v3671 = vrot.slane %v3623, 4
        %v3672 = vsel %vm859, %v3671, %v3559
        %v3673 = vrot.slane %v3559, 4
        %v3674 = vsel %vm859, %v3623, %v3673
        %v3676 = vunpack.c.l.s4 1983009808
        %v3677 = vunpack.c.0.s8 %v3676
        %v3678 = vperm.slane %v3672, %v3677
        %v3680 = vunpack.c.l.s4 1983009808
        %v3681 = vunpack.c.0.s8 %v3680
        %v3682 = vperm.slane %v3674, %v3681
        %v3683 = vrot.slane %v3655, 4
        %v3684 = vsel %vm859, %v3683, %v3591
        %v3685 = vrot.slane %v3591, 4
        %v3686 = vsel %vm859, %v3655, %v3685
        %v3688 = vunpack.c.l.s4 1983009808
        %v3689 = vunpack.c.0.s8 %v3688
        %v3690 = vperm.slane %v3684, %v3689
        %v3692 = vunpack.c.l.s4 1983009808
        %v3693 = vunpack.c.0.s8 %v3692
        %v3694 = vperm.slane %v3686, %v3693
        %v3695 = vrot.slane %v3690, 4
        %v3696 = vsel %vm859, %v3695, %v3678
        %v3697 = vrot.slane %v3678, 4
        %v3698 = vsel %vm859, %v3690, %v3697
        %v3700 = vunpack.c.l.s4 1934713408
        %v3701 = vunpack.c.0.s8 %v3700
        %v3702 = vperm.slane %v3696, %v3701
        %v3704 = vunpack.c.l.s4 1934713408
        %v3705 = vunpack.c.0.s8 %v3704
        %v3706 = vperm.slane %v3698, %v3705
        %v3707 = vrot.slane %v3694, 4
        %v3708 = vsel %vm859, %v3707, %v3682
        %v3709 = vrot.slane %v3682, 4
        %v3710 = vsel %vm859, %v3694, %v3709
        %v3712 = vunpack.c.l.s4 1934713408
        %v3713 = vunpack.c.0.s8 %v3712
        %v3714 = vperm.slane %v3708, %v3713
        %v3716 = vunpack.c.l.s4 1934713408
        %v3717 = vunpack.c.0.s8 %v3716
        %v3718 = vperm.slane %v3710, %v3717
        %v3719 = vrot.slane %v3702, 4
        %v3720 = vsel %vm859, 0.0, %v3719
        %v3721 = vrot.slane %v3706, 4
        %v3722 = vsel %vm859, 0.0, %v3721
        %v3723 = vrot.slane %v3714, 4
        %v3724 = vsel %vm859, 0.0, %v3723
        %v3725 = vrot.slane %v3718, 4
        %v3726 = vsel %vm859, 0.0, %v3725
        %v3727 = vrot.slane %v3624, 4
        %v3728 = vsel %vm859, %v3727, %v3560
        %v3729 = vrot.slane %v3560, 4
        %v3730 = vsel %vm859, %v3624, %v3729
        %v3732 = vunpack.c.l.s4 1983009808
        %v3733 = vunpack.c.0.s8 %v3732
        %v3734 = vperm.slane %v3728, %v3733
        %v3736 = vunpack.c.l.s4 1983009808
        %v3737 = vunpack.c.0.s8 %v3736
        %v3738 = vperm.slane %v3730, %v3737
        %v3739 = vrot.slane %v3656, 4
        %v3740 = vsel %vm859, %v3739, %v3592
        %v3741 = vrot.slane %v3592, 4
        %v3742 = vsel %vm859, %v3656, %v3741
        %v3744 = vunpack.c.l.s4 1983009808
        %v3745 = vunpack.c.0.s8 %v3744
        %v3746 = vperm.slane %v3740, %v3745
        %v3748 = vunpack.c.l.s4 1983009808
        %v3749 = vunpack.c.0.s8 %v3748
        %v3750 = vperm.slane %v3742, %v3749
        %v3751 = vrot.slane %v3746, 4
        %v3752 = vsel %vm859, %v3751, %v3734
        %v3753 = vrot.slane %v3734, 4
        %v3754 = vsel %vm859, %v3746, %v3753
        %v3756 = vunpack.c.l.s4 1934713408
        %v3757 = vunpack.c.0.s8 %v3756
        %v3758 = vperm.slane %v3752, %v3757
        %v3760 = vunpack.c.l.s4 1934713408
        %v3761 = vunpack.c.0.s8 %v3760
        %v3762 = vperm.slane %v3754, %v3761
        %v3763 = vrot.slane %v3750, 4
        %v3764 = vsel %vm859, %v3763, %v3738
        %v3765 = vrot.slane %v3738, 4
        %v3766 = vsel %vm859, %v3750, %v3765
        %v3768 = vunpack.c.l.s4 1934713408
        %v3769 = vunpack.c.0.s8 %v3768
        %v3770 = vperm.slane %v3764, %v3769
        %v3772 = vunpack.c.l.s4 1934713408
        %v3773 = vunpack.c.0.s8 %v3772
        %v3774 = vperm.slane %v3766, %v3773
        %v3775 = vrot.slane %v3758, 4
        %v3776 = vsel %vm859, 0.0, %v3775
        %v3777 = vrot.slane %v3762, 4
        %v3778 = vsel %vm859, 0.0, %v3777
        %v3779 = vrot.slane %v3770, 4
        %v3780 = vsel %vm859, 0.0, %v3779
        %v3781 = vrot.slane %v3774, 4
        %v3782 = vsel %vm859, 0.0, %v3781
        %v3783 = vsel %vm859, %v3721, %v3702
        %v3785 = vunpack.c.l.s4 1983009808
        %v3786 = vunpack.c.0.s8 %v3785
        %v3787 = vperm.slane %v3783, %v3786
        %v3788 = vrot.slane %v3722, 4
        %v3789 = vsel %vm859, %v3788, %v3720
        %v3791 = vunpack.c.l.s4 1983009808
        %v3792 = vunpack.c.0.s8 %v3791
        %v3793 = vperm.slane %v3789, %v3792
        %v3794 = vsel %vm859, %v3725, %v3714
        %v3796 = vunpack.c.l.s4 1983009808
        %v3797 = vunpack.c.0.s8 %v3796
        %v3798 = vperm.slane %v3794, %v3797
        %v3799 = vrot.slane %v3726, 4
        %v3800 = vsel %vm859, %v3799, %v3724
        %v3802 = vunpack.c.l.s4 1983009808
        %v3803 = vunpack.c.0.s8 %v3802
        %v3804 = vperm.slane %v3800, %v3803
        %v3805 = vrot.slane %v3793, 4
        %v3806 = vsel %vm859, %v3805, %v3787
        %v3807 = vrot.slane %v3787, 4
        %v3808 = vsel %vm859, %v3793, %v3807
        %v3810 = vunpack.c.l.s4 1934713408
        %v3811 = vunpack.c.0.s8 %v3810
        %v3812 = vperm.slane %v3806, %v3811
        %v3814 = vunpack.c.l.s4 1934713408
        %v3815 = vunpack.c.0.s8 %v3814
        %v3816 = vperm.slane %v3808, %v3815
        %v3817 = vrot.slane %v3804, 4
        %v3818 = vsel %vm859, %v3817, %v3798
        %v3819 = vrot.slane %v3798, 4
        %v3820 = vsel %vm859, %v3804, %v3819
        %v3822 = vunpack.c.l.s4 1934713408
        %v3823 = vunpack.c.0.s8 %v3822
        %v3824 = vperm.slane %v3818, %v3823
        %v3826 = vunpack.c.l.s4 1934713408
        %v3827 = vunpack.c.0.s8 %v3826
        %v3828 = vperm.slane %v3820, %v3827
        %v3829 = vrot.slane %v3824, 4
        %v3830 = vsel %vm859, %v3829, %v3812
        %v3831 = vrot.slane %v3812, 4
        %v3832 = vsel %vm859, %v3824, %v3831
        %v3833 = vrot.slane %v3828, 4
        %v3834 = vsel %vm859, %v3833, %v3816
        %v3835 = vrot.slane %v3816, 4
        %v3836 = vsel %vm859, %v3828, %v3835
        %v3837 = vsel %vm859, %v3777, %v3758
        %v3839 = vunpack.c.l.s4 1983009808
        %v3840 = vunpack.c.0.s8 %v3839
        %v3841 = vperm.slane %v3837, %v3840
        %v3842 = vrot.slane %v3778, 4
        %v3843 = vsel %vm859, %v3842, %v3776
        %v3845 = vunpack.c.l.s4 1983009808
        %v3846 = vunpack.c.0.s8 %v3845
        %v3847 = vperm.slane %v3843, %v3846
        %v3848 = vsel %vm859, %v3781, %v3770
        %v3850 = vunpack.c.l.s4 1983009808
        %v3851 = vunpack.c.0.s8 %v3850
        %v3852 = vperm.slane %v3848, %v3851
        %v3853 = vrot.slane %v3782, 4
        %v3854 = vsel %vm859, %v3853, %v3780
        %v3856 = vunpack.c.l.s4 1983009808
        %v3857 = vunpack.c.0.s8 %v3856
        %v3858 = vperm.slane %v3854, %v3857
        %v3859 = vrot.slane %v3847, 4
        %v3860 = vsel %vm859, %v3859, %v3841
        %v3861 = vrot.slane %v3841, 4
        %v3862 = vsel %vm859, %v3847, %v3861
        %v3864 = vunpack.c.l.s4 1934713408
        %v3865 = vunpack.c.0.s8 %v3864
        %v3866 = vperm.slane %v3860, %v3865
        %v3868 = vunpack.c.l.s4 1934713408
        %v3869 = vunpack.c.0.s8 %v3868
        %v3870 = vperm.slane %v3862, %v3869
        %v3871 = vrot.slane %v3858, 4
        %v3872 = vsel %vm859, %v3871, %v3852
        %v3873 = vrot.slane %v3852, 4
        %v3874 = vsel %vm859, %v3858, %v3873
        %v3876 = vunpack.c.l.s4 1934713408
        %v3877 = vunpack.c.0.s8 %v3876
        %v3878 = vperm.slane %v3872, %v3877
        %v3880 = vunpack.c.l.s4 1934713408
        %v3881 = vunpack.c.0.s8 %v3880
        %v3882 = vperm.slane %v3874, %v3881
        %v3883 = vrot.slane %v3878, 4
        %v3884 = vsel %vm859, %v3883, %v3866
        %v3885 = vrot.slane %v3866, 4
        %v3886 = vsel %vm859, %v3878, %v3885
        %v3887 = vrot.slane %v3882, 4
        %v3888 = vsel %vm859, %v3887, %v3870
        %v3889 = vrot.slane %v3870, 4
        %v3890 = vsel %vm859, %v3882, %v3889
        %3893 = vrot.lane.b32.xlu0 %v3832, 16
        %v3894 = vpop.permute.xlu0 %3893
        %3895 = vrot.lane.b32.xlu0 %v3886, 16
        %v3896 = vpop.permute.xlu0 %3895
        %3901 = vrot.lane.b32.xlu0 %v3834, 32
        %v3902 = vpop.permute.xlu0 %3901
        %3903 = vrot.lane.b32.xlu0 %v3888, 32
        %v3904 = vpop.permute.xlu0 %3903
        %3909 = vrot.lane.b32.xlu0 %v3836, 48
        %v3910 = vpop.permute.xlu0 %3909
        %3911 = vrot.lane.b32.xlu0 %v3890, 48
        %v3912 = vpop.permute.xlu0 %3911
        %v3915 = vsel %vm2273, %v3830, %v3894
        %v3916 = vsel %vm2273, %v3884, %v3896
        %vm3917 = vcmask 261120
        %v3918 = vsel %vm3917, %v3915, %v3902
        %v3919 = vsel %vm3917, %v3916, %v3904
        %vm3920 = vcmask 392192
        %v3921 = vsel %vm3920, %v3918, %v3910
        %v3922 = vsel %vm3920, %v3919, %v3912
        %v3923 = vpack.c.bf16 %v3922, %v3921
        %v3925 = vperm.slane %v720, 0
        %v3935 = vunpack.c.l.b16 %v686
        %v3936 = vunpack.c.l.b16 %v687
        %v3937 = vunpack.c.l.b16 %v688
        %v3938 = vunpack.c.l.b16 %v689
        %v3939 = vunpack.c.l.b16 %v690
        %v3940 = vunpack.c.l.b16 %v691
        %v3941 = vunpack.c.l.b16 %v692
        %v3942 = vunpack.c.l.b16 %v693
        %v3943 = vpack.c.b16 %v3936, %v3935
        %v3944 = vpack.c.b16 %v3938, %v3937
        %v3945 = vpack.c.b16 %v3940, %v3939
        %v3946 = vpack.c.b16 %v3942, %v3941
        %v3952 = vsel %vm757, %v3923, 0
        %3954 = vmatpush.bf16.msra.mxu0 0
        %3955 = vmatpush.bf16.msra.mxu0 0
        %3956 = vmatpush.bf16.msra.mxu0 0
        %3957 = vmatpush.bf16.msra.mxu0 0
        %3958 = vmatpush.bf16.msra.mxu0 %v3946
        %3959 = vmatpush.bf16.msra.mxu0 %v3945
        %3960 = vmatpush.bf16.msra.mxu0 %v3944
        %3961 = vmatpush.bf16.msra.mxu0 %v3943
        %3962 = vmatmul.bf16.gmra.mxu0 %v3952
        %v3963 = vpop.f32.mrf.mxu0
        %v3964 = vadd.f32 %v3925, %v3963
        %v3965 = vpop.f32.mrf.mxu0
        %v3966 = vadd.f32 %v3925, %v3965
        %3967 = vdwg.mxu0
        %v3968 = vadd.f32 %v666, %v3964
        %v3969 = vadd.f32 %v667, %v3966
        %v3970 = vsel %vm757, %v3968, 0.0
        %3971 = vadd.xlane.f32.xlu0 %v3970
        %v3972 = vpop.xlane.xlu0 %3971
        %v3973 = vsel %vm757, %v3969, 0.0
        %3974 = vadd.xlane.f32.xlu0 %v3973
        %v3975 = vpop.xlane.xlu0 %3974
        %v3976 = vrcp.pop 64.0
        %v3977 = vmul.f32 64.0, %v3976
        %v3978 = vsub.f32 1.0, %v3977
        %v3979 = vmul.f32 %v3976, %v3978
        %v3980 = vadd.f32 %v3976, %v3979
        %vm3981 = vweird.f32 %v3976
        %v3982 = vsel %vm3981, %v3976, %v3980
        %v3983 = vmul.f32 %v3972, %v3982
        %v3984 = vmul.f32 %v3975, %v3982
        %v3985 = vsub.f32 %v3968, %v3983
        %v3986 = vsub.f32 %v3969, %v3984
        %v3987 = vmul.f32 %v3985, %v3985
        %v3988 = vmul.f32 %v3986, %v3986
        %v3989 = vsel %vm757, %v3987, 0.0
        %3990 = vadd.xlane.f32.xlu0 %v3989
        %v3991 = vpop.xlane.xlu0 %3990
        %v3992 = vsel %vm757, %v3988, 0.0
        %3993 = vadd.xlane.f32.xlu0 %v3992
        %v3994 = vpop.xlane.xlu0 %3993
        %v3995 = vmul.f32 %v3991, %v3982
        %v3996 = vmul.f32 %v3994, %v3982
        %v3997 = vadd.f32 %v3995, 1e-05
        %v3998 = vadd.f32 %v3996, 1e-05
        %v3999 = vrsqrt.pop %v3997
        %v4000 = vmul.f32 %v3999, %v3997
        %v4001 = vmul.f32 %v4000, %v3999
        %v4002 = vmul.f32 0.5, %v4001
        %v4003 = vsub.f32 1.5, %v4002
        %v4004 = vmul.f32 %v3999, %v4003
        %vm4005 = vweird.f32 %v3997
        %vm4006 = vweird.f32 %v3999
        %vm4007 = vmor %vm4005, %vm4006
        %v4008 = vsel %vm4007, %v3999, %v4004
        %v4009 = vrsqrt.pop %v3998
        %v4010 = vmul.f32 %v4009, %v3998
        %v4011 = vmul.f32 %v4010, %v4009
        %v4012 = vmul.f32 0.5, %v4011
        %v4013 = vsub.f32 1.5, %v4012
        %v4014 = vmul.f32 %v4009, %v4013
        %vm4015 = vweird.f32 %v3998
        %vm4016 = vweird.f32 %v4009
        %vm4017 = vmor %vm4015, %vm4016
        %v4018 = vsel %vm4017, %v4009, %v4014
        %v4019 = vmul.f32 %v3985, %v4008
        %v4020 = vmul.f32 %v3986, %v4018
        %v4022 = vperm.slane %v723, 0
        %v4024 = vmul.f32 %v4019, %v4022
        %v4025 = vmul.f32 %v4020, %v4022
        %v4027 = vperm.slane %v724, 0
        %v4029 = vadd.f32 %v4024, %v4027
        %v4030 = vadd.f32 %v4025, %v4027
        %v4031 = vpack.c.bf16 %v4030, %v4029
        %v4033 = vperm.slane %v721, 0
        %v4043 = vunpack.c.l.b16 %v694
        %v4044 = vunpack.c.l.b16 %v695
        %v4045 = vunpack.c.l.b16 %v696
        %v4046 = vunpack.c.l.b16 %v697
        %v4047 = vunpack.c.l.b16 %v698
        %v4048 = vunpack.c.l.b16 %v699
        %v4049 = vunpack.c.l.b16 %v700
        %v4050 = vunpack.c.l.b16 %v701
        %v4051 = vpack.c.b16 %v4044, %v4043
        %v4052 = vpack.c.b16 %v4046, %v4045
        %v4053 = vpack.c.b16 %v4048, %v4047
        %v4054 = vpack.c.b16 %v4050, %v4049
        %v4060 = vsel %vm757, %v4031, 0
        %4062 = vmatpush.bf16.msra.mxu0 0
        %4063 = vmatpush.bf16.msra.mxu0 0
        %4064 = vmatpush.bf16.msra.mxu0 0
        %4065 = vmatpush.bf16.msra.mxu0 0
        %4066 = vmatpush.bf16.msra.mxu0 %v4054
        %4067 = vmatpush.bf16.msra.mxu0 %v4053
        %4068 = vmatpush.bf16.msra.mxu0 %v4052
        %4069 = vmatpush.bf16.msra.mxu0 %v4051
        %4070 = vmatmul.bf16.gmra.mxu0 %v4060
        %v4071 = vpop.f32.mrf.mxu0
        %v4072 = vadd.f32 %v4033, %v4071
        %v4073 = vpop.f32.mrf.mxu0
        %v4074 = vadd.f32 %v4033, %v4073
        %4075 = vdwg.mxu0
        %v4076 = vmax.f32 %v4072, 0.0
        %v4077 = vmax.f32 %v4074, 0.0
        %v4078 = vpack.c.bf16 %v4077, %v4076
        %v4080 = vperm.slane %v722, 0
        %v4098 = vunpack.c.l.b16 %v702
        %v4099 = vunpack.c.l.b16 %v703
        %v4100 = vunpack.c.l.b16 %v704
        %v4101 = vunpack.c.l.b16 %v705
        %v4102 = vunpack.c.l.b16 %v706
        %v4103 = vunpack.c.l.b16 %v707
        %v4104 = vunpack.c.l.b16 %v708
        %v4105 = vunpack.c.l.b16 %v709
        %v4106 = vunpack.c.l.b16 %v710
        %v4107 = vunpack.c.l.b16 %v711
        %v4108 = vunpack.c.l.b16 %v712
        %v4109 = vunpack.c.l.b16 %v713
        %v4110 = vunpack.c.l.b16 %v714
        %v4111 = vunpack.c.l.b16 %v715
        %v4112 = vunpack.c.l.b16 %v716
        %v4113 = vunpack.c.l.b16 %v717
        %v4114 = vpack.c.b16 %v4099, %v4098
        %v4115 = vpack.c.b16 %v4101, %v4100
        %v4116 = vpack.c.b16 %v4103, %v4102
        %v4117 = vpack.c.b16 %v4105, %v4104
        %v4118 = vpack.c.b16 %v4107, %v4106
        %v4119 = vpack.c.b16 %v4109, %v4108
        %v4120 = vpack.c.b16 %v4111, %v4110
        %v4121 = vpack.c.b16 %v4113, %v4112
        %4130 = vmatpush.bf16.msra.mxu0 %v4121
        %4131 = vmatpush.bf16.msra.mxu0 %v4120
        %4132 = vmatpush.bf16.msra.mxu0 %v4119
        %4133 = vmatpush.bf16.msra.mxu0 %v4118
        %4134 = vmatpush.bf16.msra.mxu0 %v4117
        %4135 = vmatpush.bf16.msra.mxu0 %v4116
        %4136 = vmatpush.bf16.msra.mxu0 %v4115
        %4137 = vmatpush.bf16.msra.mxu0 %v4114
        %4138 = vmatmul.bf16.gmra.mxu0 %v4078
        %v4139 = vpop.f32.mrf.mxu0
        %v4140 = vadd.f32 %v4080, %v4139
        %v4141 = vpop.f32.mrf.mxu0
        %v4142 = vadd.f32 %v4080, %v4141
        %4143 = vdwg.mxu0
        %v4144 = vadd.f32 %v4029, %v4140
        %v4145 = vadd.f32 %v4030, %v4142
        %v4146 = vsel %vm757, %v4144, 0.0
        %4147 = vadd.xlane.f32.xlu0 %v4146
        %v4148 = vpop.xlane.xlu0 %4147
        %v4149 = vsel %vm757, %v4145, 0.0
        %4150 = vadd.xlane.f32.xlu0 %v4149
        %v4151 = vpop.xlane.xlu0 %4150
        %v4152 = vmul.f32 %v4148, %v3982
        %v4153 = vmul.f32 %v4151, %v3982
        %v4154 = vsub.f32 %v4144, %v4152
        %v4155 = vsub.f32 %v4145, %v4153
        %v4156 = vmul.f32 %v4154, %v4154
        %v4157 = vmul.f32 %v4155, %v4155
        %v4158 = vsel %vm757, %v4156, 0.0
        %4159 = vadd.xlane.f32.xlu0 %v4158
        %v4160 = vpop.xlane.xlu0 %4159
        %v4161 = vsel %vm757, %v4157, 0.0
        %4162 = vadd.xlane.f32.xlu0 %v4161
        %v4163 = vpop.xlane.xlu0 %4162
        %v4164 = vmul.f32 %v4160, %v3982
        %v4165 = vmul.f32 %v4163, %v3982
        %v4166 = vadd.f32 %v4164, 1e-05
        %v4167 = vadd.f32 %v4165, 1e-05
        %v4168 = vrsqrt.pop %v4166
        %v4169 = vmul.f32 %v4168, %v4166
        %v4170 = vmul.f32 %v4169, %v4168
        %v4171 = vmul.f32 0.5, %v4170
        %v4172 = vsub.f32 1.5, %v4171
        %v4173 = vmul.f32 %v4168, %v4172
        %vm4174 = vweird.f32 %v4166
        %vm4175 = vweird.f32 %v4168
        %vm4176 = vmor %vm4174, %vm4175
        %v4177 = vsel %vm4176, %v4168, %v4173
        %v4178 = vrsqrt.pop %v4167
        %v4179 = vmul.f32 %v4178, %v4167
        %v4180 = vmul.f32 %v4179, %v4178
        %v4181 = vmul.f32 0.5, %v4180
        %v4182 = vsub.f32 1.5, %v4181
        %v4183 = vmul.f32 %v4178, %v4182
        %vm4184 = vweird.f32 %v4167
        %vm4185 = vweird.f32 %v4178
        %vm4186 = vmor %vm4184, %vm4185
        %v4187 = vsel %vm4186, %v4178, %v4183
        %v4188 = vmul.f32 %v4154, %v4177
        %v4189 = vmul.f32 %v4155, %v4187
        %v4191 = vperm.slane %v725, 0
        %v4193 = vmul.f32 %v4188, %v4191
        %v4194 = vmul.f32 %v4189, %v4191
        %v4196 = vperm.slane %v726, 0
        %v4198 = vadd.f32 %v4193, %v4196
        %v4199 = vadd.f32 %v4194, %v4196
        %4200 = vst.msk [vmem:[#allocation2] sm:$0xff] %vm757, %v4198
        %4201 = vst.msk [vmem:[#allocation2 + $0x8] sm:$0xff] %vm757, %v4199
        %p4202 = scmp.eq.s32.totalorder %s39, 1
        // Predicated region
        $region109: #{tpu_custom_call.1} parent=91 // pred_check
          %p4203 = pneg %p4202
        $region110: #{tpu_custom_call.1} parent=91 // pred_check_branch
          %4205 = sbr.rel (%p4203) target = $region112
        $region111: #{tpu_custom_call.1} parent=91 // pred_region
          %v4206 = vld [vmem:[%s16] sm:$0x1]
          %v4207 = vld [vmem:[%s17] sm:$0x1]
          %v4208 = vsel %vm757, %v4198, 0.0
          %4209 = vadd.xlane.f32.xlu0 %v4208
          %v4210 = vpop.xlane.xlu0 %4209
          %v4211 = vsel %vm757, %v4199, 0.0
          %4212 = vadd.xlane.f32.xlu0 %v4211
          %v4213 = vpop.xlane.xlu0 %4212
          %v4214 = vmul.f32 %v4210, %v3982
          %v4215 = vmul.f32 %v4213, %v3982
          %v4216 = vsub.f32 %v4198, %v4214
          %v4217 = vsub.f32 %v4199, %v4215
          %v4218 = vmul.f32 %v4216, %v4216
          %v4219 = vmul.f32 %v4217, %v4217
          %v4220 = vsel %vm757, %v4218, 0.0
          %4221 = vadd.xlane.f32.xlu0 %v4220
          %v4222 = vpop.xlane.xlu0 %4221
          %v4223 = vsel %vm757, %v4219, 0.0
          %4224 = vadd.xlane.f32.xlu0 %v4223
          %v4225 = vpop.xlane.xlu0 %4224
          %v4226 = vmul.f32 %v4222, %v3982
          %v4227 = vmul.f32 %v4225, %v3982
          %v4228 = vadd.f32 %v4226, 1e-05
          %v4229 = vadd.f32 %v4227, 1e-05
          %v4230 = vrsqrt.pop %v4228
          %v4231 = vmul.f32 %v4230, %v4228
          %v4232 = vmul.f32 %v4231, %v4230
          %v4233 = vmul.f32 0.5, %v4232
          %v4234 = vsub.f32 1.5, %v4233
          %v4235 = vmul.f32 %v4230, %v4234
          %vm4236 = vweird.f32 %v4228
          %vm4237 = vweird.f32 %v4230
          %vm4238 = vmor %vm4236, %vm4237
          %v4239 = vsel %vm4238, %v4230, %v4235
          %v4240 = vrsqrt.pop %v4229
          %v4241 = vmul.f32 %v4240, %v4229
          %v4242 = vmul.f32 %v4241, %v4240
          %v4243 = vmul.f32 0.5, %v4242
          %v4244 = vsub.f32 1.5, %v4243
          %v4245 = vmul.f32 %v4240, %v4244
          %vm4246 = vweird.f32 %v4229
          %vm4247 = vweird.f32 %v4240
          %vm4248 = vmor %vm4246, %vm4247
          %v4249 = vsel %vm4248, %v4240, %v4245
          %v4250 = vmul.f32 %v4216, %v4239
          %v4251 = vmul.f32 %v4217, %v4249
          %v4253 = vperm.slane %v4206, 0
          %v4255 = vmul.f32 %v4250, %v4253
          %v4256 = vmul.f32 %v4251, %v4253
          %v4258 = vperm.slane %v4207, 0
          %v4260 = vadd.f32 %v4255, %v4258
          %v4261 = vadd.f32 %v4256, %v4258
          %4262 = vst.msk [vmem:[%s645] sm:$0xff] %vm757, %v4260
          %4263 = vst.msk [vmem:[%s645 + $0x8] sm:$0xff] %vm757, %v4261
        $region112: #{tpu_custom_call.1} parent=91 // pred_fallthru
          _
        %s4264 = sand.u32 %s442, 1
        %s4265 = scalar_lea.sflag [#allocation5], %s4264
        %s4266 = sand.u32 %s442, 1
        %s4267 = smul.addr %s4266, 16
        %s4268 = scalar_lea.vmem [#allocation9], %s4267
        // Predicated region
        $region113: #{tpu_custom_call.1} parent=91 // pred_check
          %p4269 = pneg %p452
        $region114: #{tpu_custom_call.1} parent=91 // pred_check_branch
          %4271 = sbr.rel (%p4269) target = $region116
        $region115: #{tpu_custom_call.1} parent=91 // pred_region
          %4273 = vsyncadd %s4265, 0
          %s4274 = smul.addr %s38, 2
          %s4275 = smul.addr %s4274, 8
          %s4276 = scalar_lea.hbm %s18, %s4275
          %s4277 = sshll.u32 %s4268, 4
          %s4278 = int_to_ptr.vmem [resolvable:$true] %s4277
          %s4279 = sshll.u32 %s4276, 4
          %s4280 = int_to_ptr.hbm [resolvable:$true] %s4279
          %4285 = dma.vmem_to_hbm [thread:$0]  %s4278, 256, %s4280, %s4265, 128, 128, 8
        $region116: #{tpu_custom_call.1} parent=91 // pred_fallthru
          _
      $region92: #{tpu_custom_call.1} parent=5 // pred_fallthru
        _
      %p4286 = scmp.le.s32.totalorder 2, %s29
      // Predicated region
      $region117: #{tpu_custom_call.1} parent=5 // pred_check
        %p4287 = pneg %p4286
      $region118: #{tpu_custom_call.1} parent=5 // pred_check_branch
        %4289 = sbr.rel (%p4287) target = $region120
      $region119: #{tpu_custom_call.1} parent=5 // pred_region
        %s4290 = ssub.s32 %s29, 2
        // Predicated region
        $region121: #{tpu_custom_call.1} parent=119 // pred_check
          %p4291 = pneg %p458
        $region122: #{tpu_custom_call.1} parent=119 // pred_check_branch
          %4293 = sbr.rel (%p4291) target = $region124
        $region123: #{tpu_custom_call.1} parent=119 // pred_region
          %s4294 = sand.u32 %s443, 1
          %s4295 = scalar_lea.sflag [#allocation5], %s4294
          %s4296 = sand.u32 %s443, 1
          %s4297 = smul.addr %s4296, 16
          %s4298 = scalar_lea.vmem [#allocation9], %s4297
          %4300 = dma.done %s4295, 256
        $region124: #{tpu_custom_call.1} parent=119 // pred_fallthru
          _
      $region120: #{tpu_custom_call.1} parent=5 // pred_fallthru
        _
    $region6: #{tpu_custom_call.1} parent=1 // loop_footer
      %s33 = sadd.s32 1, %s29
    $region7: #{tpu_custom_call.1} parent=1 // loop_footer_branch
      %28 = sbr.rel target = $region3
    $region8: #{tpu_custom_call.1} parent=1 // loop_exit
      _
    %4301 = vsyncpa [#allocation4], 1
    %s4302 = scalar_lea.sflag [#allocation4], 1
    %4303 = vsyncpa %s4302, 1
    %4304 = vsyncpa [#allocation7], 1
    %4305 = vsyncpa [#allocation5], 1
    %s4306 = scalar_lea.sflag [#allocation5], 1
    %4307 = vsyncpa %s4306, 1

// kernel: tpu_custom_call.1
$region0: #{tpu_custom_call.1}
  #allocation0 [shape = 'u32[]', space=smem, size = 0x4, offset = 0x4, fixed_abs, tag = 'smem constant byte address 0x4 - core index']
  #allocation1 [shape = 'u32[72,128]{1,0:T(1,128)}', space=vmem, size = 0x9000, scoped, tag = 'internal scratch']
  #allocation2 [shape = 'f32[16,64]{1,0:T(8,128)}', space=vmem, size = 0x2000, scoped, tag = 'scratch operand']
  %s0 = inlined_call_operand.vmem [shape: f32[2,16,64], index: 0, kind: input, shape index: {}]
  %s1 = inlined_call_operand.vmem [shape: f32[2,16,64], index: 1, kind: input, shape index: {}]
  %s2 = inlined_call_operand.vmem [shape: bf16[64,128], index: 2, kind: input, shape index: {}]
  %s3 = inlined_call_operand.vmem [shape: f32[1,128], index: 3, kind: input, shape index: {}]
  %s4 = inlined_call_operand.hbm [shape: bf16[64,64], index: 4, kind: input, shape index: {}]
  %s5 = inlined_call_operand.vmem [shape: f32[1,64], index: 5, kind: input, shape index: {}]
  %s6 = inlined_call_operand.hbm [shape: bf16[64,64], index: 6, kind: input, shape index: {}]
  %s7 = inlined_call_operand.vmem [shape: f32[1,64], index: 7, kind: input, shape index: {}]
  %s8 = inlined_call_operand.vmem [shape: f32[1,64], index: 8, kind: input, shape index: {}]
  %s9 = inlined_call_operand.vmem [shape: f32[1,64], index: 9, kind: input, shape index: {}]
  %s10 = inlined_call_operand.hbm [shape: bf16[64,128], index: 10, kind: input, shape index: {}]
  %s11 = inlined_call_operand.vmem [shape: f32[1,128], index: 11, kind: input, shape index: {}]
  %s12 = inlined_call_operand.vmem [shape: bf16[128,64], index: 12, kind: input, shape index: {}]
  %s13 = inlined_call_operand.vmem [shape: f32[1,64], index: 13, kind: input, shape index: {}]
  %s14 = inlined_call_operand.vmem [shape: f32[1,64], index: 14, kind: input, shape index: {}]
  %s15 = inlined_call_operand.vmem [shape: f32[1,64], index: 15, kind: input, shape index: {}]
  %s16 = inlined_call_operand.vmem [shape: f32[1,64], index: 16, kind: input, shape index: {}]
  %s17 = inlined_call_operand.vmem [shape: f32[1,64], index: 17, kind: input, shape index: {}]
  %s18 = inlined_call_operand.hbm [shape: f32[2,16,64], index: 18, kind: output, shape index: {}]
  %s19 = sld [smem:[#allocation0]]
  $region125: #{tpu_custom_call.1} parent=0
    _
  %s21 = ssub.s32 1, %s19
  %s22 = scalar_select 0, %s21, %s19
  $region1: #{tpu_custom_call.1} parent=0
    #allocation3 [shape = 'u8[16384]{0}', space=vmem, size = 0x4000, scoped, tag = 'input window, operand 4, single buffered']
    #allocation4 [shape = 's32[2]{0}', space=sflag, size = 0x8, scoped, tag = 'scoped memory for tpu_custom_call.1']
    #allocation5 [shape = 's32[2]{0}', space=sflag, size = 0x8, scoped, tag = 'scoped memory for tpu_custom_call.1']
    #allocation6 [shape = 'u8[16384]{0}', space=vmem, size = 0x4000, scoped, tag = 'input window, operand 6, single buffered']
    #allocation7 [shape = 's32[1]{0}', space=sflag, size = 0x4, scoped, tag = 'scoped memory for tpu_custom_call.1']
    #allocation8 [shape = 'u8[16384]{0}', space=vmem, size = 0x4000, scoped, tag = 'input window, operand 10, single buffered']
    #allocation9 [shape = 'u8[16384]{0}', space=vmem, size = 0x4000, scoped, tag = 'output window, operand 0']
    %23 = vsyncpa [#allocation4], 0
    %24 = vsyncpa [#allocation7], 0
    %25 = vsyncpa [#allocation5], 0
    %s26 = scalar_lea.sflag [#allocation5], 1
    %27 = vsyncpa %s26, 0
    loop: start=0, step=1, limit=6
    $region2: #{tpu_custom_call.1} parent=1 // loop_pre_header
      _
    $region3: #{tpu_custom_call.1} parent=1 // loop_header
      %s29 = sphi 0, %s33
      %p30 = scmp.ge.s32.totalorder %s29, 6
      %s36 = sphi 0, %s48
      %s37 = sphi 0, %s44
      %s38 = sphi 0, %s36
      %s39 = sphi 0, %s37
      %s40 = sphi 0, %s38
      %s41 = sphi 0, %s39
      %s51 = sphi 0, %s53
      %s54 = sphi 0, %s51
      %s55 = sphi 0, %s54
      %s71 = sphi 0, %s55
      %s77 = sphi 0, %s79
      %s80 = sphi 0, %s77
      %s81 = sphi 0, %s80
      %s97 = sphi 0, %s81
      %s101 = sphi 0, %s101
      %s103 = sphi 0, %s101
      %s104 = sphi 0, %s103
      %s118 = sphi 0, %s104
      %s122 = sphi 0, %s122
      %s124 = sphi 0, %s122
      %s125 = sphi 0, %s124
      %s139 = sphi 0, %s125
      %s143 = sphi 0, %s143
      %s145 = sphi 0, %s143
      %s146 = sphi 0, %s145
      %s160 = sphi 0, %s146
      %s164 = sphi 0, %s164
      %s166 = sphi 0, %s164
      %s167 = sphi 0, %s166
      %s181 = sphi 0, %s167
      %s185 = sphi 0, %s185
      %s187 = sphi 0, %s185
      %s188 = sphi 0, %s187
      %s202 = sphi 0, %s188
      %s206 = sphi 0, %s206
      %s208 = sphi 0, %s206
      %s209 = sphi 0, %s208
      %s223 = sphi 0, %s209
      %s227 = sphi 0, %s227
      %s229 = sphi 0, %s227
      %s230 = sphi 0, %s229
      %s244 = sphi 0, %s230
      %s248 = sphi 0, %s248
      %s250 = sphi 0, %s248
      %s251 = sphi 0, %s250
      %s265 = sphi 0, %s251
      %s269 = sphi 0, %s269
      %s271 = sphi 0, %s269
      %s272 = sphi 0, %s271
      %s286 = sphi 0, %s272
      %s290 = sphi 0, %s290
      %s292 = sphi 0, %s290
      %s293 = sphi 0, %s292
      %s307 = sphi 0, %s293
      %s311 = sphi 0, %s311
      %s313 = sphi 0, %s311
      %s314 = sphi 0, %s313
      %s328 = sphi 0, %s314
      %s332 = sphi 0, %s332
      %s334 = sphi 0, %s332
      %s335 = sphi 0, %s334
      %s349 = sphi 0, %s335
      %s353 = sphi 0, %s353
      %s355 = sphi 0, %s353
      %s356 = sphi 0, %s355
      %s370 = sphi 0, %s356
      %s374 = sphi 0, %s374
      %s376 = sphi 0, %s374
      %s377 = sphi 0, %s376
      %s391 = sphi 0, %s377
      %s395 = sphi 0, %s395
      %s397 = sphi 0, %s395
      %s398 = sphi 0, %s397
      %s412 = sphi 0, %s398
      %s416 = sphi 0, %s416
      %s418 = sphi 0, %s416
      %s419 = sphi 0, %s418
      %s433 = sphi 0, %s419
      %s439 = sphi 0, %s441
      %s442 = sphi 0, %s439
      %s443 = sphi 0, %s442
      %s459 = sphi 0, %s443
    $region4: #{tpu_custom_call.1} parent=1 // loop_header_branch
      %32 = sbr.rel (%p30) target = $region8
    $region5: #{tpu_custom_call.1} parent=1 // loop_body
      %s34 = ssub.s32 %s29, 1
      %s35 = ssub.s32 %s29, 2
      %s42 = sadd.s32 1, %s37
      %p43 = scmp.ge.s32.totalorder %s42, 2
      %s44 = scalar_select %p43, 0, %s42
      %s45 = sadd.s32 1, %s36
      %s46 = scalar_select %p43, %s45, %s36
      %p47 = scmp.ge.s32.totalorder %s46, 2
      %s48 = scalar_select %p47, 0, %s46
      %s49 = ssub.s32 %s36, %s48
      %p50 = scmp.eq.s32.totalorder %s49, 0
      %s52 = sadd.s32 %s51, 1
      %s53 = scalar_select %p50, %s51, %s52
      %p56 = pneg %p50
      %p57 = scmp.eq.s32.totalorder %s29, 3
      %p58 = por %p56, %p57
      %p59 = scmp.ne.s32.totalorder %s51, %s54
      %p60 = scmp.eq.s32.totalorder %s29, 0
      %p61 = por %p59, %p60
      %p62 = scmp.ne.s32.totalorder %s51, %s54
      %p63 = scmp.eq.s32.totalorder %s34, 3
      %p64 = por %p62, %p63
      %p65 = scmp.ne.s32.totalorder %s54, %s55
      %p66 = scmp.eq.s32.totalorder %s34, 0
      %p67 = por %p65, %p66
      %p68 = scmp.ne.s32.totalorder %s54, %s55
      %p69 = scmp.eq.s32.totalorder %s35, 3
      %p70 = por %p68, %p69
      %p72 = scmp.ne.s32.totalorder %s55, %s71
      %p73 = scmp.eq.s32.totalorder %s35, 0
      %p74 = por %p72, %p73
      %s75 = ssub.s32 %s36, %s48
      %p76 = scmp.eq.s32.totalorder %s75, 0
      %s78 = sadd.s32 %s77, 1
      %s79 = scalar_select %p76, %s77, %s78
      %p82 = pneg %p76
      %p83 = scmp.eq.s32.totalorder %s29, 3
      %p84 = por %p82, %p83
      %p85 = scmp.ne.s32.totalorder %s77, %s80
      %p86 = scmp.eq.s32.totalorder %s29, 0
      %p87 = por %p85, %p86
      %p88 = scmp.ne.s32.totalorder %s77, %s80
      %p89 = scmp.eq.s32.totalorder %s34, 3
      %p90 = por %p88, %p89
      %p91 = scmp.ne.s32.totalorder %s80, %s81
      %p92 = scmp.eq.s32.totalorder %s34, 0
      %p93 = por %p91, %p92
      %p94 = scmp.ne.s32.totalorder %s80, %s81
      %p95 = scmp.eq.s32.totalorder %s35, 3
      %p96 = por %p94, %p95
      %p98 = scmp.ne.s32.totalorder %s81, %s97
      %p99 = scmp.eq.s32.totalorder %s35, 0
      %p100 = por %p98, %p99
      %s102 = sadd.s32 %s101, 1
      %p105 = scmp.eq.s32.totalorder %s29, 3
      %p106 = scmp.ne.s32.totalorder %s101, %s103
      %p107 = scmp.eq.s32.totalorder %s29, 0
      %p108 = por %p106, %p107
      %p109 = scmp.ne.s32.totalorder %s101, %s103
      %p110 = scmp.eq.s32.totalorder %s34, 3
      %p111 = por %p109, %p110
      %p112 = scmp.ne.s32.totalorder %s103, %s104
      %p113 = scmp.eq.s32.totalorder %s34, 0
      %p114 = por %p112, %p113
      %p115 = scmp.ne.s32.totalorder %s103, %s104
      %p116 = scmp.eq.s32.totalorder %s35, 3
      %p117 = por %p115, %p116
      %p119 = scmp.ne.s32.totalorder %s104, %s118
      %p120 = scmp.eq.s32.totalorder %s35, 0
      %p121 = por %p119, %p120
      %s123 = sadd.s32 %s122, 1
      %p126 = scmp.eq.s32.totalorder %s29, 3
      %p127 = scmp.ne.s32.totalorder %s122, %s124
      %p128 = scmp.eq.s32.totalorder %s29, 0
      %p129 = por %p127, %p128
      %p130 = scmp.ne.s32.totalorder %s122, %s124
      %p131 = scmp.eq.s32.totalorder %s34, 3
      %p132 = por %p130, %p131
      %p133 = scmp.ne.s32.totalorder %s124, %s125
      %p134 = scmp.eq.s32.totalorder %s34, 0
      %p135 = por %p133, %p134
      %p136 = scmp.ne.s32.totalorder %s124, %s125
      %p137 = scmp.eq.s32.totalorder %s35, 3
      %p138 = por %p136, %p137
      %p140 = scmp.ne.s32.totalorder %s125, %s139
      %p141 = scmp.eq.s32.totalorder %s35, 0
      %p142 = por %p140, %p141
      %s144 = sadd.s32 %s143, 1
      %p147 = scmp.eq.s32.totalorder %s29, 3
      %p148 = scmp.ne.s32.totalorder %s143, %s145
      %p149 = scmp.eq.s32.totalorder %s29, 0
      %p150 = por %p148, %p149
      %p151 = scmp.ne.s32.totalorder %s143, %s145
      %p152 = scmp.eq.s32.totalorder %s34, 3
      %p153 = por %p151, %p152
      %p154 = scmp.ne.s32.totalorder %s145, %s146
      %p155 = scmp.eq.s32.totalorder %s34, 0
      %p156 = por %p154, %p155
      %p157 = scmp.ne.s32.totalorder %s145, %s146
      %p158 = scmp.eq.s32.totalorder %s35, 3
      %p159 = por %p157, %p158
      %p161 = scmp.ne.s32.totalorder %s146, %s160
      %p162 = scmp.eq.s32.totalorder %s35, 0
      %p163 = por %p161, %p162
      %s165 = sadd.s32 %s164, 1
      %p168 = scmp.eq.s32.totalorder %s29, 3
      %p169 = scmp.ne.s32.totalorder %s164, %s166
      %p170 = scmp.eq.s32.totalorder %s29, 0
      %p171 = por %p169, %p170
      %p172 = scmp.ne.s32.totalorder %s164, %s166
      %p173 = scmp.eq.s32.totalorder %s34, 3
      %p174 = por %p172, %p173
      %p175 = scmp.ne.s32.totalorder %s166, %s167
      %p176 = scmp.eq.s32.totalorder %s34, 0
      %p177 = por %p175, %p176
      %p178 = scmp.ne.s32.totalorder %s166, %s167
      %p179 = scmp.eq.s32.totalorder %s35, 3
      %p180 = por %p178, %p179
      %p182 = scmp.ne.s32.totalorder %s167, %s181
      %p183 = scmp.eq.s32.totalorder %s35, 0
      %p184 = por %p182, %p183
      %s186 = sadd.s32 %s185, 1
      %p189 = scmp.eq.s32.totalorder %s29, 3
      %p190 = scmp.ne.s32.totalorder %s185, %s187
      %p191 = scmp.eq.s32.totalorder %s29, 0
      %p192 = por %p190, %p191
      %p193 = scmp.ne.s32.totalorder %s185, %s187
      %p194 = scmp.eq.s32.totalorder %s34, 3
      %p195 = por %p193, %p194
      %p196 = scmp.ne.s32.totalorder %s187, %s188
      %p197 = scmp.eq.s32.totalorder %s34, 0
      %p198 = por %p196, %p197
      %p199 = scmp.ne.s32.totalorder %s187, %s188
      %p200 = scmp.eq.s32.totalorder %s35, 3
      %p201 = por %p199, %p200
      %p203 = scmp.ne.s32.totalorder %s188, %s202
      %p204 = scmp.eq.s32.totalorder %s35, 0
      %p205 = por %p203, %p204
      %s207 = sadd.s32 %s206, 1
      %p210 = scmp.eq.s32.totalorder %s29, 3
      %p211 = scmp.ne.s32.totalorder %s206, %s208
      %p212 = scmp.eq.s32.totalorder %s29, 0
      %p213 = por %p211, %p212
      %p214 = scmp.ne.s32.totalorder %s206, %s208
      %p215 = scmp.eq.s32.totalorder %s34, 3
      %p216 = por %p214, %p215
      %p217 = scmp.ne.s32.totalorder %s208, %s209
      %p218 = scmp.eq.s32.totalorder %s34, 0
      %p219 = por %p217, %p218
      %p220 = scmp.ne.s32.totalorder %s208, %s209
      %p221 = scmp.eq.s32.totalorder %s35, 3
      %p222 = por %p220, %p221
      %p224 = scmp.ne.s32.totalorder %s209, %s223
      %p225 = scmp.eq.s32.totalorder %s35, 0
      %p226 = por %p224, %p225
      %s228 = sadd.s32 %s227, 1
      %p231 = scmp.eq.s32.totalorder %s29, 3
      %p232 = scmp.ne.s32.totalorder %s227, %s229
      %p233 = scmp.eq.s32.totalorder %s29, 0
      %p234 = por %p232, %p233
      %p235 = scmp.ne.s32.totalorder %s227, %s229
      %p236 = scmp.eq.s32.totalorder %s34, 3
      %p237 = por %p235, %p236
      %p238 = scmp.ne.s32.totalorder %s229, %s230
      %p239 = scmp.eq.s32.totalorder %s34, 0
      %p240 = por %p238, %p239
      %p241 = scmp.ne.s32.totalorder %s229, %s230
      %p242 = scmp.eq.s32.totalorder %s35, 3
      %p243 = por %p241, %p242
      %p245 = scmp.ne.s32.totalorder %s230, %s244
      %p246 = scmp.eq.s32.totalorder %s35, 0
      %p247 = por %p245, %p246
      %s249 = sadd.s32 %s248, 1
      %p252 = scmp.eq.s32.totalorder %s29, 3
      %p253 = scmp.ne.s32.totalorder %s248, %s250
      %p254 = scmp.eq.s32.totalorder %s29, 0
      %p255 = por %p253, %p254
      %p256 = scmp.ne.s32.totalorder %s248, %s250
      %p257 = scmp.eq.s32.totalorder %s34, 3
      %p258 = por %p256, %p257
      %p259 = scmp.ne.s32.totalorder %s250, %s251
      %p260 = scmp.eq.s32.totalorder %s34, 0
      %p261 = por %p259, %p260
      %p262 = scmp.ne.s32.totalorder %s250, %s251
      %p263 = scmp.eq.s32.totalorder %s35, 3
      %p264 = por %p262, %p263
      %p266 = scmp.ne.s32.totalorder %s251, %s265
      %p267 = scmp.eq.s32.totalorder %s35, 0
      %p268 = por %p266, %p267
      %s270 = sadd.s32 %s269, 1
      %p273 = scmp.eq.s32.totalorder %s29, 3
      %p274 = scmp.ne.s32.totalorder %s269, %s271
      %p275 = scmp.eq.s32.totalorder %s29, 0
      %p276 = por %p274, %p275
      %p277 = scmp.ne.s32.totalorder %s269, %s271
      %p278 = scmp.eq.s32.totalorder %s34, 3
      %p279 = por %p277, %p278
      %p280 = scmp.ne.s32.totalorder %s271, %s272
      %p281 = scmp.eq.s32.totalorder %s34, 0
      %p282 = por %p280, %p281
      %p283 = scmp.ne.s32.totalorder %s271, %s272
      %p284 = scmp.eq.s32.totalorder %s35, 3
      %p285 = por %p283, %p284
      %p287 = scmp.ne.s32.totalorder %s272, %s286
      %p288 = scmp.eq.s32.totalorder %s35, 0
      %p289 = por %p287, %p288
      %s291 = sadd.s32 %s290, 1
      %p294 = scmp.eq.s32.totalorder %s29, 3
      %p295 = scmp.ne.s32.totalorder %s290, %s292
      %p296 = scmp.eq.s32.totalorder %s29, 0
      %p297 = por %p295, %p296
      %p298 = scmp.ne.s32.totalorder %s290, %s292
      %p299 = scmp.eq.s32.totalorder %s34, 3
      %p300 = por %p298, %p299
      %p301 = scmp.ne.s32.totalorder %s292, %s293
      %p302 = scmp.eq.s32.totalorder %s34, 0
      %p303 = por %p301, %p302
      %p304 = scmp.ne.s32.totalorder %s292, %s293
      %p305 = scmp.eq.s32.totalorder %s35, 3
      %p306 = por %p304, %p305
      %p308 = scmp.ne.s32.totalorder %s293, %s307
      %p309 = scmp.eq.s32.totalorder %s35, 0
      %p310 = por %p308, %p309
      %s312 = sadd.s32 %s311, 1
      %p315 = scmp.eq.s32.totalorder %s29, 3
      %p316 = scmp.ne.s32.totalorder %s311, %s313
      %p317 = scmp.eq.s32.totalorder %s29, 0
      %p318 = por %p316, %p317
      %p319 = scmp.ne.s32.totalorder %s311, %s313
      %p320 = scmp.eq.s32.totalorder %s34, 3
      %p321 = por %p319, %p320
      %p322 = scmp.ne.s32.totalorder %s313, %s314
      %p323 = scmp.eq.s32.totalorder %s34, 0
      %p324 = por %p322, %p323
      %p325 = scmp.ne.s32.totalorder %s313, %s314
      %p326 = scmp.eq.s32.totalorder %s35, 3
      %p327 = por %p325, %p326
      %p329 = scmp.ne.s32.totalorder %s314, %s328
      %p330 = scmp.eq.s32.totalorder %s35, 0
      %p331 = por %p329, %p330
      %s333 = sadd.s32 %s332, 1
      %p336 = scmp.eq.s32.totalorder %s29, 3
      %p337 = scmp.ne.s32.totalorder %s332, %s334
      %p338 = scmp.eq.s32.totalorder %s29, 0
      %p339 = por %p337, %p338
      %p340 = scmp.ne.s32.totalorder %s332, %s334
      %p341 = scmp.eq.s32.totalorder %s34, 3
      %p342 = por %p340, %p341
      %p343 = scmp.ne.s32.totalorder %s334, %s335
      %p344 = scmp.eq.s32.totalorder %s34, 0
      %p345 = por %p343, %p344
      %p346 = scmp.ne.s32.totalorder %s334, %s335
      %p347 = scmp.eq.s32.totalorder %s35, 3
      %p348 = por %p346, %p347
      %p350 = scmp.ne.s32.totalorder %s335, %s349
      %p351 = scmp.eq.s32.totalorder %s35, 0
      %p352 = por %p350, %p351
      %s354 = sadd.s32 %s353, 1
      %p357 = scmp.eq.s32.totalorder %s29, 3
      %p358 = scmp.ne.s32.totalorder %s353, %s355
      %p359 = scmp.eq.s32.totalorder %s29, 0
      %p360 = por %p358, %p359
      %p361 = scmp.ne.s32.totalorder %s353, %s355
      %p362 = scmp.eq.s32.totalorder %s34, 3
      %p363 = por %p361, %p362
      %p364 = scmp.ne.s32.totalorder %s355, %s356
      %p365 = scmp.eq.s32.totalorder %s34, 0
      %p366 = por %p364, %p365
      %p367 = scmp.ne.s32.totalorder %s355, %s356
      %p368 = scmp.eq.s32.totalorder %s35, 3
      %p369 = por %p367, %p368
      %p371 = scmp.ne.s32.totalorder %s356, %s370
      %p372 = scmp.eq.s32.totalorder %s35, 0
      %p373 = por %p371, %p372
      %s375 = sadd.s32 %s374, 1
      %p378 = scmp.eq.s32.totalorder %s29, 3
      %p379 = scmp.ne.s32.totalorder %s374, %s376
      %p380 = scmp.eq.s32.totalorder %s29, 0
      %p381 = por %p379, %p380
      %p382 = scmp.ne.s32.totalorder %s374, %s376
      %p383 = scmp.eq.s32.totalorder %s34, 3
      %p384 = por %p382, %p383
      %p385 = scmp.ne.s32.totalorder %s376, %s377
      %p386 = scmp.eq.s32.totalorder %s34, 0
      %p387 = por %p385, %p386
      %p388 = scmp.ne.s32.totalorder %s376, %s377
      %p389 = scmp.eq.s32.totalorder %s35, 3
      %p390 = por %p388, %p389
      %p392 = scmp.ne.s32.totalorder %s377, %s391
      %p393 = scmp.eq.s32.totalorder %s35, 0
      %p394 = por %p392, %p393
      %s396 = sadd.s32 %s395, 1
      %p399 = scmp.eq.s32.totalorder %s29, 3
      %p400 = scmp.ne.s32.totalorder %s395, %s397
      %p401 = scmp.eq.s32.totalorder %s29, 0
      %p402 = por %p400, %p401
      %p403 = scmp.ne.s32.totalorder %s395, %s397
      %p404 = scmp.eq.s32.totalorder %s34, 3
      %p405 = por %p403, %p404
      %p406 = scmp.ne.s32.totalorder %s397, %s398
      %p407 = scmp.eq.s32.totalorder %s34, 0
      %p408 = por %p406, %p407
      %p409 = scmp.ne.s32.totalorder %s397, %s398
      %p410 = scmp.eq.s32.totalorder %s35, 3
      %p411 = por %p409, %p410
      %p413 = scmp.ne.s32.totalorder %s398, %s412
      %p414 = scmp.eq.s32.totalorder %s35, 0
      %p415 = por %p413, %p414
      %s417 = sadd.s32 %s416, 1
      %p420 = scmp.eq.s32.totalorder %s29, 3
      %p421 = scmp.ne.s32.totalorder %s416, %s418
      %p422 = scmp.eq.s32.totalorder %s29, 0
      %p423 = por %p421, %p422
      %p424 = scmp.ne.s32.totalorder %s416, %s418
      %p425 = scmp.eq.s32.totalorder %s34, 3
      %p426 = por %p424, %p425
      %p427 = scmp.ne.s32.totalorder %s418, %s419
      %p428 = scmp.eq.s32.totalorder %s34, 0
      %p429 = por %p427, %p428
      %p430 = scmp.ne.s32.totalorder %s418, %s419
      %p431 = scmp.eq.s32.totalorder %s35, 3
      %p432 = por %p430, %p431
      %p434 = scmp.ne.s32.totalorder %s419, %s433
      %p435 = scmp.eq.s32.totalorder %s35, 0
      %p436 = por %p434, %p435
      %s437 = ssub.s32 %s36, %s48
      %p438 = scmp.eq.s32.totalorder %s437, 0
      %s440 = sadd.s32 %s439, 1
      %s441 = scalar_select %p438, %s439, %s440
      %p444 = pneg %p438
      %p445 = scmp.eq.s32.totalorder %s29, 3
      %p446 = por %p444, %p445
      %p447 = scmp.ne.s32.totalorder %s439, %s442
      %p448 = scmp.eq.s32.totalorder %s29, 0
      %p449 = por %p447, %p448
      %p450 = scmp.ne.s32.totalorder %s439, %s442
      %p451 = scmp.eq.s32.totalorder %s34, 3
      %p452 = por %p450, %p451
      %p453 = scmp.ne.s32.totalorder %s442, %s443
      %p454 = scmp.eq.s32.totalorder %s34, 0
      %p455 = por %p453, %p454
      %p456 = scmp.ne.s32.totalorder %s442, %s443
      %p457 = scmp.eq.s32.totalorder %s35, 3
      %p458 = por %p456, %p457
      %p460 = scmp.ne.s32.totalorder %s443, %s459
      %p461 = scmp.eq.s32.totalorder %s35, 0
      %p462 = por %p460, %p461
      %p463 = scmp.le.s32.totalorder 1, %s29
      %p464 = scmp.lt.s32.totalorder %s29, 5
      %p465 = pnand %p463, %p464
      %p466 = pneg %p465
      // Predicated region
      $region9: #{tpu_custom_call.1} parent=5 // pred_check
        _
      $region10: #{tpu_custom_call.1} parent=5 // pred_check_branch
        %468 = sbr.rel (%p465) target = $region12
      $region11: #{tpu_custom_call.1} parent=5 // pred_region
        %s469 = ssub.s32 %s29, 1
        // Predicated region
        $region13: #{tpu_custom_call.1} parent=11 // pred_check
          %p470 = pneg %p114
        $region14: #{tpu_custom_call.1} parent=11 // pred_check_branch
          %472 = sbr.rel (%p470) target = $region16
        $region15: #{tpu_custom_call.1} parent=11 // pred_region
          _
        $region16: #{tpu_custom_call.1} parent=11 // pred_fallthru
          _
        // Predicated region
        $region17: #{tpu_custom_call.1} parent=11 // pred_check
          %p473 = pneg %p135
        $region18: #{tpu_custom_call.1} parent=11 // pred_check_branch
          %475 = sbr.rel (%p473) target = $region20
        $region19: #{tpu_custom_call.1} parent=11 // pred_region
          _
        $region20: #{tpu_custom_call.1} parent=11 // pred_fallthru
          _
        // Predicated region
        $region21: #{tpu_custom_call.1} parent=11 // pred_check
          %p476 = pneg %p156
        $region22: #{tpu_custom_call.1} parent=11 // pred_check_branch
          %478 = sbr.rel (%p476) target = $region24
        $region23: #{tpu_custom_call.1} parent=11 // pred_region
          %480 = vsyncadd [#allocation4], 0
          %s481 = sshll.u32 %s4, 4
          %s482 = int_to_ptr.hbm [resolvable:$true] %s481
          %s483 = sshll.u32 [#allocation3], 4
          %s484 = int_to_ptr.vmem [resolvable:$true] %s483
          %489 = dma.hbm_to_vmem [thread:$0]  %s482, 512, %s484, [#allocation4], 64, 64, 4
        $region24: #{tpu_custom_call.1} parent=11 // pred_fallthru
          _
        // Predicated region
        $region25: #{tpu_custom_call.1} parent=11 // pred_check
          %p490 = pneg %p177
        $region26: #{tpu_custom_call.1} parent=11 // pred_check_branch
          %492 = sbr.rel (%p490) target = $region28
        $region27: #{tpu_custom_call.1} parent=11 // pred_region
          _
        $region28: #{tpu_custom_call.1} parent=11 // pred_fallthru
          _
        // Predicated region
        $region29: #{tpu_custom_call.1} parent=11 // pred_check
          %p493 = pneg %p198
        $region30: #{tpu_custom_call.1} parent=11 // pred_check_branch
          %495 = sbr.rel (%p493) target = $region32
        $region31: #{tpu_custom_call.1} parent=11 // pred_region
          %497 = vsyncadd [#allocation7], 0
          %s498 = sshll.u32 %s6, 4
          %s499 = int_to_ptr.hbm [resolvable:$true] %s498
          %s500 = sshll.u32 [#allocation6], 4
          %s501 = int_to_ptr.vmem [resolvable:$true] %s500
          %506 = dma.hbm_to_vmem [thread:$0]  %s499, 512, %s501, [#allocation7], 64, 64, 4
        $region32: #{tpu_custom_call.1} parent=11 // pred_fallthru
          _
        // Predicated region
        $region33: #{tpu_custom_call.1} parent=11 // pred_check
          %p507 = pneg %p219
        $region34: #{tpu_custom_call.1} parent=11 // pred_check_branch
          %509 = sbr.rel (%p507) target = $region36
        $region35: #{tpu_custom_call.1} parent=11 // pred_region
          _
        $region36: #{tpu_custom_call.1} parent=11 // pred_fallthru
          _
        // Predicated region
        $region37: #{tpu_custom_call.1} parent=11 // pred_check
          %p510 = pneg %p240
        $region38: #{tpu_custom_call.1} parent=11 // pred_check_branch
          %512 = sbr.rel (%p510) target = $region40
        $region39: #{tpu_custom_call.1} parent=11 // pred_region
          _
        $region40: #{tpu_custom_call.1} parent=11 // pred_fallthru
          _
        // Predicated region
        $region41: #{tpu_custom_call.1} parent=11 // pred_check
          %p513 = pneg %p261
        $region42: #{tpu_custom_call.1} parent=11 // pred_check_branch
          %515 = sbr.rel (%p513) target = $region44
        $region43: #{tpu_custom_call.1} parent=11 // pred_region
          _
        $region44: #{tpu_custom_call.1} parent=11 // pred_fallthru
          _
        // Predicated region
        $region45: #{tpu_custom_call.1} parent=11 // pred_check
          %p516 = pneg %p282
        $region46: #{tpu_custom_call.1} parent=11 // pred_check_branch
          %518 = sbr.rel (%p516) target = $region48
        $region47: #{tpu_custom_call.1} parent=11 // pred_region
          %520 = vsyncadd [#allocation7], 0
          %s521 = sshll.u32 %s10, 4
          %s522 = int_to_ptr.hbm [resolvable:$true] %s521
          %s523 = sshll.u32 [#allocation8], 4
          %s524 = int_to_ptr.vmem [resolvable:$true] %s523
          %529 = dma.hbm_to_vmem [thread:$0]  %s522, 512, %s524, [#allocation7], 64, 64, 4
        $region48: #{tpu_custom_call.1} parent=11 // pred_fallthru
          _
        // Predicated region
        $region49: #{tpu_custom_call.1} parent=11 // pred_check
          %p530 = pneg %p303
        $region50: #{tpu_custom_call.1} parent=11 // pred_check_branch
          %532 = sbr.rel (%p530) target = $region52
        $region51: #{tpu_custom_call.1} parent=11 // pred_region
          _
        $region52: #{tpu_custom_call.1} parent=11 // pred_fallthru
          _
        // Predicated region
        $region53: #{tpu_custom_call.1} parent=11 // pred_check
          %p533 = pneg %p324
        $region54: #{tpu_custom_call.1} parent=11 // pred_check_branch
          %535 = sbr.rel (%p533) target = $region56
        $region55: #{tpu_custom_call.1} parent=11 // pred_region
          _
        $region56: #{tpu_custom_call.1} parent=11 // pred_fallthru
          _
        // Predicated region
        $region57: #{tpu_custom_call.1} parent=11 // pred_check
          %p536 = pneg %p345
        $region58: #{tpu_custom_call.1} parent=11 // pred_check_branch
          %538 = sbr.rel (%p536) target = $region60
        $region59: #{tpu_custom_call.1} parent=11 // pred_region
          _
        $region60: #{tpu_custom_call.1} parent=11 // pred_fallthru
          _
        // Predicated region
        $region61: #{tpu_custom_call.1} parent=11 // pred_check
          %p539 = pneg %p366
        $region62: #{tpu_custom_call.1} parent=11 // pred_check_branch
          %541 = sbr.rel (%p539) target = $region64
        $region63: #{tpu_custom_call.1} parent=11 // pred_region
          _
        $region64: #{tpu_custom_call.1} parent=11 // pred_fallthru
          _
        // Predicated region
        $region65: #{tpu_custom_call.1} parent=11 // pred_check
          %p542 = pneg %p387
        $region66: #{tpu_custom_call.1} parent=11 // pred_check_branch
          %544 = sbr.rel (%p542) target = $region68
        $region67: #{tpu_custom_call.1} parent=11 // pred_region
          _
        $region68: #{tpu_custom_call.1} parent=11 // pred_fallthru
          _
        // Predicated region
        $region69: #{tpu_custom_call.1} parent=11 // pred_check
          %p545 = pneg %p408
        $region70: #{tpu_custom_call.1} parent=11 // pred_check_branch
          %547 = sbr.rel (%p545) target = $region72
        $region71: #{tpu_custom_call.1} parent=11 // pred_region
          _
        $region72: #{tpu_custom_call.1} parent=11 // pred_fallthru
          _
        // Predicated region
        $region73: #{tpu_custom_call.1} parent=11 // pred_check
          %p548 = pneg %p429
        $region74: #{tpu_custom_call.1} parent=11 // pred_check_branch
          %550 = sbr.rel (%p548) target = $region76
        $region75: #{tpu_custom_call.1} parent=11 // pred_region
          _
        $region76: #{tpu_custom_call.1} parent=11 // pred_fallthru
          _
      $region12: #{tpu_custom_call.1} parent=5 // pred_fallthru
        _
      %p551 = scmp.lt.s32.totalorder %s29, 4
      // Predicated region
      $region77: #{tpu_custom_call.1} parent=5 // pred_check
        %p552 = pneg %p551
      $region78: #{tpu_custom_call.1} parent=5 // pred_check_branch
        %554 = sbr.rel (%p552) target = $region80
      $region79: #{tpu_custom_call.1} parent=5 // pred_region
        // Predicated region
        $region81: #{tpu_custom_call.1} parent=79 // pred_check
          %p555 = pneg %p61
        $region82: #{tpu_custom_call.1} parent=79 // pred_check_branch
          %557 = sbr.rel (%p555) target = $region84
        $region83: #{tpu_custom_call.1} parent=79 // pred_region
          %p558 = scmp.lt.s32.totalorder %s36, 1
          %s559 = scalar_select %p558, %s36, 1
          %s560 = smul.addr %s559, 2
          %s561 = smul.addr %s560, 8
          %s562 = scalar_lea.vmem %s0, %s561
        $region84: #{tpu_custom_call.1} parent=79 // pred_fallthru
          _
        // Predicated region
        $region85: #{tpu_custom_call.1} parent=79 // pred_check
          %p563 = pneg %p87
        $region86: #{tpu_custom_call.1} parent=79 // pred_check_branch
          %565 = sbr.rel (%p563) target = $region88
        $region87: #{tpu_custom_call.1} parent=79 // pred_region
          %p566 = scmp.lt.s32.totalorder %s36, 1
          %s567 = scalar_select %p566, %s36, 1
          %s568 = smul.addr %s567, 2
          %s569 = smul.addr %s568, 8
          %s570 = scalar_lea.vmem %s1, %s569
        $region88: #{tpu_custom_call.1} parent=79 // pred_fallthru
          _
      $region80: #{tpu_custom_call.1} parent=5 // pred_fallthru
        _
      %p571 = scmp.le.s32.totalorder 1, %s29
      %p572 = scmp.lt.s32.totalorder %s29, 5
      %p573 = pnand %p571, %p572
      %p574 = pneg %p573
      // Predicated region
      $region89: #{tpu_custom_call.1} parent=5 // pred_check
        _
      $region90: #{tpu_custom_call.1} parent=5 // pred_check_branch
        %576 = sbr.rel (%p573) target = $region92
      $region91: #{tpu_custom_call.1} parent=5 // pred_region
        %s577 = ssub.s32 %s29, 1
        // Predicated region
        $region93: #{tpu_custom_call.1} parent=91 // pred_check
          %p578 = pneg %p156
        $region94: #{tpu_custom_call.1} parent=91 // pred_check_branch
          %580 = sbr.rel (%p578) target = $region96
        $region95: #{tpu_custom_call.1} parent=91 // pred_region
          %582 = dma.done [#allocation4], 512
        $region96: #{tpu_custom_call.1} parent=91 // pred_fallthru
          _
        // Predicated region
        $region97: #{tpu_custom_call.1} parent=91 // pred_check
          %p583 = pneg %p198
        $region98: #{tpu_custom_call.1} parent=91 // pred_check_branch
          %585 = sbr.rel (%p583) target = $region100
        $region99: #{tpu_custom_call.1} parent=91 // pred_region
          %587 = dma.done [#allocation7], 512
        $region100: #{tpu_custom_call.1} parent=91 // pred_fallthru
          _
        // Predicated region
        $region101: #{tpu_custom_call.1} parent=91 // pred_check
          %p588 = pneg %p282
        $region102: #{tpu_custom_call.1} parent=91 // pred_check_branch
          %590 = sbr.rel (%p588) target = $region104
        $region103: #{tpu_custom_call.1} parent=91 // pred_region
          %592 = dma.done [#allocation7], 512
        $region104: #{tpu_custom_call.1} parent=91 // pred_fallthru
          _
        %p593 = scmp.lt.s32.totalorder %s38, 1
        %s594 = scalar_select %p593, %s38, 1
        %s595 = smul.addr %s594, 2
        %s596 = smul.addr %s595, 8
        %s597 = scalar_lea.vmem %s0, %s596
        %p598 = pneg %p67
        %p599 = pneg %p64
        %p600 = scmp.lt.s32.totalorder %s38, 1
        %s601 = scalar_select %p600, %s38, 1
        %s602 = smul.addr %s601, 2
        %s603 = smul.addr %s602, 8
        %s604 = scalar_lea.vmem %s1, %s603
        %p605 = pneg %p93
        %p606 = pneg %p90
        %p607 = pneg %p114
        %p608 = pneg %p111
        %p609 = pneg %p135
        %p610 = pneg %p132
        %p611 = pneg %p156
        %p612 = pneg %p153
        %p613 = pneg %p177
        %p614 = pneg %p174
        %p615 = pneg %p198
        %p616 = pneg %p195
        %p617 = pneg %p219
        %p618 = pneg %p216
        %p619 = pneg %p240
        %p620 = pneg %p237
        %p621 = pneg %p261
        %p622 = pneg %p258
        %p623 = pneg %p282
        %p624 = pneg %p279
        %p625 = pneg %p303
        %p626 = pneg %p300
        %p627 = pneg %p324
        %p628 = pneg %p321
        %p629 = pneg %p345
        %p630 = pneg %p342
        %p631 = pneg %p366
        %p632 = pneg %p363
        %p633 = pneg %p387
        %p634 = pneg %p384
        %p635 = pneg %p408
        %p636 = pneg %p405
        %p637 = pneg %p429
        %p638 = pneg %p426
        %p639 = pneg %p455
        %p640 = pneg %p452
        %s641 = sand.u32 %s442, 1
        %s642 = scalar_lea.sflag [#allocation5], %s641
        %s643 = sand.u32 %s442, 1
        %s644 = smul.addr %s643, 16
        %s645 = scalar_lea.vmem [#allocation9], %s644
        %p646 = scmp.lt.s32.totalorder %s38, 1
        %s647 = scalar_select %p646, %s38, 1
        %s648 = smul.addr %s647, 2
        %s649 = smul.addr %s648, 8
        %s650 = scalar_lea.vmem %s0, %s649
        %p651 = scmp.lt.s32.totalorder %s38, 1
        %s652 = scalar_select %p651, %s38, 1
        %s653 = smul.addr %s652, 2
        %s654 = smul.addr %s653, 8
        %s655 = scalar_lea.vmem %s1, %s654
        %p657 = scmp.eq.s32.totalorder %s39, 0
        // Predicated region
        $region105: #{tpu_custom_call.1} parent=91 // pred_check
          %p658 = pneg %p657
        $region106: #{tpu_custom_call.1} parent=91 // pred_check_branch
          %660 = sbr.rel (%p658) target = $region108
        $region107: #{tpu_custom_call.1} parent=91 // pred_region
          %v661 = vld [vmem:[%s650] sm:$0xff]
          %v662 = vld [vmem:[%s650 + $0x8] sm:$0xff]
          %vm663 = vcmask 523264
          %664 = vst.msk [vmem:[#allocation2] sm:$0xff] %vm663, %v661
          %665 = vst.msk [vmem:[#allocation2 + $0x8] sm:$0xff] %vm663, %v662
        $region108: #{tpu_custom_call.1} parent=91 // pred_fallthru
          _
        %v666 = vld [vmem:[#allocation2] sm:$0xff]
        %v667 = vld [vmem:[#allocation2 + $0x8] sm:$0xff]
        %v668 = vld [vmem:[%s655] sm:$0xff]
        %v669 = vld [vmem:[%s655 + $0x8] sm:$0xff]
        %v670 = vld [vmem:[%s2] sm:$0xf]
        %v671 = vld [vmem:[%s2 + $0x4] sm:$0xf]
        %v672 = vld [vmem:[%s2 + $0x8] sm:$0xf]
        %v673 = vld [vmem:[%s2 + $0xc] sm:$0xf]
        %v674 = vld [vmem:[%s2 + $0x10] sm:$0xf]
        %v675 = vld [vmem:[%s2 + $0x14] sm:$0xf]
        %v676 = vld [vmem:[%s2 + $0x18] sm:$0xf]
        %v677 = vld [vmem:[%s2 + $0x1c] sm:$0xf]
        %v678 = vld [vmem:[#allocation3] sm:$0xf]
        %v679 = vld [vmem:[#allocation3 + $0x4] sm:$0xf]
        %v680 = vld [vmem:[#allocation3 + $0x8] sm:$0xf]
        %v681 = vld [vmem:[#allocation3 + $0xc] sm:$0xf]
        %v682 = vld [vmem:[#allocation3 + $0x10] sm:$0xf]
        %v683 = vld [vmem:[#allocation3 + $0x14] sm:$0xf]
        %v684 = vld [vmem:[#allocation3 + $0x18] sm:$0xf]
        %v685 = vld [vmem:[#allocation3 + $0x1c] sm:$0xf]
        %v686 = vld [vmem:[#allocation6] sm:$0xf]
        %v687 = vld [vmem:[#allocation6 + $0x4] sm:$0xf]
        %v688 = vld [vmem:[#allocation6 + $0x8] sm:$0xf]
        %v689 = vld [vmem:[#allocation6 + $0xc] sm:$0xf]
        %v690 = vld [vmem:[#allocation6 + $0x10] sm:$0xf]
        %v691 = vld [vmem:[#allocation6 + $0x14] sm:$0xf]
        %v692 = vld [vmem:[#allocation6 + $0x18] sm:$0xf]
        %v693 = vld [vmem:[#allocation6 + $0x1c] sm:$0xf]
        %v694 = vld [vmem:[#allocation8] sm:$0xf]
        %v695 = vld [vmem:[#allocation8 + $0x4] sm:$0xf]
        %v696 = vld [vmem:[#allocation8 + $0x8] sm:$0xf]
        %v697 = vld [vmem:[#allocation8 + $0xc] sm:$0xf]
        %v698 = vld [vmem:[#allocation8 + $0x10] sm:$0xf]
        %v699 = vld [vmem:[#allocation8 + $0x14] sm:$0xf]
        %v700 = vld [vmem:[#allocation8 + $0x18] sm:$0xf]
        %v701 = vld [vmem:[#allocation8 + $0x1c] sm:$0xf]
        %v702 = vld [vmem:[%s12] sm:$0xf]
        %v703 = vld [vmem:[%s12 + $0x4] sm:$0xf]
        %v704 = vld [vmem:[%s12 + $0x8] sm:$0xf]
        %v705 = vld [vmem:[%s12 + $0xc] sm:$0xf]
        %v706 = vld [vmem:[%s12 + $0x10] sm:$0xf]
        %v707 = vld [vmem:[%s12 + $0x14] sm:$0xf]
        %v708 = vld [vmem:[%s12 + $0x18] sm:$0xf]
        %v709 = vld [vmem:[%s12 + $0x1c] sm:$0xf]
        %v710 = vld [vmem:[%s12 + $0x20] sm:$0xf]
        %v711 = vld [vmem:[%s12 + $0x24] sm:$0xf]
        %v712 = vld [vmem:[%s12 + $0x28] sm:$0xf]
        %v713 = vld [vmem:[%s12 + $0x2c] sm:$0xf]
        %v714 = vld [vmem:[%s12 + $0x30] sm:$0xf]
        %v715 = vld [vmem:[%s12 + $0x34] sm:$0xf]
        %v716 = vld [vmem:[%s12 + $0x38] sm:$0xf]
        %v717 = vld [vmem:[%s12 + $0x3c] sm:$0xf]
        %v718 = vld [vmem:[%s3] sm:$0x1]
        %v719 = vld [vmem:[%s5] sm:$0x1]
        %v720 = vld [vmem:[%s7] sm:$0x1]
        %v721 = vld [vmem:[%s11] sm:$0x1]
        %v722 = vld [vmem:[%s13] sm:$0x1]
        %v723 = vld [vmem:[%s8] sm:$0x1]
        %v724 = vld [vmem:[%s9] sm:$0x1]
        %v725 = vld [vmem:[%s14] sm:$0x1]
        %v726 = vld [vmem:[%s15] sm:$0x1]
        %v727 = vadd.f32 %v666, %v668
        %v728 = vadd.f32 %v667, %v669
        %v729 = vpack.c.bf16 %v728, %v727
        %v731 = vperm.slane %v718, 0
        %v741 = vunpack.c.l.b16 %v670
        %v742 = vunpack.c.l.b16 %v671
        %v743 = vunpack.c.l.b16 %v672
        %v744 = vunpack.c.l.b16 %v673
        %v745 = vunpack.c.l.b16 %v674
        %v746 = vunpack.c.l.b16 %v675
        %v747 = vunpack.c.l.b16 %v676
        %v748 = vunpack.c.l.b16 %v677
        %v749 = vpack.c.b16 %v742, %v741
        %v750 = vpack.c.b16 %v744, %v743
        %v751 = vpack.c.b16 %v746, %v745
        %v752 = vpack.c.b16 %v748, %v747
        %vm757 = vcmask 523264
        %v759 = vsel %vm757, %v729, 0
        %761 = vmatpush.bf16.msra.mxu0 0
        %762 = vmatpush.bf16.msra.mxu0 0
        %763 = vmatpush.bf16.msra.mxu0 0
        %764 = vmatpush.bf16.msra.mxu0 0
        %765 = vmatpush.bf16.msra.mxu0 %v752
        %766 = vmatpush.bf16.msra.mxu0 %v751
        %767 = vmatpush.bf16.msra.mxu0 %v750
        %768 = vmatpush.bf16.msra.mxu0 %v749
        %769 = vmatmul.bf16.gmra.mxu0 %v759
        %v770 = vpop.f32.mrf.mxu0
        %v771 = vadd.f32 %v731, %v770
        %v772 = vpop.f32.mrf.mxu0
        %v773 = vadd.f32 %v731, %v772
        %774 = vdwg.mxu0
        %v775 = vpack.c.bf16 %v667, %v666
        %v777 = vperm.slane %v719, 0
        %v787 = vunpack.c.l.b16 %v678
        %v788 = vunpack.c.l.b16 %v679
        %v789 = vunpack.c.l.b16 %v680
        %v790 = vunpack.c.l.b16 %v681
        %v791 = vunpack.c.l.b16 %v682
        %v792 = vunpack.c.l.b16 %v683
        %v793 = vunpack.c.l.b16 %v684
        %v794 = vunpack.c.l.b16 %v685
        %v795 = vpack.c.b16 %v788, %v787
        %v796 = vpack.c.b16 %v790, %v789
        %v797 = vpack.c.b16 %v792, %v791
        %v798 = vpack.c.b16 %v794, %v793
        %v804 = vsel %vm757, %v775, 0
        %806 = vmatpush.bf16.msra.mxu0 0
        %807 = vmatpush.bf16.msra.mxu0 0
        %808 = vmatpush.bf16.msra.mxu0 0
        %809 = vmatpush.bf16.msra.mxu0 0
        %810 = vmatpush.bf16.msra.mxu0 %v798
        %811 = vmatpush.bf16.msra.mxu0 %v797
        %812 = vmatpush.bf16.msra.mxu0 %v796
        %813 = vmatpush.bf16.msra.mxu0 %v795
        %814 = vmatmul.bf16.gmra.mxu0 %v804
        %v815 = vpop.f32.mrf.mxu0
        %v816 = vadd.f32 %v777, %v815
        %v817 = vpop.f32.mrf.mxu0
        %v818 = vadd.f32 %v777, %v817
        %819 = vdwg.mxu0
        %822 = vrot.lane.b32.xlu0 %v771, 112
        %v823 = vpop.permute.xlu0 %822
        %824 = vrot.lane.b32.xlu0 %v773, 112
        %v825 = vpop.permute.xlu0 %824
        %826 = vrot.lane.b32.xlu0 %v771, 96
        %v827 = vpop.permute.xlu0 %826
        %828 = vrot.lane.b32.xlu0 %v773, 96
        %v829 = vpop.permute.xlu0 %828
        %830 = vrot.lane.b32.xlu0 %v771, 80
        %v831 = vpop.permute.xlu0 %830
        %832 = vrot.lane.b32.xlu0 %v773, 80
        %v833 = vpop.permute.xlu0 %832
        %834 = vrot.lane.b32.xlu0 %v771, 64
        %v835 = vpop.permute.xlu0 %834
        %836 = vrot.lane.b32.xlu0 %v773, 64
        %v837 = vpop.permute.xlu0 %836
        %838 = vrot.lane.b32.xlu0 %v823, 64
        %v839 = vpop.permute.xlu0 %838
        %840 = vrot.lane.b32.xlu0 %v825, 64
        %v841 = vpop.permute.xlu0 %840
        %842 = vrot.lane.b32.xlu0 %v827, 64
        %v843 = vpop.permute.xlu0 %842
        %844 = vrot.lane.b32.xlu0 %v829, 64
        %v845 = vpop.permute.xlu0 %844
        %846 = vrot.lane.b32.xlu0 %v831, 64
        %v847 = vpop.permute.xlu0 %846
        %848 = vrot.lane.b32.xlu0 %v833, 64
        %v849 = vpop.permute.xlu0 %848
        %v858 = vrot.slane %v843, 4
        %vm859 = vcmask 1047556
        %v860 = vsel %vm859, %v858, %v835
        %v861 = vrot.slane %v835, 4
        %v862 = vsel %vm859, %v843, %v861
        %v864 = vunpack.c.l.s4 1983009808
        %v865 = vunpack.c.0.s8 %v864
        %v866 = vperm.slane %v860, %v865
        %v868 = vunpack.c.l.s4 1983009808
        %v869 = vunpack.c.0.s8 %v868
        %v870 = vperm.slane %v862, %v869
        %v871 = vrot.slane %v847, 4
        %v872 = vsel %vm859, %v871, %v839
        %v873 = vrot.slane %v839, 4
        %v874 = vsel %vm859, %v847, %v873
        %v876 = vunpack.c.l.s4 1983009808
        %v877 = vunpack.c.0.s8 %v876
        %v878 = vperm.slane %v872, %v877
        %v880 = vunpack.c.l.s4 1983009808
        %v881 = vunpack.c.0.s8 %v880
        %v882 = vperm.slane %v874, %v881
        %v883 = vrot.slane %v878, 4
        %v884 = vsel %vm859, %v883, %v866
        %v885 = vrot.slane %v866, 4
        %v886 = vsel %vm859, %v878, %v885
        %v888 = vunpack.c.l.s4 1934713408
        %v889 = vunpack.c.0.s8 %v888
        %v890 = vperm.slane %v884, %v889
        %v892 = vunpack.c.l.s4 1934713408
        %v893 = vunpack.c.0.s8 %v892
        %v894 = vperm.slane %v886, %v893
        %v895 = vrot.slane %v882, 4
        %v896 = vsel %vm859, %v895, %v870
        %v897 = vrot.slane %v870, 4
        %v898 = vsel %vm859, %v882, %v897
        %v900 = vunpack.c.l.s4 1934713408
        %v901 = vunpack.c.0.s8 %v900
        %v902 = vperm.slane %v896, %v901
        %v904 = vunpack.c.l.s4 1934713408
        %v905 = vunpack.c.0.s8 %v904
        %v906 = vperm.slane %v898, %v905
        %v907 = vrot.slane %v890, 4
        %v908 = vsel %vm859, 0.0, %v907
        %v909 = vrot.slane %v894, 4
        %v910 = vsel %vm859, 0.0, %v909
        %v911 = vrot.slane %v902, 4
        %v912 = vsel %vm859, 0.0, %v911
        %v913 = vrot.slane %v906, 4
        %v914 = vsel %vm859, 0.0, %v913
        %v915 = vrot.slane %v845, 4
        %v916 = vsel %vm859, %v915, %v837
        %v917 = vrot.slane %v837, 4
        %v918 = vsel %vm859, %v845, %v917
        %v920 = vunpack.c.l.s4 1983009808
        %v921 = vunpack.c.0.s8 %v920
        %v922 = vperm.slane %v916, %v921
        %v924 = vunpack.c.l.s4 1983009808
        %v925 = vunpack.c.0.s8 %v924
        %v926 = vperm.slane %v918, %v925
        %v927 = vrot.slane %v849, 4
        %v928 = vsel %vm859, %v927, %v841
        %v929 = vrot.slane %v841, 4
        %v930 = vsel %vm859, %v849, %v929
        %v932 = vunpack.c.l.s4 1983009808
        %v933 = vunpack.c.0.s8 %v932
        %v934 = vperm.slane %v928, %v933
        %v936 = vunpack.c.l.s4 1983009808
        %v937 = vunpack.c.0.s8 %v936
        %v938 = vperm.slane %v930, %v937
        %v939 = vrot.slane %v934, 4
        %v940 = vsel %vm859, %v939, %v922
        %v941 = vrot.slane %v922, 4
        %v942 = vsel %vm859, %v934, %v941
        %v944 = vunpack.c.l.s4 1934713408
        %v945 = vunpack.c.0.s8 %v944
        %v946 = vperm.slane %v940, %v945
        %v948 = vunpack.c.l.s4 1934713408
        %v949 = vunpack.c.0.s8 %v948
        %v950 = vperm.slane %v942, %v949
        %v951 = vrot.slane %v938, 4
        %v952 = vsel %vm859, %v951, %v926
        %v953 = vrot.slane %v926, 4
        %v954 = vsel %vm859, %v938, %v953
        %v956 = vunpack.c.l.s4 1934713408
        %v957 = vunpack.c.0.s8 %v956
        %v958 = vperm.slane %v952, %v957
        %v960 = vunpack.c.l.s4 1934713408
        %v961 = vunpack.c.0.s8 %v960
        %v962 = vperm.slane %v954, %v961
        %v963 = vrot.slane %v946, 4
        %v964 = vsel %vm859, 0.0, %v963
        %v965 = vrot.slane %v950, 4
        %v966 = vsel %vm859, 0.0, %v965
        %v967 = vrot.slane %v958, 4
        %v968 = vsel %vm859, 0.0, %v967
        %v969 = vrot.slane %v962, 4
        %v970 = vsel %vm859, 0.0, %v969
        %v971 = vpack.c.bf16 %v890, %v890
        %v972 = vpack.c.bf16 %v908, %v908
        %v973 = vpack.c.bf16 %v894, %v894
        %v974 = vpack.c.bf16 %v910, %v910
        %v975 = vpack.c.bf16 %v902, %v902
        %v976 = vpack.c.bf16 %v912, %v912
        %v977 = vpack.c.bf16 %v906, %v906
        %v978 = vpack.c.bf16 %v914, %v914
        %v979 = vpack.c.bf16 %v946, %v946
        %v980 = vpack.c.bf16 %v964, %v964
        %v981 = vpack.c.bf16 %v950, %v950
        %v982 = vpack.c.bf16 %v966, %v966
        %v983 = vpack.c.bf16 %v958, %v958
        %v984 = vpack.c.bf16 %v968, %v968
        %v985 = vpack.c.bf16 %v962, %v962
        %v986 = vpack.c.bf16 %v970, %v970
        %989 = vrot.lane.b32.xlu0 %v816, 112
        %v990 = vpop.permute.xlu0 %989
        %991 = vrot.lane.b32.xlu0 %v818, 112
        %v992 = vpop.permute.xlu0 %991
        %995 = vrot.lane.b32.xlu0 %v816, 96
        %v996 = vpop.permute.xlu0 %995
        %997 = vrot.lane.b32.xlu0 %v818, 96
        %v998 = vpop.permute.xlu0 %997
        %1001 = vrot.lane.b32.xlu0 %v816, 80
        %v1002 = vpop.permute.xlu0 %1001
        %1003 = vrot.lane.b32.xlu0 %v818, 80
        %v1004 = vpop.permute.xlu0 %1003
        %v1007 = vrot.slane %v996, 4
        %v1008 = vsel %vm859, %v1007, %v816
        %v1009 = vrot.slane %v816, 4
        %v1010 = vsel %vm859, %v996, %v1009
        %v1012 = vunpack.c.l.s4 1983009808
        %v1013 = vunpack.c.0.s8 %v1012
        %v1014 = vperm.slane %v1008, %v1013
        %v1016 = vunpack.c.l.s4 1983009808
        %v1017 = vunpack.c.0.s8 %v1016
        %v1018 = vperm.slane %v1010, %v1017
        %v1019 = vrot.slane %v1002, 4
        %v1020 = vsel %vm859, %v1019, %v990
        %v1021 = vrot.slane %v990, 4
        %v1022 = vsel %vm859, %v1002, %v1021
        %v1024 = vunpack.c.l.s4 1983009808
        %v1025 = vunpack.c.0.s8 %v1024
        %v1026 = vperm.slane %v1020, %v1025
        %v1028 = vunpack.c.l.s4 1983009808
        %v1029 = vunpack.c.0.s8 %v1028
        %v1030 = vperm.slane %v1022, %v1029
        %v1031 = vrot.slane %v1026, 4
        %v1032 = vsel %vm859, %v1031, %v1014
        %v1033 = vrot.slane %v1014, 4
        %v1034 = vsel %vm859, %v1026, %v1033
        %v1036 = vunpack.c.l.s4 1934713408
        %v1037 = vunpack.c.0.s8 %v1036
        %v1038 = vperm.slane %v1032, %v1037
        %v1040 = vunpack.c.l.s4 1934713408
        %v1041 = vunpack.c.0.s8 %v1040
        %v1042 = vperm.slane %v1034, %v1041
        %v1043 = vrot.slane %v1030, 4
        %v1044 = vsel %vm859, %v1043, %v1018
        %v1045 = vrot.slane %v1018, 4
        %v1046 = vsel %vm859, %v1030, %v1045
        %v1048 = vunpack.c.l.s4 1934713408
        %v1049 = vunpack.c.0.s8 %v1048
        %v1050 = vperm.slane %v1044, %v1049
        %v1052 = vunpack.c.l.s4 1934713408
        %v1053 = vunpack.c.0.s8 %v1052
        %v1054 = vperm.slane %v1046, %v1053
        %v1055 = vrot.slane %v1038, 4
        %v1056 = vsel %vm859, 0.0, %v1055
        %v1057 = vrot.slane %v1042, 4
        %v1058 = vsel %vm859, 0.0, %v1057
        %v1059 = vrot.slane %v1050, 4
        %v1060 = vsel %vm859, 0.0, %v1059
        %v1061 = vrot.slane %v1054, 4
        %v1062 = vsel %vm859, 0.0, %v1061
        %v1063 = vrot.slane %v998, 4
        %v1064 = vsel %vm859, %v1063, %v818
        %v1065 = vrot.slane %v818, 4
        %v1066 = vsel %vm859, %v998, %v1065
        %v1068 = vunpack.c.l.s4 1983009808
        %v1069 = vunpack.c.0.s8 %v1068
        %v1070 = vperm.slane %v1064, %v1069
        %v1072 = vunpack.c.l.s4 1983009808
        %v1073 = vunpack.c.0.s8 %v1072
        %v1074 = vperm.slane %v1066, %v1073
        %v1075 = vrot.slane %v1004, 4
        %v1076 = vsel %vm859, %v1075, %v992
        %v1077 = vrot.slane %v992, 4
        %v1078 = vsel %vm859, %v1004, %v1077
        %v1080 = vunpack.c.l.s4 1983009808
        %v1081 = vunpack.c.0.s8 %v1080
        %v1082 = vperm.slane %v1076, %v1081
        %v1084 = vunpack.c.l.s4 1983009808
        %v1085 = vunpack.c.0.s8 %v1084
        %v1086 = vperm.slane %v1078, %v1085
        %v1087 = vrot.slane %v1082, 4
        %v1088 = vsel %vm859, %v1087, %v1070
        %v1089 = vrot.slane %v1070, 4
        %v1090 = vsel %vm859, %v1082, %v1089
        %v1092 = vunpack.c.l.s4 1934713408
        %v1093 = vunpack.c.0.s8 %v1092
        %v1094 = vperm.slane %v1088, %v1093
        %v1096 = vunpack.c.l.s4 1934713408
        %v1097 = vunpack.c.0.s8 %v1096
        %v1098 = vperm.slane %v1090, %v1097
        %v1099 = vrot.slane %v1086, 4
        %v1100 = vsel %vm859, %v1099, %v1074
        %v1101 = vrot.slane %v1074, 4
        %v1102 = vsel %vm859, %v1086, %v1101
        %v1104 = vunpack.c.l.s4 1934713408
        %v1105 = vunpack.c.0.s8 %v1104
        %v1106 = vperm.slane %v1100, %v1105
        %v1108 = vunpack.c.l.s4 1934713408
        %v1109 = vunpack.c.0.s8 %v1108
        %v1110 = vperm.slane %v1102, %v1109
        %v1111 = vrot.slane %v1094, 4
        %v1112 = vsel %vm859, 0.0, %v1111
        %v1113 = vrot.slane %v1098, 4
        %v1114 = vsel %vm859, 0.0, %v1113
        %v1115 = vrot.slane %v1106, 4
        %v1116 = vsel %vm859, 0.0, %v1115
        %v1117 = vrot.slane %v1110, 4
        %v1118 = vsel %vm859, 0.0, %v1117
        %v1119 = vpack.c.bf16 %v1038, %v1038
        %v1120 = vpack.c.bf16 %v1056, %v1056
        %v1121 = vpack.c.bf16 %v1042, %v1042
        %v1122 = vpack.c.bf16 %v1058, %v1058
        %v1123 = vpack.c.bf16 %v1050, %v1050
        %v1124 = vpack.c.bf16 %v1060, %v1060
        %v1125 = vpack.c.bf16 %v1054, %v1054
        %v1126 = vpack.c.bf16 %v1062, %v1062
        %v1127 = vpack.c.bf16 %v1094, %v1094
        %v1128 = vpack.c.bf16 %v1112, %v1112
        %v1129 = vpack.c.bf16 %v1098, %v1098
        %v1130 = vpack.c.bf16 %v1114, %v1114
        %v1131 = vpack.c.bf16 %v1106, %v1106
        %v1132 = vpack.c.bf16 %v1116, %v1116
        %v1133 = vpack.c.bf16 %v1110, %v1110
        %v1134 = vpack.c.bf16 %v1118, %v1118
        %v1141 = vrot.slane %v827, 4
        %v1142 = vsel %vm859, %v1141, %v771
        %v1143 = vrot.slane %v771, 4
        %v1144 = vsel %vm859, %v827, %v1143
        %v1146 = vunpack.c.l.s4 1983009808
        %v1147 = vunpack.c.0.s8 %v1146
        %v1148 = vperm.slane %v1142, %v1147
        %v1150 = vunpack.c.l.s4 1983009808
        %v1151 = vunpack.c.0.s8 %v1150
        %v1152 = vperm.slane %v1144, %v1151
        %v1153 = vrot.slane %v831, 4
        %v1154 = vsel %vm859, %v1153, %v823
        %v1155 = vrot.slane %v823, 4
        %v1156 = vsel %vm859, %v831, %v1155
        %v1158 = vunpack.c.l.s4 1983009808
        %v1159 = vunpack.c.0.s8 %v1158
        %v1160 = vperm.slane %v1154, %v1159
        %v1162 = vunpack.c.l.s4 1983009808
        %v1163 = vunpack.c.0.s8 %v1162
        %v1164 = vperm.slane %v1156, %v1163
        %v1165 = vrot.slane %v1160, 4
        %v1166 = vsel %vm859, %v1165, %v1148
        %v1167 = vrot.slane %v1148, 4
        %v1168 = vsel %vm859, %v1160, %v1167
        %v1170 = vunpack.c.l.s4 1934713408
        %v1171 = vunpack.c.0.s8 %v1170
        %v1172 = vperm.slane %v1166, %v1171
        %v1174 = vunpack.c.l.s4 1934713408
        %v1175 = vunpack.c.0.s8 %v1174
        %v1176 = vperm.slane %v1168, %v1175
        %v1177 = vrot.slane %v1164, 4
        %v1178 = vsel %vm859, %v1177, %v1152
        %v1179 = vrot.slane %v1152, 4
        %v1180 = vsel %vm859, %v1164, %v1179
        %v1182 = vunpack.c.l.s4 1934713408
        %v1183 = vunpack.c.0.s8 %v1182
        %v1184 = vperm.slane %v1178, %v1183
        %v1186 = vunpack.c.l.s4 1934713408
        %v1187 = vunpack.c.0.s8 %v1186
        %v1188 = vperm.slane %v1180, %v1187
        %v1189 = vrot.slane %v1172, 4
        %v1190 = vsel %vm859, 0.0, %v1189
        %v1191 = vrot.slane %v1176, 4
        %v1192 = vsel %vm859, 0.0, %v1191
        %v1193 = vrot.slane %v1184, 4
        %v1194 = vsel %vm859, 0.0, %v1193
        %v1195 = vrot.slane %v1188, 4
        %v1196 = vsel %vm859, 0.0, %v1195
        %v1197 = vrot.slane %v829, 4
        %v1198 = vsel %vm859, %v1197, %v773
        %v1199 = vrot.slane %v773, 4
        %v1200 = vsel %vm859, %v829, %v1199
        %v1202 = vunpack.c.l.s4 1983009808
        %v1203 = vunpack.c.0.s8 %v1202
        %v1204 = vperm.slane %v1198, %v1203
        %v1206 = vunpack.c.l.s4 1983009808
        %v1207 = vunpack.c.0.s8 %v1206
        %v1208 = vperm.slane %v1200, %v1207
        %v1209 = vrot.slane %v833, 4
        %v1210 = vsel %vm859, %v1209, %v825
        %v1211 = vrot.slane %v825, 4
        %v1212 = vsel %vm859, %v833, %v1211
        %v1214 = vunpack.c.l.s4 1983009808
        %v1215 = vunpack.c.0.s8 %v1214
        %v1216 = vperm.slane %v1210, %v1215
        %v1218 = vunpack.c.l.s4 1983009808
        %v1219 = vunpack.c.0.s8 %v1218
        %v1220 = vperm.slane %v1212, %v1219
        %v1221 = vrot.slane %v1216, 4
        %v1222 = vsel %vm859, %v1221, %v1204
        %v1223 = vrot.slane %v1204, 4
        %v1224 = vsel %vm859, %v1216, %v1223
        %v1226 = vunpack.c.l.s4 1934713408
        %v1227 = vunpack.c.0.s8 %v1226
        %v1228 = vperm.slane %v1222, %v1227
        %v1230 = vunpack.c.l.s4 1934713408
        %v1231 = vunpack.c.0.s8 %v1230
        %v1232 = vperm.slane %v1224, %v1231
        %v1233 = vrot.slane %v1220, 4
        %v1234 = vsel %vm859, %v1233, %v1208
        %v1235 = vrot.slane %v1208, 4
        %v1236 = vsel %vm859, %v1220, %v1235
        %v1238 = vunpack.c.l.s4 1934713408
        %v1239 = vunpack.c.0.s8 %v1238
        %v1240 = vperm.slane %v1234, %v1239
        %v1242 = vunpack.c.l.s4 1934713408
        %v1243 = vunpack.c.0.s8 %v1242
        %v1244 = vperm.slane %v1236, %v1243
        %v1245 = vrot.slane %v1228, 4
        %v1246 = vsel %vm859, 0.0, %v1245
        %v1247 = vrot.slane %v1232, 4
        %v1248 = vsel %vm859, 0.0, %v1247
        %v1249 = vrot.slane %v1240, 4
        %v1250 = vsel %vm859, 0.0, %v1249
        %v1251 = vrot.slane %v1244, 4
        %v1252 = vsel %vm859, 0.0, %v1251
        %v1253 = vpack.c.bf16 %v1172, %v1172
        %v1254 = vpack.c.bf16 %v1190, %v1190
        %v1255 = vpack.c.bf16 %v1176, %v1176
        %v1256 = vpack.c.bf16 %v1192, %v1192
        %v1257 = vpack.c.bf16 %v1184, %v1184
        %v1258 = vpack.c.bf16 %v1194, %v1194
        %v1259 = vpack.c.bf16 %v1188, %v1188
        %v1260 = vpack.c.bf16 %v1196, %v1196
        %v1261 = vpack.c.bf16 %v1228, %v1228
        %v1262 = vpack.c.bf16 %v1246, %v1246
        %v1263 = vpack.c.bf16 %v1232, %v1232
        %v1264 = vpack.c.bf16 %v1248, %v1248
        %v1265 = vpack.c.bf16 %v1240, %v1240
        %v1266 = vpack.c.bf16 %v1250, %v1250
        %v1267 = vpack.c.bf16 %v1244, %v1244
        %v1268 = vpack.c.bf16 %v1252, %v1252
        %v1269 = vrot.slane %v1257, 4
        %vm1270 = vcmask 1047556
        %v1271 = vsel %vm1270, %v1269, %v1253
        %v1273 = vunpack.c.l.s4 1983009808
        %v1274 = vunpack.c.0.s8 %v1273
        %v1275 = vperm.slane %v1271, %v1274
        %v1276 = vrot.slane %v1259, 4
        %v1277 = vsel %vm1270, %v1276, %v1255
        %v1279 = vunpack.c.l.s4 1983009808
        %v1280 = vunpack.c.0.s8 %v1279
        %v1281 = vperm.slane %v1277, %v1280
        %v1282 = vrot.slane %v1281, 4
        %v1283 = vsel %vm1270, %v1282, %v1275
        %v1285 = vunpack.c.l.s4 1934713408
        %v1286 = vunpack.c.0.s8 %v1285
        %v1287 = vperm.slane %v1283, %v1286
        %v1288 = vrot.slane %v1287, 4
        %v1289 = vsel %vm1270, 0, %v1288
        %v1290 = vrot.slane %v1258, 4
        %v1291 = vsel %vm1270, %v1290, %v1254
        %v1293 = vunpack.c.l.s4 1983009808
        %v1294 = vunpack.c.0.s8 %v1293
        %v1295 = vperm.slane %v1291, %v1294
        %v1296 = vrot.slane %v1260, 4
        %v1297 = vsel %vm1270, %v1296, %v1256
        %v1299 = vunpack.c.l.s4 1983009808
        %v1300 = vunpack.c.0.s8 %v1299
        %v1301 = vperm.slane %v1297, %v1300
        %v1302 = vrot.slane %v1301, 4
        %v1303 = vsel %vm1270, %v1302, %v1295
        %v1305 = vunpack.c.l.s4 1934713408
        %v1306 = vunpack.c.0.s8 %v1305
        %v1307 = vperm.slane %v1303, %v1306
        %v1308 = vrot.slane %v1307, 4
        %v1309 = vsel %vm1270, 0, %v1308
        %v1310 = vrot.slane %v1265, 4
        %v1311 = vsel %vm1270, %v1310, %v1261
        %v1313 = vunpack.c.l.s4 1983009808
        %v1314 = vunpack.c.0.s8 %v1313
        %v1315 = vperm.slane %v1311, %v1314
        %v1316 = vrot.slane %v1267, 4
        %v1317 = vsel %vm1270, %v1316, %v1263
        %v1319 = vunpack.c.l.s4 1983009808
        %v1320 = vunpack.c.0.s8 %v1319
        %v1321 = vperm.slane %v1317, %v1320
        %v1322 = vrot.slane %v1321, 4
        %v1323 = vsel %vm1270, %v1322, %v1315
        %v1325 = vunpack.c.l.s4 1934713408
        %v1326 = vunpack.c.0.s8 %v1325
        %v1327 = vperm.slane %v1323, %v1326
        %v1328 = vrot.slane %v1327, 4
        %v1329 = vsel %vm1270, 0, %v1328
        %v1330 = vrot.slane %v1266, 4
        %v1331 = vsel %vm1270, %v1330, %v1262
        %v1333 = vunpack.c.l.s4 1983009808
        %v1334 = vunpack.c.0.s8 %v1333
        %v1335 = vperm.slane %v1331, %v1334
        %v1336 = vrot.slane %v1268, 4
        %v1337 = vsel %vm1270, %v1336, %v1264
        %v1339 = vunpack.c.l.s4 1983009808
        %v1340 = vunpack.c.0.s8 %v1339
        %v1341 = vperm.slane %v1337, %v1340
        %v1342 = vrot.slane %v1341, 4
        %v1343 = vsel %vm1270, %v1342, %v1335
        %v1345 = vunpack.c.l.s4 1934713408
        %v1346 = vunpack.c.0.s8 %v1345
        %v1347 = vperm.slane %v1343, %v1346
        %v1348 = vrot.slane %v1347, 4
        %v1349 = vsel %vm1270, 0, %v1348
        %v1352 = vpack.i.b16 %v1307, %v1287
        %v1353 = vshrl.u32 %v1287, 16
        %v1354 = vshrl.u32 %v1307, 16
        %v1355 = vpack.i.b16 %v1354, %v1353
        %v1358 = vpack.i.b16 %v1309, %v1289
        %v1359 = vshrl.u32 %v1289, 16
        %v1360 = vshrl.u32 %v1309, 16
        %v1361 = vpack.i.b16 %v1360, %v1359
        %v1364 = vpack.i.b16 %v1347, %v1327
        %v1365 = vshrl.u32 %v1327, 16
        %v1366 = vshrl.u32 %v1347, 16
        %v1367 = vpack.i.b16 %v1366, %v1365
        %v1370 = vpack.i.b16 %v1349, %v1329
        %v1371 = vshrl.u32 %v1329, 16
        %v1372 = vshrl.u32 %v1349, 16
        %v1373 = vpack.i.b16 %v1372, %v1371
        %1374 = vxpose.xlu0.c.b16.start [1/8] %v971, 128
        %1375 = vxpose.xlu0.c.b16.cont [2/8] 0, 128
        %1376 = vxpose.xlu0.c.b16.cont [3/8] 0, 128
        %1377 = vxpose.xlu0.c.b16.cont [4/8] 0, 128
        %1378 = vxpose.xlu0.c.b16.cont [5/8] 0, 128
        %1379 = vxpose.xlu0.c.b16.cont [6/8] 0, 128
        %1380 = vxpose.xlu0.c.b16.cont [7/8] 0, 128
        %1381 = vxpose.xlu0.c.b16.end [8/8] 0, 128
        %v1382 = vpop.trf.xlu0
        %v1383 = vpop.trf.xlu0
        %v1384 = vpop.trf.xlu0
        %v1385 = vpop.trf.xlu0
        %v1386 = vpop.trf.xlu0
        %v1387 = vpop.trf.xlu0
        %v1388 = vpop.trf.xlu0
        %v1389 = vpop.trf.xlu0
        %1390 = vxpose.xlu0.c.b16.start [1/8] %v972, 128
        %1391 = vxpose.xlu0.c.b16.cont [2/8] 0, 128
        %1392 = vxpose.xlu0.c.b16.cont [3/8] 0, 128
        %1393 = vxpose.xlu0.c.b16.cont [4/8] 0, 128
        %1394 = vxpose.xlu0.c.b16.cont [5/8] 0, 128
        %1395 = vxpose.xlu0.c.b16.cont [6/8] 0, 128
        %1396 = vxpose.xlu0.c.b16.cont [7/8] 0, 128
        %1397 = vxpose.xlu0.c.b16.end [8/8] 0, 128
        %v1398 = vpop.trf.xlu0
        %v1399 = vpop.trf.xlu0
        %v1400 = vpop.trf.xlu0
        %v1401 = vpop.trf.xlu0
        %v1402 = vpop.trf.xlu0
        %v1403 = vpop.trf.xlu0
        %v1404 = vpop.trf.xlu0
        %v1405 = vpop.trf.xlu0
        %1406 = vxpose.xlu0.c.b16.start [1/8] %v973, 128
        %1407 = vxpose.xlu0.c.b16.cont [2/8] 0, 128
        %1408 = vxpose.xlu0.c.b16.cont [3/8] 0, 128
        %1409 = vxpose.xlu0.c.b16.cont [4/8] 0, 128
        %1410 = vxpose.xlu0.c.b16.cont [5/8] 0, 128
        %1411 = vxpose.xlu0.c.b16.cont [6/8] 0, 128
        %1412 = vxpose.xlu0.c.b16.cont [7/8] 0, 128
        %1413 = vxpose.xlu0.c.b16.end [8/8] 0, 128
        %v1414 = vpop.trf.xlu0
        %v1415 = vpop.trf.xlu0
        %v1416 = vpop.trf.xlu0
        %v1417 = vpop.trf.xlu0
        %v1418 = vpop.trf.xlu0
        %v1419 = vpop.trf.xlu0
        %v1420 = vpop.trf.xlu0
        %v1421 = vpop.trf.xlu0
        %1422 = vxpose.xlu0.c.b16.start [1/8] %v974, 128
        %1423 = vxpose.xlu0.c.b16.cont [2/8] 0, 128
        %1424 = vxpose.xlu0.c.b16.cont [3/8] 0, 128
        %1425 = vxpose.xlu0.c.b16.cont [4/8] 0, 128
        %1426 = vxpose.xlu0.c.b16.cont [5/8] 0, 128
        %1427 = vxpose.xlu0.c.b16.cont [6/8] 0, 128
        %1428 = vxpose.xlu0.c.b16.cont [7/8] 0, 128
        %1429 = vxpose.xlu0.c.b16.end [8/8] 0, 128
        %v1430 = vpop.trf.xlu0
        %v1431 = vpop.trf.xlu0
        %v1432 = vpop.trf.xlu0
        %v1433 = vpop.trf.xlu0
        %v1434 = vpop.trf.xlu0
        %v1435 = vpop.trf.xlu0
        %v1436 = vpop.trf.xlu0
        %v1437 = vpop.trf.xlu0
        %1438 = vxpose.xlu0.c.b16.start [1/8] %v975, 128
        %1439 = vxpose.xlu0.c.b16.cont [2/8] 0, 128
        %1440 = vxpose.xlu0.c.b16.cont [3/8] 0, 128
        %1441 = vxpose.xlu0.c.b16.cont [4/8] 0, 128
        %1442 = vxpose.xlu0.c.b16.cont [5/8] 0, 128
        %1443 = vxpose.xlu0.c.b16.cont [6/8] 0, 128
        %1444 = vxpose.xlu0.c.b16.cont [7/8] 0, 128
        %1445 = vxpose.xlu0.c.b16.end [8/8] 0, 128
        %v1446 = vpop.trf.xlu0
        %v1447 = vpop.trf.xlu0
        %v1448 = vpop.trf.xlu0
        %v1449 = vpop.trf.xlu0
        %v1450 = vpop.trf.xlu0
        %v1451 = vpop.trf.xlu0
        %v1452 = vpop.trf.xlu0
        %v1453 = vpop.trf.xlu0
        %1454 = vxpose.xlu0.c.b16.start [1/8] %v976, 128
        %1455 = vxpose.xlu0.c.b16.cont [2/8] 0, 128
        %1456 = vxpose.xlu0.c.b16.cont [3/8] 0, 128
        %1457 = vxpose.xlu0.c.b16.cont [4/8] 0, 128
        %1458 = vxpose.xlu0.c.b16.cont [5/8] 0, 128
        %1459 = vxpose.xlu0.c.b16.cont [6/8] 0, 128
        %1460 = vxpose.xlu0.c.b16.cont [7/8] 0, 128
        %1461 = vxpose.xlu0.c.b16.end [8/8] 0, 128
        %v1462 = vpop.trf.xlu0
        %v1463 = vpop.trf.xlu0
        %v1464 = vpop.trf.xlu0
        %v1465 = vpop.trf.xlu0
        %v1466 = vpop.trf.xlu0
        %v1467 = vpop.trf.xlu0
        %v1468 = vpop.trf.xlu0
        %v1469 = vpop.trf.xlu0
        %1470 = vxpose.xlu0.c.b16.start [1/8] %v977, 128
        %1471 = vxpose.xlu0.c.b16.cont [2/8] 0, 128
        %1472 = vxpose.xlu0.c.b16.cont [3/8] 0, 128
        %1473 = vxpose.xlu0.c.b16.cont [4/8] 0, 128
        %1474 = vxpose.xlu0.c.b16.cont [5/8] 0, 128
        %1475 = vxpose.xlu0.c.b16.cont [6/8] 0, 128
        %1476 = vxpose.xlu0.c.b16.cont [7/8] 0, 128
        %1477 = vxpose.xlu0.c.b16.end [8/8] 0, 128
        %v1478 = vpop.trf.xlu0
        %v1479 = vpop.trf.xlu0
        %v1480 = vpop.trf.xlu0
        %v1481 = vpop.trf.xlu0
        %v1482 = vpop.trf.xlu0
        %v1483 = vpop.trf.xlu0
        %v1484 = vpop.trf.xlu0
        %v1485 = vpop.trf.xlu0
        %1486 = vxpose.xlu0.c.b16.start [1/8] %v978, 128
        %1487 = vxpose.xlu0.c.b16.cont [2/8] 0, 128
        %1488 = vxpose.xlu0.c.b16.cont [3/8] 0, 128
        %1489 = vxpose.xlu0.c.b16.cont [4/8] 0, 128
        %1490 = vxpose.xlu0.c.b16.cont [5/8] 0, 128
        %1491 = vxpose.xlu0.c.b16.cont [6/8] 0, 128
        %1492 = vxpose.xlu0.c.b16.cont [7/8] 0, 128
        %1493 = vxpose.xlu0.c.b16.end [8/8] 0, 128
        %v1494 = vpop.trf.xlu0
        %v1495 = vpop.trf.xlu0
        %v1496 = vpop.trf.xlu0
        %v1497 = vpop.trf.xlu0
        %v1498 = vpop.trf.xlu0
        %v1499 = vpop.trf.xlu0
        %v1500 = vpop.trf.xlu0
        %v1501 = vpop.trf.xlu0
        %1502 = vxpose.xlu0.c.b16.start [1/8] %v979, 128
        %1503 = vxpose.xlu0.c.b16.cont [2/8] 0, 128
        %1504 = vxpose.xlu0.c.b16.cont [3/8] 0, 128
        %1505 = vxpose.xlu0.c.b16.cont [4/8] 0, 128
        %1506 = vxpose.xlu0.c.b16.cont [5/8] 0, 128
        %1507 = vxpose.xlu0.c.b16.cont [6/8] 0, 128
        %1508 = vxpose.xlu0.c.b16.cont [7/8] 0, 128
        %1509 = vxpose.xlu0.c.b16.end [8/8] 0, 128
        %v1510 = vpop.trf.xlu0
        %v1511 = vpop.trf.xlu0
        %v1512 = vpop.trf.xlu0
        %v1513 = vpop.trf.xlu0
        %v1514 = vpop.trf.xlu0
        %v1515 = vpop.trf.xlu0
        %v1516 = vpop.trf.xlu0
        %v1517 = vpop.trf.xlu0
        %1518 = vxpose.xlu0.c.b16.start [1/8] %v980, 128
        %1519 = vxpose.xlu0.c.b16.cont [2/8] 0, 128
        %1520 = vxpose.xlu0.c.b16.cont [3/8] 0, 128
        %1521 = vxpose.xlu0.c.b16.cont [4/8] 0, 128
        %1522 = vxpose.xlu0.c.b16.cont [5/8] 0, 128
        %1523 = vxpose.xlu0.c.b16.cont [6/8] 0, 128
        %1524 = vxpose.xlu0.c.b16.cont [7/8] 0, 128
        %1525 = vxpose.xlu0.c.b16.end [8/8] 0, 128
        %v1526 = vpop.trf.xlu0
        %v1527 = vpop.trf.xlu0
        %v1528 = vpop.trf.xlu0
        %v1529 = vpop.trf.xlu0
        %v1530 = vpop.trf.xlu0
        %v1531 = vpop.trf.xlu0
        %v1532 = vpop.trf.xlu0
        %v1533 = vpop.trf.xlu0
        %1534 = vxpose.xlu0.c.b16.start [1/8] %v981, 128
        %1535 = vxpose.xlu0.c.b16.cont [2/8] 0, 128
        %1536 = vxpose.xlu0.c.b16.cont [3/8] 0, 128
        %1537 = vxpose.xlu0.c.b16.cont [4/8] 0, 128
        %1538 = vxpose.xlu0.c.b16.cont [5/8] 0, 128
        %1539 = vxpose.xlu0.c.b16.cont [6/8] 0, 128
        %1540 = vxpose.xlu0.c.b16.cont [7/8] 0, 128
        %1541 = vxpose.xlu0.c.b16.end [8/8] 0, 128
        %v1542 = vpop.trf.xlu0
        %v1543 = vpop.trf.xlu0
        %v1544 = vpop.trf.xlu0
        %v1545 = vpop.trf.xlu0
        %v1546 = vpop.trf.xlu0
        %v1547 = vpop.trf.xlu0
        %v1548 = vpop.trf.xlu0
        %v1549 = vpop.trf.xlu0
        %1550 = vxpose.xlu0.c.b16.start [1/8] %v982, 128
        %1551 = vxpose.xlu0.c.b16.cont [2/8] 0, 128
        %1552 = vxpose.xlu0.c.b16.cont [3/8] 0, 128
        %1553 = vxpose.xlu0.c.b16.cont [4/8] 0, 128
        %1554 = vxpose.xlu0.c.b16.cont [5/8] 0, 128
        %1555 = vxpose.xlu0.c.b16.cont [6/8] 0, 128
        %1556 = vxpose.xlu0.c.b16.cont [7/8] 0, 128
        %1557 = vxpose.xlu0.c.b16.end [8/8] 0, 128
        %v1558 = vpop.trf.xlu0
        %v1559 = vpop.trf.xlu0
        %v1560 = vpop.trf.xlu0
        %v1561 = vpop.trf.xlu0
        %v1562 = vpop.trf.xlu0
        %v1563 = vpop.trf.xlu0
        %v1564 = vpop.trf.xlu0
        %v1565 = vpop.trf.xlu0
        %1566 = vxpose.xlu0.c.b16.start [1/8] %v983, 128
        %1567 = vxpose.xlu0.c.b16.cont [2/8] 0, 128
        %1568 = vxpose.xlu0.c.b16.cont [3/8] 0, 128
        %1569 = vxpose.xlu0.c.b16.cont [4/8] 0, 128
        %1570 = vxpose.xlu0.c.b16.cont [5/8] 0, 128
        %1571 = vxpose.xlu0.c.b16.cont [6/8] 0, 128
        %1572 = vxpose.xlu0.c.b16.cont [7/8] 0, 128
        %1573 = vxpose.xlu0.c.b16.end [8/8] 0, 128
        %v1574 = vpop.trf.xlu0
        %v1575 = vpop.trf.xlu0
        %v1576 = vpop.trf.xlu0
        %v1577 = vpop.trf.xlu0
        %v1578 = vpop.trf.xlu0
        %v1579 = vpop.trf.xlu0
        %v1580 = vpop.trf.xlu0
        %v1581 = vpop.trf.xlu0
        %1582 = vxpose.xlu0.c.b16.start [1/8] %v984, 128
        %1583 = vxpose.xlu0.c.b16.cont [2/8] 0, 128
        %1584 = vxpose.xlu0.c.b16.cont [3/8] 0, 128
        %1585 = vxpose.xlu0.c.b16.cont [4/8] 0, 128
        %1586 = vxpose.xlu0.c.b16.cont [5/8] 0, 128
        %1587 = vxpose.xlu0.c.b16.cont [6/8] 0, 128
        %1588 = vxpose.xlu0.c.b16.cont [7/8] 0, 128
        %1589 = vxpose.xlu0.c.b16.end [8/8] 0, 128
        %v1590 = vpop.trf.xlu0
        %v1591 = vpop.trf.xlu0
        %v1592 = vpop.trf.xlu0
        %v1593 = vpop.trf.xlu0
        %v1594 = vpop.trf.xlu0
        %v1595 = vpop.trf.xlu0
        %v1596 = vpop.trf.xlu0
        %v1597 = vpop.trf.xlu0
        %1598 = vxpose.xlu0.c.b16.start [1/8] %v985, 128
        %1599 = vxpose.xlu0.c.b16.cont [2/8] 0, 128
        %1600 = vxpose.xlu0.c.b16.cont [3/8] 0, 128
        %1601 = vxpose.xlu0.c.b16.cont [4/8] 0, 128
        %1602 = vxpose.xlu0.c.b16.cont [5/8] 0, 128
        %1603 = vxpose.xlu0.c.b16.cont [6/8] 0, 128
        %1604 = vxpose.xlu0.c.b16.cont [7/8] 0, 128
        %1605 = vxpose.xlu0.c.b16.end [8/8] 0, 128
        %v1606 = vpop.trf.xlu0
        %v1607 = vpop.trf.xlu0
        %v1608 = vpop.trf.xlu0
        %v1609 = vpop.trf.xlu0
        %v1610 = vpop.trf.xlu0
        %v1611 = vpop.trf.xlu0
        %v1612 = vpop.trf.xlu0
        %v1613 = vpop.trf.xlu0
        %1614 = vxpose.xlu0.c.b16.start [1/8] %v986, 128
        %1615 = vxpose.xlu0.c.b16.cont [2/8] 0, 128
        %1616 = vxpose.xlu0.c.b16.cont [3/8] 0, 128
        %1617 = vxpose.xlu0.c.b16.cont [4/8] 0, 128
        %1618 = vxpose.xlu0.c.b16.cont [5/8] 0, 128
        %1619 = vxpose.xlu0.c.b16.cont [6/8] 0, 128
        %1620 = vxpose.xlu0.c.b16.cont [7/8] 0, 128
        %1621 = vxpose.xlu0.c.b16.end [8/8] 0, 128
        %v1622 = vpop.trf.xlu0
        %v1623 = vpop.trf.xlu0
        %v1624 = vpop.trf.xlu0
        %v1625 = vpop.trf.xlu0
        %v1626 = vpop.trf.xlu0
        %v1627 = vpop.trf.xlu0
        %v1628 = vpop.trf.xlu0
        %v1629 = vpop.trf.xlu0
        %v1630 = vrot.slane %v1446, 4
        %v1631 = vsel %vm1270, %v1630, %v1382
        %v1632 = vrot.slane %v1382, 4
        %v1633 = vsel %vm1270, %v1446, %v1632
        %v1635 = vunpack.c.l.s4 1983009808
        %v1636 = vunpack.c.0.s8 %v1635
        %v1637 = vperm.slane %v1631, %v1636
        %v1639 = vunpack.c.l.s4 1983009808
        %v1640 = vunpack.c.0.s8 %v1639
        %v1641 = vperm.slane %v1633, %v1640
        %v1642 = vrot.slane %v1478, 4
        %v1643 = vsel %vm1270, %v1642, %v1414
        %v1644 = vrot.slane %v1414, 4
        %v1645 = vsel %vm1270, %v1478, %v1644
        %v1647 = vunpack.c.l.s4 1983009808
        %v1648 = vunpack.c.0.s8 %v1647
        %v1649 = vperm.slane %v1643, %v1648
        %v1651 = vunpack.c.l.s4 1983009808
        %v1652 = vunpack.c.0.s8 %v1651
        %v1653 = vperm.slane %v1645, %v1652
        %v1654 = vrot.slane %v1574, 4
        %v1655 = vsel %vm1270, %v1654, %v1510
        %v1656 = vrot.slane %v1510, 4
        %v1657 = vsel %vm1270, %v1574, %v1656
        %v1659 = vunpack.c.l.s4 1983009808
        %v1660 = vunpack.c.0.s8 %v1659
        %v1661 = vperm.slane %v1655, %v1660
        %v1663 = vunpack.c.l.s4 1983009808
        %v1664 = vunpack.c.0.s8 %v1663
        %v1665 = vperm.slane %v1657, %v1664
        %v1666 = vrot.slane %v1606, 4
        %v1667 = vsel %vm1270, %v1666, %v1542
        %v1668 = vrot.slane %v1542, 4
        %v1669 = vsel %vm1270, %v1606, %v1668
        %v1671 = vunpack.c.l.s4 1983009808
        %v1672 = vunpack.c.0.s8 %v1671
        %v1673 = vperm.slane %v1667, %v1672
        %v1675 = vunpack.c.l.s4 1983009808
        %v1676 = vunpack.c.0.s8 %v1675
        %v1677 = vperm.slane %v1669, %v1676
        %v1678 = vrot.slane %v1649, 4
        %v1679 = vsel %vm1270, %v1678, %v1637
        %v1680 = vrot.slane %v1637, 4
        %v1681 = vsel %vm1270, %v1649, %v1680
        %v1683 = vunpack.c.l.s4 1934713408
        %v1684 = vunpack.c.0.s8 %v1683
        %v1685 = vperm.slane %v1679, %v1684
        %v1687 = vunpack.c.l.s4 1934713408
        %v1688 = vunpack.c.0.s8 %v1687
        %v1689 = vperm.slane %v1681, %v1688
        %v1690 = vrot.slane %v1653, 4
        %v1691 = vsel %vm1270, %v1690, %v1641
        %v1692 = vrot.slane %v1641, 4
        %v1693 = vsel %vm1270, %v1653, %v1692
        %v1695 = vunpack.c.l.s4 1934713408
        %v1696 = vunpack.c.0.s8 %v1695
        %v1697 = vperm.slane %v1691, %v1696
        %v1699 = vunpack.c.l.s4 1934713408
        %v1700 = vunpack.c.0.s8 %v1699
        %v1701 = vperm.slane %v1693, %v1700
        %v1702 = vrot.slane %v1673, 4
        %v1703 = vsel %vm1270, %v1702, %v1661
        %v1704 = vrot.slane %v1661, 4
        %v1705 = vsel %vm1270, %v1673, %v1704
        %v1707 = vunpack.c.l.s4 1934713408
        %v1708 = vunpack.c.0.s8 %v1707
        %v1709 = vperm.slane %v1703, %v1708
        %v1711 = vunpack.c.l.s4 1934713408
        %v1712 = vunpack.c.0.s8 %v1711
        %v1713 = vperm.slane %v1705, %v1712
        %v1714 = vrot.slane %v1677, 4
        %v1715 = vsel %vm1270, %v1714, %v1665
        %v1716 = vrot.slane %v1665, 4
        %v1717 = vsel %vm1270, %v1677, %v1716
        %v1719 = vunpack.c.l.s4 1934713408
        %v1720 = vunpack.c.0.s8 %v1719
        %v1721 = vperm.slane %v1715, %v1720
        %v1723 = vunpack.c.l.s4 1934713408
        %v1724 = vunpack.c.0.s8 %v1723
        %v1725 = vperm.slane %v1717, %v1724
        %v1726 = vrot.slane %v1709, 4
        %v1727 = vsel %vm1270, %v1726, %v1685
        %v1728 = vrot.slane %v1685, 4
        %v1729 = vsel %vm1270, %v1709, %v1728
        %v1730 = vrot.slane %v1713, 4
        %v1731 = vsel %vm1270, %v1730, %v1689
        %v1732 = vrot.slane %v1689, 4
        %v1733 = vsel %vm1270, %v1713, %v1732
        %v1734 = vrot.slane %v1721, 4
        %v1735 = vsel %vm1270, %v1734, %v1697
        %v1736 = vrot.slane %v1697, 4
        %v1737 = vsel %vm1270, %v1721, %v1736
        %v1738 = vrot.slane %v1725, 4
        %v1739 = vsel %vm1270, %v1738, %v1701
        %v1740 = vrot.slane %v1701, 4
        %v1741 = vsel %vm1270, %v1725, %v1740
        %v1742 = vrot.slane %v1462, 4
        %v1743 = vsel %vm1270, %v1742, %v1398
        %v1744 = vrot.slane %v1398, 4
        %v1745 = vsel %vm1270, %v1462, %v1744
        %v1747 = vunpack.c.l.s4 1983009808
        %v1748 = vunpack.c.0.s8 %v1747
        %v1749 = vperm.slane %v1743, %v1748
        %v1751 = vunpack.c.l.s4 1983009808
        %v1752 = vunpack.c.0.s8 %v1751
        %v1753 = vperm.slane %v1745, %v1752
        %v1754 = vrot.slane %v1494, 4
        %v1755 = vsel %vm1270, %v1754, %v1430
        %v1756 = vrot.slane %v1430, 4
        %v1757 = vsel %vm1270, %v1494, %v1756
        %v1759 = vunpack.c.l.s4 1983009808
        %v1760 = vunpack.c.0.s8 %v1759
        %v1761 = vperm.slane %v1755, %v1760
        %v1763 = vunpack.c.l.s4 1983009808
        %v1764 = vunpack.c.0.s8 %v1763
        %v1765 = vperm.slane %v1757, %v1764
        %v1766 = vrot.slane %v1590, 4
        %v1767 = vsel %vm1270, %v1766, %v1526
        %v1768 = vrot.slane %v1526, 4
        %v1769 = vsel %vm1270, %v1590, %v1768
        %v1771 = vunpack.c.l.s4 1983009808
        %v1772 = vunpack.c.0.s8 %v1771
        %v1773 = vperm.slane %v1767, %v1772
        %v1775 = vunpack.c.l.s4 1983009808
        %v1776 = vunpack.c.0.s8 %v1775
        %v1777 = vperm.slane %v1769, %v1776
        %v1778 = vrot.slane %v1622, 4
        %v1779 = vsel %vm1270, %v1778, %v1558
        %v1780 = vrot.slane %v1558, 4
        %v1781 = vsel %vm1270, %v1622, %v1780
        %v1783 = vunpack.c.l.s4 1983009808
        %v1784 = vunpack.c.0.s8 %v1783
        %v1785 = vperm.slane %v1779, %v1784
        %v1787 = vunpack.c.l.s4 1983009808
        %v1788 = vunpack.c.0.s8 %v1787
        %v1789 = vperm.slane %v1781, %v1788
        %v1790 = vrot.slane %v1761, 4
        %v1791 = vsel %vm1270, %v1790, %v1749
        %v1792 = vrot.slane %v1749, 4
        %v1793 = vsel %vm1270, %v1761, %v1792
        %v1795 = vunpack.c.l.s4 1934713408
        %v1796 = vunpack.c.0.s8 %v1795
        %v1797 = vperm.slane %v1791, %v1796
        %v1799 = vunpack.c.l.s4 1934713408
        %v1800 = vunpack.c.0.s8 %v1799
        %v1801 = vperm.slane %v1793, %v1800
        %v1802 = vrot.slane %v1765, 4
        %v1803 = vsel %vm1270, %v1802, %v1753
        %v1804 = vrot.slane %v1753, 4
        %v1805 = vsel %vm1270, %v1765, %v1804
        %v1807 = vunpack.c.l.s4 1934713408
        %v1808 = vunpack.c.0.s8 %v1807
        %v1809 = vperm.slane %v1803, %v1808
        %v1811 = vunpack.c.l.s4 1934713408
        %v1812 = vunpack.c.0.s8 %v1811
        %v1813 = vperm.slane %v1805, %v1812
        %v1814 = vrot.slane %v1785, 4
        %v1815 = vsel %vm1270, %v1814, %v1773
        %v1816 = vrot.slane %v1773, 4
        %v1817 = vsel %vm1270, %v1785, %v1816
        %v1819 = vunpack.c.l.s4 1934713408
        %v1820 = vunpack.c.0.s8 %v1819
        %v1821 = vperm.slane %v1815, %v1820
        %v1823 = vunpack.c.l.s4 1934713408
        %v1824 = vunpack.c.0.s8 %v1823
        %v1825 = vperm.slane %v1817, %v1824
        %v1826 = vrot.slane %v1789, 4
        %v1827 = vsel %vm1270, %v1826, %v1777
        %v1828 = vrot.slane %v1777, 4
        %v1829 = vsel %vm1270, %v1789, %v1828
        %v1831 = vunpack.c.l.s4 1934713408
        %v1832 = vunpack.c.0.s8 %v1831
        %v1833 = vperm.slane %v1827, %v1832
        %v1835 = vunpack.c.l.s4 1934713408
        %v1836 = vunpack.c.0.s8 %v1835
        %v1837 = vperm.slane %v1829, %v1836
        %v1838 = vrot.slane %v1821, 4
        %v1839 = vsel %vm1270, %v1838, %v1797
        %v1840 = vrot.slane %v1797, 4
        %v1841 = vsel %vm1270, %v1821, %v1840
        %v1842 = vrot.slane %v1825, 4
        %v1843 = vsel %vm1270, %v1842, %v1801
        %v1844 = vrot.slane %v1801, 4
        %v1845 = vsel %vm1270, %v1825, %v1844
        %v1846 = vrot.slane %v1833, 4
        %v1847 = vsel %vm1270, %v1846, %v1809
        %v1848 = vrot.slane %v1809, 4
        %v1849 = vsel %vm1270, %v1833, %v1848
        %v1850 = vrot.slane %v1837, 4
        %v1851 = vsel %vm1270, %v1850, %v1813
        %v1852 = vrot.slane %v1813, 4
        %v1853 = vsel %vm1270, %v1837, %v1852
        %v1856 = vpack.i.b16 %v1839, %v1727
        %v1858 = vshrl.u32 %v1727, 16
        %v1859 = vshrl.u32 %v1839, 16
        %v1860 = vpack.i.b16 %v1859, %v1858
        %v1864 = vpack.i.b16 %v1841, %v1729
        %v1866 = vshrl.u32 %v1729, 16
        %v1867 = vshrl.u32 %v1841, 16
        %v1868 = vpack.i.b16 %v1867, %v1866
        %v1872 = vpack.i.b16 %v1843, %v1731
        %v1874 = vshrl.u32 %v1731, 16
        %v1875 = vshrl.u32 %v1843, 16
        %v1876 = vpack.i.b16 %v1875, %v1874
        %v1880 = vpack.i.b16 %v1845, %v1733
        %v1882 = vshrl.u32 %v1733, 16
        %v1883 = vshrl.u32 %v1845, 16
        %v1884 = vpack.i.b16 %v1883, %v1882
        %v1888 = vpack.i.b16 %v1847, %v1735
        %v1890 = vshrl.u32 %v1735, 16
        %v1891 = vshrl.u32 %v1847, 16
        %v1892 = vpack.i.b16 %v1891, %v1890
        %v1896 = vpack.i.b16 %v1849, %v1737
        %v1898 = vshrl.u32 %v1737, 16
        %v1899 = vshrl.u32 %v1849, 16
        %v1900 = vpack.i.b16 %v1899, %v1898
        %v1904 = vpack.i.b16 %v1851, %v1739
        %v1906 = vshrl.u32 %v1739, 16
        %v1907 = vshrl.u32 %v1851, 16
        %v1908 = vpack.i.b16 %v1907, %v1906
        %v1912 = vpack.i.b16 %v1853, %v1741
        %v1914 = vshrl.u32 %v1741, 16
        %v1915 = vshrl.u32 %v1853, 16
        %v1916 = vpack.i.b16 %v1915, %v1914
        %1918 = vxpose.xlu0.c.b16.start [1/8] %v1856, 128
        %1919 = vxpose.xlu0.c.b16.cont [2/8] 0, 128
        %1920 = vxpose.xlu0.c.b16.cont [3/8] 0, 128
        %1921 = vxpose.xlu0.c.b16.cont [4/8] 0, 128
        %1922 = vxpose.xlu0.c.b16.cont [5/8] 0, 128
        %1923 = vxpose.xlu0.c.b16.cont [6/8] 0, 128
        %1924 = vxpose.xlu0.c.b16.cont [7/8] 0, 128
        %1925 = vxpose.xlu0.c.b16.end [8/8] 0, 128
        %v1926 = vpop.trf.xlu0
        %v1927 = vpop.trf.xlu0
        %v1928 = vpop.trf.xlu0
        %v1929 = vpop.trf.xlu0
        %v1930 = vpop.trf.xlu0
        %v1931 = vpop.trf.xlu0
        %v1932 = vpop.trf.xlu0
        %v1933 = vpop.trf.xlu0
        %1934 = vxpose.xlu0.c.b16.start [1/8] %v1860, 128
        %1935 = vxpose.xlu0.c.b16.cont [2/8] 0, 128
        %1936 = vxpose.xlu0.c.b16.cont [3/8] 0, 128
        %1937 = vxpose.xlu0.c.b16.cont [4/8] 0, 128
        %1938 = vxpose.xlu0.c.b16.cont [5/8] 0, 128
        %1939 = vxpose.xlu0.c.b16.cont [6/8] 0, 128
        %1940 = vxpose.xlu0.c.b16.cont [7/8] 0, 128
        %1941 = vxpose.xlu0.c.b16.end [8/8] 0, 128
        %v1942 = vpop.trf.xlu0
        %v1943 = vpop.trf.xlu0
        %v1944 = vpop.trf.xlu0
        %v1945 = vpop.trf.xlu0
        %v1946 = vpop.trf.xlu0
        %v1947 = vpop.trf.xlu0
        %v1948 = vpop.trf.xlu0
        %v1949 = vpop.trf.xlu0
        %1950 = vxpose.xlu0.c.b16.start [1/8] %v1864, 128
        %1951 = vxpose.xlu0.c.b16.cont [2/8] 0, 128
        %1952 = vxpose.xlu0.c.b16.cont [3/8] 0, 128
        %1953 = vxpose.xlu0.c.b16.cont [4/8] 0, 128
        %1954 = vxpose.xlu0.c.b16.cont [5/8] 0, 128
        %1955 = vxpose.xlu0.c.b16.cont [6/8] 0, 128
        %1956 = vxpose.xlu0.c.b16.cont [7/8] 0, 128
        %1957 = vxpose.xlu0.c.b16.end [8/8] 0, 128
        %v1958 = vpop.trf.xlu0
        %v1959 = vpop.trf.xlu0
        %v1960 = vpop.trf.xlu0
        %v1961 = vpop.trf.xlu0
        %v1962 = vpop.trf.xlu0
        %v1963 = vpop.trf.xlu0
        %v1964 = vpop.trf.xlu0
        %v1965 = vpop.trf.xlu0
        %1966 = vxpose.xlu0.c.b16.start [1/8] %v1868, 128
        %1967 = vxpose.xlu0.c.b16.cont [2/8] 0, 128
        %1968 = vxpose.xlu0.c.b16.cont [3/8] 0, 128
        %1969 = vxpose.xlu0.c.b16.cont [4/8] 0, 128
        %1970 = vxpose.xlu0.c.b16.cont [5/8] 0, 128
        %1971 = vxpose.xlu0.c.b16.cont [6/8] 0, 128
        %1972 = vxpose.xlu0.c.b16.cont [7/8] 0, 128
        %1973 = vxpose.xlu0.c.b16.end [8/8] 0, 128
        %v1974 = vpop.trf.xlu0
        %v1975 = vpop.trf.xlu0
        %v1976 = vpop.trf.xlu0
        %v1977 = vpop.trf.xlu0
        %v1978 = vpop.trf.xlu0
        %v1979 = vpop.trf.xlu0
        %v1980 = vpop.trf.xlu0
        %v1981 = vpop.trf.xlu0
        %1982 = vxpose.xlu0.c.b16.start [1/8] %v1872, 128
        %1983 = vxpose.xlu0.c.b16.cont [2/8] 0, 128
        %1984 = vxpose.xlu0.c.b16.cont [3/8] 0, 128
        %1985 = vxpose.xlu0.c.b16.cont [4/8] 0, 128
        %1986 = vxpose.xlu0.c.b16.cont [5/8] 0, 128
        %1987 = vxpose.xlu0.c.b16.cont [6/8] 0, 128
        %1988 = vxpose.xlu0.c.b16.cont [7/8] 0, 128
        %1989 = vxpose.xlu0.c.b16.end [8/8] 0, 128
        %v1990 = vpop.trf.xlu0
        %v1991 = vpop.trf.xlu0
        %v1992 = vpop.trf.xlu0
        %v1993 = vpop.trf.xlu0
        %v1994 = vpop.trf.xlu0
        %v1995 = vpop.trf.xlu0
        %v1996 = vpop.trf.xlu0
        %v1997 = vpop.trf.xlu0
        %1998 = vxpose.xlu0.c.b16.start [1/8] %v1876, 128
        %1999 = vxpose.xlu0.c.b16.cont [2/8] 0, 128
        %2000 = vxpose.xlu0.c.b16.cont [3/8] 0, 128
        %2001 = vxpose.xlu0.c.b16.cont [4/8] 0, 128
        %2002 = vxpose.xlu0.c.b16.cont [5/8] 0, 128
        %2003 = vxpose.xlu0.c.b16.cont [6/8] 0, 128
        %2004 = vxpose.xlu0.c.b16.cont [7/8] 0, 128
        %2005 = vxpose.xlu0.c.b16.end [8/8] 0, 128
        %v2006 = vpop.trf.xlu0
        %v2007 = vpop.trf.xlu0
        %v2008 = vpop.trf.xlu0
        %v2009 = vpop.trf.xlu0
        %v2010 = vpop.trf.xlu0
        %v2011 = vpop.trf.xlu0
        %v2012 = vpop.trf.xlu0
        %v2013 = vpop.trf.xlu0
        %2014 = vxpose.xlu0.c.b16.start [1/8] %v1880, 128
        %2015 = vxpose.xlu0.c.b16.cont [2/8] 0, 128
        %2016 = vxpose.xlu0.c.b16.cont [3/8] 0, 128
        %2017 = vxpose.xlu0.c.b16.cont [4/8] 0, 128
        %2018 = vxpose.xlu0.c.b16.cont [5/8] 0, 128
        %2019 = vxpose.xlu0.c.b16.cont [6/8] 0, 128
        %2020 = vxpose.xlu0.c.b16.cont [7/8] 0, 128
        %2021 = vxpose.xlu0.c.b16.end [8/8] 0, 128
        %v2022 = vpop.trf.xlu0
        %v2023 = vpop.trf.xlu0
        %v2024 = vpop.trf.xlu0
        %v2025 = vpop.trf.xlu0
        %v2026 = vpop.trf.xlu0
        %v2027 = vpop.trf.xlu0
        %v2028 = vpop.trf.xlu0
        %v2029 = vpop.trf.xlu0
        %2030 = vxpose.xlu0.c.b16.start [1/8] %v1884, 128
        %2031 = vxpose.xlu0.c.b16.cont [2/8] 0, 128
        %2032 = vxpose.xlu0.c.b16.cont [3/8] 0, 128
        %2033 = vxpose.xlu0.c.b16.cont [4/8] 0, 128
        %2034 = vxpose.xlu0.c.b16.cont [5/8] 0, 128
        %2035 = vxpose.xlu0.c.b16.cont [6/8] 0, 128
        %2036 = vxpose.xlu0.c.b16.cont [7/8] 0, 128
        %2037 = vxpose.xlu0.c.b16.end [8/8] 0, 128
        %v2038 = vpop.trf.xlu0
        %v2039 = vpop.trf.xlu0
        %v2040 = vpop.trf.xlu0
        %v2041 = vpop.trf.xlu0
        %v2042 = vpop.trf.xlu0
        %v2043 = vpop.trf.xlu0
        %v2044 = vpop.trf.xlu0
        %v2045 = vpop.trf.xlu0
        %2046 = vxpose.xlu0.c.b16.start [1/8] %v1888, 128
        %2047 = vxpose.xlu0.c.b16.cont [2/8] 0, 128
        %2048 = vxpose.xlu0.c.b16.cont [3/8] 0, 128
        %2049 = vxpose.xlu0.c.b16.cont [4/8] 0, 128
        %2050 = vxpose.xlu0.c.b16.cont [5/8] 0, 128
        %2051 = vxpose.xlu0.c.b16.cont [6/8] 0, 128
        %2052 = vxpose.xlu0.c.b16.cont [7/8] 0, 128
        %2053 = vxpose.xlu0.c.b16.end [8/8] 0, 128
        %v2054 = vpop.trf.xlu0
        %v2055 = vpop.trf.xlu0
        %v2056 = vpop.trf.xlu0
        %v2057 = vpop.trf.xlu0
        %v2058 = vpop.trf.xlu0
        %v2059 = vpop.trf.xlu0
        %v2060 = vpop.trf.xlu0
        %v2061 = vpop.trf.xlu0
        %2062 = vxpose.xlu0.c.b16.start [1/8] %v1892, 128
        %2063 = vxpose.xlu0.c.b16.cont [2/8] 0, 128
        %2064 = vxpose.xlu0.c.b16.cont [3/8] 0, 128
        %2065 = vxpose.xlu0.c.b16.cont [4/8] 0, 128
        %2066 = vxpose.xlu0.c.b16.cont [5/8] 0, 128
        %2067 = vxpose.xlu0.c.b16.cont [6/8] 0, 128
        %2068 = vxpose.xlu0.c.b16.cont [7/8] 0, 128
        %2069 = vxpose.xlu0.c.b16.end [8/8] 0, 128
        %v2070 = vpop.trf.xlu0
        %v2071 = vpop.trf.xlu0
        %v2072 = vpop.trf.xlu0
        %v2073 = vpop.trf.xlu0
        %v2074 = vpop.trf.xlu0
        %v2075 = vpop.trf.xlu0
        %v2076 = vpop.trf.xlu0
        %v2077 = vpop.trf.xlu0
        %2078 = vxpose.xlu0.c.b16.start [1/8] %v1896, 128
        %2079 = vxpose.xlu0.c.b16.cont [2/8] 0, 128
        %2080 = vxpose.xlu0.c.b16.cont [3/8] 0, 128
        %2081 = vxpose.xlu0.c.b16.cont [4/8] 0, 128
        %2082 = vxpose.xlu0.c.b16.cont [5/8] 0, 128
        %2083 = vxpose.xlu0.c.b16.cont [6/8] 0, 128
        %2084 = vxpose.xlu0.c.b16.cont [7/8] 0, 128
        %2085 = vxpose.xlu0.c.b16.end [8/8] 0, 128
        %v2086 = vpop.trf.xlu0
        %v2087 = vpop.trf.xlu0
        %v2088 = vpop.trf.xlu0
        %v2089 = vpop.trf.xlu0
        %v2090 = vpop.trf.xlu0
        %v2091 = vpop.trf.xlu0
        %v2092 = vpop.trf.xlu0
        %v2093 = vpop.trf.xlu0
        %2094 = vxpose.xlu0.c.b16.start [1/8] %v1900, 128
        %2095 = vxpose.xlu0.c.b16.cont [2/8] 0, 128
        %2096 = vxpose.xlu0.c.b16.cont [3/8] 0, 128
        %2097 = vxpose.xlu0.c.b16.cont [4/8] 0, 128
        %2098 = vxpose.xlu0.c.b16.cont [5/8] 0, 128
        %2099 = vxpose.xlu0.c.b16.cont [6/8] 0, 128
        %2100 = vxpose.xlu0.c.b16.cont [7/8] 0, 128
        %2101 = vxpose.xlu0.c.b16.end [8/8] 0, 128
        %v2102 = vpop.trf.xlu0
        %v2103 = vpop.trf.xlu0
        %v2104 = vpop.trf.xlu0
        %v2105 = vpop.trf.xlu0
        %v2106 = vpop.trf.xlu0
        %v2107 = vpop.trf.xlu0
        %v2108 = vpop.trf.xlu0
        %v2109 = vpop.trf.xlu0
        %2110 = vxpose.xlu0.c.b16.start [1/8] %v1904, 128
        %2111 = vxpose.xlu0.c.b16.cont [2/8] 0, 128
        %2112 = vxpose.xlu0.c.b16.cont [3/8] 0, 128
        %2113 = vxpose.xlu0.c.b16.cont [4/8] 0, 128
        %2114 = vxpose.xlu0.c.b16.cont [5/8] 0, 128
        %2115 = vxpose.xlu0.c.b16.cont [6/8] 0, 128
        %2116 = vxpose.xlu0.c.b16.cont [7/8] 0, 128
        %2117 = vxpose.xlu0.c.b16.end [8/8] 0, 128
        %v2118 = vpop.trf.xlu0
        %v2119 = vpop.trf.xlu0
        %v2120 = vpop.trf.xlu0
        %v2121 = vpop.trf.xlu0
        %v2122 = vpop.trf.xlu0
        %v2123 = vpop.trf.xlu0
        %v2124 = vpop.trf.xlu0
        %v2125 = vpop.trf.xlu0
        %2126 = vxpose.xlu0.c.b16.start [1/8] %v1908, 128
        %2127 = vxpose.xlu0.c.b16.cont [2/8] 0, 128
        %2128 = vxpose.xlu0.c.b16.cont [3/8] 0, 128
        %2129 = vxpose.xlu0.c.b16.cont [4/8] 0, 128
        %2130 = vxpose.xlu0.c.b16.cont [5/8] 0, 128
        %2131 = vxpose.xlu0.c.b16.cont [6/8] 0, 128
        %2132 = vxpose.xlu0.c.b16.cont [7/8] 0, 128
        %2133 = vxpose.xlu0.c.b16.end [8/8] 0, 128
        %v2134 = vpop.trf.xlu0
        %v2135 = vpop.trf.xlu0
        %v2136 = vpop.trf.xlu0
        %v2137 = vpop.trf.xlu0
        %v2138 = vpop.trf.xlu0
        %v2139 = vpop.trf.xlu0
        %v2140 = vpop.trf.xlu0
        %v2141 = vpop.trf.xlu0
        %2142 = vxpose.xlu0.c.b16.start [1/8] %v1912, 128
        %2143 = vxpose.xlu0.c.b16.cont [2/8] 0, 128
        %2144 = vxpose.xlu0.c.b16.cont [3/8] 0, 128
        %2145 = vxpose.xlu0.c.b16.cont [4/8] 0, 128
        %2146 = vxpose.xlu0.c.b16.cont [5/8] 0, 128
        %2147 = vxpose.xlu0.c.b16.cont [6/8] 0, 128
        %2148 = vxpose.xlu0.c.b16.cont [7/8] 0, 128
        %2149 = vxpose.xlu0.c.b16.end [8/8] 0, 128
        %v2150 = vpop.trf.xlu0
        %v2151 = vpop.trf.xlu0
        %v2152 = vpop.trf.xlu0
        %v2153 = vpop.trf.xlu0
        %v2154 = vpop.trf.xlu0
        %v2155 = vpop.trf.xlu0
        %v2156 = vpop.trf.xlu0
        %v2157 = vpop.trf.xlu0
        %2158 = vxpose.xlu0.c.b16.start [1/8] %v1916, 128
        %2159 = vxpose.xlu0.c.b16.cont [2/8] 0, 128
        %2160 = vxpose.xlu0.c.b16.cont [3/8] 0, 128
        %2161 = vxpose.xlu0.c.b16.cont [4/8] 0, 128
        %2162 = vxpose.xlu0.c.b16.cont [5/8] 0, 128
        %2163 = vxpose.xlu0.c.b16.cont [6/8] 0, 128
        %2164 = vxpose.xlu0.c.b16.cont [7/8] 0, 128
        %2165 = vxpose.xlu0.c.b16.end [8/8] 0, 128
        %v2166 = vpop.trf.xlu0
        %v2167 = vpop.trf.xlu0
        %v2168 = vpop.trf.xlu0
        %v2169 = vpop.trf.xlu0
        %v2170 = vpop.trf.xlu0
        %v2171 = vpop.trf.xlu0
        %v2172 = vpop.trf.xlu0
        %v2173 = vpop.trf.xlu0
        %v2174 = vrot.slane %v1990, 4
        %v2175 = vsel %vm1270, %v2174, %v1926
        %v2177 = vunpack.c.l.s4 1983009808
        %v2178 = vunpack.c.0.s8 %v2177
        %v2179 = vperm.slane %v2175, %v2178
        %v2180 = vrot.slane %v2022, 4
        %v2181 = vsel %vm1270, %v2180, %v1958
        %v2183 = vunpack.c.l.s4 1983009808
        %v2184 = vunpack.c.0.s8 %v2183
        %v2185 = vperm.slane %v2181, %v2184
        %v2186 = vrot.slane %v2118, 4
        %v2187 = vsel %vm1270, %v2186, %v2054
        %v2189 = vunpack.c.l.s4 1983009808
        %v2190 = vunpack.c.0.s8 %v2189
        %v2191 = vperm.slane %v2187, %v2190
        %v2192 = vrot.slane %v2150, 4
        %v2193 = vsel %vm1270, %v2192, %v2086
        %v2195 = vunpack.c.l.s4 1983009808
        %v2196 = vunpack.c.0.s8 %v2195
        %v2197 = vperm.slane %v2193, %v2196
        %v2198 = vrot.slane %v2185, 4
        %v2199 = vsel %vm1270, %v2198, %v2179
        %v2201 = vunpack.c.l.s4 1934713408
        %v2202 = vunpack.c.0.s8 %v2201
        %v2203 = vperm.slane %v2199, %v2202
        %v2204 = vrot.slane %v2197, 4
        %v2205 = vsel %vm1270, %v2204, %v2191
        %v2207 = vunpack.c.l.s4 1934713408
        %v2208 = vunpack.c.0.s8 %v2207
        %v2209 = vperm.slane %v2205, %v2208
        %v2210 = vrot.slane %v2209, 4
        %v2211 = vsel %vm1270, %v2210, %v2203
        %v2212 = vrot.slane %v2203, 4
        %v2213 = vsel %vm1270, %v2209, %v2212
        %v2214 = vrot.slane %v2006, 4
        %v2215 = vsel %vm1270, %v2214, %v1942
        %v2217 = vunpack.c.l.s4 1983009808
        %v2218 = vunpack.c.0.s8 %v2217
        %v2219 = vperm.slane %v2215, %v2218
        %v2220 = vrot.slane %v2038, 4
        %v2221 = vsel %vm1270, %v2220, %v1974
        %v2223 = vunpack.c.l.s4 1983009808
        %v2224 = vunpack.c.0.s8 %v2223
        %v2225 = vperm.slane %v2221, %v2224
        %v2226 = vrot.slane %v2134, 4
        %v2227 = vsel %vm1270, %v2226, %v2070
        %v2229 = vunpack.c.l.s4 1983009808
        %v2230 = vunpack.c.0.s8 %v2229
        %v2231 = vperm.slane %v2227, %v2230
        %v2232 = vrot.slane %v2166, 4
        %v2233 = vsel %vm1270, %v2232, %v2102
        %v2235 = vunpack.c.l.s4 1983009808
        %v2236 = vunpack.c.0.s8 %v2235
        %v2237 = vperm.slane %v2233, %v2236
        %v2238 = vrot.slane %v2225, 4
        %v2239 = vsel %vm1270, %v2238, %v2219
        %v2241 = vunpack.c.l.s4 1934713408
        %v2242 = vunpack.c.0.s8 %v2241
        %v2243 = vperm.slane %v2239, %v2242
        %v2244 = vrot.slane %v2237, 4
        %v2245 = vsel %vm1270, %v2244, %v2231
        %v2247 = vunpack.c.l.s4 1934713408
        %v2248 = vunpack.c.0.s8 %v2247
        %v2249 = vperm.slane %v2245, %v2248
        %v2250 = vrot.slane %v2249, 4
        %v2251 = vsel %vm1270, %v2250, %v2243
        %v2252 = vrot.slane %v2243, 4
        %v2253 = vsel %vm1270, %v2249, %v2252
        %v2256 = vpack.i.b16 %v2251, %v2211
        %v2258 = vshrl.u32 %v2211, 16
        %v2259 = vshrl.u32 %v2251, 16
        %v2260 = vpack.i.b16 %v2259, %v2258
        %v2264 = vpack.i.b16 %v2253, %v2213
        %v2266 = vshrl.u32 %v2213, 16
        %v2267 = vshrl.u32 %v2253, 16
        %v2268 = vpack.i.b16 %v2267, %v2266
        %v2270 = vunpack.c.l.b16 %v1352
        %v2271 = vunpack.c.l.b16 %v1364
        %v2272 = vpack.c.b16 %v2271, %v2270
        %vm2273 = vcmask 130048
        %v2275 = vsel %vm2273, %v2272, 0
        %2277 = vmatpush.bf16.msra.mxu0 0
        %2278 = vmatpush.bf16.msra.mxu0 0
        %2279 = vmatpush.bf16.msra.mxu0 0
        %2280 = vmatpush.bf16.msra.mxu0 0
        %2281 = vmatpush.bf16.msra.mxu0 0
        %2282 = vmatpush.bf16.msra.mxu0 0
        %2283 = vmatpush.bf16.msra.mxu0 0
        %2284 = vmatpush.bf16.msra.mxu0 %v2256
        %2285 = vmatmul.bf16.gmra.mxu0 %v2275
        %v2286 = vpop.f32.mrf.mxu0
        %v2287 = vadd.f32 0.0, %v2286
        %v2288 = vpop.f32.mrf.mxu0
        %v2289 = vadd.f32 0.0, %v2288
        %2290 = vdwg.mxu0
        %v2291 = vunpack.c.l.b16 %v1355
        %v2292 = vunpack.c.l.b16 %v1367
        %v2293 = vpack.c.b16 %v2292, %v2291
        %v2295 = vsel %vm2273, %v2293, 0
        %2297 = vmatpush.bf16.msra.mxu0 0
        %2298 = vmatpush.bf16.msra.mxu0 0
        %2299 = vmatpush.bf16.msra.mxu0 0
        %2300 = vmatpush.bf16.msra.mxu0 0
        %2301 = vmatpush.bf16.msra.mxu0 0
        %2302 = vmatpush.bf16.msra.mxu0 0
        %2303 = vmatpush.bf16.msra.mxu0 0
        %2304 = vmatpush.bf16.msra.mxu0 %v2260
        %2305 = vmatmul.bf16.gmra.mxu0 %v2295
        %v2306 = vpop.f32.mrf.mxu0
        %v2307 = vadd.f32 0.0, %v2306
        %v2308 = vpop.f32.mrf.mxu0
        %v2309 = vadd.f32 0.0, %v2308
        %2310 = vdwg.mxu0
        %v2311 = vunpack.c.l.b16 %v1358
        %v2312 = vunpack.c.l.b16 %v1370
        %v2313 = vpack.c.b16 %v2312, %v2311
        %v2315 = vsel %vm2273, %v2313, 0
        %2317 = vmatpush.bf16.msra.mxu0 0
        %2318 = vmatpush.bf16.msra.mxu0 0
        %2319 = vmatpush.bf16.msra.mxu0 0
        %2320 = vmatpush.bf16.msra.mxu0 0
        %2321 = vmatpush.bf16.msra.mxu0 0
        %2322 = vmatpush.bf16.msra.mxu0 0
        %2323 = vmatpush.bf16.msra.mxu0 0
        %2324 = vmatpush.bf16.msra.mxu0 %v2264
        %2325 = vmatmul.bf16.gmra.mxu0 %v2315
        %v2326 = vpop.f32.mrf.mxu0
        %v2327 = vadd.f32 0.0, %v2326
        %v2328 = vpop.f32.mrf.mxu0
        %v2329 = vadd.f32 0.0, %v2328
        %2330 = vdwg.mxu0
        %v2331 = vunpack.c.l.b16 %v1361
        %v2332 = vunpack.c.l.b16 %v1373
        %v2333 = vpack.c.b16 %v2332, %v2331
        %v2335 = vsel %vm2273, %v2333, 0
        %2337 = vmatpush.bf16.msra.mxu0 0
        %2338 = vmatpush.bf16.msra.mxu0 0
        %2339 = vmatpush.bf16.msra.mxu0 0
        %2340 = vmatpush.bf16.msra.mxu0 0
        %2341 = vmatpush.bf16.msra.mxu0 0
        %2342 = vmatpush.bf16.msra.mxu0 0
        %2343 = vmatpush.bf16.msra.mxu0 0
        %2344 = vmatpush.bf16.msra.mxu0 %v2268
        %2345 = vmatmul.bf16.gmra.mxu0 %v2335
        %v2346 = vpop.f32.mrf.mxu0
        %v2347 = vadd.f32 0.0, %v2346
        %v2348 = vpop.f32.mrf.mxu0
        %v2349 = vadd.f32 0.0, %v2348
        %2350 = vdwg.mxu0
        %v2351 = vsel %vm2273, %v2287, -inf
        %2352 = vmax.xlane.f32.xlu0 %v2351
        %v2353 = vpop.xlane.xlu0 %2352
        %v2354 = vsel %vm2273, %v2289, -inf
        %2355 = vmax.xlane.f32.xlu0 %v2354
        %v2356 = vpop.xlane.xlu0 %2355
        %v2357 = vsel %vm2273, %v2307, -inf
        %2358 = vmax.xlane.f32.xlu0 %v2357
        %v2359 = vpop.xlane.xlu0 %2358
        %v2360 = vsel %vm2273, %v2309, -inf
        %2361 = vmax.xlane.f32.xlu0 %v2360
        %v2362 = vpop.xlane.xlu0 %2361
        %v2363 = vsel %vm2273, %v2327, -inf
        %2364 = vmax.xlane.f32.xlu0 %v2363
        %v2365 = vpop.xlane.xlu0 %2364
        %v2366 = vsel %vm2273, %v2329, -inf
        %2367 = vmax.xlane.f32.xlu0 %v2366
        %v2368 = vpop.xlane.xlu0 %2367
        %v2369 = vsel %vm2273, %v2347, -inf
        %2370 = vmax.xlane.f32.xlu0 %v2369
        %v2371 = vpop.xlane.xlu0 %2370
        %v2372 = vsel %vm2273, %v2349, -inf
        %2373 = vmax.xlane.f32.xlu0 %v2372
        %v2374 = vpop.xlane.xlu0 %2373
        %v2375 = vsub.f32 %v2287, %v2353
        %v2376 = vsub.f32 %v2289, %v2356
        %v2377 = vsub.f32 %v2307, %v2359
        %v2378 = vsub.f32 %v2309, %v2362
        %v2379 = vsub.f32 %v2327, %v2365
        %v2380 = vsub.f32 %v2329, %v2368
        %v2381 = vsub.f32 %v2347, %v2371
        %v2382 = vsub.f32 %v2349, %v2374
        %v2383 = vmul.f32 %v2375, 1.442695
        %v2384 = vpow.pop %v2383
        %v2385 = vmul.f32 %v2376, 1.442695
        %v2386 = vpow.pop %v2385
        %v2387 = vmul.f32 %v2377, 1.442695
        %v2388 = vpow.pop %v2387
        %v2389 = vmul.f32 %v2378, 1.442695
        %v2390 = vpow.pop %v2389
        %v2391 = vmul.f32 %v2379, 1.442695
        %v2392 = vpow.pop %v2391
        %v2393 = vmul.f32 %v2380, 1.442695
        %v2394 = vpow.pop %v2393
        %v2395 = vmul.f32 %v2381, 1.442695
        %v2396 = vpow.pop %v2395
        %v2397 = vmul.f32 %v2382, 1.442695
        %v2398 = vpow.pop %v2397
        %v2399 = vsel %vm2273, %v2384, 0.0
        %2400 = vadd.xlane.f32.xlu0 %v2399
        %v2401 = vpop.xlane.xlu0 %2400
        %v2402 = vsel %vm2273, %v2386, 0.0
        %2403 = vadd.xlane.f32.xlu0 %v2402
        %v2404 = vpop.xlane.xlu0 %2403
        %v2405 = vsel %vm2273, %v2388, 0.0
        %2406 = vadd.xlane.f32.xlu0 %v2405
        %v2407 = vpop.xlane.xlu0 %2406
        %v2408 = vsel %vm2273, %v2390, 0.0
        %2409 = vadd.xlane.f32.xlu0 %v2408
        %v2410 = vpop.xlane.xlu0 %2409
        %v2411 = vsel %vm2273, %v2392, 0.0
        %2412 = vadd.xlane.f32.xlu0 %v2411
        %v2413 = vpop.xlane.xlu0 %2412
        %v2414 = vsel %vm2273, %v2394, 0.0
        %2415 = vadd.xlane.f32.xlu0 %v2414
        %v2416 = vpop.xlane.xlu0 %2415
        %v2417 = vsel %vm2273, %v2396, 0.0
        %2418 = vadd.xlane.f32.xlu0 %v2417
        %v2419 = vpop.xlane.xlu0 %2418
        %v2420 = vsel %vm2273, %v2398, 0.0
        %2421 = vadd.xlane.f32.xlu0 %v2420
        %v2422 = vpop.xlane.xlu0 %2421
        %v2423 = vrcp.pop %v2401
        %v2424 = vmul.f32 %v2401, %v2423
        %v2425 = vsub.f32 1.0, %v2424
        %v2426 = vmul.f32 %v2423, %v2425
        %v2427 = vadd.f32 %v2423, %v2426
        %vm2428 = vweird.f32 %v2401
        %vm2429 = vweird.f32 %v2423
        %vm2430 = vmor %vm2428, %vm2429
        %v2431 = vsel %vm2430, %v2423, %v2427
        %v2432 = vand.u32 2147483647, %v2401
        %vm2433 = vcmp.eq.f32.partialorder %v2432, 8.507059e+37
        %v2434 = vand.u32 %v2401, 2147483648
        %v2435 = vor.u32 1.1754944e-38, %v2434
        %v2436 = vsel %vm2433, %v2435, %v2431
        %v2437 = vmul.f32 %v2384, %v2436
        %v2438 = vrcp.pop %v2404
        %v2439 = vmul.f32 %v2404, %v2438
        %v2440 = vsub.f32 1.0, %v2439
        %v2441 = vmul.f32 %v2438, %v2440
        %v2442 = vadd.f32 %v2438, %v2441
        %vm2443 = vweird.f32 %v2404
        %vm2444 = vweird.f32 %v2438
        %vm2445 = vmor %vm2443, %vm2444
        %v2446 = vsel %vm2445, %v2438, %v2442
        %v2447 = vand.u32 2147483647, %v2404
        %vm2448 = vcmp.eq.f32.partialorder %v2447, 8.507059e+37
        %v2449 = vand.u32 %v2404, 2147483648
        %v2450 = vor.u32 1.1754944e-38, %v2449
        %v2451 = vsel %vm2448, %v2450, %v2446
        %v2452 = vmul.f32 %v2386, %v2451
        %v2453 = vrcp.pop %v2407
        %v2454 = vmul.f32 %v2407, %v2453
        %v2455 = vsub.f32 1.0, %v2454
        %v2456 = vmul.f32 %v2453, %v2455
        %v2457 = vadd.f32 %v2453, %v2456
        %vm2458 = vweird.f32 %v2407
        %vm2459 = vweird.f32 %v2453
        %vm2460 = vmor %vm2458, %vm2459
        %v2461 = vsel %vm2460, %v2453, %v2457
        %v2462 = vand.u32 2147483647, %v2407
        %vm2463 = vcmp.eq.f32.partialorder %v2462, 8.507059e+37
        %v2464 = vand.u32 %v2407, 2147483648
        %v2465 = vor.u32 1.1754944e-38, %v2464
        %v2466 = vsel %vm2463, %v2465, %v2461
        %v2467 = vmul.f32 %v2388, %v2466
        %v2468 = vrcp.pop %v2410
        %v2469 = vmul.f32 %v2410, %v2468
        %v2470 = vsub.f32 1.0, %v2469
        %v2471 = vmul.f32 %v2468, %v2470
        %v2472 = vadd.f32 %v2468, %v2471
        %vm2473 = vweird.f32 %v2410
        %vm2474 = vweird.f32 %v2468
        %vm2475 = vmor %vm2473, %vm2474
        %v2476 = vsel %vm2475, %v2468, %v2472
        %v2477 = vand.u32 2147483647, %v2410
        %vm2478 = vcmp.eq.f32.partialorder %v2477, 8.507059e+37
        %v2479 = vand.u32 %v2410, 2147483648
        %v2480 = vor.u32 1.1754944e-38, %v2479
        %v2481 = vsel %vm2478, %v2480, %v2476
        %v2482 = vmul.f32 %v2390, %v2481
        %v2483 = vrcp.pop %v2413
        %v2484 = vmul.f32 %v2413, %v2483
        %v2485 = vsub.f32 1.0, %v2484
        %v2486 = vmul.f32 %v2483, %v2485
        %v2487 = vadd.f32 %v2483, %v2486
        %vm2488 = vweird.f32 %v2413
        %vm2489 = vweird.f32 %v2483
        %vm2490 = vmor %vm2488, %vm2489
        %v2491 = vsel %vm2490, %v2483, %v2487
        %v2492 = vand.u32 2147483647, %v2413
        %vm2493 = vcmp.eq.f32.partialorder %v2492, 8.507059e+37
        %v2494 = vand.u32 %v2413, 2147483648
        %v2495 = vor.u32 1.1754944e-38, %v2494
        %v2496 = vsel %vm2493, %v2495, %v2491
        %v2497 = vmul.f32 %v2392, %v2496
        %v2498 = vrcp.pop %v2416
        %v2499 = vmul.f32 %v2416, %v2498
        %v2500 = vsub.f32 1.0, %v2499
        %v2501 = vmul.f32 %v2498, %v2500
        %v2502 = vadd.f32 %v2498, %v2501
        %vm2503 = vweird.f32 %v2416
        %vm2504 = vweird.f32 %v2498
        %vm2505 = vmor %vm2503, %vm2504
        %v2506 = vsel %vm2505, %v2498, %v2502
        %v2507 = vand.u32 2147483647, %v2416
        %vm2508 = vcmp.eq.f32.partialorder %v2507, 8.507059e+37
        %v2509 = vand.u32 %v2416, 2147483648
        %v2510 = vor.u32 1.1754944e-38, %v2509
        %v2511 = vsel %vm2508, %v2510, %v2506
        %v2512 = vmul.f32 %v2394, %v2511
        %v2513 = vrcp.pop %v2419
        %v2514 = vmul.f32 %v2419, %v2513
        %v2515 = vsub.f32 1.0, %v2514
        %v2516 = vmul.f32 %v2513, %v2515
        %v2517 = vadd.f32 %v2513, %v2516
        %vm2518 = vweird.f32 %v2419
        %vm2519 = vweird.f32 %v2513
        %vm2520 = vmor %vm2518, %vm2519
        %v2521 = vsel %vm2520, %v2513, %v2517
        %v2522 = vand.u32 2147483647, %v2419
        %vm2523 = vcmp.eq.f32.partialorder %v2522, 8.507059e+37
        %v2524 = vand.u32 %v2419, 2147483648
        %v2525 = vor.u32 1.1754944e-38, %v2524
        %v2526 = vsel %vm2523, %v2525, %v2521
        %v2527 = vmul.f32 %v2396, %v2526
        %v2528 = vrcp.pop %v2422
        %v2529 = vmul.f32 %v2422, %v2528
        %v2530 = vsub.f32 1.0, %v2529
        %v2531 = vmul.f32 %v2528, %v2530
        %v2532 = vadd.f32 %v2528, %v2531
        %vm2533 = vweird.f32 %v2422
        %vm2534 = vweird.f32 %v2528
        %vm2535 = vmor %vm2533, %vm2534
        %v2536 = vsel %vm2535, %v2528, %v2532
        %v2537 = vand.u32 2147483647, %v2422
        %vm2538 = vcmp.eq.f32.partialorder %v2537, 8.507059e+37
        %v2539 = vand.u32 %v2422, 2147483648
        %v2540 = vor.u32 1.1754944e-38, %v2539
        %v2541 = vsel %vm2538, %v2540, %v2536
        %v2542 = vmul.f32 %v2398, %v2541
        %v2543 = vpack.c.bf16 %v2437, %v2437
        %v2544 = vpack.c.bf16 %v2452, %v2452
        %v2545 = vpack.c.bf16 %v2467, %v2467
        %v2546 = vpack.c.bf16 %v2482, %v2482
        %v2547 = vpack.c.bf16 %v2497, %v2497
        %v2548 = vpack.c.bf16 %v2512, %v2512
        %v2549 = vpack.c.bf16 %v2527, %v2527
        %v2550 = vpack.c.bf16 %v2542, %v2542
        %2551 = vxpose.xlu0.c.b16.start [1/8] %v1119, 128
        %2552 = vxpose.xlu0.c.b16.cont [2/8] 0, 128
        %2553 = vxpose.xlu0.c.b16.cont [3/8] 0, 128
        %2554 = vxpose.xlu0.c.b16.cont [4/8] 0, 128
        %2555 = vxpose.xlu0.c.b16.cont [5/8] 0, 128
        %2556 = vxpose.xlu0.c.b16.cont [6/8] 0, 128
        %2557 = vxpose.xlu0.c.b16.cont [7/8] 0, 128
        %2558 = vxpose.xlu0.c.b16.end [8/8] 0, 128
        %v2559 = vpop.trf.xlu0
        %v2560 = vpop.trf.xlu0
        %v2561 = vpop.trf.xlu0
        %v2562 = vpop.trf.xlu0
        %v2563 = vpop.trf.xlu0
        %v2564 = vpop.trf.xlu0
        %v2565 = vpop.trf.xlu0
        %v2566 = vpop.trf.xlu0
        %2567 = vxpose.xlu0.c.b16.start [1/8] %v1120, 128
        %2568 = vxpose.xlu0.c.b16.cont [2/8] 0, 128
        %2569 = vxpose.xlu0.c.b16.cont [3/8] 0, 128
        %2570 = vxpose.xlu0.c.b16.cont [4/8] 0, 128
        %2571 = vxpose.xlu0.c.b16.cont [5/8] 0, 128
        %2572 = vxpose.xlu0.c.b16.cont [6/8] 0, 128
        %2573 = vxpose.xlu0.c.b16.cont [7/8] 0, 128
        %2574 = vxpose.xlu0.c.b16.end [8/8] 0, 128
        %v2575 = vpop.trf.xlu0
        %v2576 = vpop.trf.xlu0
        %v2577 = vpop.trf.xlu0
        %v2578 = vpop.trf.xlu0
        %v2579 = vpop.trf.xlu0
        %v2580 = vpop.trf.xlu0
        %v2581 = vpop.trf.xlu0
        %v2582 = vpop.trf.xlu0
        %2583 = vxpose.xlu0.c.b16.start [1/8] %v1121, 128
        %2584 = vxpose.xlu0.c.b16.cont [2/8] 0, 128
        %2585 = vxpose.xlu0.c.b16.cont [3/8] 0, 128
        %2586 = vxpose.xlu0.c.b16.cont [4/8] 0, 128
        %2587 = vxpose.xlu0.c.b16.cont [5/8] 0, 128
        %2588 = vxpose.xlu0.c.b16.cont [6/8] 0, 128
        %2589 = vxpose.xlu0.c.b16.cont [7/8] 0, 128
        %2590 = vxpose.xlu0.c.b16.end [8/8] 0, 128
        %v2591 = vpop.trf.xlu0
        %v2592 = vpop.trf.xlu0
        %v2593 = vpop.trf.xlu0
        %v2594 = vpop.trf.xlu0
        %v2595 = vpop.trf.xlu0
        %v2596 = vpop.trf.xlu0
        %v2597 = vpop.trf.xlu0
        %v2598 = vpop.trf.xlu0
        %2599 = vxpose.xlu0.c.b16.start [1/8] %v1122, 128
        %2600 = vxpose.xlu0.c.b16.cont [2/8] 0, 128
        %2601 = vxpose.xlu0.c.b16.cont [3/8] 0, 128
        %2602 = vxpose.xlu0.c.b16.cont [4/8] 0, 128
        %2603 = vxpose.xlu0.c.b16.cont [5/8] 0, 128
        %2604 = vxpose.xlu0.c.b16.cont [6/8] 0, 128
        %2605 = vxpose.xlu0.c.b16.cont [7/8] 0, 128
        %2606 = vxpose.xlu0.c.b16.end [8/8] 0, 128
        %v2607 = vpop.trf.xlu0
        %v2608 = vpop.trf.xlu0
        %v2609 = vpop.trf.xlu0
        %v2610 = vpop.trf.xlu0
        %v2611 = vpop.trf.xlu0
        %v2612 = vpop.trf.xlu0
        %v2613 = vpop.trf.xlu0
        %v2614 = vpop.trf.xlu0
        %2615 = vxpose.xlu0.c.b16.start [1/8] %v1123, 128
        %2616 = vxpose.xlu0.c.b16.cont [2/8] 0, 128
        %2617 = vxpose.xlu0.c.b16.cont [3/8] 0, 128
        %2618 = vxpose.xlu0.c.b16.cont [4/8] 0, 128
        %2619 = vxpose.xlu0.c.b16.cont [5/8] 0, 128
        %2620 = vxpose.xlu0.c.b16.cont [6/8] 0, 128
        %2621 = vxpose.xlu0.c.b16.cont [7/8] 0, 128
        %2622 = vxpose.xlu0.c.b16.end [8/8] 0, 128
        %v2623 = vpop.trf.xlu0
        %v2624 = vpop.trf.xlu0
        %v2625 = vpop.trf.xlu0
        %v2626 = vpop.trf.xlu0
        %v2627 = vpop.trf.xlu0
        %v2628 = vpop.trf.xlu0
        %v2629 = vpop.trf.xlu0
        %v2630 = vpop.trf.xlu0
        %2631 = vxpose.xlu0.c.b16.start [1/8] %v1124, 128
        %2632 = vxpose.xlu0.c.b16.cont [2/8] 0, 128
        %2633 = vxpose.xlu0.c.b16.cont [3/8] 0, 128
        %2634 = vxpose.xlu0.c.b16.cont [4/8] 0, 128
        %2635 = vxpose.xlu0.c.b16.cont [5/8] 0, 128
        %2636 = vxpose.xlu0.c.b16.cont [6/8] 0, 128
        %2637 = vxpose.xlu0.c.b16.cont [7/8] 0, 128
        %2638 = vxpose.xlu0.c.b16.end [8/8] 0, 128
        %v2639 = vpop.trf.xlu0
        %v2640 = vpop.trf.xlu0
        %v2641 = vpop.trf.xlu0
        %v2642 = vpop.trf.xlu0
        %v2643 = vpop.trf.xlu0
        %v2644 = vpop.trf.xlu0
        %v2645 = vpop.trf.xlu0
        %v2646 = vpop.trf.xlu0
        %2647 = vxpose.xlu0.c.b16.start [1/8] %v1125, 128
        %2648 = vxpose.xlu0.c.b16.cont [2/8] 0, 128
        %2649 = vxpose.xlu0.c.b16.cont [3/8] 0, 128
        %2650 = vxpose.xlu0.c.b16.cont [4/8] 0, 128
        %2651 = vxpose.xlu0.c.b16.cont [5/8] 0, 128
        %2652 = vxpose.xlu0.c.b16.cont [6/8] 0, 128
        %2653 = vxpose.xlu0.c.b16.cont [7/8] 0, 128
        %2654 = vxpose.xlu0.c.b16.end [8/8] 0, 128
        %v2655 = vpop.trf.xlu0
        %v2656 = vpop.trf.xlu0
        %v2657 = vpop.trf.xlu0
        %v2658 = vpop.trf.xlu0
        %v2659 = vpop.trf.xlu0
        %v2660 = vpop.trf.xlu0
        %v2661 = vpop.trf.xlu0
        %v2662 = vpop.trf.xlu0
        %2663 = vxpose.xlu0.c.b16.start [1/8] %v1126, 128
        %2664 = vxpose.xlu0.c.b16.cont [2/8] 0, 128
        %2665 = vxpose.xlu0.c.b16.cont [3/8] 0, 128
        %2666 = vxpose.xlu0.c.b16.cont [4/8] 0, 128
        %2667 = vxpose.xlu0.c.b16.cont [5/8] 0, 128
        %2668 = vxpose.xlu0.c.b16.cont [6/8] 0, 128
        %2669 = vxpose.xlu0.c.b16.cont [7/8] 0, 128
        %2670 = vxpose.xlu0.c.b16.end [8/8] 0, 128
        %v2671 = vpop.trf.xlu0
        %v2672 = vpop.trf.xlu0
        %v2673 = vpop.trf.xlu0
        %v2674 = vpop.trf.xlu0
        %v2675 = vpop.trf.xlu0
        %v2676 = vpop.trf.xlu0
        %v2677 = vpop.trf.xlu0
        %v2678 = vpop.trf.xlu0
        %2679 = vxpose.xlu0.c.b16.start [1/8] %v1127, 128
        %2680 = vxpose.xlu0.c.b16.cont [2/8] 0, 128
        %2681 = vxpose.xlu0.c.b16.cont [3/8] 0, 128
        %2682 = vxpose.xlu0.c.b16.cont [4/8] 0, 128
        %2683 = vxpose.xlu0.c.b16.cont [5/8] 0, 128
        %2684 = vxpose.xlu0.c.b16.cont [6/8] 0, 128
        %2685 = vxpose.xlu0.c.b16.cont [7/8] 0, 128
        %2686 = vxpose.xlu0.c.b16.end [8/8] 0, 128
        %v2687 = vpop.trf.xlu0
        %v2688 = vpop.trf.xlu0
        %v2689 = vpop.trf.xlu0
        %v2690 = vpop.trf.xlu0
        %v2691 = vpop.trf.xlu0
        %v2692 = vpop.trf.xlu0
        %v2693 = vpop.trf.xlu0
        %v2694 = vpop.trf.xlu0
        %2695 = vxpose.xlu0.c.b16.start [1/8] %v1128, 128
        %2696 = vxpose.xlu0.c.b16.cont [2/8] 0, 128
        %2697 = vxpose.xlu0.c.b16.cont [3/8] 0, 128
        %2698 = vxpose.xlu0.c.b16.cont [4/8] 0, 128
        %2699 = vxpose.xlu0.c.b16.cont [5/8] 0, 128
        %2700 = vxpose.xlu0.c.b16.cont [6/8] 0, 128
        %2701 = vxpose.xlu0.c.b16.cont [7/8] 0, 128
        %2702 = vxpose.xlu0.c.b16.end [8/8] 0, 128
        %v2703 = vpop.trf.xlu0
        %v2704 = vpop.trf.xlu0
        %v2705 = vpop.trf.xlu0
        %v2706 = vpop.trf.xlu0
        %v2707 = vpop.trf.xlu0
        %v2708 = vpop.trf.xlu0
        %v2709 = vpop.trf.xlu0
        %v2710 = vpop.trf.xlu0
        %2711 = vxpose.xlu0.c.b16.start [1/8] %v1129, 128
        %2712 = vxpose.xlu0.c.b16.cont [2/8] 0, 128
        %2713 = vxpose.xlu0.c.b16.cont [3/8] 0, 128
        %2714 = vxpose.xlu0.c.b16.cont [4/8] 0, 128
        %2715 = vxpose.xlu0.c.b16.cont [5/8] 0, 128
        %2716 = vxpose.xlu0.c.b16.cont [6/8] 0, 128
        %2717 = vxpose.xlu0.c.b16.cont [7/8] 0, 128
        %2718 = vxpose.xlu0.c.b16.end [8/8] 0, 128
        %v2719 = vpop.trf.xlu0
        %v2720 = vpop.trf.xlu0
        %v2721 = vpop.trf.xlu0
        %v2722 = vpop.trf.xlu0
        %v2723 = vpop.trf.xlu0
        %v2724 = vpop.trf.xlu0
        %v2725 = vpop.trf.xlu0
        %v2726 = vpop.trf.xlu0
        %2727 = vxpose.xlu0.c.b16.start [1/8] %v1130, 128
        %2728 = vxpose.xlu0.c.b16.cont [2/8] 0, 128
        %2729 = vxpose.xlu0.c.b16.cont [3/8] 0, 128
        %2730 = vxpose.xlu0.c.b16.cont [4/8] 0, 128
        %2731 = vxpose.xlu0.c.b16.cont [5/8] 0, 128
        %2732 = vxpose.xlu0.c.b16.cont [6/8] 0, 128
        %2733 = vxpose.xlu0.c.b16.cont [7/8] 0, 128
        %2734 = vxpose.xlu0.c.b16.end [8/8] 0, 128
        %v2735 = vpop.trf.xlu0
        %v2736 = vpop.trf.xlu0
        %v2737 = vpop.trf.xlu0
        %v2738 = vpop.trf.xlu0
        %v2739 = vpop.trf.xlu0
        %v2740 = vpop.trf.xlu0
        %v2741 = vpop.trf.xlu0
        %v2742 = vpop.trf.xlu0
        %2743 = vxpose.xlu0.c.b16.start [1/8] %v1131, 128
        %2744 = vxpose.xlu0.c.b16.cont [2/8] 0, 128
        %2745 = vxpose.xlu0.c.b16.cont [3/8] 0, 128
        %2746 = vxpose.xlu0.c.b16.cont [4/8] 0, 128
        %2747 = vxpose.xlu0.c.b16.cont [5/8] 0, 128
        %2748 = vxpose.xlu0.c.b16.cont [6/8] 0, 128
        %2749 = vxpose.xlu0.c.b16.cont [7/8] 0, 128
        %2750 = vxpose.xlu0.c.b16.end [8/8] 0, 128
        %v2751 = vpop.trf.xlu0
        %v2752 = vpop.trf.xlu0
        %v2753 = vpop.trf.xlu0
        %v2754 = vpop.trf.xlu0
        %v2755 = vpop.trf.xlu0
        %v2756 = vpop.trf.xlu0
        %v2757 = vpop.trf.xlu0
        %v2758 = vpop.trf.xlu0
        %2759 = vxpose.xlu0.c.b16.start [1/8] %v1132, 128
        %2760 = vxpose.xlu0.c.b16.cont [2/8] 0, 128
        %2761 = vxpose.xlu0.c.b16.cont [3/8] 0, 128
        %2762 = vxpose.xlu0.c.b16.cont [4/8] 0, 128
        %2763 = vxpose.xlu0.c.b16.cont [5/8] 0, 128
        %2764 = vxpose.xlu0.c.b16.cont [6/8] 0, 128
        %2765 = vxpose.xlu0.c.b16.cont [7/8] 0, 128
        %2766 = vxpose.xlu0.c.b16.end [8/8] 0, 128
        %v2767 = vpop.trf.xlu0
        %v2768 = vpop.trf.xlu0
        %v2769 = vpop.trf.xlu0
        %v2770 = vpop.trf.xlu0
        %v2771 = vpop.trf.xlu0
        %v2772 = vpop.trf.xlu0
        %v2773 = vpop.trf.xlu0
        %v2774 = vpop.trf.xlu0
        %2775 = vxpose.xlu0.c.b16.start [1/8] %v1133, 128
        %2776 = vxpose.xlu0.c.b16.cont [2/8] 0, 128
        %2777 = vxpose.xlu0.c.b16.cont [3/8] 0, 128
        %2778 = vxpose.xlu0.c.b16.cont [4/8] 0, 128
        %2779 = vxpose.xlu0.c.b16.cont [5/8] 0, 128
        %2780 = vxpose.xlu0.c.b16.cont [6/8] 0, 128
        %2781 = vxpose.xlu0.c.b16.cont [7/8] 0, 128
        %2782 = vxpose.xlu0.c.b16.end [8/8] 0, 128
        %v2783 = vpop.trf.xlu0
        %v2784 = vpop.trf.xlu0
        %v2785 = vpop.trf.xlu0
        %v2786 = vpop.trf.xlu0
        %v2787 = vpop.trf.xlu0
        %v2788 = vpop.trf.xlu0
        %v2789 = vpop.trf.xlu0
        %v2790 = vpop.trf.xlu0
        %2791 = vxpose.xlu0.c.b16.start [1/8] %v1134, 128
        %2792 = vxpose.xlu0.c.b16.cont [2/8] 0, 128
        %2793 = vxpose.xlu0.c.b16.cont [3/8] 0, 128
        %2794 = vxpose.xlu0.c.b16.cont [4/8] 0, 128
        %2795 = vxpose.xlu0.c.b16.cont [5/8] 0, 128
        %2796 = vxpose.xlu0.c.b16.cont [6/8] 0, 128
        %2797 = vxpose.xlu0.c.b16.cont [7/8] 0, 128
        %2798 = vxpose.xlu0.c.b16.end [8/8] 0, 128
        %v2799 = vpop.trf.xlu0
        %v2800 = vpop.trf.xlu0
        %v2801 = vpop.trf.xlu0
        %v2802 = vpop.trf.xlu0
        %v2803 = vpop.trf.xlu0
        %v2804 = vpop.trf.xlu0
        %v2805 = vpop.trf.xlu0
        %v2806 = vpop.trf.xlu0
        %v2807 = vrot.slane %v2623, 4
        %v2808 = vsel %vm1270, %v2807, %v2559
        %v2809 = vrot.slane %v2559, 4
        %v2810 = vsel %vm1270, %v2623, %v2809
        %v2812 = vunpack.c.l.s4 1983009808
        %v2813 = vunpack.c.0.s8 %v2812
        %v2814 = vperm.slane %v2808, %v2813
        %v2816 = vunpack.c.l.s4 1983009808
        %v2817 = vunpack.c.0.s8 %v2816
        %v2818 = vperm.slane %v2810, %v2817
        %v2819 = vrot.slane %v2655, 4
        %v2820 = vsel %vm1270, %v2819, %v2591
        %v2821 = vrot.slane %v2591, 4
        %v2822 = vsel %vm1270, %v2655, %v2821
        %v2824 = vunpack.c.l.s4 1983009808
        %v2825 = vunpack.c.0.s8 %v2824
        %v2826 = vperm.slane %v2820, %v2825
        %v2828 = vunpack.c.l.s4 1983009808
        %v2829 = vunpack.c.0.s8 %v2828
        %v2830 = vperm.slane %v2822, %v2829
        %v2831 = vrot.slane %v2751, 4
        %v2832 = vsel %vm1270, %v2831, %v2687
        %v2833 = vrot.slane %v2687, 4
        %v2834 = vsel %vm1270, %v2751, %v2833
        %v2836 = vunpack.c.l.s4 1983009808
        %v2837 = vunpack.c.0.s8 %v2836
        %v2838 = vperm.slane %v2832, %v2837
        %v2840 = vunpack.c.l.s4 1983009808
        %v2841 = vunpack.c.0.s8 %v2840
        %v2842 = vperm.slane %v2834, %v2841
        %v2843 = vrot.slane %v2783, 4
        %v2844 = vsel %vm1270, %v2843, %v2719
        %v2845 = vrot.slane %v2719, 4
        %v2846 = vsel %vm1270, %v2783, %v2845
        %v2848 = vunpack.c.l.s4 1983009808
        %v2849 = vunpack.c.0.s8 %v2848
        %v2850 = vperm.slane %v2844, %v2849
        %v2852 = vunpack.c.l.s4 1983009808
        %v2853 = vunpack.c.0.s8 %v2852
        %v2854 = vperm.slane %v2846, %v2853
        %v2855 = vrot.slane %v2826, 4
        %v2856 = vsel %vm1270, %v2855, %v2814
        %v2857 = vrot.slane %v2814, 4
        %v2858 = vsel %vm1270, %v2826, %v2857
        %v2860 = vunpack.c.l.s4 1934713408
        %v2861 = vunpack.c.0.s8 %v2860
        %v2862 = vperm.slane %v2856, %v2861
        %v2864 = vunpack.c.l.s4 1934713408
        %v2865 = vunpack.c.0.s8 %v2864
        %v2866 = vperm.slane %v2858, %v2865
        %v2867 = vrot.slane %v2830, 4
        %v2868 = vsel %vm1270, %v2867, %v2818
        %v2869 = vrot.slane %v2818, 4
        %v2870 = vsel %vm1270, %v2830, %v2869
        %v2872 = vunpack.c.l.s4 1934713408
        %v2873 = vunpack.c.0.s8 %v2872
        %v2874 = vperm.slane %v2868, %v2873
        %v2876 = vunpack.c.l.s4 1934713408
        %v2877 = vunpack.c.0.s8 %v2876
        %v2878 = vperm.slane %v2870, %v2877
        %v2879 = vrot.slane %v2850, 4
        %v2880 = vsel %vm1270, %v2879, %v2838
        %v2881 = vrot.slane %v2838, 4
        %v2882 = vsel %vm1270, %v2850, %v2881
        %v2884 = vunpack.c.l.s4 1934713408
        %v2885 = vunpack.c.0.s8 %v2884
        %v2886 = vperm.slane %v2880, %v2885
        %v2888 = vunpack.c.l.s4 1934713408
        %v2889 = vunpack.c.0.s8 %v2888
        %v2890 = vperm.slane %v2882, %v2889
        %v2891 = vrot.slane %v2854, 4
        %v2892 = vsel %vm1270, %v2891, %v2842
        %v2893 = vrot.slane %v2842, 4
        %v2894 = vsel %vm1270, %v2854, %v2893
        %v2896 = vunpack.c.l.s4 1934713408
        %v2897 = vunpack.c.0.s8 %v2896
        %v2898 = vperm.slane %v2892, %v2897
        %v2900 = vunpack.c.l.s4 1934713408
        %v2901 = vunpack.c.0.s8 %v2900
        %v2902 = vperm.slane %v2894, %v2901
        %v2903 = vrot.slane %v2886, 4
        %v2904 = vsel %vm1270, %v2903, %v2862
        %v2905 = vrot.slane %v2862, 4
        %v2906 = vsel %vm1270, %v2886, %v2905
        %v2907 = vrot.slane %v2890, 4
        %v2908 = vsel %vm1270, %v2907, %v2866
        %v2909 = vrot.slane %v2866, 4
        %v2910 = vsel %vm1270, %v2890, %v2909
        %v2911 = vrot.slane %v2898, 4
        %v2912 = vsel %vm1270, %v2911, %v2874
        %v2913 = vrot.slane %v2874, 4
        %v2914 = vsel %vm1270, %v2898, %v2913
        %v2915 = vrot.slane %v2902, 4
        %v2916 = vsel %vm1270, %v2915, %v2878
        %v2917 = vrot.slane %v2878, 4
        %v2918 = vsel %vm1270, %v2902, %v2917
        %v2919 = vrot.slane %v2639, 4
        %v2920 = vsel %vm1270, %v2919, %v2575
        %v2921 = vrot.slane %v2575, 4
        %v2922 = vsel %vm1270, %v2639, %v2921
        %v2924 = vunpack.c.l.s4 1983009808
        %v2925 = vunpack.c.0.s8 %v2924
        %v2926 = vperm.slane %v2920, %v2925
        %v2928 = vunpack.c.l.s4 1983009808
        %v2929 = vunpack.c.0.s8 %v2928
        %v2930 = vperm.slane %v2922, %v2929
        %v2931 = vrot.slane %v2671, 4
        %v2932 = vsel %vm1270, %v2931, %v2607
        %v2933 = vrot.slane %v2607, 4
        %v2934 = vsel %vm1270, %v2671, %v2933
        %v2936 = vunpack.c.l.s4 1983009808
        %v2937 = vunpack.c.0.s8 %v2936
        %v2938 = vperm.slane %v2932, %v2937
        %v2940 = vunpack.c.l.s4 1983009808
        %v2941 = vunpack.c.0.s8 %v2940
        %v2942 = vperm.slane %v2934, %v2941
        %v2943 = vrot.slane %v2767, 4
        %v2944 = vsel %vm1270, %v2943, %v2703
        %v2945 = vrot.slane %v2703, 4
        %v2946 = vsel %vm1270, %v2767, %v2945
        %v2948 = vunpack.c.l.s4 1983009808
        %v2949 = vunpack.c.0.s8 %v2948
        %v2950 = vperm.slane %v2944, %v2949
        %v2952 = vunpack.c.l.s4 1983009808
        %v2953 = vunpack.c.0.s8 %v2952
        %v2954 = vperm.slane %v2946, %v2953
        %v2955 = vrot.slane %v2799, 4
        %v2956 = vsel %vm1270, %v2955, %v2735
        %v2957 = vrot.slane %v2735, 4
        %v2958 = vsel %vm1270, %v2799, %v2957
        %v2960 = vunpack.c.l.s4 1983009808
        %v2961 = vunpack.c.0.s8 %v2960
        %v2962 = vperm.slane %v2956, %v2961
        %v2964 = vunpack.c.l.s4 1983009808
        %v2965 = vunpack.c.0.s8 %v2964
        %v2966 = vperm.slane %v2958, %v2965
        %v2967 = vrot.slane %v2938, 4
        %v2968 = vsel %vm1270, %v2967, %v2926
        %v2969 = vrot.slane %v2926, 4
        %v2970 = vsel %vm1270, %v2938, %v2969
        %v2972 = vunpack.c.l.s4 1934713408
        %v2973 = vunpack.c.0.s8 %v2972
        %v2974 = vperm.slane %v2968, %v2973
        %v2976 = vunpack.c.l.s4 1934713408
        %v2977 = vunpack.c.0.s8 %v2976
        %v2978 = vperm.slane %v2970, %v2977
        %v2979 = vrot.slane %v2942, 4
        %v2980 = vsel %vm1270, %v2979, %v2930
        %v2981 = vrot.slane %v2930, 4
        %v2982 = vsel %vm1270, %v2942, %v2981
        %v2984 = vunpack.c.l.s4 1934713408
        %v2985 = vunpack.c.0.s8 %v2984
        %v2986 = vperm.slane %v2980, %v2985
        %v2988 = vunpack.c.l.s4 1934713408
        %v2989 = vunpack.c.0.s8 %v2988
        %v2990 = vperm.slane %v2982, %v2989
        %v2991 = vrot.slane %v2962, 4
        %v2992 = vsel %vm1270, %v2991, %v2950
        %v2993 = vrot.slane %v2950, 4
        %v2994 = vsel %vm1270, %v2962, %v2993
        %v2996 = vunpack.c.l.s4 1934713408
        %v2997 = vunpack.c.0.s8 %v2996
        %v2998 = vperm.slane %v2992, %v2997
        %v3000 = vunpack.c.l.s4 1934713408
        %v3001 = vunpack.c.0.s8 %v3000
        %v3002 = vperm.slane %v2994, %v3001
        %v3003 = vrot.slane %v2966, 4
        %v3004 = vsel %vm1270, %v3003, %v2954
        %v3005 = vrot.slane %v2954, 4
        %v3006 = vsel %vm1270, %v2966, %v3005
        %v3008 = vunpack.c.l.s4 1934713408
        %v3009 = vunpack.c.0.s8 %v3008
        %v3010 = vperm.slane %v3004, %v3009
        %v3012 = vunpack.c.l.s4 1934713408
        %v3013 = vunpack.c.0.s8 %v3012
        %v3014 = vperm.slane %v3006, %v3013
        %v3015 = vrot.slane %v2998, 4
        %v3016 = vsel %vm1270, %v3015, %v2974
        %v3017 = vrot.slane %v2974, 4
        %v3018 = vsel %vm1270, %v2998, %v3017
        %v3019 = vrot.slane %v3002, 4
        %v3020 = vsel %vm1270, %v3019, %v2978
        %v3021 = vrot.slane %v2978, 4
        %v3022 = vsel %vm1270, %v3002, %v3021
        %v3023 = vrot.slane %v3010, 4
        %v3024 = vsel %vm1270, %v3023, %v2986
        %v3025 = vrot.slane %v2986, 4
        %v3026 = vsel %vm1270, %v3010, %v3025
        %v3027 = vrot.slane %v3014, 4
        %v3028 = vsel %vm1270, %v3027, %v2990
        %v3029 = vrot.slane %v2990, 4
        %v3030 = vsel %vm1270, %v3014, %v3029
        %v3033 = vpack.i.b16 %v3016, %v2904
        %v3035 = vshrl.u32 %v2904, 16
        %v3036 = vshrl.u32 %v3016, 16
        %v3037 = vpack.i.b16 %v3036, %v3035
        %v3041 = vpack.i.b16 %v3018, %v2906
        %v3043 = vshrl.u32 %v2906, 16
        %v3044 = vshrl.u32 %v3018, 16
        %v3045 = vpack.i.b16 %v3044, %v3043
        %v3049 = vpack.i.b16 %v3020, %v2908
        %v3051 = vshrl.u32 %v2908, 16
        %v3052 = vshrl.u32 %v3020, 16
        %v3053 = vpack.i.b16 %v3052, %v3051
        %v3057 = vpack.i.b16 %v3022, %v2910
        %v3059 = vshrl.u32 %v2910, 16
        %v3060 = vshrl.u32 %v3022, 16
        %v3061 = vpack.i.b16 %v3060, %v3059
        %v3065 = vpack.i.b16 %v3024, %v2912
        %v3067 = vshrl.u32 %v2912, 16
        %v3068 = vshrl.u32 %v3024, 16
        %v3069 = vpack.i.b16 %v3068, %v3067
        %v3073 = vpack.i.b16 %v3026, %v2914
        %v3075 = vshrl.u32 %v2914, 16
        %v3076 = vshrl.u32 %v3026, 16
        %v3077 = vpack.i.b16 %v3076, %v3075
        %v3081 = vpack.i.b16 %v3028, %v2916
        %v3083 = vshrl.u32 %v2916, 16
        %v3084 = vshrl.u32 %v3028, 16
        %v3085 = vpack.i.b16 %v3084, %v3083
        %v3089 = vpack.i.b16 %v3030, %v2918
        %v3091 = vshrl.u32 %v2918, 16
        %v3092 = vshrl.u32 %v3030, 16
        %v3093 = vpack.i.b16 %v3092, %v3091
        %3095 = vxpose.xlu0.c.b16.start [1/8] %v3033, 128
        %3096 = vxpose.xlu0.c.b16.cont [2/8] 0, 128
        %3097 = vxpose.xlu0.c.b16.cont [3/8] 0, 128
        %3098 = vxpose.xlu0.c.b16.cont [4/8] 0, 128
        %3099 = vxpose.xlu0.c.b16.cont [5/8] 0, 128
        %3100 = vxpose.xlu0.c.b16.cont [6/8] 0, 128
        %3101 = vxpose.xlu0.c.b16.cont [7/8] 0, 128
        %3102 = vxpose.xlu0.c.b16.end [8/8] 0, 128
        %v3103 = vpop.trf.xlu0
        %v3104 = vpop.trf.xlu0
        %v3105 = vpop.trf.xlu0
        %v3106 = vpop.trf.xlu0
        %v3107 = vpop.trf.xlu0
        %v3108 = vpop.trf.xlu0
        %v3109 = vpop.trf.xlu0
        %v3110 = vpop.trf.xlu0
        %3111 = vxpose.xlu0.c.b16.start [1/8] %v3037, 128
        %3112 = vxpose.xlu0.c.b16.cont [2/8] 0, 128
        %3113 = vxpose.xlu0.c.b16.cont [3/8] 0, 128
        %3114 = vxpose.xlu0.c.b16.cont [4/8] 0, 128
        %3115 = vxpose.xlu0.c.b16.cont [5/8] 0, 128
        %3116 = vxpose.xlu0.c.b16.cont [6/8] 0, 128
        %3117 = vxpose.xlu0.c.b16.cont [7/8] 0, 128
        %3118 = vxpose.xlu0.c.b16.end [8/8] 0, 128
        %v3119 = vpop.trf.xlu0
        %v3120 = vpop.trf.xlu0
        %v3121 = vpop.trf.xlu0
        %v3122 = vpop.trf.xlu0
        %v3123 = vpop.trf.xlu0
        %v3124 = vpop.trf.xlu0
        %v3125 = vpop.trf.xlu0
        %v3126 = vpop.trf.xlu0
        %3127 = vxpose.xlu0.c.b16.start [1/8] %v3041, 128
        %3128 = vxpose.xlu0.c.b16.cont [2/8] 0, 128
        %3129 = vxpose.xlu0.c.b16.cont [3/8] 0, 128
        %3130 = vxpose.xlu0.c.b16.cont [4/8] 0, 128
        %3131 = vxpose.xlu0.c.b16.cont [5/8] 0, 128
        %3132 = vxpose.xlu0.c.b16.cont [6/8] 0, 128
        %3133 = vxpose.xlu0.c.b16.cont [7/8] 0, 128
        %3134 = vxpose.xlu0.c.b16.end [8/8] 0, 128
        %v3135 = vpop.trf.xlu0
        %v3136 = vpop.trf.xlu0
        %v3137 = vpop.trf.xlu0
        %v3138 = vpop.trf.xlu0
        %v3139 = vpop.trf.xlu0
        %v3140 = vpop.trf.xlu0
        %v3141 = vpop.trf.xlu0
        %v3142 = vpop.trf.xlu0
        %3143 = vxpose.xlu0.c.b16.start [1/8] %v3045, 128
        %3144 = vxpose.xlu0.c.b16.cont [2/8] 0, 128
        %3145 = vxpose.xlu0.c.b16.cont [3/8] 0, 128
        %3146 = vxpose.xlu0.c.b16.cont [4/8] 0, 128
        %3147 = vxpose.xlu0.c.b16.cont [5/8] 0, 128
        %3148 = vxpose.xlu0.c.b16.cont [6/8] 0, 128
        %3149 = vxpose.xlu0.c.b16.cont [7/8] 0, 128
        %3150 = vxpose.xlu0.c.b16.end [8/8] 0, 128
        %v3151 = vpop.trf.xlu0
        %v3152 = vpop.trf.xlu0
        %v3153 = vpop.trf.xlu0
        %v3154 = vpop.trf.xlu0
        %v3155 = vpop.trf.xlu0
        %v3156 = vpop.trf.xlu0
        %v3157 = vpop.trf.xlu0
        %v3158 = vpop.trf.xlu0
        %3159 = vxpose.xlu0.c.b16.start [1/8] %v3049, 128
        %3160 = vxpose.xlu0.c.b16.cont [2/8] 0, 128
        %3161 = vxpose.xlu0.c.b16.cont [3/8] 0, 128
        %3162 = vxpose.xlu0.c.b16.cont [4/8] 0, 128
        %3163 = vxpose.xlu0.c.b16.cont [5/8] 0, 128
        %3164 = vxpose.xlu0.c.b16.cont [6/8] 0, 128
        %3165 = vxpose.xlu0.c.b16.cont [7/8] 0, 128
        %3166 = vxpose.xlu0.c.b16.end [8/8] 0, 128
        %v3167 = vpop.trf.xlu0
        %v3168 = vpop.trf.xlu0
        %v3169 = vpop.trf.xlu0
        %v3170 = vpop.trf.xlu0
        %v3171 = vpop.trf.xlu0
        %v3172 = vpop.trf.xlu0
        %v3173 = vpop.trf.xlu0
        %v3174 = vpop.trf.xlu0
        %3175 = vxpose.xlu0.c.b16.start [1/8] %v3053, 128
        %3176 = vxpose.xlu0.c.b16.cont [2/8] 0, 128
        %3177 = vxpose.xlu0.c.b16.cont [3/8] 0, 128
        %3178 = vxpose.xlu0.c.b16.cont [4/8] 0, 128
        %3179 = vxpose.xlu0.c.b16.cont [5/8] 0, 128
        %3180 = vxpose.xlu0.c.b16.cont [6/8] 0, 128
        %3181 = vxpose.xlu0.c.b16.cont [7/8] 0, 128
        %3182 = vxpose.xlu0.c.b16.end [8/8] 0, 128
        %v3183 = vpop.trf.xlu0
        %v3184 = vpop.trf.xlu0
        %v3185 = vpop.trf.xlu0
        %v3186 = vpop.trf.xlu0
        %v3187 = vpop.trf.xlu0
        %v3188 = vpop.trf.xlu0
        %v3189 = vpop.trf.xlu0
        %v3190 = vpop.trf.xlu0
        %3191 = vxpose.xlu0.c.b16.start [1/8] %v3057, 128
        %3192 = vxpose.xlu0.c.b16.cont [2/8] 0, 128
        %3193 = vxpose.xlu0.c.b16.cont [3/8] 0, 128
        %3194 = vxpose.xlu0.c.b16.cont [4/8] 0, 128
        %3195 = vxpose.xlu0.c.b16.cont [5/8] 0, 128
        %3196 = vxpose.xlu0.c.b16.cont [6/8] 0, 128
        %3197 = vxpose.xlu0.c.b16.cont [7/8] 0, 128
        %3198 = vxpose.xlu0.c.b16.end [8/8] 0, 128
        %v3199 = vpop.trf.xlu0
        %v3200 = vpop.trf.xlu0
        %v3201 = vpop.trf.xlu0
        %v3202 = vpop.trf.xlu0
        %v3203 = vpop.trf.xlu0
        %v3204 = vpop.trf.xlu0
        %v3205 = vpop.trf.xlu0
        %v3206 = vpop.trf.xlu0
        %3207 = vxpose.xlu0.c.b16.start [1/8] %v3061, 128
        %3208 = vxpose.xlu0.c.b16.cont [2/8] 0, 128
        %3209 = vxpose.xlu0.c.b16.cont [3/8] 0, 128
        %3210 = vxpose.xlu0.c.b16.cont [4/8] 0, 128
        %3211 = vxpose.xlu0.c.b16.cont [5/8] 0, 128
        %3212 = vxpose.xlu0.c.b16.cont [6/8] 0, 128
        %3213 = vxpose.xlu0.c.b16.cont [7/8] 0, 128
        %3214 = vxpose.xlu0.c.b16.end [8/8] 0, 128
        %v3215 = vpop.trf.xlu0
        %v3216 = vpop.trf.xlu0
        %v3217 = vpop.trf.xlu0
        %v3218 = vpop.trf.xlu0
        %v3219 = vpop.trf.xlu0
        %v3220 = vpop.trf.xlu0
        %v3221 = vpop.trf.xlu0
        %v3222 = vpop.trf.xlu0
        %3223 = vxpose.xlu0.c.b16.start [1/8] %v3065, 128
        %3224 = vxpose.xlu0.c.b16.cont [2/8] 0, 128
        %3225 = vxpose.xlu0.c.b16.cont [3/8] 0, 128
        %3226 = vxpose.xlu0.c.b16.cont [4/8] 0, 128
        %3227 = vxpose.xlu0.c.b16.cont [5/8] 0, 128
        %3228 = vxpose.xlu0.c.b16.cont [6/8] 0, 128
        %3229 = vxpose.xlu0.c.b16.cont [7/8] 0, 128
        %3230 = vxpose.xlu0.c.b16.end [8/8] 0, 128
        %v3231 = vpop.trf.xlu0
        %v3232 = vpop.trf.xlu0
        %v3233 = vpop.trf.xlu0
        %v3234 = vpop.trf.xlu0
        %v3235 = vpop.trf.xlu0
        %v3236 = vpop.trf.xlu0
        %v3237 = vpop.trf.xlu0
        %v3238 = vpop.trf.xlu0
        %3239 = vxpose.xlu0.c.b16.start [1/8] %v3069, 128
        %3240 = vxpose.xlu0.c.b16.cont [2/8] 0, 128
        %3241 = vxpose.xlu0.c.b16.cont [3/8] 0, 128
        %3242 = vxpose.xlu0.c.b16.cont [4/8] 0, 128
        %3243 = vxpose.xlu0.c.b16.cont [5/8] 0, 128
        %3244 = vxpose.xlu0.c.b16.cont [6/8] 0, 128
        %3245 = vxpose.xlu0.c.b16.cont [7/8] 0, 128
        %3246 = vxpose.xlu0.c.b16.end [8/8] 0, 128
        %v3247 = vpop.trf.xlu0
        %v3248 = vpop.trf.xlu0
        %v3249 = vpop.trf.xlu0
        %v3250 = vpop.trf.xlu0
        %v3251 = vpop.trf.xlu0
        %v3252 = vpop.trf.xlu0
        %v3253 = vpop.trf.xlu0
        %v3254 = vpop.trf.xlu0
        %3255 = vxpose.xlu0.c.b16.start [1/8] %v3073, 128
        %3256 = vxpose.xlu0.c.b16.cont [2/8] 0, 128
        %3257 = vxpose.xlu0.c.b16.cont [3/8] 0, 128
        %3258 = vxpose.xlu0.c.b16.cont [4/8] 0, 128
        %3259 = vxpose.xlu0.c.b16.cont [5/8] 0, 128
        %3260 = vxpose.xlu0.c.b16.cont [6/8] 0, 128
        %3261 = vxpose.xlu0.c.b16.cont [7/8] 0, 128
        %3262 = vxpose.xlu0.c.b16.end [8/8] 0, 128
        %v3263 = vpop.trf.xlu0
        %v3264 = vpop.trf.xlu0
        %v3265 = vpop.trf.xlu0
        %v3266 = vpop.trf.xlu0
        %v3267 = vpop.trf.xlu0
        %v3268 = vpop.trf.xlu0
        %v3269 = vpop.trf.xlu0
        %v3270 = vpop.trf.xlu0
        %3271 = vxpose.xlu0.c.b16.start [1/8] %v3077, 128
        %3272 = vxpose.xlu0.c.b16.cont [2/8] 0, 128
        %3273 = vxpose.xlu0.c.b16.cont [3/8] 0, 128
        %3274 = vxpose.xlu0.c.b16.cont [4/8] 0, 128
        %3275 = vxpose.xlu0.c.b16.cont [5/8] 0, 128
        %3276 = vxpose.xlu0.c.b16.cont [6/8] 0, 128
        %3277 = vxpose.xlu0.c.b16.cont [7/8] 0, 128
        %3278 = vxpose.xlu0.c.b16.end [8/8] 0, 128
        %v3279 = vpop.trf.xlu0
        %v3280 = vpop.trf.xlu0
        %v3281 = vpop.trf.xlu0
        %v3282 = vpop.trf.xlu0
        %v3283 = vpop.trf.xlu0
        %v3284 = vpop.trf.xlu0
        %v3285 = vpop.trf.xlu0
        %v3286 = vpop.trf.xlu0
        %3287 = vxpose.xlu0.c.b16.start [1/8] %v3081, 128
        %3288 = vxpose.xlu0.c.b16.cont [2/8] 0, 128
        %3289 = vxpose.xlu0.c.b16.cont [3/8] 0, 128
        %3290 = vxpose.xlu0.c.b16.cont [4/8] 0, 128
        %3291 = vxpose.xlu0.c.b16.cont [5/8] 0, 128
        %3292 = vxpose.xlu0.c.b16.cont [6/8] 0, 128
        %3293 = vxpose.xlu0.c.b16.cont [7/8] 0, 128
        %3294 = vxpose.xlu0.c.b16.end [8/8] 0, 128
        %v3295 = vpop.trf.xlu0
        %v3296 = vpop.trf.xlu0
        %v3297 = vpop.trf.xlu0
        %v3298 = vpop.trf.xlu0
        %v3299 = vpop.trf.xlu0
        %v3300 = vpop.trf.xlu0
        %v3301 = vpop.trf.xlu0
        %v3302 = vpop.trf.xlu0
        %3303 = vxpose.xlu0.c.b16.start [1/8] %v3085, 128
        %3304 = vxpose.xlu0.c.b16.cont [2/8] 0, 128
        %3305 = vxpose.xlu0.c.b16.cont [3/8] 0, 128
        %3306 = vxpose.xlu0.c.b16.cont [4/8] 0, 128
        %3307 = vxpose.xlu0.c.b16.cont [5/8] 0, 128
        %3308 = vxpose.xlu0.c.b16.cont [6/8] 0, 128
        %3309 = vxpose.xlu0.c.b16.cont [7/8] 0, 128
        %3310 = vxpose.xlu0.c.b16.end [8/8] 0, 128
        %v3311 = vpop.trf.xlu0
        %v3312 = vpop.trf.xlu0
        %v3313 = vpop.trf.xlu0
        %v3314 = vpop.trf.xlu0
        %v3315 = vpop.trf.xlu0
        %v3316 = vpop.trf.xlu0
        %v3317 = vpop.trf.xlu0
        %v3318 = vpop.trf.xlu0
        %3319 = vxpose.xlu0.c.b16.start [1/8] %v3089, 128
        %3320 = vxpose.xlu0.c.b16.cont [2/8] 0, 128
        %3321 = vxpose.xlu0.c.b16.cont [3/8] 0, 128
        %3322 = vxpose.xlu0.c.b16.cont [4/8] 0, 128
        %3323 = vxpose.xlu0.c.b16.cont [5/8] 0, 128
        %3324 = vxpose.xlu0.c.b16.cont [6/8] 0, 128
        %3325 = vxpose.xlu0.c.b16.cont [7/8] 0, 128
        %3326 = vxpose.xlu0.c.b16.end [8/8] 0, 128
        %v3327 = vpop.trf.xlu0
        %v3328 = vpop.trf.xlu0
        %v3329 = vpop.trf.xlu0
        %v3330 = vpop.trf.xlu0
        %v3331 = vpop.trf.xlu0
        %v3332 = vpop.trf.xlu0
        %v3333 = vpop.trf.xlu0
        %v3334 = vpop.trf.xlu0
        %3335 = vxpose.xlu0.c.b16.start [1/8] %v3093, 128
        %3336 = vxpose.xlu0.c.b16.cont [2/8] 0, 128
        %3337 = vxpose.xlu0.c.b16.cont [3/8] 0, 128
        %3338 = vxpose.xlu0.c.b16.cont [4/8] 0, 128
        %3339 = vxpose.xlu0.c.b16.cont [5/8] 0, 128
        %3340 = vxpose.xlu0.c.b16.cont [6/8] 0, 128
        %3341 = vxpose.xlu0.c.b16.cont [7/8] 0, 128
        %3342 = vxpose.xlu0.c.b16.end [8/8] 0, 128
        %v3343 = vpop.trf.xlu0
        %v3344 = vpop.trf.xlu0
        %v3345 = vpop.trf.xlu0
        %v3346 = vpop.trf.xlu0
        %v3347 = vpop.trf.xlu0
        %v3348 = vpop.trf.xlu0
        %v3349 = vpop.trf.xlu0
        %v3350 = vpop.trf.xlu0
        %v3351 = vrot.slane %v3167, 4
        %v3352 = vsel %vm1270, %v3351, %v3103
        %v3354 = vunpack.c.l.s4 1983009808
        %v3355 = vunpack.c.0.s8 %v3354
        %v3356 = vperm.slane %v3352, %v3355
        %v3357 = vrot.slane %v3199, 4
        %v3358 = vsel %vm1270, %v3357, %v3135
        %v3360 = vunpack.c.l.s4 1983009808
        %v3361 = vunpack.c.0.s8 %v3360
        %v3362 = vperm.slane %v3358, %v3361
        %v3363 = vrot.slane %v3295, 4
        %v3364 = vsel %vm1270, %v3363, %v3231
        %v3366 = vunpack.c.l.s4 1983009808
        %v3367 = vunpack.c.0.s8 %v3366
        %v3368 = vperm.slane %v3364, %v3367
        %v3369 = vrot.slane %v3327, 4
        %v3370 = vsel %vm1270, %v3369, %v3263
        %v3372 = vunpack.c.l.s4 1983009808
        %v3373 = vunpack.c.0.s8 %v3372
        %v3374 = vperm.slane %v3370, %v3373
        %v3375 = vrot.slane %v3362, 4
        %v3376 = vsel %vm1270, %v3375, %v3356
        %v3378 = vunpack.c.l.s4 1934713408
        %v3379 = vunpack.c.0.s8 %v3378
        %v3380 = vperm.slane %v3376, %v3379
        %v3381 = vrot.slane %v3374, 4
        %v3382 = vsel %vm1270, %v3381, %v3368
        %v3384 = vunpack.c.l.s4 1934713408
        %v3385 = vunpack.c.0.s8 %v3384
        %v3386 = vperm.slane %v3382, %v3385
        %v3387 = vrot.slane %v3386, 4
        %v3388 = vsel %vm1270, %v3387, %v3380
        %v3389 = vrot.slane %v3380, 4
        %v3390 = vsel %vm1270, %v3386, %v3389
        %v3391 = vrot.slane %v3183, 4
        %v3392 = vsel %vm1270, %v3391, %v3119
        %v3394 = vunpack.c.l.s4 1983009808
        %v3395 = vunpack.c.0.s8 %v3394
        %v3396 = vperm.slane %v3392, %v3395
        %v3397 = vrot.slane %v3215, 4
        %v3398 = vsel %vm1270, %v3397, %v3151
        %v3400 = vunpack.c.l.s4 1983009808
        %v3401 = vunpack.c.0.s8 %v3400
        %v3402 = vperm.slane %v3398, %v3401
        %v3403 = vrot.slane %v3311, 4
        %v3404 = vsel %vm1270, %v3403, %v3247
        %v3406 = vunpack.c.l.s4 1983009808
        %v3407 = vunpack.c.0.s8 %v3406
        %v3408 = vperm.slane %v3404, %v3407
        %v3409 = vrot.slane %v3343, 4
        %v3410 = vsel %vm1270, %v3409, %v3279
        %v3412 = vunpack.c.l.s4 1983009808
        %v3413 = vunpack.c.0.s8 %v3412
        %v3414 = vperm.slane %v3410, %v3413
        %v3415 = vrot.slane %v3402, 4
        %v3416 = vsel %vm1270, %v3415, %v3396
        %v3418 = vunpack.c.l.s4 1934713408
        %v3419 = vunpack.c.0.s8 %v3418
        %v3420 = vperm.slane %v3416, %v3419
        %v3421 = vrot.slane %v3414, 4
        %v3422 = vsel %vm1270, %v3421, %v3408
        %v3424 = vunpack.c.l.s4 1934713408
        %v3425 = vunpack.c.0.s8 %v3424
        %v3426 = vperm.slane %v3422, %v3425
        %v3427 = vrot.slane %v3426, 4
        %v3428 = vsel %vm1270, %v3427, %v3420
        %v3429 = vrot.slane %v3420, 4
        %v3430 = vsel %vm1270, %v3426, %v3429
        %v3433 = vpack.i.b16 %v3428, %v3388
        %v3434 = vshrl.u32 %v3388, 16
        %v3435 = vshrl.u32 %v3428, 16
        %v3436 = vpack.i.b16 %v3435, %v3434
        %v3439 = vpack.i.b16 %v3430, %v3390
        %v3440 = vshrl.u32 %v3390, 16
        %v3441 = vshrl.u32 %v3430, 16
        %v3442 = vpack.i.b16 %v3441, %v3440
        %v3445 = vunpack.c.l.b16 %v2543
        %v3446 = vunpack.c.l.b16 %v2544
        %v3447 = vpack.c.b16 %v3446, %v3445
        %v3449 = vsel %vm2273, %v3433, 0
        %v3452 = vsel %vm2273, %v3447, 0
        %3454 = vmatpush.bf16.xpose.msra.mxu0 0
        %3455 = vmatpush.bf16.xpose.msra.mxu0 0
        %3456 = vmatpush.bf16.xpose.msra.mxu0 0
        %3457 = vmatpush.bf16.xpose.msra.mxu0 0
        %3458 = vmatpush.bf16.xpose.msra.mxu0 0
        %3459 = vmatpush.bf16.xpose.msra.mxu0 0
        %3460 = vmatpush.bf16.xpose.msra.mxu0 0
        %3461 = vmatpush.bf16.xpose.msra.mxu0 %v3452
        %3462 = vmatmul.bf16.gmra.mxu0 %v3449
        %v3463 = vpop.f32.mrf.mxu0
        %v3464 = vadd.f32 0.0, %v3463
        %v3465 = vpop.f32.mrf.mxu0
        %v3466 = vadd.f32 0.0, %v3465
        %3467 = vdwg.mxu0
        %v3470 = vunpack.c.l.b16 %v2545
        %v3471 = vunpack.c.l.b16 %v2546
        %v3472 = vpack.c.b16 %v3471, %v3470
        %v3474 = vsel %vm2273, %v3436, 0
        %v3477 = vsel %vm2273, %v3472, 0
        %3479 = vmatpush.bf16.xpose.msra.mxu0 0
        %3480 = vmatpush.bf16.xpose.msra.mxu0 0
        %3481 = vmatpush.bf16.xpose.msra.mxu0 0
        %3482 = vmatpush.bf16.xpose.msra.mxu0 0
        %3483 = vmatpush.bf16.xpose.msra.mxu0 0
        %3484 = vmatpush.bf16.xpose.msra.mxu0 0
        %3485 = vmatpush.bf16.xpose.msra.mxu0 0
        %3486 = vmatpush.bf16.xpose.msra.mxu0 %v3477
        %3487 = vmatmul.bf16.gmra.mxu0 %v3474
        %v3488 = vpop.f32.mrf.mxu0
        %v3489 = vadd.f32 0.0, %v3488
        %v3490 = vpop.f32.mrf.mxu0
        %v3491 = vadd.f32 0.0, %v3490
        %3492 = vdwg.mxu0
        %v3495 = vunpack.c.l.b16 %v2547
        %v3496 = vunpack.c.l.b16 %v2548
        %v3497 = vpack.c.b16 %v3496, %v3495
        %v3499 = vsel %vm2273, %v3439, 0
        %v3502 = vsel %vm2273, %v3497, 0
        %3504 = vmatpush.bf16.xpose.msra.mxu0 0
        %3505 = vmatpush.bf16.xpose.msra.mxu0 0
        %3506 = vmatpush.bf16.xpose.msra.mxu0 0
        %3507 = vmatpush.bf16.xpose.msra.mxu0 0
        %3508 = vmatpush.bf16.xpose.msra.mxu0 0
        %3509 = vmatpush.bf16.xpose.msra.mxu0 0
        %3510 = vmatpush.bf16.xpose.msra.mxu0 0
        %3511 = vmatpush.bf16.xpose.msra.mxu0 %v3502
        %3512 = vmatmul.bf16.gmra.mxu0 %v3499
        %v3513 = vpop.f32.mrf.mxu0
        %v3514 = vadd.f32 0.0, %v3513
        %v3515 = vpop.f32.mrf.mxu0
        %v3516 = vadd.f32 0.0, %v3515
        %3517 = vdwg.mxu0
        %v3520 = vunpack.c.l.b16 %v2549
        %v3521 = vunpack.c.l.b16 %v2550
        %v3522 = vpack.c.b16 %v3521, %v3520
        %v3524 = vsel %vm2273, %v3442, 0
        %v3527 = vsel %vm2273, %v3522, 0
        %3529 = vmatpush.bf16.xpose.msra.mxu0 0
        %3530 = vmatpush.bf16.xpose.msra.mxu0 0
        %3531 = vmatpush.bf16.xpose.msra.mxu0 0
        %3532 = vmatpush.bf16.xpose.msra.mxu0 0
        %3533 = vmatpush.bf16.xpose.msra.mxu0 0
        %3534 = vmatpush.bf16.xpose.msra.mxu0 0
        %3535 = vmatpush.bf16.xpose.msra.mxu0 0
        %3536 = vmatpush.bf16.xpose.msra.mxu0 %v3527
        %3537 = vmatmul.bf16.gmra.mxu0 %v3524
        %v3538 = vpop.f32.mrf.mxu0
        %v3539 = vadd.f32 0.0, %v3538
        %v3540 = vpop.f32.mrf.mxu0
        %v3541 = vadd.f32 0.0, %v3540
        %3542 = vdwg.mxu0
        %3543 = vxpose.xlu0.b32.start [1/16] %v3464, 128
        %3544 = vxpose.xlu0.b32.cont [2/16] %v3466, 128
        %3545 = vxpose.xlu0.b32.cont [3/16] 0.0, 128
        %3546 = vxpose.xlu0.b32.cont [4/16] 0.0, 128
        %3547 = vxpose.xlu0.b32.cont [5/16] 0.0, 128
        %3548 = vxpose.xlu0.b32.cont [6/16] 0.0, 128
        %3549 = vxpose.xlu0.b32.cont [7/16] 0.0, 128
        %3550 = vxpose.xlu0.b32.cont [8/16] 0.0, 128
        %3551 = vxpose.xlu0.b32.cont [9/16] 0.0, 128
        %3552 = vxpose.xlu0.b32.cont [10/16] 0.0, 128
        %3553 = vxpose.xlu0.b32.cont [11/16] 0.0, 128
        %3554 = vxpose.xlu0.b32.cont [12/16] 0.0, 128
        %3555 = vxpose.xlu0.b32.cont [13/16] 0.0, 128
        %3556 = vxpose.xlu0.b32.cont [14/16] 0.0, 128
        %3557 = vxpose.xlu0.b32.cont [15/16] 0.0, 128
        %3558 = vxpose.xlu0.b32.end [16/16] 0.0, 128
        %v3559 = vpop.trf.xlu0
        %v3560 = vpop.trf.xlu0
        %v3561 = vpop.trf.xlu0
        %v3562 = vpop.trf.xlu0
        %v3563 = vpop.trf.xlu0
        %v3564 = vpop.trf.xlu0
        %v3565 = vpop.trf.xlu0
        %v3566 = vpop.trf.xlu0
        %v3567 = vpop.trf.xlu0
        %v3568 = vpop.trf.xlu0
        %v3569 = vpop.trf.xlu0
        %v3570 = vpop.trf.xlu0
        %v3571 = vpop.trf.xlu0
        %v3572 = vpop.trf.xlu0
        %v3573 = vpop.trf.xlu0
        %v3574 = vpop.trf.xlu0
        %3575 = vxpose.xlu0.b32.start [1/16] %v3489, 128
        %3576 = vxpose.xlu0.b32.cont [2/16] %v3491, 128
        %3577 = vxpose.xlu0.b32.cont [3/16] 0.0, 128
        %3578 = vxpose.xlu0.b32.cont [4/16] 0.0, 128
        %3579 = vxpose.xlu0.b32.cont [5/16] 0.0, 128
        %3580 = vxpose.xlu0.b32.cont [6/16] 0.0, 128
        %3581 = vxpose.xlu0.b32.cont [7/16] 0.0, 128
        %3582 = vxpose.xlu0.b32.cont [8/16] 0.0, 128
        %3583 = vxpose.xlu0.b32.cont [9/16] 0.0, 128
        %3584 = vxpose.xlu0.b32.cont [10/16] 0.0, 128
        %3585 = vxpose.xlu0.b32.cont [11/16] 0.0, 128
        %3586 = vxpose.xlu0.b32.cont [12/16] 0.0, 128
        %3587 = vxpose.xlu0.b32.cont [13/16] 0.0, 128
        %3588 = vxpose.xlu0.b32.cont [14/16] 0.0, 128
        %3589 = vxpose.xlu0.b32.cont [15/16] 0.0, 128
        %3590 = vxpose.xlu0.b32.end [16/16] 0.0, 128
        %v3591 = vpop.trf.xlu0
        %v3592 = vpop.trf.xlu0
        %v3593 = vpop.trf.xlu0
        %v3594 = vpop.trf.xlu0
        %v3595 = vpop.trf.xlu0
        %v3596 = vpop.trf.xlu0
        %v3597 = vpop.trf.xlu0
        %v3598 = vpop.trf.xlu0
        %v3599 = vpop.trf.xlu0
        %v3600 = vpop.trf.xlu0
        %v3601 = vpop.trf.xlu0
        %v3602 = vpop.trf.xlu0
        %v3603 = vpop.trf.xlu0
        %v3604 = vpop.trf.xlu0
        %v3605 = vpop.trf.xlu0
        %v3606 = vpop.trf.xlu0
        %3607 = vxpose.xlu0.b32.start [1/16] %v3514, 128
        %3608 = vxpose.xlu0.b32.cont [2/16] %v3516, 128
        %3609 = vxpose.xlu0.b32.cont [3/16] 0.0, 128
        %3610 = vxpose.xlu0.b32.cont [4/16] 0.0, 128
        %3611 = vxpose.xlu0.b32.cont [5/16] 0.0, 128
        %3612 = vxpose.xlu0.b32.cont [6/16] 0.0, 128
        %3613 = vxpose.xlu0.b32.cont [7/16] 0.0, 128
        %3614 = vxpose.xlu0.b32.cont [8/16] 0.0, 128
        %3615 = vxpose.xlu0.b32.cont [9/16] 0.0, 128
        %3616 = vxpose.xlu0.b32.cont [10/16] 0.0, 128
        %3617 = vxpose.xlu0.b32.cont [11/16] 0.0, 128
        %3618 = vxpose.xlu0.b32.cont [12/16] 0.0, 128
        %3619 = vxpose.xlu0.b32.cont [13/16] 0.0, 128
        %3620 = vxpose.xlu0.b32.cont [14/16] 0.0, 128
        %3621 = vxpose.xlu0.b32.cont [15/16] 0.0, 128
        %3622 = vxpose.xlu0.b32.end [16/16] 0.0, 128
        %v3623 = vpop.trf.xlu0
        %v3624 = vpop.trf.xlu0
        %v3625 = vpop.trf.xlu0
        %v3626 = vpop.trf.xlu0
        %v3627 = vpop.trf.xlu0
        %v3628 = vpop.trf.xlu0
        %v3629 = vpop.trf.xlu0
        %v3630 = vpop.trf.xlu0
        %v3631 = vpop.trf.xlu0
        %v3632 = vpop.trf.xlu0
        %v3633 = vpop.trf.xlu0
        %v3634 = vpop.trf.xlu0
        %v3635 = vpop.trf.xlu0
        %v3636 = vpop.trf.xlu0
        %v3637 = vpop.trf.xlu0
        %v3638 = vpop.trf.xlu0
        %3639 = vxpose.xlu0.b32.start [1/16] %v3539, 128
        %3640 = vxpose.xlu0.b32.cont [2/16] %v3541, 128
        %3641 = vxpose.xlu0.b32.cont [3/16] 0.0, 128
        %3642 = vxpose.xlu0.b32.cont [4/16] 0.0, 128
        %3643 = vxpose.xlu0.b32.cont [5/16] 0.0, 128
        %3644 = vxpose.xlu0.b32.cont [6/16] 0.0, 128
        %3645 = vxpose.xlu0.b32.cont [7/16] 0.0, 128
        %3646 = vxpose.xlu0.b32.cont [8/16] 0.0, 128
        %3647 = vxpose.xlu0.b32.cont [9/16] 0.0, 128
        %3648 = vxpose.xlu0.b32.cont [10/16] 0.0, 128
        %3649 = vxpose.xlu0.b32.cont [11/16] 0.0, 128
        %3650 = vxpose.xlu0.b32.cont [12/16] 0.0, 128
        %3651 = vxpose.xlu0.b32.cont [13/16] 0.0, 128
        %3652 = vxpose.xlu0.b32.cont [14/16] 0.0, 128
        %3653 = vxpose.xlu0.b32.cont [15/16] 0.0, 128
        %3654 = vxpose.xlu0.b32.end [16/16] 0.0, 128
        %v3655 = vpop.trf.xlu0
        %v3656 = vpop.trf.xlu0
        %v3657 = vpop.trf.xlu0
        %v3658 = vpop.trf.xlu0
        %v3659 = vpop.trf.xlu0
        %v3660 = vpop.trf.xlu0
        %v3661 = vpop.trf.xlu0
        %v3662 = vpop.trf.xlu0
        %v3663 = vpop.trf.xlu0
        %v3664 = vpop.trf.xlu0
        %v3665 = vpop.trf.xlu0
        %v3666 = vpop.trf.xlu0
        %v3667 = vpop.trf.xlu0
        %v3668 = vpop.trf.xlu0
        %v3669 = vpop.trf.xlu0
        %v3670 = vpop.trf.xlu0
        %v3671 = vrot.slane %v3623, 4
        %v3672 = vsel %vm859, %v3671, %v3559
        %v3673 = vrot.slane %v3559, 4
        %v3674 = vsel %vm859, %v3623, %v3673
        %v3676 = vunpack.c.l.s4 1983009808
        %v3677 = vunpack.c.0.s8 %v3676
        %v3678 = vperm.slane %v3672, %v3677
        %v3680 = vunpack.c.l.s4 1983009808
        %v3681 = vunpack.c.0.s8 %v3680
        %v3682 = vperm.slane %v3674, %v3681
        %v3683 = vrot.slane %v3655, 4
        %v3684 = vsel %vm859, %v3683, %v3591
        %v3685 = vrot.slane %v3591, 4
        %v3686 = vsel %vm859, %v3655, %v3685
        %v3688 = vunpack.c.l.s4 1983009808
        %v3689 = vunpack.c.0.s8 %v3688
        %v3690 = vperm.slane %v3684, %v3689
        %v3692 = vunpack.c.l.s4 1983009808
        %v3693 = vunpack.c.0.s8 %v3692
        %v3694 = vperm.slane %v3686, %v3693
        %v3695 = vrot.slane %v3690, 4
        %v3696 = vsel %vm859, %v3695, %v3678
        %v3697 = vrot.slane %v3678, 4
        %v3698 = vsel %vm859, %v3690, %v3697
        %v3700 = vunpack.c.l.s4 1934713408
        %v3701 = vunpack.c.0.s8 %v3700
        %v3702 = vperm.slane %v3696, %v3701
        %v3704 = vunpack.c.l.s4 1934713408
        %v3705 = vunpack.c.0.s8 %v3704
        %v3706 = vperm.slane %v3698, %v3705
        %v3707 = vrot.slane %v3694, 4
        %v3708 = vsel %vm859, %v3707, %v3682
        %v3709 = vrot.slane %v3682, 4
        %v3710 = vsel %vm859, %v3694, %v3709
        %v3712 = vunpack.c.l.s4 1934713408
        %v3713 = vunpack.c.0.s8 %v3712
        %v3714 = vperm.slane %v3708, %v3713
        %v3716 = vunpack.c.l.s4 1934713408
        %v3717 = vunpack.c.0.s8 %v3716
        %v3718 = vperm.slane %v3710, %v3717
        %v3719 = vrot.slane %v3702, 4
        %v3720 = vsel %vm859, 0.0, %v3719
        %v3721 = vrot.slane %v3706, 4
        %v3722 = vsel %vm859, 0.0, %v3721
        %v3723 = vrot.slane %v3714, 4
        %v3724 = vsel %vm859, 0.0, %v3723
        %v3725 = vrot.slane %v3718, 4
        %v3726 = vsel %vm859, 0.0, %v3725
        %v3727 = vrot.slane %v3624, 4
        %v3728 = vsel %vm859, %v3727, %v3560
        %v3729 = vrot.slane %v3560, 4
        %v3730 = vsel %vm859, %v3624, %v3729
        %v3732 = vunpack.c.l.s4 1983009808
        %v3733 = vunpack.c.0.s8 %v3732
        %v3734 = vperm.slane %v3728, %v3733
        %v3736 = vunpack.c.l.s4 1983009808
        %v3737 = vunpack.c.0.s8 %v3736
        %v3738 = vperm.slane %v3730, %v3737
        %v3739 = vrot.slane %v3656, 4
        %v3740 = vsel %vm859, %v3739, %v3592
        %v3741 = vrot.slane %v3592, 4
        %v3742 = vsel %vm859, %v3656, %v3741
        %v3744 = vunpack.c.l.s4 1983009808
        %v3745 = vunpack.c.0.s8 %v3744
        %v3746 = vperm.slane %v3740, %v3745
        %v3748 = vunpack.c.l.s4 1983009808
        %v3749 = vunpack.c.0.s8 %v3748
        %v3750 = vperm.slane %v3742, %v3749
        %v3751 = vrot.slane %v3746, 4
        %v3752 = vsel %vm859, %v3751, %v3734
        %v3753 = vrot.slane %v3734, 4
        %v3754 = vsel %vm859, %v3746, %v3753
        %v3756 = vunpack.c.l.s4 1934713408
        %v3757 = vunpack.c.0.s8 %v3756
        %v3758 = vperm.slane %v3752, %v3757
        %v3760 = vunpack.c.l.s4 1934713408
        %v3761 = vunpack.c.0.s8 %v3760
        %v3762 = vperm.slane %v3754, %v3761
        %v3763 = vrot.slane %v3750, 4
        %v3764 = vsel %vm859, %v3763, %v3738
        %v3765 = vrot.slane %v3738, 4
        %v3766 = vsel %vm859, %v3750, %v3765
        %v3768 = vunpack.c.l.s4 1934713408
        %v3769 = vunpack.c.0.s8 %v3768
        %v3770 = vperm.slane %v3764, %v3769
        %v3772 = vunpack.c.l.s4 1934713408
        %v3773 = vunpack.c.0.s8 %v3772
        %v3774 = vperm.slane %v3766, %v3773
        %v3775 = vrot.slane %v3758, 4
        %v3776 = vsel %vm859, 0.0, %v3775
        %v3777 = vrot.slane %v3762, 4
        %v3778 = vsel %vm859, 0.0, %v3777
        %v3779 = vrot.slane %v3770, 4
        %v3780 = vsel %vm859, 0.0, %v3779
        %v3781 = vrot.slane %v3774, 4
        %v3782 = vsel %vm859, 0.0, %v3781
        %v3783 = vsel %vm859, %v3721, %v3702
        %v3785 = vunpack.c.l.s4 1983009808
        %v3786 = vunpack.c.0.s8 %v3785
        %v3787 = vperm.slane %v3783, %v3786
        %v3788 = vrot.slane %v3722, 4
        %v3789 = vsel %vm859, %v3788, %v3720
        %v3791 = vunpack.c.l.s4 1983009808
        %v3792 = vunpack.c.0.s8 %v3791
        %v3793 = vperm.slane %v3789, %v3792
        %v3794 = vsel %vm859, %v3725, %v3714
        %v3796 = vunpack.c.l.s4 1983009808
        %v3797 = vunpack.c.0.s8 %v3796
        %v3798 = vperm.slane %v3794, %v3797
        %v3799 = vrot.slane %v3726, 4
        %v3800 = vsel %vm859, %v3799, %v3724
        %v3802 = vunpack.c.l.s4 1983009808
        %v3803 = vunpack.c.0.s8 %v3802
        %v3804 = vperm.slane %v3800, %v3803
        %v3805 = vrot.slane %v3793, 4
        %v3806 = vsel %vm859, %v3805, %v3787
        %v3807 = vrot.slane %v3787, 4
        %v3808 = vsel %vm859, %v3793, %v3807
        %v3810 = vunpack.c.l.s4 1934713408
        %v3811 = vunpack.c.0.s8 %v3810
        %v3812 = vperm.slane %v3806, %v3811
        %v3814 = vunpack.c.l.s4 1934713408
        %v3815 = vunpack.c.0.s8 %v3814
        %v3816 = vperm.slane %v3808, %v3815
        %v3817 = vrot.slane %v3804, 4
        %v3818 = vsel %vm859, %v3817, %v3798
        %v3819 = vrot.slane %v3798, 4
        %v3820 = vsel %vm859, %v3804, %v3819
        %v3822 = vunpack.c.l.s4 1934713408
        %v3823 = vunpack.c.0.s8 %v3822
        %v3824 = vperm.slane %v3818, %v3823
        %v3826 = vunpack.c.l.s4 1934713408
        %v3827 = vunpack.c.0.s8 %v3826
        %v3828 = vperm.slane %v3820, %v3827
        %v3829 = vrot.slane %v3824, 4
        %v3830 = vsel %vm859, %v3829, %v3812
        %v3831 = vrot.slane %v3812, 4
        %v3832 = vsel %vm859, %v3824, %v3831
        %v3833 = vrot.slane %v3828, 4
        %v3834 = vsel %vm859, %v3833, %v3816
        %v3835 = vrot.slane %v3816, 4
        %v3836 = vsel %vm859, %v3828, %v3835
        %v3837 = vsel %vm859, %v3777, %v3758
        %v3839 = vunpack.c.l.s4 1983009808
        %v3840 = vunpack.c.0.s8 %v3839
        %v3841 = vperm.slane %v3837, %v3840
        %v3842 = vrot.slane %v3778, 4
        %v3843 = vsel %vm859, %v3842, %v3776
        %v3845 = vunpack.c.l.s4 1983009808
        %v3846 = vunpack.c.0.s8 %v3845
        %v3847 = vperm.slane %v3843, %v3846
        %v3848 = vsel %vm859, %v3781, %v3770
        %v3850 = vunpack.c.l.s4 1983009808
        %v3851 = vunpack.c.0.s8 %v3850
        %v3852 = vperm.slane %v3848, %v3851
        %v3853 = vrot.slane %v3782, 4
        %v3854 = vsel %vm859, %v3853, %v3780
        %v3856 = vunpack.c.l.s4 1983009808
        %v3857 = vunpack.c.0.s8 %v3856
        %v3858 = vperm.slane %v3854, %v3857
        %v3859 = vrot.slane %v3847, 4
        %v3860 = vsel %vm859, %v3859, %v3841
        %v3861 = vrot.slane %v3841, 4
        %v3862 = vsel %vm859, %v3847, %v3861
        %v3864 = vunpack.c.l.s4 1934713408
        %v3865 = vunpack.c.0.s8 %v3864
        %v3866 = vperm.slane %v3860, %v3865
        %v3868 = vunpack.c.l.s4 1934713408
        %v3869 = vunpack.c.0.s8 %v3868
        %v3870 = vperm.slane %v3862, %v3869
        %v3871 = vrot.slane %v3858, 4
        %v3872 = vsel %vm859, %v3871, %v3852
        %v3873 = vrot.slane %v3852, 4
        %v3874 = vsel %vm859, %v3858, %v3873
        %v3876 = vunpack.c.l.s4 1934713408
        %v3877 = vunpack.c.0.s8 %v3876
        %v3878 = vperm.slane %v3872, %v3877
        %v3880 = vunpack.c.l.s4 1934713408
        %v3881 = vunpack.c.0.s8 %v3880
        %v3882 = vperm.slane %v3874, %v3881
        %v3883 = vrot.slane %v3878, 4
        %v3884 = vsel %vm859, %v3883, %v3866
        %v3885 = vrot.slane %v3866, 4
        %v3886 = vsel %vm859, %v3878, %v3885
        %v3887 = vrot.slane %v3882, 4
        %v3888 = vsel %vm859, %v3887, %v3870
        %v3889 = vrot.slane %v3870, 4
        %v3890 = vsel %vm859, %v3882, %v3889
        %3893 = vrot.lane.b32.xlu0 %v3832, 16
        %v3894 = vpop.permute.xlu0 %3893
        %3895 = vrot.lane.b32.xlu0 %v3886, 16
        %v3896 = vpop.permute.xlu0 %3895
        %3901 = vrot.lane.b32.xlu0 %v3834, 32
        %v3902 = vpop.permute.xlu0 %3901
        %3903 = vrot.lane.b32.xlu0 %v3888, 32
        %v3904 = vpop.permute.xlu0 %3903
        %3909 = vrot.lane.b32.xlu0 %v3836, 48
        %v3910 = vpop.permute.xlu0 %3909
        %3911 = vrot.lane.b32.xlu0 %v3890, 48
        %v3912 = vpop.permute.xlu0 %3911
        %v3915 = vsel %vm2273, %v3830, %v3894
        %v3916 = vsel %vm2273, %v3884, %v3896
        %vm3917 = vcmask 261120
        %v3918 = vsel %vm3917, %v3915, %v3902
        %v3919 = vsel %vm3917, %v3916, %v3904
        %vm3920 = vcmask 392192
        %v3921 = vsel %vm3920, %v3918, %v3910
        %v3922 = vsel %vm3920, %v3919, %v3912
        %v3923 = vpack.c.bf16 %v3922, %v3921
        %v3925 = vperm.slane %v720, 0
        %v3935 = vunpack.c.l.b16 %v686
        %v3936 = vunpack.c.l.b16 %v687
        %v3937 = vunpack.c.l.b16 %v688
        %v3938 = vunpack.c.l.b16 %v689
        %v3939 = vunpack.c.l.b16 %v690
        %v3940 = vunpack.c.l.b16 %v691
        %v3941 = vunpack.c.l.b16 %v692
        %v3942 = vunpack.c.l.b16 %v693
        %v3943 = vpack.c.b16 %v3936, %v3935
        %v3944 = vpack.c.b16 %v3938, %v3937
        %v3945 = vpack.c.b16 %v3940, %v3939
        %v3946 = vpack.c.b16 %v3942, %v3941
        %v3952 = vsel %vm757, %v3923, 0
        %3954 = vmatpush.bf16.msra.mxu0 0
        %3955 = vmatpush.bf16.msra.mxu0 0
        %3956 = vmatpush.bf16.msra.mxu0 0
        %3957 = vmatpush.bf16.msra.mxu0 0
        %3958 = vmatpush.bf16.msra.mxu0 %v3946
        %3959 = vmatpush.bf16.msra.mxu0 %v3945
        %3960 = vmatpush.bf16.msra.mxu0 %v3944
        %3961 = vmatpush.bf16.msra.mxu0 %v3943
        %3962 = vmatmul.bf16.gmra.mxu0 %v3952
        %v3963 = vpop.f32.mrf.mxu0
        %v3964 = vadd.f32 %v3925, %v3963
        %v3965 = vpop.f32.mrf.mxu0
        %v3966 = vadd.f32 %v3925, %v3965
        %3967 = vdwg.mxu0
        %v3968 = vadd.f32 %v666, %v3964
        %v3969 = vadd.f32 %v667, %v3966
        %v3970 = vsel %vm757, %v3968, 0.0
        %3971 = vadd.xlane.f32.xlu0 %v3970
        %v3972 = vpop.xlane.xlu0 %3971
        %v3973 = vsel %vm757, %v3969, 0.0
        %3974 = vadd.xlane.f32.xlu0 %v3973
        %v3975 = vpop.xlane.xlu0 %3974
        %v3976 = vrcp.pop 64.0
        %v3977 = vmul.f32 64.0, %v3976
        %v3978 = vsub.f32 1.0, %v3977
        %v3979 = vmul.f32 %v3976, %v3978
        %v3980 = vadd.f32 %v3976, %v3979
        %vm3981 = vweird.f32 %v3976
        %v3982 = vsel %vm3981, %v3976, %v3980
        %v3983 = vmul.f32 %v3972, %v3982
        %v3984 = vmul.f32 %v3975, %v3982
        %v3985 = vsub.f32 %v3968, %v3983
        %v3986 = vsub.f32 %v3969, %v3984
        %v3987 = vmul.f32 %v3985, %v3985
        %v3988 = vmul.f32 %v3986, %v3986
        %v3989 = vsel %vm757, %v3987, 0.0
        %3990 = vadd.xlane.f32.xlu0 %v3989
        %v3991 = vpop.xlane.xlu0 %3990
        %v3992 = vsel %vm757, %v3988, 0.0
        %3993 = vadd.xlane.f32.xlu0 %v3992
        %v3994 = vpop.xlane.xlu0 %3993
        %v3995 = vmul.f32 %v3991, %v3982
        %v3996 = vmul.f32 %v3994, %v3982
        %v3997 = vadd.f32 %v3995, 1e-05
        %v3998 = vadd.f32 %v3996, 1e-05
        %v3999 = vrsqrt.pop %v3997
        %v4000 = vmul.f32 %v3999, %v3997
        %v4001 = vmul.f32 %v4000, %v3999
        %v4002 = vmul.f32 0.5, %v4001
        %v4003 = vsub.f32 1.5, %v4002
        %v4004 = vmul.f32 %v3999, %v4003
        %vm4005 = vweird.f32 %v3997
        %vm4006 = vweird.f32 %v3999
        %vm4007 = vmor %vm4005, %vm4006
        %v4008 = vsel %vm4007, %v3999, %v4004
        %v4009 = vrsqrt.pop %v3998
        %v4010 = vmul.f32 %v4009, %v3998
        %v4011 = vmul.f32 %v4010, %v4009
        %v4012 = vmul.f32 0.5, %v4011
        %v4013 = vsub.f32 1.5, %v4012
        %v4014 = vmul.f32 %v4009, %v4013
        %vm4015 = vweird.f32 %v3998
        %vm4016 = vweird.f32 %v4009
        %vm4017 = vmor %vm4015, %vm4016
        %v4018 = vsel %vm4017, %v4009, %v4014
        %v4019 = vmul.f32 %v3985, %v4008
        %v4020 = vmul.f32 %v3986, %v4018
        %v4022 = vperm.slane %v723, 0
        %v4024 = vmul.f32 %v4019, %v4022
        %v4025 = vmul.f32 %v4020, %v4022
        %v4027 = vperm.slane %v724, 0
        %v4029 = vadd.f32 %v4024, %v4027
        %v4030 = vadd.f32 %v4025, %v4027
        %v4031 = vpack.c.bf16 %v4030, %v4029
        %v4033 = vperm.slane %v721, 0
        %v4043 = vunpack.c.l.b16 %v694
        %v4044 = vunpack.c.l.b16 %v695
        %v4045 = vunpack.c.l.b16 %v696
        %v4046 = vunpack.c.l.b16 %v697
        %v4047 = vunpack.c.l.b16 %v698
        %v4048 = vunpack.c.l.b16 %v699
        %v4049 = vunpack.c.l.b16 %v700
        %v4050 = vunpack.c.l.b16 %v701
        %v4051 = vpack.c.b16 %v4044, %v4043
        %v4052 = vpack.c.b16 %v4046, %v4045
        %v4053 = vpack.c.b16 %v4048, %v4047
        %v4054 = vpack.c.b16 %v4050, %v4049
        %v4060 = vsel %vm757, %v4031, 0
        %4062 = vmatpush.bf16.msra.mxu0 0
        %4063 = vmatpush.bf16.msra.mxu0 0
        %4064 = vmatpush.bf16.msra.mxu0 0
        %4065 = vmatpush.bf16.msra.mxu0 0
        %4066 = vmatpush.bf16.msra.mxu0 %v4054
        %4067 = vmatpush.bf16.msra.mxu0 %v4053
        %4068 = vmatpush.bf16.msra.mxu0 %v4052
        %4069 = vmatpush.bf16.msra.mxu0 %v4051
        %4070 = vmatmul.bf16.gmra.mxu0 %v4060
        %v4071 = vpop.f32.mrf.mxu0
        %v4072 = vadd.f32 %v4033, %v4071
        %v4073 = vpop.f32.mrf.mxu0
        %v4074 = vadd.f32 %v4033, %v4073
        %4075 = vdwg.mxu0
        %v4076 = vmax.f32 %v4072, 0.0
        %v4077 = vmax.f32 %v4074, 0.0
        %v4078 = vpack.c.bf16 %v4077, %v4076
        %v4080 = vperm.slane %v722, 0
        %v4098 = vunpack.c.l.b16 %v702
        %v4099 = vunpack.c.l.b16 %v703
        %v4100 = vunpack.c.l.b16 %v704
        %v4101 = vunpack.c.l.b16 %v705
        %v4102 = vunpack.c.l.b16 %v706
        %v4103 = vunpack.c.l.b16 %v707
        %v4104 = vunpack.c.l.b16 %v708
        %v4105 = vunpack.c.l.b16 %v709
        %v4106 = vunpack.c.l.b16 %v710
        %v4107 = vunpack.c.l.b16 %v711
        %v4108 = vunpack.c.l.b16 %v712
        %v4109 = vunpack.c.l.b16 %v713
        %v4110 = vunpack.c.l.b16 %v714
        %v4111 = vunpack.c.l.b16 %v715
        %v4112 = vunpack.c.l.b16 %v716
        %v4113 = vunpack.c.l.b16 %v717
        %v4114 = vpack.c.b16 %v4099, %v4098
        %v4115 = vpack.c.b16 %v4101, %v4100
        %v4116 = vpack.c.b16 %v4103, %v4102
        %v4117 = vpack.c.b16 %v4105, %v4104
        %v4118 = vpack.c.b16 %v4107, %v4106
        %v4119 = vpack.c.b16 %v4109, %v4108
        %v4120 = vpack.c.b16 %v4111, %v4110
        %v4121 = vpack.c.b16 %v4113, %v4112
        %4130 = vmatpush.bf16.msra.mxu0 %v4121
        %4131 = vmatpush.bf16.msra.mxu0 %v4120
        %4132 = vmatpush.bf16.msra.mxu0 %v4119
        %4133 = vmatpush.bf16.msra.mxu0 %v4118
        %4134 = vmatpush.bf16.msra.mxu0 %v4117
        %4135 = vmatpush.bf16.msra.mxu0 %v4116
        %4136 = vmatpush.bf16.msra.mxu0 %v4115
        %4137 = vmatpush.bf16.msra.mxu0 %v4114
        %4138 = vmatmul.bf16.gmra.mxu0 %v4078
        %v4139 = vpop.f32.mrf.mxu0
        %v4140 = vadd.f32 %v4080, %v4139
        %v4141 = vpop.f32.mrf.mxu0
        %v4142 = vadd.f32 %v4080, %v4141
        %4143 = vdwg.mxu0
        %v4144 = vadd.f32 %v4029, %v4140
        %v4145 = vadd.f32 %v4030, %v4142
        %v4146 = vsel %vm757, %v4144, 0.0
        %4147 = vadd.xlane.f32.xlu0 %v4146
        %v4148 = vpop.xlane.xlu0 %4147
        %v4149 = vsel %vm757, %v4145, 0.0
        %4150 = vadd.xlane.f32.xlu0 %v4149
        %v4151 = vpop.xlane.xlu0 %4150
        %v4152 = vmul.f32 %v4148, %v3982
        %v4153 = vmul.f32 %v4151, %v3982
        %v4154 = vsub.f32 %v4144, %v4152
        %v4155 = vsub.f32 %v4145, %v4153
        %v4156 = vmul.f32 %v4154, %v4154
        %v4157 = vmul.f32 %v4155, %v4155
        %v4158 = vsel %vm757, %v4156, 0.0
        %4159 = vadd.xlane.f32.xlu0 %v4158
        %v4160 = vpop.xlane.xlu0 %4159
        %v4161 = vsel %vm757, %v4157, 0.0
        %4162 = vadd.xlane.f32.xlu0 %v4161
        %v4163 = vpop.xlane.xlu0 %4162
        %v4164 = vmul.f32 %v4160, %v3982
        %v4165 = vmul.f32 %v4163, %v3982
        %v4166 = vadd.f32 %v4164, 1e-05
        %v4167 = vadd.f32 %v4165, 1e-05
        %v4168 = vrsqrt.pop %v4166
        %v4169 = vmul.f32 %v4168, %v4166
        %v4170 = vmul.f32 %v4169, %v4168
        %v4171 = vmul.f32 0.5, %v4170
        %v4172 = vsub.f32 1.5, %v4171
        %v4173 = vmul.f32 %v4168, %v4172
        %vm4174 = vweird.f32 %v4166
        %vm4175 = vweird.f32 %v4168
        %vm4176 = vmor %vm4174, %vm4175
        %v4177 = vsel %vm4176, %v4168, %v4173
        %v4178 = vrsqrt.pop %v4167
        %v4179 = vmul.f32 %v4178, %v4167
        %v4180 = vmul.f32 %v4179, %v4178
        %v4181 = vmul.f32 0.5, %v4180
        %v4182 = vsub.f32 1.5, %v4181
        %v4183 = vmul.f32 %v4178, %v4182
        %vm4184 = vweird.f32 %v4167
        %vm4185 = vweird.f32 %v4178
        %vm4186 = vmor %vm4184, %vm4185
        %v4187 = vsel %vm4186, %v4178, %v4183
        %v4188 = vmul.f32 %v4154, %v4177
        %v4189 = vmul.f32 %v4155, %v4187
        %v4191 = vperm.slane %v725, 0
        %v4193 = vmul.f32 %v4188, %v4191
        %v4194 = vmul.f32 %v4189, %v4191
        %v4196 = vperm.slane %v726, 0
        %v4198 = vadd.f32 %v4193, %v4196
        %v4199 = vadd.f32 %v4194, %v4196
        %4200 = vst.msk [vmem:[#allocation2] sm:$0xff] %vm757, %v4198
        %4201 = vst.msk [vmem:[#allocation2 + $0x8] sm:$0xff] %vm757, %v4199
        %p4202 = scmp.eq.s32.totalorder %s39, 1
        // Predicated region
        $region109: #{tpu_custom_call.1} parent=91 // pred_check
          %p4203 = pneg %p4202
        $region110: #{tpu_custom_call.1} parent=91 // pred_check_branch
          %4205 = sbr.rel (%p4203) target = $region112
        $region111: #{tpu_custom_call.1} parent=91 // pred_region
          %v4206 = vld [vmem:[%s16] sm:$0x1]
          %v4207 = vld [vmem:[%s17] sm:$0x1]
          %v4208 = vsel %vm757, %v4198, 0.0
          %4209 = vadd.xlane.f32.xlu0 %v4208
          %v4210 = vpop.xlane.xlu0 %4209
          %v4211 = vsel %vm757, %v4199, 0.0
          %4212 = vadd.xlane.f32.xlu0 %v4211
          %v4213 = vpop.xlane.xlu0 %4212
          %v4214 = vmul.f32 %v4210, %v3982
          %v4215 = vmul.f32 %v4213, %v3982
          %v4216 = vsub.f32 %v4198, %v4214
          %v4217 = vsub.f32 %v4199, %v4215
          %v4218 = vmul.f32 %v4216, %v4216
          %v4219 = vmul.f32 %v4217, %v4217
          %v4220 = vsel %vm757, %v4218, 0.0
          %4221 = vadd.xlane.f32.xlu0 %v4220
          %v4222 = vpop.xlane.xlu0 %4221
          %v4223 = vsel %vm757, %v4219, 0.0
          %4224 = vadd.xlane.f32.xlu0 %v4223
          %v4225 = vpop.xlane.xlu0 %4224
          %v4226 = vmul.f32 %v4222, %v3982
          %v4227 = vmul.f32 %v4225, %v3982
          %v4228 = vadd.f32 %v4226, 1e-05
          %v4229 = vadd.f32 %v4227, 1e-05
          %v4230 = vrsqrt.pop %v4228
          %v4231 = vmul.f32 %v4230, %v4228
          %v4232 = vmul.f32 %v4231, %v4230
          %v4233 = vmul.f32 0.5, %v4232
          %v4234 = vsub.f32 1.5, %v4233
          %v4235 = vmul.f32 %v4230, %v4234
          %vm4236 = vweird.f32 %v4228
          %vm4237 = vweird.f32 %v4230
          %vm4238 = vmor %vm4236, %vm4237
          %v4239 = vsel %vm4238, %v4230, %v4235
          %v4240 = vrsqrt.pop %v4229
          %v4241 = vmul.f32 %v4240, %v4229
          %v4242 = vmul.f32 %v4241, %v4240
          %v4243 = vmul.f32 0.5, %v4242
          %v4244 = vsub.f32 1.5, %v4243
          %v4245 = vmul.f32 %v4240, %v4244
          %vm4246 = vweird.f32 %v4229
          %vm4247 = vweird.f32 %v4240
          %vm4248 = vmor %vm4246, %vm4247
          %v4249 = vsel %vm4248, %v4240, %v4245
          %v4250 = vmul.f32 %v4216, %v4239
          %v4251 = vmul.f32 %v4217, %v4249
          %v4253 = vperm.slane %v4206, 0
          %v4255 = vmul.f32 %v4250, %v4253
          %v4256 = vmul.f32 %v4251, %v4253
          %v4258 = vperm.slane %v4207, 0
          %v4260 = vadd.f32 %v4255, %v4258
          %v4261 = vadd.f32 %v4256, %v4258
          %4262 = vst.msk [vmem:[%s645] sm:$0xff] %vm757, %v4260
          %4263 = vst.msk [vmem:[%s645 + $0x8] sm:$0xff] %vm757, %v4261
        $region112: #{tpu_custom_call.1} parent=91 // pred_fallthru
          _
        %s4264 = sand.u32 %s442, 1
        %s4265 = scalar_lea.sflag [#allocation5], %s4264
        %s4266 = sand.u32 %s442, 1
        %s4267 = smul.addr %s4266, 16
        %s4268 = scalar_lea.vmem [#allocation9], %s4267
        // Predicated region
        $region113: #{tpu_custom_call.1} parent=91 // pred_check
          %p4269 = pneg %p452
        $region114: #{tpu_custom_call.1} parent=91 // pred_check_branch
          %4271 = sbr.rel (%p4269) target = $region116
        $region115: #{tpu_custom_call.1} parent=91 // pred_region
          %4273 = vsyncadd %s4265, 0
          %s4274 = smul.addr %s38, 2
          %s4275 = smul.addr %s4274, 8
          %s4276 = scalar_lea.hbm %s18, %s4275
          %s4277 = sshll.u32 %s4268, 4
          %s4278 = int_to_ptr.vmem [resolvable:$true] %s4277
          %s4279 = sshll.u32 %s4276, 4
          %s4280 = int_to_ptr.hbm [resolvable:$true] %s4279
          %4285 = dma.vmem_to_hbm [thread:$0]  %s4278, 256, %s4280, %s4265, 128, 128, 8
        $region116: #{tpu_custom_call.1} parent=91 // pred_fallthru
          _
      $region92: #{tpu_custom_call.1} parent=5 // pred_fallthru
        _
      %p4286 = scmp.le.s32.totalorder 2, %s29
      // Predicated region
      $region117: #{tpu_custom_call.1} parent=5 // pred_check
        %p4287 = pneg %p4286
      $region118: #{tpu_custom_call.1} parent=5 // pred_check_branch
        %4289 = sbr.rel (%p4287) target = $region120
      $region119: #{tpu_custom_call.1} parent=5 // pred_region
        %s4290 = ssub.s32 %s29, 2
        // Predicated region
        $region121: #{tpu_custom_call.1} parent=119 // pred_check
          %p4291 = pneg %p458
        $region122: #{tpu_custom_call.1} parent=119 // pred_check_branch
          %4293 = sbr.rel (%p4291) target = $region124
        $region123: #{tpu_custom_call.1} parent=119 // pred_region
          %s4294 = sand.u32 %s443, 1
          %s4295 = scalar_lea.sflag [#allocation5], %s4294
          %s4296 = sand.u32 %s443, 1
          %s4297 = smul.addr %s4296, 16
          %s4298 = scalar_lea.vmem [#allocation9], %s4297
          %4300 = dma.done %s4295, 256
        $region124: #{tpu_custom_call.1} parent=119 // pred_fallthru
          _
      $region120: #{tpu_custom_call.1} parent=5 // pred_fallthru
        _
    $region6: #{tpu_custom_call.1} parent=1 // loop_footer
      %s33 = sadd.s32 1, %s29
    $region7: #{tpu_custom_call.1} parent=1 // loop_footer_branch
      %28 = sbr.rel target = $region3
    $region8: #{tpu_custom_call.1} parent=1 // loop_exit
      _
    %4301 = vsyncpa [#allocation4], 1
    %s4302 = scalar_lea.sflag [#allocation4], 1
    %4303 = vsyncpa %s4302, 1
    %4304 = vsyncpa [#allocation7], 1
    %4305 = vsyncpa [#allocation5], 1
    %s4306 = scalar_lea.sflag [#allocation5], 1
    %4307 = vsyncpa %s4306, 1

</llo_original>
